<compile_context>
chip_gen: v6e
topology: v6e:2x2x1
jax: 0.10.0
libtpu: 0.0.40
codegen_flags: <defaults>
</compile_context>

<pallas_src>
import jax
import jax.numpy as jnp
from jax.experimental import pallas as pl
from jax.experimental.pallas import tpu as pltpu

FINE_GRAINED_CATEGORIES = 200
SUPER_CATEGORIES = 20
GAN_R_NUM = 2


def _round_up(x, m):
    return (x + m - 1) // m * m


def _const_index_map(ndim):
    def imap(n):
        return (0,) * ndim
    return imap


# ----------------------------------------------------------------------------
# Fused kernel: whole NEXT_STAGE_G forward for B images per grid step.
# Activation layout: channel-major (C, B*S_img) f32, halo-padded flattened
# spatial in the lane dim.
# ----------------------------------------------------------------------------
def _make_fused_kernel(Wp, S_img, B, cin_joint_p, cin_res_p, ngf, num_residual):
    S = B * S_img
    n_w = 4 + 4 * num_residual     # (w,b) joint + 4 per ResBlock + (w,b) same
    # Tap t = dy*3+dx needs pad[:, p + (dy-1)*Wp + (dx-1)] at output column p,
    # i.e. a roll by -(offset).  Interior columns never wrap (the zero halo covers
    # the +-(Wp+1) reach), so wrap-around only touches halo columns -> masked out.
    shifts = [((1 - dy) * Wp + (1 - dx)) % S for dy in range(3) for dx in range(3)]

    def kernel(*refs):
        hc_ref, mask_ref = refs[0], refs[1]
        w_refs = refs[2:2 + n_w]
        o_ref = refs[2 + n_w]
        pad_ref = refs[3 + n_w]       # (cmax, S) f32 activation (zero halo)
        stack_ref = refs[4 + n_w]     # (9*max_cin_p, S) bf16 im2col tap stack

        mask = mask_ref[...]          # (1, S) f32: 1 on interior columns, else 0

        def conv(src_row, cin_p, w_ref, b_ref, glu):
            # conv3x3 + folded BN (+ GLU): ONE MXU dot with K = 9*cin_p.
            act = pad_ref[src_row:src_row + cin_p, :]                # (cin_p, S) f32
            for t, s in enumerate(shifts):
                tap = act if s == 0 else pltpu.roll(act, s, axis=1)  # XLU rotate
                stack_ref[t * cin_p:(t + 1) * cin_p, :] = tap.astype(jnp.bfloat16)
            y = jnp.dot(w_ref[...], stack_ref[0:9 * cin_p, :],
                        preferred_element_type=jnp.float32)          # (cout2, S) f32
            y = y + b_ref[...]                                       # (cout2,1) bcast
            if glu:
                c = y.shape[0] // 2
                y = y[:c, :] * jax.nn.sigmoid(y[c:, :])
            return y * mask            # re-zero the halo/tail columns

        # Input was halo/channel zero-padded and laid out channel-major by the host.
        pad_ref[...] = hc_ref[0]

        # jointConv = conv3x3(ngf+efg -> 2*ngf) + BN + GLU
        out = conv(0, cin_joint_p, w_refs[0], w_refs[1], glu=True)   # (ngf, S)
        pad_ref[0:ngf, :] = out

        # ResBlocks: conv+BN+GLU, conv+BN, residual add.  The GLU branch output is
        # parked in rows [ngf:2*ngf] so the residual in rows [0:ngf] stays intact
        # (no extra residual copy needed).
        for i in range(num_residual):
            wa, ba, wb, bb = w_refs[2 + 4 * i: 6 + 4 * i]
            mid = conv(0, cin_res_p, wa, ba, glu=True)               # (ngf, S)
            pad_ref[ngf:2 * ngf, :] = mid
            out = conv(ngf, cin_res_p, wb, bb, glu=False) + pad_ref[0:ngf, :]
            pad_ref[0:ngf, :] = out

        # samesample = conv3x3(ngf -> ngf) + BN + GLU -> ngf//2 channels
        o_ref[0] = conv(0, cin_res_p, w_refs[n_w - 2], w_refs[n_w - 1], glu=True)

    return kernel


# ----------------------------------------------------------------------------
# Host-side weight preparation: fold BN scale into the conv weight and pack it
# channel-major im2col style: (cout, 9*cin_p) with K ordered (tap, channel).
# GLU value/gate stay fused along the cout rows (value first, gate second).
# ----------------------------------------------------------------------------
def _fold_conv_bn_cm(p, cin, cin_p):
    w = p["w"].astype(jnp.float32) * p["scale"].astype(jnp.float32)   # (3,3,cin,cout)
    cout = w.shape[-1]
    wz = jnp.zeros((3, 3, cin_p, cout), jnp.float32).at[:, :, :cin, :].set(w)
    w_cm = wz.reshape(9 * cin_p, cout).T                              # (cout, 9*cin_p)
    b = p["bias"].astype(jnp.float32).reshape(cout, 1)
    return [w_cm.astype(jnp.bfloat16), b]


def _flatten_params(params, ngf, ef_dim, num_residual, cin_joint_p, cin_res_p):
    flat = list(_fold_conv_bn_cm(params["joint"], ngf + ef_dim, cin_joint_p))
    for i in range(num_residual):
        flat += _fold_conv_bn_cm(params[f"res{i}_a"], ngf, cin_res_p)
        flat += _fold_conv_bn_cm(params[f"res{i}_b"], ngf, cin_res_p)
    flat += _fold_conv_bn_cm(params["same"], ngf, cin_res_p)
    return flat


# ----------------------------------------------------------------------------
# Deterministic parameter init (synthetic weights; BN folded into scale/bias)
# ----------------------------------------------------------------------------
def _conv_bn_params(key, cin, cout, eps=1e-5):
    kw, kg, kb, km, kv = jax.random.split(key, 5)
    w = 0.05 * jax.random.normal(kw, (3, 3, cin, cout), jnp.float32)
    gamma = 1.0 + 0.1 * jax.random.normal(kg, (cout,), jnp.float32)
    beta = 0.1 * jax.random.normal(kb, (cout,), jnp.float32)
    mean = 0.1 * jax.random.normal(km, (cout,), jnp.float32)
    var = jax.random.uniform(kv, (cout,), jnp.float32, 0.5, 1.5)
    scale = gamma / jnp.sqrt(var + eps)
    bias = beta - mean * scale
    return dict(w=w, scale=scale, bias=bias)


def init_next_stage_g_params(key, ngf, ef_dim, num_residual):
    keys = jax.random.split(key, 2 + 2 * num_residual)
    p = {}
    # jointConv = Block3x3_relu(ngf+efg, ngf): conv -> 2*ngf, BN(2*ngf), GLU
    p["joint"] = _conv_bn_params(keys[0], ngf + ef_dim, ngf * 2)
    # ResBlock(ngf): conv ngf->2ngf, BN, GLU, conv ngf->ngf, BN
    for i in range(num_residual):
        p[f"res{i}_a"] = _conv_bn_params(keys[1 + 2 * i], ngf, ngf * 2)
        p[f"res{i}_b"] = _conv_bn_params(keys[2 + 2 * i], ngf, ngf)
    # samesample = sameBlock(ngf, ngf//2): conv ngf -> (ngf//2)*2 = ngf, BN, GLU
    p["same"] = _conv_bn_params(keys[1 + 2 * num_residual], ngf, ngf)
    return p


# ----------------------------------------------------------------------------
# NEXT_STAGE_G.forward
# ----------------------------------------------------------------------------
def next_stage_g(h_code, code, params, *, ef_dim, num_residual=GAN_R_NUM,
                 images_per_step=1):
    """h_code: (N, ngf, H, W) NCHW; code: (N, ef_dim).  Returns (N, ngf//2, H, W)."""
    N, ngf, H, W = h_code.shape
    assert ngf % 16 == 0, "ngf must be a multiple of 16 for aligned bf16 tap packing"
    B = images_per_step
    assert N % B == 0, "images_per_step must divide the batch"
    Hp, Wp = H + 2, W + 2
    S_img = _round_up(Hp * Wp, 128)          # lanes per image (zero tail)
    S = B * S_img
    cin_joint = ngf + ef_dim
    cin_joint_p = _round_up(cin_joint, 16)
    cin_res_p = ngf
    cmax = max(cin_joint_p, 2 * ngf)
    out_c = ngf // 2

    # code.view(-1,ef,1,1).repeat(1,1,s,s); torch.cat((code, h_code), 1); then
    # channel-major + halo + lane/channel zero padding (all fused host-side XLA).
    code_map = jnp.broadcast_to(code.reshape(N, ef_dim, 1, 1).astype(jnp.float32),
                                (N, ef_dim, H, W))
    hc = jnp.concatenate([code_map, h_code.astype(jnp.float32)], axis=1)
    hc = jnp.pad(hc, ((0, 0), (0, cmax - cin_joint), (1, 1), (1, 1)))
    hc = hc.reshape(N, cmax, Hp * Wp)
    hc = jnp.pad(hc, ((0, 0), (0, 0), (0, S_img - Hp * Wp)))
    hc = hc.reshape(N // B, B, cmax, S_img).transpose(0, 2, 1, 3)
    hc = hc.reshape(N // B, cmax, S)

    # interior-column mask: 1 on real pixels, 0 on halo columns and lane tail.
    mask = jnp.zeros((Hp, Wp), jnp.float32).at[1:H + 1, 1:W + 1].set(1.0)
    mask = jnp.pad(mask.reshape(1, Hp * Wp), ((0, 0), (0, S_img - Hp * Wp)))
    mask = jnp.tile(mask, (1, B))                                    # (1, S)

    flat_w = _flatten_params(params, ngf, ef_dim, num_residual,
                             cin_joint_p, cin_res_p)
    kernel = _make_fused_kernel(Wp, S_img, B, cin_joint_p, cin_res_p,
                                ngf, num_residual)

    in_specs = [pl.BlockSpec((1, cmax, S), lambda n: (n, 0, 0)),
                pl.BlockSpec((1, S), lambda n: (0, 0))]
    for a in flat_w:
        in_specs.append(pl.BlockSpec(a.shape, _const_index_map(a.ndim)))

    out = pl.pallas_call(
        kernel,
        out_shape=jax.ShapeDtypeStruct((N // B, out_c, S), jnp.float32),
        grid=(N // B,),
        in_specs=in_specs,
        out_specs=pl.BlockSpec((1, out_c, S), lambda n: (n, 0, 0)),
        scratch_shapes=[
            pltpu.VMEM((cmax, S), jnp.float32),
            pltpu.VMEM((9 * max(cin_joint_p, cin_res_p), S), jnp.bfloat16),
        ],
        compiler_params=pltpu.CompilerParams(
            dimension_semantics=("parallel",)),
    )(hc, mask, *flat_w)

    # (N//B, out_c, B*S_img) -> (N, out_c, H, W): un-pack lane batching, drop the
    # lane tail and the 1-pixel halo.  Output is already channel-major (NCHW).
    out = out.reshape(N // B, out_c, B, S_img).transpose(0, 2, 1, 3)
    out = out.reshape(N, out_c, S_img)[:, :, :Hp * Wp].reshape(N, out_c, Hp, Wp)
    return out[:, :, 1:H + 1, 1:W + 1]


# ----------------------------------------------------------------------------
# Pure-JAX reference (matches the kernel's bf16 MXU inputs / f32 accumulation)
# ----------------------------------------------------------------------------
def _reference_forward(hc_nhwc, params, num_residual):
    def q(v):
        return v.astype(jnp.bfloat16).astype(jnp.float32)

    def conv_bn(x, p):
        w = p["w"].astype(jnp.float32) * p["scale"].astype(jnp.float32)
        y = jax.lax.conv_general_dilated(
            q(x), q(w), window_strides=(1, 1), padding="SAME",
            dimension_numbers=("NHWC", "HWIO", "NHWC"),
            precision=jax.lax.Precision.HIGHEST)
        return y + p["bias"].astype(jnp.float32)

    def glu(y):
        c = y.shape[-1] // 2
        return y[..., :c] * jax.nn.sigmoid(y[..., c:])

    x = glu(conv_bn(hc_nhwc, params["joint"]))
    for i in range(num_residual):
        r = x
        t = glu(conv_bn(x, params[f"res{i}_a"]))
        x = conv_bn(t, params[f"res{i}_b"]) + r
    return glu(conv_bn(x, params["same"]))


# ----------------------------------------------------------------------------
if __name__ == "__main__":
    key = jax.random.PRNGKey(0)
    kp, kh, kc = jax.random.split(key, 3)

    N, ngf, H, W = 2, 32, 16, 16
    ef_dim = SUPER_CATEGORIES          # use_hrc = 1
    num_residual = GAN_R_NUM

    params = init_next_stage_g_params(kp, ngf, ef_dim, num_residual)
    h_code = jax.random.normal(kh, (N, ngf, H, W), jnp.float32)
    code = jax.random.normal(kc, (N, ef_dim), jnp.float32)

    # pure-JAX reference of the same (eval-mode) math
    x_nhwc = jnp.transpose(h_code, (0, 2, 3, 1))
    code_map = jnp.broadcast_to(code[:, None, None, :], (N, H, W, ef_dim))
    hc_nhwc = jnp.concatenate([code_map, x_nhwc], axis=-1)
    ref = jnp.transpose(_reference_forward(hc_nhwc, params, num_residual),
                        (0, 3, 1, 2))

    # images_per_step=1: grid=(N,) "parallel" (v7x: both TensorCores busy).
    # images_per_step=2: one grid step with both images packed along lanes
    # (amortizes per-step overhead on single-TC v5e/v6e).
    for b in (1, 2):
        out = next_stage_g(h_code, code, params, ef_dim=ef_dim,
                           num_residual=num_residual, images_per_step=b)
        out = jax.block_until_ready(out)

        assert out.shape == (N, ngf // 2, H, W), out.shape
        assert out.dtype == jnp.float32
        assert bool(jnp.all(jnp.isfinite(out)))
        max_err = float(jnp.max(jnp.abs(out - ref)))
        assert max_err < 1e-2, f"images_per_step={b}: max abs err {max_err}"

    print("KERNEL_OK")
</pallas_src>

<mosaic_0001>
module attributes {stable_mosaic.version = 11 : i64} {
  func.func @kernel(%arg0: i32, %arg1: memref<1x64x384xf32, #tpu.memory_space<vmem>>, %arg2: memref<1x384xf32, #tpu.memory_space<vmem>>, %arg3: memref<64x576xbf16, #tpu.memory_space<vmem>>, %arg4: memref<64x1xf32, #tpu.memory_space<vmem>>, %arg5: memref<64x288xbf16, #tpu.memory_space<vmem>>, %arg6: memref<64x1xf32, #tpu.memory_space<vmem>>, %arg7: memref<32x288xbf16, #tpu.memory_space<vmem>>, %arg8: memref<32x1xf32, #tpu.memory_space<vmem>>, %arg9: memref<64x288xbf16, #tpu.memory_space<vmem>>, %arg10: memref<64x1xf32, #tpu.memory_space<vmem>>, %arg11: memref<32x288xbf16, #tpu.memory_space<vmem>>, %arg12: memref<32x1xf32, #tpu.memory_space<vmem>>, %arg13: memref<32x288xbf16, #tpu.memory_space<vmem>>, %arg14: memref<32x1xf32, #tpu.memory_space<vmem>>, %arg15: memref<1x16x384xf32, #tpu.memory_space<vmem>>, %arg16: memref<64x384xf32, #tpu.memory_space<vmem>>, %arg17: memref<576x384xbf16, #tpu.memory_space<vmem>>) attributes {dimension_semantics = [#tpu.dimension_semantics<parallel>], iteration_bounds = array<i64: 2>, scalar_prefetch = 0 : i64, scratch_operands = 2 : i64, tpu.core_type = #tpu.core_type<tc>, window_params = [{transform_indices = @transform_0, window_bounds = array<i64: 1, 64, 384>}, {pipeline_mode = #tpu.pipeline_mode<synchronous>, transform_indices = @transform_1, window_bounds = array<i64: 1, 384>}, {pipeline_mode = #tpu.pipeline_mode<synchronous>, transform_indices = @transform_2, window_bounds = array<i64: 64, 576>}, {pipeline_mode = #tpu.pipeline_mode<synchronous>, transform_indices = @transform_3, window_bounds = array<i64: 64, 1>}, {pipeline_mode = #tpu.pipeline_mode<synchronous>, transform_indices = @transform_4, window_bounds = array<i64: 64, 288>}, {pipeline_mode = #tpu.pipeline_mode<synchronous>, transform_indices = @transform_5, window_bounds = array<i64: 64, 1>}, {pipeline_mode = #tpu.pipeline_mode<synchronous>, transform_indices = @transform_6, window_bounds = array<i64: 32, 288>}, {pipeline_mode = #tpu.pipeline_mode<synchronous>, transform_indices = @transform_7, window_bounds = array<i64: 32, 1>}, {pipeline_mode = #tpu.pipeline_mode<synchronous>, transform_indices = @transform_8, window_bounds = array<i64: 64, 288>}, {pipeline_mode = #tpu.pipeline_mode<synchronous>, transform_indices = @transform_9, window_bounds = array<i64: 64, 1>}, {pipeline_mode = #tpu.pipeline_mode<synchronous>, transform_indices = @transform_10, window_bounds = array<i64: 32, 288>}, {pipeline_mode = #tpu.pipeline_mode<synchronous>, transform_indices = @transform_11, window_bounds = array<i64: 32, 1>}, {pipeline_mode = #tpu.pipeline_mode<synchronous>, transform_indices = @transform_12, window_bounds = array<i64: 32, 288>}, {pipeline_mode = #tpu.pipeline_mode<synchronous>, transform_indices = @transform_13, window_bounds = array<i64: 32, 1>}, {transform_indices = @transform_14, window_bounds = array<i64: 1, 16, 384>}]} {
    %c0 = arith.constant 0 : index
    %c0_0 = arith.constant 0 : index
    %0 = vector.load %arg2[%c0, %c0_0] : memref<1x384xf32, #tpu.memory_space<vmem>>, vector<1x384xf32>
    %c0_1 = arith.constant 0 : index
    %c0_2 = arith.constant 0 : index
    %c0_3 = arith.constant 0 : index
    %1 = vector.load %arg1[%c0_1, %c0_2, %c0_3] : memref<1x64x384xf32, #tpu.memory_space<vmem>>, vector<1x64x384xf32>
    %2 = vector.shape_cast %1 : vector<1x64x384xf32> to vector<64x384xf32>
    %c0_4 = arith.constant 0 : index
    %c0_5 = arith.constant 0 : index
    %3 = vector.load %arg16[%c0_4, %c0_5] : memref<64x384xf32, #tpu.memory_space<vmem>>, vector<64x384xf32>
    tpu.vector_store %arg16[%c0_4, %c0_5], %2 {strides = array<i32>} : memref<64x384xf32, #tpu.memory_space<vmem>>, vector<64x384xf32>,
    %c0_6 = arith.constant 0 : index
    %c0_7 = arith.constant 0 : index
    %4 = vector.load %arg16[%c0_6, %c0_7] : memref<64x384xf32, #tpu.memory_space<vmem>>, vector<64x384xf32>
    %c19_i32 = arith.constant 19 : i32
    %5 = tpu.dynamic_rotate %4 by %c19_i32 dim 1 : vector<64x384xf32>, i32 -> vector<64x384xf32>
    %6 = arith.truncf %5 : vector<64x384xf32> to vector<64x384xbf16>
    %c0_8 = arith.constant 0 : index
    %c0_9 = arith.constant 0 : index
    %7 = vector.load %arg17[%c0_8, %c0_9] : memref<576x384xbf16, #tpu.memory_space<vmem>>, vector<64x384xbf16>
    tpu.vector_store %arg17[%c0_8, %c0_9], %6 {strides = array<i32>} : memref<576x384xbf16, #tpu.memory_space<vmem>>, vector<64x384xbf16>,
    %c18_i32 = arith.constant 18 : i32
    %8 = tpu.dynamic_rotate %4 by %c18_i32 dim 1 : vector<64x384xf32>, i32 -> vector<64x384xf32>
    %9 = arith.truncf %8 : vector<64x384xf32> to vector<64x384xbf16>
    %c64 = arith.constant 64 : index
    %c0_10 = arith.constant 0 : index
    %10 = vector.load %arg17[%c64, %c0_10] : memref<576x384xbf16, #tpu.memory_space<vmem>>, vector<64x384xbf16>
    tpu.vector_store %arg17[%c64, %c0_10], %9 {strides = array<i32>} : memref<576x384xbf16, #tpu.memory_space<vmem>>, vector<64x384xbf16>,
    %c17_i32 = arith.constant 17 : i32
    %11 = tpu.dynamic_rotate %4 by %c17_i32 dim 1 : vector<64x384xf32>, i32 -> vector<64x384xf32>
    %12 = arith.truncf %11 : vector<64x384xf32> to vector<64x384xbf16>
    %c128 = arith.constant 128 : index
    %c0_11 = arith.constant 0 : index
    %13 = vector.load %arg17[%c128, %c0_11] : memref<576x384xbf16, #tpu.memory_space<vmem>>, vector<64x384xbf16>
    tpu.vector_store %arg17[%c128, %c0_11], %12 {strides = array<i32>} : memref<576x384xbf16, #tpu.memory_space<vmem>>, vector<64x384xbf16>,
    %c1_i32 = arith.constant 1 : i32
    %14 = tpu.dynamic_rotate %4 by %c1_i32 dim 1 : vector<64x384xf32>, i32 -> vector<64x384xf32>
    %15 = arith.truncf %14 : vector<64x384xf32> to vector<64x384xbf16>
    %c192 = arith.constant 192 : index
    %c0_12 = arith.constant 0 : index
    %16 = vector.load %arg17[%c192, %c0_12] : memref<576x384xbf16, #tpu.memory_space<vmem>>, vector<64x384xbf16>
    tpu.vector_store %arg17[%c192, %c0_12], %15 {strides = array<i32>} : memref<576x384xbf16, #tpu.memory_space<vmem>>, vector<64x384xbf16>,
    %17 = arith.truncf %4 : vector<64x384xf32> to vector<64x384xbf16>
    %c256 = arith.constant 256 : index
    %c0_13 = arith.constant 0 : index
    %18 = vector.load %arg17[%c256, %c0_13] : memref<576x384xbf16, #tpu.memory_space<vmem>>, vector<64x384xbf16>
    tpu.vector_store %arg17[%c256, %c0_13], %17 {strides = array<i32>} : memref<576x384xbf16, #tpu.memory_space<vmem>>, vector<64x384xbf16>,
    %c383_i32 = arith.constant 383 : i32
    %19 = tpu.dynamic_rotate %4 by %c383_i32 dim 1 : vector<64x384xf32>, i32 -> vector<64x384xf32>
    %20 = arith.truncf %19 : vector<64x384xf32> to vector<64x384xbf16>
    %c320 = arith.constant 320 : index
    %c0_14 = arith.constant 0 : index
    %21 = vector.load %arg17[%c320, %c0_14] : memref<576x384xbf16, #tpu.memory_space<vmem>>, vector<64x384xbf16>
    tpu.vector_store %arg17[%c320, %c0_14], %20 {strides = array<i32>} : memref<576x384xbf16, #tpu.memory_space<vmem>>, vector<64x384xbf16>,
    %c367_i32 = arith.constant 367 : i32
    %22 = tpu.dynamic_rotate %4 by %c367_i32 dim 1 : vector<64x384xf32>, i32 -> vector<64x384xf32>
    %23 = arith.truncf %22 : vector<64x384xf32> to vector<64x384xbf16>
    %c384 = arith.constant 384 : index
    %c0_15 = arith.constant 0 : index
    %24 = vector.load %arg17[%c384, %c0_15] : memref<576x384xbf16, #tpu.memory_space<vmem>>, vector<64x384xbf16>
    tpu.vector_store %arg17[%c384, %c0_15], %23 {strides = array<i32>} : memref<576x384xbf16, #tpu.memory_space<vmem>>, vector<64x384xbf16>,
    %c366_i32 = arith.constant 366 : i32
    %25 = tpu.dynamic_rotate %4 by %c366_i32 dim 1 : vector<64x384xf32>, i32 -> vector<64x384xf32>
    %26 = arith.truncf %25 : vector<64x384xf32> to vector<64x384xbf16>
    %c448 = arith.constant 448 : index
    %c0_16 = arith.constant 0 : index
    %27 = vector.load %arg17[%c448, %c0_16] : memref<576x384xbf16, #tpu.memory_space<vmem>>, vector<64x384xbf16>
    tpu.vector_store %arg17[%c448, %c0_16], %26 {strides = array<i32>} : memref<576x384xbf16, #tpu.memory_space<vmem>>, vector<64x384xbf16>,
    %c365_i32 = arith.constant 365 : i32
    %28 = tpu.dynamic_rotate %4 by %c365_i32 dim 1 : vector<64x384xf32>, i32 -> vector<64x384xf32>
    %29 = arith.truncf %28 : vector<64x384xf32> to vector<64x384xbf16>
    %c512 = arith.constant 512 : index
    %c0_17 = arith.constant 0 : index
    %30 = vector.load %arg17[%c512, %c0_17] : memref<576x384xbf16, #tpu.memory_space<vmem>>, vector<64x384xbf16>
    tpu.vector_store %arg17[%c512, %c0_17], %29 {strides = array<i32>} : memref<576x384xbf16, #tpu.memory_space<vmem>>, vector<64x384xbf16>,
    %c0_18 = arith.constant 0 : index
    %c0_19 = arith.constant 0 : index
    %31 = vector.load %arg3[%c0_18, %c0_19] : memref<64x576xbf16, #tpu.memory_space<vmem>>, vector<64x576xbf16>
    %c0_20 = arith.constant 0 : index
    %c0_21 = arith.constant 0 : index
    %32 = vector.load %arg17[%c0_20, %c0_21] : memref<576x384xbf16, #tpu.memory_space<vmem>>, vector<576x384xbf16>
    %cst = arith.constant dense<0.000000e+00> : vector<64x384xf32>
    %33 = tpu.matmul %31, %32, %cst {dimension_numbers = #tpu.dot_dimension_numbers<[1], [0], [0], [1], [0, 0, 1, 1], [], []>} : vector<64x576xbf16>, vector<576x384xbf16>, vector<64x384xf32> -> vector<64x384xf32>
    %c0_22 = arith.constant 0 : index
    %c0_23 = arith.constant 0 : index
    %34 = vector.load %arg4[%c0_22, %c0_23] : memref<64x1xf32, #tpu.memory_space<vmem>>, vector<64x1xf32>
    %35 = vector.broadcast %34 : vector<64x1xf32> to vector<64x384xf32>
    %36 = arith.addf %33, %35 : vector<64x384xf32>
    %37 = vector.extract_strided_slice %36 {offsets = [0, 0], sizes = [32, 384], strides = [1, 1]} : vector<64x384xf32> to vector<32x384xf32>
    %38 = vector.extract_strided_slice %36 {offsets = [32, 0], sizes = [32, 384], strides = [1, 1]} : vector<64x384xf32> to vector<32x384xf32>
    %39 = arith.negf %38 : vector<32x384xf32>
    %40 = math.exp %39 : vector<32x384xf32>
    %cst_24 = arith.constant 1.000000e+00 : f32
    %41 = vector.broadcast %cst_24 : f32 to vector<32x384xf32>
    %42 = arith.addf %41, %40 : vector<32x384xf32>
    %43 = arith.divf %41, %42 : vector<32x384xf32>
    %44 = arith.mulf %37, %43 : vector<32x384xf32>
    %45 = vector.broadcast %0 : vector<1x384xf32> to vector<32x384xf32>
    %46 = arith.mulf %44, %45 : vector<32x384xf32>
    %c0_25 = arith.constant 0 : index
    %c0_26 = arith.constant 0 : index
    %47 = vector.load %arg16[%c0_25, %c0_26] : memref<64x384xf32, #tpu.memory_space<vmem>>, vector<32x384xf32>
    tpu.vector_store %arg16[%c0_25, %c0_26], %46 {strides = array<i32>} : memref<64x384xf32, #tpu.memory_space<vmem>>, vector<32x384xf32>,
    %c0_27 = arith.constant 0 : index
    %c0_28 = arith.constant 0 : index
    %48 = vector.load %arg16[%c0_27, %c0_28] : memref<64x384xf32, #tpu.memory_space<vmem>>, vector<32x384xf32>
    %c19_i32_29 = arith.constant 19 : i32
    %49 = tpu.dynamic_rotate %48 by %c19_i32_29 dim 1 : vector<32x384xf32>, i32 -> vector<32x384xf32>
    %50 = arith.truncf %49 : vector<32x384xf32> to vector<32x384xbf16>
    %c0_30 = arith.constant 0 : index
    %c0_31 = arith.constant 0 : index
    %51 = vector.load %arg17[%c0_30, %c0_31] : memref<576x384xbf16, #tpu.memory_space<vmem>>, vector<32x384xbf16>
    tpu.vector_store %arg17[%c0_30, %c0_31], %50 {strides = array<i32>} : memref<576x384xbf16, #tpu.memory_space<vmem>>, vector<32x384xbf16>,
    %c18_i32_32 = arith.constant 18 : i32
    %52 = tpu.dynamic_rotate %48 by %c18_i32_32 dim 1 : vector<32x384xf32>, i32 -> vector<32x384xf32>
    %53 = arith.truncf %52 : vector<32x384xf32> to vector<32x384xbf16>
    %c32 = arith.constant 32 : index
    %c0_33 = arith.constant 0 : index
    %54 = vector.load %arg17[%c32, %c0_33] : memref<576x384xbf16, #tpu.memory_space<vmem>>, vector<32x384xbf16>
    tpu.vector_store %arg17[%c32, %c0_33], %53 {strides = array<i32>} : memref<576x384xbf16, #tpu.memory_space<vmem>>, vector<32x384xbf16>,
    %c17_i32_34 = arith.constant 17 : i32
    %55 = tpu.dynamic_rotate %48 by %c17_i32_34 dim 1 : vector<32x384xf32>, i32 -> vector<32x384xf32>
    %56 = arith.truncf %55 : vector<32x384xf32> to vector<32x384xbf16>
    %c64_35 = arith.constant 64 : index
    %c0_36 = arith.constant 0 : index
    %57 = vector.load %arg17[%c64_35, %c0_36] : memref<576x384xbf16, #tpu.memory_space<vmem>>, vector<32x384xbf16>
    tpu.vector_store %arg17[%c64_35, %c0_36], %56 {strides = array<i32>} : memref<576x384xbf16, #tpu.memory_space<vmem>>, vector<32x384xbf16>,
    %c1_i32_37 = arith.constant 1 : i32
    %58 = tpu.dynamic_rotate %48 by %c1_i32_37 dim 1 : vector<32x384xf32>, i32 -> vector<32x384xf32>
    %59 = arith.truncf %58 : vector<32x384xf32> to vector<32x384xbf16>
    %c96 = arith.constant 96 : index
    %c0_38 = arith.constant 0 : index
    %60 = vector.load %arg17[%c96, %c0_38] : memref<576x384xbf16, #tpu.memory_space<vmem>>, vector<32x384xbf16>
    tpu.vector_store %arg17[%c96, %c0_38], %59 {strides = array<i32>} : memref<576x384xbf16, #tpu.memory_space<vmem>>, vector<32x384xbf16>,
    %61 = arith.truncf %48 : vector<32x384xf32> to vector<32x384xbf16>
    %c128_39 = arith.constant 128 : index
    %c0_40 = arith.constant 0 : index
    %62 = vector.load %arg17[%c128_39, %c0_40] : memref<576x384xbf16, #tpu.memory_space<vmem>>, vector<32x384xbf16>
    tpu.vector_store %arg17[%c128_39, %c0_40], %61 {strides = array<i32>} : memref<576x384xbf16, #tpu.memory_space<vmem>>, vector<32x384xbf16>,
    %c383_i32_41 = arith.constant 383 : i32
    %63 = tpu.dynamic_rotate %48 by %c383_i32_41 dim 1 : vector<32x384xf32>, i32 -> vector<32x384xf32>
    %64 = arith.truncf %63 : vector<32x384xf32> to vector<32x384xbf16>
    %c160 = arith.constant 160 : index
    %c0_42 = arith.constant 0 : index
    %65 = vector.load %arg17[%c160, %c0_42] : memref<576x384xbf16, #tpu.memory_space<vmem>>, vector<32x384xbf16>
    tpu.vector_store %arg17[%c160, %c0_42], %64 {strides = array<i32>} : memref<576x384xbf16, #tpu.memory_space<vmem>>, vector<32x384xbf16>,
    %c367_i32_43 = arith.constant 367 : i32
    %66 = tpu.dynamic_rotate %48 by %c367_i32_43 dim 1 : vector<32x384xf32>, i32 -> vector<32x384xf32>
    %67 = arith.truncf %66 : vector<32x384xf32> to vector<32x384xbf16>
    %c192_44 = arith.constant 192 : index
    %c0_45 = arith.constant 0 : index
    %68 = vector.load %arg17[%c192_44, %c0_45] : memref<576x384xbf16, #tpu.memory_space<vmem>>, vector<32x384xbf16>
    tpu.vector_store %arg17[%c192_44, %c0_45], %67 {strides = array<i32>} : memref<576x384xbf16, #tpu.memory_space<vmem>>, vector<32x384xbf16>,
    %c366_i32_46 = arith.constant 366 : i32
    %69 = tpu.dynamic_rotate %48 by %c366_i32_46 dim 1 : vector<32x384xf32>, i32 -> vector<32x384xf32>
    %70 = arith.truncf %69 : vector<32x384xf32> to vector<32x384xbf16>
    %c224 = arith.constant 224 : index
    %c0_47 = arith.constant 0 : index
    %71 = vector.load %arg17[%c224, %c0_47] : memref<576x384xbf16, #tpu.memory_space<vmem>>, vector<32x384xbf16>
    tpu.vector_store %arg17[%c224, %c0_47], %70 {strides = array<i32>} : memref<576x384xbf16, #tpu.memory_space<vmem>>, vector<32x384xbf16>,
    %c365_i32_48 = arith.constant 365 : i32
    %72 = tpu.dynamic_rotate %48 by %c365_i32_48 dim 1 : vector<32x384xf32>, i32 -> vector<32x384xf32>
    %73 = arith.truncf %72 : vector<32x384xf32> to vector<32x384xbf16>
    %c256_49 = arith.constant 256 : index
    %c0_50 = arith.constant 0 : index
    %74 = vector.load %arg17[%c256_49, %c0_50] : memref<576x384xbf16, #tpu.memory_space<vmem>>, vector<32x384xbf16>
    tpu.vector_store %arg17[%c256_49, %c0_50], %73 {strides = array<i32>} : memref<576x384xbf16, #tpu.memory_space<vmem>>, vector<32x384xbf16>,
    %c0_51 = arith.constant 0 : index
    %c0_52 = arith.constant 0 : index
    %75 = vector.load %arg5[%c0_51, %c0_52] : memref<64x288xbf16, #tpu.memory_space<vmem>>, vector<64x288xbf16>
    %c0_53 = arith.constant 0 : index
    %c0_54 = arith.constant 0 : index
    %76 = vector.load %arg17[%c0_53, %c0_54] : memref<576x384xbf16, #tpu.memory_space<vmem>>, vector<288x384xbf16>
    %cst_55 = arith.constant dense<0.000000e+00> : vector<64x384xf32>
    %77 = tpu.matmul %75, %76, %cst_55 {dimension_numbers = #tpu.dot_dimension_numbers<[1], [0], [0], [1], [0, 0, 1, 1], [], []>} : vector<64x288xbf16>, vector<288x384xbf16>, vector<64x384xf32> -> vector<64x384xf32>
    %c0_56 = arith.constant 0 : index
    %c0_57 = arith.constant 0 : index
    %78 = vector.load %arg6[%c0_56, %c0_57] : memref<64x1xf32, #tpu.memory_space<vmem>>, vector<64x1xf32>
    %79 = vector.broadcast %78 : vector<64x1xf32> to vector<64x384xf32>
    %80 = arith.addf %77, %79 : vector<64x384xf32>
    %81 = vector.extract_strided_slice %80 {offsets = [0, 0], sizes = [32, 384], strides = [1, 1]} : vector<64x384xf32> to vector<32x384xf32>
    %82 = vector.extract_strided_slice %80 {offsets = [32, 0], sizes = [32, 384], strides = [1, 1]} : vector<64x384xf32> to vector<32x384xf32>
    %83 = arith.negf %82 : vector<32x384xf32>
    %84 = math.exp %83 : vector<32x384xf32>
    %cst_58 = arith.constant 1.000000e+00 : f32
    %85 = vector.broadcast %cst_58 : f32 to vector<32x384xf32>
    %86 = arith.addf %85, %84 : vector<32x384xf32>
    %87 = arith.divf %85, %86 : vector<32x384xf32>
    %88 = arith.mulf %81, %87 : vector<32x384xf32>
    %89 = vector.broadcast %0 : vector<1x384xf32> to vector<32x384xf32>
    %90 = arith.mulf %88, %89 : vector<32x384xf32>
    %c32_59 = arith.constant 32 : index
    %c0_60 = arith.constant 0 : index
    %91 = vector.load %arg16[%c32_59, %c0_60] : memref<64x384xf32, #tpu.memory_space<vmem>>, vector<32x384xf32>
    tpu.vector_store %arg16[%c32_59, %c0_60], %90 {strides = array<i32>} : memref<64x384xf32, #tpu.memory_space<vmem>>, vector<32x384xf32>,
    %c32_61 = arith.constant 32 : index
    %c0_62 = arith.constant 0 : index
    %92 = vector.load %arg16[%c32_61, %c0_62] : memref<64x384xf32, #tpu.memory_space<vmem>>, vector<32x384xf32>
    %c19_i32_63 = arith.constant 19 : i32
    %93 = tpu.dynamic_rotate %92 by %c19_i32_63 dim 1 : vector<32x384xf32>, i32 -> vector<32x384xf32>
    %94 = arith.truncf %93 : vector<32x384xf32> to vector<32x384xbf16>
    %c0_64 = arith.constant 0 : index
    %c0_65 = arith.constant 0 : index
    %95 = vector.load %arg17[%c0_64, %c0_65] : memref<576x384xbf16, #tpu.memory_space<vmem>>, vector<32x384xbf16>
    tpu.vector_store %arg17[%c0_64, %c0_65], %94 {strides = array<i32>} : memref<576x384xbf16, #tpu.memory_space<vmem>>, vector<32x384xbf16>,
    %c18_i32_66 = arith.constant 18 : i32
    %96 = tpu.dynamic_rotate %92 by %c18_i32_66 dim 1 : vector<32x384xf32>, i32 -> vector<32x384xf32>
    %97 = arith.truncf %96 : vector<32x384xf32> to vector<32x384xbf16>
    %c32_67 = arith.constant 32 : index
    %c0_68 = arith.constant 0 : index
    %98 = vector.load %arg17[%c32_67, %c0_68] : memref<576x384xbf16, #tpu.memory_space<vmem>>, vector<32x384xbf16>
    tpu.vector_store %arg17[%c32_67, %c0_68], %97 {strides = array<i32>} : memref<576x384xbf16, #tpu.memory_space<vmem>>, vector<32x384xbf16>,
    %c17_i32_69 = arith.constant 17 : i32
    %99 = tpu.dynamic_rotate %92 by %c17_i32_69 dim 1 : vector<32x384xf32>, i32 -> vector<32x384xf32>
    %100 = arith.truncf %99 : vector<32x384xf32> to vector<32x384xbf16>
    %c64_70 = arith.constant 64 : index
    %c0_71 = arith.constant 0 : index
    %101 = vector.load %arg17[%c64_70, %c0_71] : memref<576x384xbf16, #tpu.memory_space<vmem>>, vector<32x384xbf16>
    tpu.vector_store %arg17[%c64_70, %c0_71], %100 {strides = array<i32>} : memref<576x384xbf16, #tpu.memory_space<vmem>>, vector<32x384xbf16>,
    %c1_i32_72 = arith.constant 1 : i32
    %102 = tpu.dynamic_rotate %92 by %c1_i32_72 dim 1 : vector<32x384xf32>, i32 -> vector<32x384xf32>
    %103 = arith.truncf %102 : vector<32x384xf32> to vector<32x384xbf16>
    %c96_73 = arith.constant 96 : index
    %c0_74 = arith.constant 0 : index
    %104 = vector.load %arg17[%c96_73, %c0_74] : memref<576x384xbf16, #tpu.memory_space<vmem>>, vector<32x384xbf16>
    tpu.vector_store %arg17[%c96_73, %c0_74], %103 {strides = array<i32>} : memref<576x384xbf16, #tpu.memory_space<vmem>>, vector<32x384xbf16>,
    %105 = arith.truncf %92 : vector<32x384xf32> to vector<32x384xbf16>
    %c128_75 = arith.constant 128 : index
    %c0_76 = arith.constant 0 : index
    %106 = vector.load %arg17[%c128_75, %c0_76] : memref<576x384xbf16, #tpu.memory_space<vmem>>, vector<32x384xbf16>
    tpu.vector_store %arg17[%c128_75, %c0_76], %105 {strides = array<i32>} : memref<576x384xbf16, #tpu.memory_space<vmem>>, vector<32x384xbf16>,
    %c383_i32_77 = arith.constant 383 : i32
    %107 = tpu.dynamic_rotate %92 by %c383_i32_77 dim 1 : vector<32x384xf32>, i32 -> vector<32x384xf32>
    %108 = arith.truncf %107 : vector<32x384xf32> to vector<32x384xbf16>
    %c160_78 = arith.constant 160 : index
    %c0_79 = arith.constant 0 : index
    %109 = vector.load %arg17[%c160_78, %c0_79] : memref<576x384xbf16, #tpu.memory_space<vmem>>, vector<32x384xbf16>
    tpu.vector_store %arg17[%c160_78, %c0_79], %108 {strides = array<i32>} : memref<576x384xbf16, #tpu.memory_space<vmem>>, vector<32x384xbf16>,
    %c367_i32_80 = arith.constant 367 : i32
    %110 = tpu.dynamic_rotate %92 by %c367_i32_80 dim 1 : vector<32x384xf32>, i32 -> vector<32x384xf32>
    %111 = arith.truncf %110 : vector<32x384xf32> to vector<32x384xbf16>
    %c192_81 = arith.constant 192 : index
    %c0_82 = arith.constant 0 : index
    %112 = vector.load %arg17[%c192_81, %c0_82] : memref<576x384xbf16, #tpu.memory_space<vmem>>, vector<32x384xbf16>
    tpu.vector_store %arg17[%c192_81, %c0_82], %111 {strides = array<i32>} : memref<576x384xbf16, #tpu.memory_space<vmem>>, vector<32x384xbf16>,
    %c366_i32_83 = arith.constant 366 : i32
    %113 = tpu.dynamic_rotate %92 by %c366_i32_83 dim 1 : vector<32x384xf32>, i32 -> vector<32x384xf32>
    %114 = arith.truncf %113 : vector<32x384xf32> to vector<32x384xbf16>
    %c224_84 = arith.constant 224 : index
    %c0_85 = arith.constant 0 : index
    %115 = vector.load %arg17[%c224_84, %c0_85] : memref<576x384xbf16, #tpu.memory_space<vmem>>, vector<32x384xbf16>
    tpu.vector_store %arg17[%c224_84, %c0_85], %114 {strides = array<i32>} : memref<576x384xbf16, #tpu.memory_space<vmem>>, vector<32x384xbf16>,
    %c365_i32_86 = arith.constant 365 : i32
    %116 = tpu.dynamic_rotate %92 by %c365_i32_86 dim 1 : vector<32x384xf32>, i32 -> vector<32x384xf32>
    %117 = arith.truncf %116 : vector<32x384xf32> to vector<32x384xbf16>
    %c256_87 = arith.constant 256 : index
    %c0_88 = arith.constant 0 : index
    %118 = vector.load %arg17[%c256_87, %c0_88] : memref<576x384xbf16, #tpu.memory_space<vmem>>, vector<32x384xbf16>
    tpu.vector_store %arg17[%c256_87, %c0_88], %117 {strides = array<i32>} : memref<576x384xbf16, #tpu.memory_space<vmem>>, vector<32x384xbf16>,
    %c0_89 = arith.constant 0 : index
    %c0_90 = arith.constant 0 : index
    %119 = vector.load %arg7[%c0_89, %c0_90] : memref<32x288xbf16, #tpu.memory_space<vmem>>, vector<32x288xbf16>
    %c0_91 = arith.constant 0 : index
    %c0_92 = arith.constant 0 : index
    %120 = vector.load %arg17[%c0_91, %c0_92] : memref<576x384xbf16, #tpu.memory_space<vmem>>, vector<288x384xbf16>
    %cst_93 = arith.constant dense<0.000000e+00> : vector<32x384xf32>
    %121 = tpu.matmul %119, %120, %cst_93 {dimension_numbers = #tpu.dot_dimension_numbers<[1], [0], [0], [1], [0, 0, 1, 1], [], []>} : vector<32x288xbf16>, vector<288x384xbf16>, vector<32x384xf32> -> vector<32x384xf32>
    %c0_94 = arith.constant 0 : index
    %c0_95 = arith.constant 0 : index
    %122 = vector.load %arg8[%c0_94, %c0_95] : memref<32x1xf32, #tpu.memory_space<vmem>>, vector<32x1xf32>
    %123 = vector.broadcast %122 : vector<32x1xf32> to vector<32x384xf32>
    %124 = arith.addf %121, %123 : vector<32x384xf32>
    %125 = vector.broadcast %0 : vector<1x384xf32> to vector<32x384xf32>
    %126 = arith.mulf %124, %125 : vector<32x384xf32>
    %c0_96 = arith.constant 0 : index
    %c0_97 = arith.constant 0 : index
    %127 = vector.load %arg16[%c0_96, %c0_97] : memref<64x384xf32, #tpu.memory_space<vmem>>, vector<32x384xf32>
    %128 = arith.addf %126, %127 : vector<32x384xf32>
    %c0_98 = arith.constant 0 : index
    %c0_99 = arith.constant 0 : index
    %129 = vector.load %arg16[%c0_98, %c0_99] : memref<64x384xf32, #tpu.memory_space<vmem>>, vector<32x384xf32>
    tpu.vector_store %arg16[%c0_98, %c0_99], %128 {strides = array<i32>} : memref<64x384xf32, #tpu.memory_space<vmem>>, vector<32x384xf32>,
    %c0_100 = arith.constant 0 : index
    %c0_101 = arith.constant 0 : index
    %130 = vector.load %arg16[%c0_100, %c0_101] : memref<64x384xf32, #tpu.memory_space<vmem>>, vector<32x384xf32>
    %c19_i32_102 = arith.constant 19 : i32
    %131 = tpu.dynamic_rotate %130 by %c19_i32_102 dim 1 : vector<32x384xf32>, i32 -> vector<32x384xf32>
    %132 = arith.truncf %131 : vector<32x384xf32> to vector<32x384xbf16>
    %c0_103 = arith.constant 0 : index
    %c0_104 = arith.constant 0 : index
    %133 = vector.load %arg17[%c0_103, %c0_104] : memref<576x384xbf16, #tpu.memory_space<vmem>>, vector<32x384xbf16>
    tpu.vector_store %arg17[%c0_103, %c0_104], %132 {strides = array<i32>} : memref<576x384xbf16, #tpu.memory_space<vmem>>, vector<32x384xbf16>,
    %c18_i32_105 = arith.constant 18 : i32
    %134 = tpu.dynamic_rotate %130 by %c18_i32_105 dim 1 : vector<32x384xf32>, i32 -> vector<32x384xf32>
    %135 = arith.truncf %134 : vector<32x384xf32> to vector<32x384xbf16>
    %c32_106 = arith.constant 32 : index
    %c0_107 = arith.constant 0 : index
    %136 = vector.load %arg17[%c32_106, %c0_107] : memref<576x384xbf16, #tpu.memory_space<vmem>>, vector<32x384xbf16>
    tpu.vector_store %arg17[%c32_106, %c0_107], %135 {strides = array<i32>} : memref<576x384xbf16, #tpu.memory_space<vmem>>, vector<32x384xbf16>,
    %c17_i32_108 = arith.constant 17 : i32
    %137 = tpu.dynamic_rotate %130 by %c17_i32_108 dim 1 : vector<32x384xf32>, i32 -> vector<32x384xf32>
    %138 = arith.truncf %137 : vector<32x384xf32> to vector<32x384xbf16>
    %c64_109 = arith.constant 64 : index
    %c0_110 = arith.constant 0 : index
    %139 = vector.load %arg17[%c64_109, %c0_110] : memref<576x384xbf16, #tpu.memory_space<vmem>>, vector<32x384xbf16>
    tpu.vector_store %arg17[%c64_109, %c0_110], %138 {strides = array<i32>} : memref<576x384xbf16, #tpu.memory_space<vmem>>, vector<32x384xbf16>,
    %c1_i32_111 = arith.constant 1 : i32
    %140 = tpu.dynamic_rotate %130 by %c1_i32_111 dim 1 : vector<32x384xf32>, i32 -> vector<32x384xf32>
    %141 = arith.truncf %140 : vector<32x384xf32> to vector<32x384xbf16>
    %c96_112 = arith.constant 96 : index
    %c0_113 = arith.constant 0 : index
    %142 = vector.load %arg17[%c96_112, %c0_113] : memref<576x384xbf16, #tpu.memory_space<vmem>>, vector<32x384xbf16>
    tpu.vector_store %arg17[%c96_112, %c0_113], %141 {strides = array<i32>} : memref<576x384xbf16, #tpu.memory_space<vmem>>, vector<32x384xbf16>,
    %143 = arith.truncf %130 : vector<32x384xf32> to vector<32x384xbf16>
    %c128_114 = arith.constant 128 : index
    %c0_115 = arith.constant 0 : index
    %144 = vector.load %arg17[%c128_114, %c0_115] : memref<576x384xbf16, #tpu.memory_space<vmem>>, vector<32x384xbf16>
    tpu.vector_store %arg17[%c128_114, %c0_115], %143 {strides = array<i32>} : memref<576x384xbf16, #tpu.memory_space<vmem>>, vector<32x384xbf16>,
    %c383_i32_116 = arith.constant 383 : i32
    %145 = tpu.dynamic_rotate %130 by %c383_i32_116 dim 1 : vector<32x384xf32>, i32 -> vector<32x384xf32>
    %146 = arith.truncf %145 : vector<32x384xf32> to vector<32x384xbf16>
    %c160_117 = arith.constant 160 : index
    %c0_118 = arith.constant 0 : index
    %147 = vector.load %arg17[%c160_117, %c0_118] : memref<576x384xbf16, #tpu.memory_space<vmem>>, vector<32x384xbf16>
    tpu.vector_store %arg17[%c160_117, %c0_118], %146 {strides = array<i32>} : memref<576x384xbf16, #tpu.memory_space<vmem>>, vector<32x384xbf16>,
    %c367_i32_119 = arith.constant 367 : i32
    %148 = tpu.dynamic_rotate %130 by %c367_i32_119 dim 1 : vector<32x384xf32>, i32 -> vector<32x384xf32>
    %149 = arith.truncf %148 : vector<32x384xf32> to vector<32x384xbf16>
    %c192_120 = arith.constant 192 : index
    %c0_121 = arith.constant 0 : index
    %150 = vector.load %arg17[%c192_120, %c0_121] : memref<576x384xbf16, #tpu.memory_space<vmem>>, vector<32x384xbf16>
    tpu.vector_store %arg17[%c192_120, %c0_121], %149 {strides = array<i32>} : memref<576x384xbf16, #tpu.memory_space<vmem>>, vector<32x384xbf16>,
    %c366_i32_122 = arith.constant 366 : i32
    %151 = tpu.dynamic_rotate %130 by %c366_i32_122 dim 1 : vector<32x384xf32>, i32 -> vector<32x384xf32>
    %152 = arith.truncf %151 : vector<32x384xf32> to vector<32x384xbf16>
    %c224_123 = arith.constant 224 : index
    %c0_124 = arith.constant 0 : index
    %153 = vector.load %arg17[%c224_123, %c0_124] : memref<576x384xbf16, #tpu.memory_space<vmem>>, vector<32x384xbf16>
    tpu.vector_store %arg17[%c224_123, %c0_124], %152 {strides = array<i32>} : memref<576x384xbf16, #tpu.memory_space<vmem>>, vector<32x384xbf16>,
    %c365_i32_125 = arith.constant 365 : i32
    %154 = tpu.dynamic_rotate %130 by %c365_i32_125 dim 1 : vector<32x384xf32>, i32 -> vector<32x384xf32>
    %155 = arith.truncf %154 : vector<32x384xf32> to vector<32x384xbf16>
    %c256_126 = arith.constant 256 : index
    %c0_127 = arith.constant 0 : index
    %156 = vector.load %arg17[%c256_126, %c0_127] : memref<576x384xbf16, #tpu.memory_space<vmem>>, vector<32x384xbf16>
    tpu.vector_store %arg17[%c256_126, %c0_127], %155 {strides = array<i32>} : memref<576x384xbf16, #tpu.memory_space<vmem>>, vector<32x384xbf16>,
    %c0_128 = arith.constant 0 : index
    %c0_129 = arith.constant 0 : index
    %157 = vector.load %arg9[%c0_128, %c0_129] : memref<64x288xbf16, #tpu.memory_space<vmem>>, vector<64x288xbf16>
    %c0_130 = arith.constant 0 : index
    %c0_131 = arith.constant 0 : index
    %158 = vector.load %arg17[%c0_130, %c0_131] : memref<576x384xbf16, #tpu.memory_space<vmem>>, vector<288x384xbf16>
    %cst_132 = arith.constant dense<0.000000e+00> : vector<64x384xf32>
    %159 = tpu.matmul %157, %158, %cst_132 {dimension_numbers = #tpu.dot_dimension_numbers<[1], [0], [0], [1], [0, 0, 1, 1], [], []>} : vector<64x288xbf16>, vector<288x384xbf16>, vector<64x384xf32> -> vector<64x384xf32>
    %c0_133 = arith.constant 0 : index
    %c0_134 = arith.constant 0 : index
    %160 = vector.load %arg10[%c0_133, %c0_134] : memref<64x1xf32, #tpu.memory_space<vmem>>, vector<64x1xf32>
    %161 = vector.broadcast %160 : vector<64x1xf32> to vector<64x384xf32>
    %162 = arith.addf %159, %161 : vector<64x384xf32>
    %163 = vector.extract_strided_slice %162 {offsets = [0, 0], sizes = [32, 384], strides = [1, 1]} : vector<64x384xf32> to vector<32x384xf32>
    %164 = vector.extract_strided_slice %162 {offsets = [32, 0], sizes = [32, 384], strides = [1, 1]} : vector<64x384xf32> to vector<32x384xf32>
    %165 = arith.negf %164 : vector<32x384xf32>
    %166 = math.exp %165 : vector<32x384xf32>
    %cst_135 = arith.constant 1.000000e+00 : f32
    %167 = vector.broadcast %cst_135 : f32 to vector<32x384xf32>
    %168 = arith.addf %167, %166 : vector<32x384xf32>
    %169 = arith.divf %167, %168 : vector<32x384xf32>
    %170 = arith.mulf %163, %169 : vector<32x384xf32>
    %171 = vector.broadcast %0 : vector<1x384xf32> to vector<32x384xf32>
    %172 = arith.mulf %170, %171 : vector<32x384xf32>
    %c32_136 = arith.constant 32 : index
    %c0_137 = arith.constant 0 : index
    %173 = vector.load %arg16[%c32_136, %c0_137] : memref<64x384xf32, #tpu.memory_space<vmem>>, vector<32x384xf32>
    tpu.vector_store %arg16[%c32_136, %c0_137], %172 {strides = array<i32>} : memref<64x384xf32, #tpu.memory_space<vmem>>, vector<32x384xf32>,
    %c32_138 = arith.constant 32 : index
    %c0_139 = arith.constant 0 : index
    %174 = vector.load %arg16[%c32_138, %c0_139] : memref<64x384xf32, #tpu.memory_space<vmem>>, vector<32x384xf32>
    %c19_i32_140 = arith.constant 19 : i32
    %175 = tpu.dynamic_rotate %174 by %c19_i32_140 dim 1 : vector<32x384xf32>, i32 -> vector<32x384xf32>
    %176 = arith.truncf %175 : vector<32x384xf32> to vector<32x384xbf16>
    %c0_141 = arith.constant 0 : index
    %c0_142 = arith.constant 0 : index
    %177 = vector.load %arg17[%c0_141, %c0_142] : memref<576x384xbf16, #tpu.memory_space<vmem>>, vector<32x384xbf16>
    tpu.vector_store %arg17[%c0_141, %c0_142], %176 {strides = array<i32>} : memref<576x384xbf16, #tpu.memory_space<vmem>>, vector<32x384xbf16>,
    %c18_i32_143 = arith.constant 18 : i32
    %178 = tpu.dynamic_rotate %174 by %c18_i32_143 dim 1 : vector<32x384xf32>, i32 -> vector<32x384xf32>
    %179 = arith.truncf %178 : vector<32x384xf32> to vector<32x384xbf16>
    %c32_144 = arith.constant 32 : index
    %c0_145 = arith.constant 0 : index
    %180 = vector.load %arg17[%c32_144, %c0_145] : memref<576x384xbf16, #tpu.memory_space<vmem>>, vector<32x384xbf16>
    tpu.vector_store %arg17[%c32_144, %c0_145], %179 {strides = array<i32>} : memref<576x384xbf16, #tpu.memory_space<vmem>>, vector<32x384xbf16>,
    %c17_i32_146 = arith.constant 17 : i32
    %181 = tpu.dynamic_rotate %174 by %c17_i32_146 dim 1 : vector<32x384xf32>, i32 -> vector<32x384xf32>
    %182 = arith.truncf %181 : vector<32x384xf32> to vector<32x384xbf16>
    %c64_147 = arith.constant 64 : index
    %c0_148 = arith.constant 0 : index
    %183 = vector.load %arg17[%c64_147, %c0_148] : memref<576x384xbf16, #tpu.memory_space<vmem>>, vector<32x384xbf16>
    tpu.vector_store %arg17[%c64_147, %c0_148], %182 {strides = array<i32>} : memref<576x384xbf16, #tpu.memory_space<vmem>>, vector<32x384xbf16>,
    %c1_i32_149 = arith.constant 1 : i32
    %184 = tpu.dynamic_rotate %174 by %c1_i32_149 dim 1 : vector<32x384xf32>, i32 -> vector<32x384xf32>
    %185 = arith.truncf %184 : vector<32x384xf32> to vector<32x384xbf16>
    %c96_150 = arith.constant 96 : index
    %c0_151 = arith.constant 0 : index
    %186 = vector.load %arg17[%c96_150, %c0_151] : memref<576x384xbf16, #tpu.memory_space<vmem>>, vector<32x384xbf16>
    tpu.vector_store %arg17[%c96_150, %c0_151], %185 {strides = array<i32>} : memref<576x384xbf16, #tpu.memory_space<vmem>>, vector<32x384xbf16>,
    %187 = arith.truncf %174 : vector<32x384xf32> to vector<32x384xbf16>
    %c128_152 = arith.constant 128 : index
    %c0_153 = arith.constant 0 : index
    %188 = vector.load %arg17[%c128_152, %c0_153] : memref<576x384xbf16, #tpu.memory_space<vmem>>, vector<32x384xbf16>
    tpu.vector_store %arg17[%c128_152, %c0_153], %187 {strides = array<i32>} : memref<576x384xbf16, #tpu.memory_space<vmem>>, vector<32x384xbf16>,
    %c383_i32_154 = arith.constant 383 : i32
    %189 = tpu.dynamic_rotate %174 by %c383_i32_154 dim 1 : vector<32x384xf32>, i32 -> vector<32x384xf32>
    %190 = arith.truncf %189 : vector<32x384xf32> to vector<32x384xbf16>
    %c160_155 = arith.constant 160 : index
    %c0_156 = arith.constant 0 : index
    %191 = vector.load %arg17[%c160_155, %c0_156] : memref<576x384xbf16, #tpu.memory_space<vmem>>, vector<32x384xbf16>
    tpu.vector_store %arg17[%c160_155, %c0_156], %190 {strides = array<i32>} : memref<576x384xbf16, #tpu.memory_space<vmem>>, vector<32x384xbf16>,
    %c367_i32_157 = arith.constant 367 : i32
    %192 = tpu.dynamic_rotate %174 by %c367_i32_157 dim 1 : vector<32x384xf32>, i32 -> vector<32x384xf32>
    %193 = arith.truncf %192 : vector<32x384xf32> to vector<32x384xbf16>
    %c192_158 = arith.constant 192 : index
    %c0_159 = arith.constant 0 : index
    %194 = vector.load %arg17[%c192_158, %c0_159] : memref<576x384xbf16, #tpu.memory_space<vmem>>, vector<32x384xbf16>
    tpu.vector_store %arg17[%c192_158, %c0_159], %193 {strides = array<i32>} : memref<576x384xbf16, #tpu.memory_space<vmem>>, vector<32x384xbf16>,
    %c366_i32_160 = arith.constant 366 : i32
    %195 = tpu.dynamic_rotate %174 by %c366_i32_160 dim 1 : vector<32x384xf32>, i32 -> vector<32x384xf32>
    %196 = arith.truncf %195 : vector<32x384xf32> to vector<32x384xbf16>
    %c224_161 = arith.constant 224 : index
    %c0_162 = arith.constant 0 : index
    %197 = vector.load %arg17[%c224_161, %c0_162] : memref<576x384xbf16, #tpu.memory_space<vmem>>, vector<32x384xbf16>
    tpu.vector_store %arg17[%c224_161, %c0_162], %196 {strides = array<i32>} : memref<576x384xbf16, #tpu.memory_space<vmem>>, vector<32x384xbf16>,
    %c365_i32_163 = arith.constant 365 : i32
    %198 = tpu.dynamic_rotate %174 by %c365_i32_163 dim 1 : vector<32x384xf32>, i32 -> vector<32x384xf32>
    %199 = arith.truncf %198 : vector<32x384xf32> to vector<32x384xbf16>
    %c256_164 = arith.constant 256 : index
    %c0_165 = arith.constant 0 : index
    %200 = vector.load %arg17[%c256_164, %c0_165] : memref<576x384xbf16, #tpu.memory_space<vmem>>, vector<32x384xbf16>
    tpu.vector_store %arg17[%c256_164, %c0_165], %199 {strides = array<i32>} : memref<576x384xbf16, #tpu.memory_space<vmem>>, vector<32x384xbf16>,
    %c0_166 = arith.constant 0 : index
    %c0_167 = arith.constant 0 : index
    %201 = vector.load %arg11[%c0_166, %c0_167] : memref<32x288xbf16, #tpu.memory_space<vmem>>, vector<32x288xbf16>
    %c0_168 = arith.constant 0 : index
    %c0_169 = arith.constant 0 : index
    %202 = vector.load %arg17[%c0_168, %c0_169] : memref<576x384xbf16, #tpu.memory_space<vmem>>, vector<288x384xbf16>
    %cst_170 = arith.constant dense<0.000000e+00> : vector<32x384xf32>
    %203 = tpu.matmul %201, %202, %cst_170 {dimension_numbers = #tpu.dot_dimension_numbers<[1], [0], [0], [1], [0, 0, 1, 1], [], []>} : vector<32x288xbf16>, vector<288x384xbf16>, vector<32x384xf32> -> vector<32x384xf32>
    %c0_171 = arith.constant 0 : index
    %c0_172 = arith.constant 0 : index
    %204 = vector.load %arg12[%c0_171, %c0_172] : memref<32x1xf32, #tpu.memory_space<vmem>>, vector<32x1xf32>
    %205 = vector.broadcast %204 : vector<32x1xf32> to vector<32x384xf32>
    %206 = arith.addf %203, %205 : vector<32x384xf32>
    %207 = vector.broadcast %0 : vector<1x384xf32> to vector<32x384xf32>
    %208 = arith.mulf %206, %207 : vector<32x384xf32>
    %c0_173 = arith.constant 0 : index
    %c0_174 = arith.constant 0 : index
    %209 = vector.load %arg16[%c0_173, %c0_174] : memref<64x384xf32, #tpu.memory_space<vmem>>, vector<32x384xf32>
    %210 = arith.addf %208, %209 : vector<32x384xf32>
    %c0_175 = arith.constant 0 : index
    %c0_176 = arith.constant 0 : index
    %211 = vector.load %arg16[%c0_175, %c0_176] : memref<64x384xf32, #tpu.memory_space<vmem>>, vector<32x384xf32>
    tpu.vector_store %arg16[%c0_175, %c0_176], %210 {strides = array<i32>} : memref<64x384xf32, #tpu.memory_space<vmem>>, vector<32x384xf32>,
    %c0_177 = arith.constant 0 : index
    %c0_178 = arith.constant 0 : index
    %212 = vector.load %arg16[%c0_177, %c0_178] : memref<64x384xf32, #tpu.memory_space<vmem>>, vector<32x384xf32>
    %c19_i32_179 = arith.constant 19 : i32
    %213 = tpu.dynamic_rotate %212 by %c19_i32_179 dim 1 : vector<32x384xf32>, i32 -> vector<32x384xf32>
    %214 = arith.truncf %213 : vector<32x384xf32> to vector<32x384xbf16>
    %c0_180 = arith.constant 0 : index
    %c0_181 = arith.constant 0 : index
    %215 = vector.load %arg17[%c0_180, %c0_181] : memref<576x384xbf16, #tpu.memory_space<vmem>>, vector<32x384xbf16>
    tpu.vector_store %arg17[%c0_180, %c0_181], %214 {strides = array<i32>} : memref<576x384xbf16, #tpu.memory_space<vmem>>, vector<32x384xbf16>,
    %c18_i32_182 = arith.constant 18 : i32
    %216 = tpu.dynamic_rotate %212 by %c18_i32_182 dim 1 : vector<32x384xf32>, i32 -> vector<32x384xf32>
    %217 = arith.truncf %216 : vector<32x384xf32> to vector<32x384xbf16>
    %c32_183 = arith.constant 32 : index
    %c0_184 = arith.constant 0 : index
    %218 = vector.load %arg17[%c32_183, %c0_184] : memref<576x384xbf16, #tpu.memory_space<vmem>>, vector<32x384xbf16>
    tpu.vector_store %arg17[%c32_183, %c0_184], %217 {strides = array<i32>} : memref<576x384xbf16, #tpu.memory_space<vmem>>, vector<32x384xbf16>,
    %c17_i32_185 = arith.constant 17 : i32
    %219 = tpu.dynamic_rotate %212 by %c17_i32_185 dim 1 : vector<32x384xf32>, i32 -> vector<32x384xf32>
    %220 = arith.truncf %219 : vector<32x384xf32> to vector<32x384xbf16>
    %c64_186 = arith.constant 64 : index
    %c0_187 = arith.constant 0 : index
    %221 = vector.load %arg17[%c64_186, %c0_187] : memref<576x384xbf16, #tpu.memory_space<vmem>>, vector<32x384xbf16>
    tpu.vector_store %arg17[%c64_186, %c0_187], %220 {strides = array<i32>} : memref<576x384xbf16, #tpu.memory_space<vmem>>, vector<32x384xbf16>,
    %c1_i32_188 = arith.constant 1 : i32
    %222 = tpu.dynamic_rotate %212 by %c1_i32_188 dim 1 : vector<32x384xf32>, i32 -> vector<32x384xf32>
    %223 = arith.truncf %222 : vector<32x384xf32> to vector<32x384xbf16>
    %c96_189 = arith.constant 96 : index
    %c0_190 = arith.constant 0 : index
    %224 = vector.load %arg17[%c96_189, %c0_190] : memref<576x384xbf16, #tpu.memory_space<vmem>>, vector<32x384xbf16>
    tpu.vector_store %arg17[%c96_189, %c0_190], %223 {strides = array<i32>} : memref<576x384xbf16, #tpu.memory_space<vmem>>, vector<32x384xbf16>,
    %225 = arith.truncf %212 : vector<32x384xf32> to vector<32x384xbf16>
    %c128_191 = arith.constant 128 : index
    %c0_192 = arith.constant 0 : index
    %226 = vector.load %arg17[%c128_191, %c0_192] : memref<576x384xbf16, #tpu.memory_space<vmem>>, vector<32x384xbf16>
    tpu.vector_store %arg17[%c128_191, %c0_192], %225 {strides = array<i32>} : memref<576x384xbf16, #tpu.memory_space<vmem>>, vector<32x384xbf16>,
    %c383_i32_193 = arith.constant 383 : i32
    %227 = tpu.dynamic_rotate %212 by %c383_i32_193 dim 1 : vector<32x384xf32>, i32 -> vector<32x384xf32>
    %228 = arith.truncf %227 : vector<32x384xf32> to vector<32x384xbf16>
    %c160_194 = arith.constant 160 : index
    %c0_195 = arith.constant 0 : index
    %229 = vector.load %arg17[%c160_194, %c0_195] : memref<576x384xbf16, #tpu.memory_space<vmem>>, vector<32x384xbf16>
    tpu.vector_store %arg17[%c160_194, %c0_195], %228 {strides = array<i32>} : memref<576x384xbf16, #tpu.memory_space<vmem>>, vector<32x384xbf16>,
    %c367_i32_196 = arith.constant 367 : i32
    %230 = tpu.dynamic_rotate %212 by %c367_i32_196 dim 1 : vector<32x384xf32>, i32 -> vector<32x384xf32>
    %231 = arith.truncf %230 : vector<32x384xf32> to vector<32x384xbf16>
    %c192_197 = arith.constant 192 : index
    %c0_198 = arith.constant 0 : index
    %232 = vector.load %arg17[%c192_197, %c0_198] : memref<576x384xbf16, #tpu.memory_space<vmem>>, vector<32x384xbf16>
    tpu.vector_store %arg17[%c192_197, %c0_198], %231 {strides = array<i32>} : memref<576x384xbf16, #tpu.memory_space<vmem>>, vector<32x384xbf16>,
    %c366_i32_199 = arith.constant 366 : i32
    %233 = tpu.dynamic_rotate %212 by %c366_i32_199 dim 1 : vector<32x384xf32>, i32 -> vector<32x384xf32>
    %234 = arith.truncf %233 : vector<32x384xf32> to vector<32x384xbf16>
    %c224_200 = arith.constant 224 : index
    %c0_201 = arith.constant 0 : index
    %235 = vector.load %arg17[%c224_200, %c0_201] : memref<576x384xbf16, #tpu.memory_space<vmem>>, vector<32x384xbf16>
    tpu.vector_store %arg17[%c224_200, %c0_201], %234 {strides = array<i32>} : memref<576x384xbf16, #tpu.memory_space<vmem>>, vector<32x384xbf16>,
    %c365_i32_202 = arith.constant 365 : i32
    %236 = tpu.dynamic_rotate %212 by %c365_i32_202 dim 1 : vector<32x384xf32>, i32 -> vector<32x384xf32>
    %237 = arith.truncf %236 : vector<32x384xf32> to vector<32x384xbf16>
    %c256_203 = arith.constant 256 : index
    %c0_204 = arith.constant 0 : index
    %238 = vector.load %arg17[%c256_203, %c0_204] : memref<576x384xbf16, #tpu.memory_space<vmem>>, vector<32x384xbf16>
    tpu.vector_store %arg17[%c256_203, %c0_204], %237 {strides = array<i32>} : memref<576x384xbf16, #tpu.memory_space<vmem>>, vector<32x384xbf16>,
    %c0_205 = arith.constant 0 : index
    %c0_206 = arith.constant 0 : index
    %239 = vector.load %arg13[%c0_205, %c0_206] : memref<32x288xbf16, #tpu.memory_space<vmem>>, vector<32x288xbf16>
    %c0_207 = arith.constant 0 : index
    %c0_208 = arith.constant 0 : index
    %240 = vector.load %arg17[%c0_207, %c0_208] : memref<576x384xbf16, #tpu.memory_space<vmem>>, vector<288x384xbf16>
    %cst_209 = arith.constant dense<0.000000e+00> : vector<32x384xf32>
    %241 = tpu.matmul %239, %240, %cst_209 {dimension_numbers = #tpu.dot_dimension_numbers<[1], [0], [0], [1], [0, 0, 1, 1], [], []>} : vector<32x288xbf16>, vector<288x384xbf16>, vector<32x384xf32> -> vector<32x384xf32>
    %c0_210 = arith.constant 0 : index
    %c0_211 = arith.constant 0 : index
    %242 = vector.load %arg14[%c0_210, %c0_211] : memref<32x1xf32, #tpu.memory_space<vmem>>, vector<32x1xf32>
    %243 = vector.broadcast %242 : vector<32x1xf32> to vector<32x384xf32>
    %244 = arith.addf %241, %243 : vector<32x384xf32>
    %245 = vector.extract_strided_slice %244 {offsets = [0, 0], sizes = [16, 384], strides = [1, 1]} : vector<32x384xf32> to vector<16x384xf32>
    %246 = vector.extract_strided_slice %244 {offsets = [16, 0], sizes = [16, 384], strides = [1, 1]} : vector<32x384xf32> to vector<16x384xf32>
    %247 = arith.negf %246 : vector<16x384xf32>
    %248 = math.exp %247 : vector<16x384xf32>
    %cst_212 = arith.constant 1.000000e+00 : f32
    %249 = vector.broadcast %cst_212 : f32 to vector<16x384xf32>
    %250 = arith.addf %249, %248 : vector<16x384xf32>
    %251 = arith.divf %249, %250 : vector<16x384xf32>
    %252 = arith.mulf %245, %251 : vector<16x384xf32>
    %253 = vector.broadcast %0 : vector<1x384xf32> to vector<16x384xf32>
    %254 = arith.mulf %252, %253 : vector<16x384xf32>
    %c0_213 = arith.constant 0 : index
    %c0_214 = arith.constant 0 : index
    %c0_215 = arith.constant 0 : index
    %255 = vector.load %arg15[%c0_213, %c0_214, %c0_215] : memref<1x16x384xf32, #tpu.memory_space<vmem>>, vector<1x16x384xf32>
    %256 = vector.shape_cast %255 : vector<1x16x384xf32> to vector<16x384xf32>
    %257 = vector.shape_cast %254 : vector<16x384xf32> to vector<1x16x384xf32>
    tpu.vector_store %arg15[%c0_213, %c0_214, %c0_215], %257 {strides = array<i32>} : memref<1x16x384xf32, #tpu.memory_space<vmem>>, vector<1x16x384xf32>,
    return
  }
  func.func @transform_0(%arg0: i32) -> (i32, i32, i32) {
    %c0_i32 = arith.constant 0 : i32
    %c0_i32_0 = arith.constant 0 : i32
    %c0_i32_1 = arith.constant 0 : i32
    return %arg0, %c0_i32, %c0_i32_0 : i32, i32, i32
  }
  func.func @transform_1(%arg0: i32) -> (i32, i32) {
    %c0_i32 = arith.constant 0 : i32
    %c0_i32_0 = arith.constant 0 : i32
    %c0_i32_1 = arith.constant 0 : i32
    return %c0_i32, %c0_i32_0 : i32, i32
  }
  func.func @transform_2(%arg0: i32) -> (i32, i32) {
    %c0_i32 = arith.constant 0 : i32
    %c0_i32_0 = arith.constant 0 : i32
    %c0_i32_1 = arith.constant 0 : i32
    return %c0_i32, %c0_i32_0 : i32, i32
  }
  func.func @transform_3(%arg0: i32) -> (i32, i32) {
    %c0_i32 = arith.constant 0 : i32
    %c0_i32_0 = arith.constant 0 : i32
    %c0_i32_1 = arith.constant 0 : i32
    return %c0_i32, %c0_i32_0 : i32, i32
  }
  func.func @transform_4(%arg0: i32) -> (i32, i32) {
    %c0_i32 = arith.constant 0 : i32
    %c0_i32_0 = arith.constant 0 : i32
    %c0_i32_1 = arith.constant 0 : i32
    return %c0_i32, %c0_i32_0 : i32, i32
  }
  func.func @transform_5(%arg0: i32) -> (i32, i32) {
    %c0_i32 = arith.constant 0 : i32
    %c0_i32_0 = arith.constant 0 : i32
    %c0_i32_1 = arith.constant 0 : i32
    return %c0_i32, %c0_i32_0 : i32, i32
  }
  func.func @transform_6(%arg0: i32) -> (i32, i32) {
    %c0_i32 = arith.constant 0 : i32
    %c0_i32_0 = arith.constant 0 : i32
    %c0_i32_1 = arith.constant 0 : i32
    return %c0_i32, %c0_i32_0 : i32, i32
  }
  func.func @transform_7(%arg0: i32) -> (i32, i32) {
    %c0_i32 = arith.constant 0 : i32
    %c0_i32_0 = arith.constant 0 : i32
    %c0_i32_1 = arith.constant 0 : i32
    return %c0_i32, %c0_i32_0 : i32, i32
  }
  func.func @transform_8(%arg0: i32) -> (i32, i32) {
    %c0_i32 = arith.constant 0 : i32
    %c0_i32_0 = arith.constant 0 : i32
    %c0_i32_1 = arith.constant 0 : i32
    return %c0_i32, %c0_i32_0 : i32, i32
  }
  func.func @transform_9(%arg0: i32) -> (i32, i32) {
    %c0_i32 = arith.constant 0 : i32
    %c0_i32_0 = arith.constant 0 : i32
    %c0_i32_1 = arith.constant 0 : i32
    return %c0_i32, %c0_i32_0 : i32, i32
  }
  func.func @transform_10(%arg0: i32) -> (i32, i32) {
    %c0_i32 = arith.constant 0 : i32
    %c0_i32_0 = arith.constant 0 : i32
    %c0_i32_1 = arith.constant 0 : i32
    return %c0_i32, %c0_i32_0 : i32, i32
  }
  func.func @transform_11(%arg0: i32) -> (i32, i32) {
    %c0_i32 = arith.constant 0 : i32
    %c0_i32_0 = arith.constant 0 : i32
    %c0_i32_1 = arith.constant 0 : i32
    return %c0_i32, %c0_i32_0 : i32, i32
  }
  func.func @transform_12(%arg0: i32) -> (i32, i32) {
    %c0_i32 = arith.constant 0 : i32
    %c0_i32_0 = arith.constant 0 : i32
    %c0_i32_1 = arith.constant 0 : i32
    return %c0_i32, %c0_i32_0 : i32, i32
  }
  func.func @transform_13(%arg0: i32) -> (i32, i32) {
    %c0_i32 = arith.constant 0 : i32
    %c0_i32_0 = arith.constant 0 : i32
    %c0_i32_1 = arith.constant 0 : i32
    return %c0_i32, %c0_i32_0 : i32, i32
  }
  func.func @transform_14(%arg0: i32) -> (i32, i32, i32) {
    %c0_i32 = arith.constant 0 : i32
    %c0_i32_0 = arith.constant 0 : i32
    %c0_i32_1 = arith.constant 0 : i32
    return %arg0, %c0_i32, %c0_i32_0 : i32, i32, i32
  }
}

</mosaic_0001>

<llo_original>
// kernel: tpu_custom_call.1
$region0: #{tpu_custom_call.1}
  #allocation0 [shape = 'u32[]', space=smem, size = 0x4, offset = 0x4, fixed_abs, tag = 'smem constant byte address 0x4 - core index']
  #allocation1 [shape = 'u32[144,128]{1,0:T(1,128)}', space=vmem, size = 0x12000, scoped, tag = 'internal scratch']
  #allocation2 [shape = 'f32[64,384]{1,0:T(8,128)}', space=vmem, size = 0x18000, scoped, tag = 'scratch operand']
  #allocation3 [shape = 'bf16[576,384]{1,0:T(8,128)(2,1)}', space=vmem, size = 0x6c000, scoped, tag = 'scratch operand']
  %s0 = inlined_call_operand.hbm [shape: f32[2,64,384], index: 0, kind: input, shape index: {}]
  %s1 = inlined_call_operand.hbm [shape: f32[1,384], index: 1, kind: input, shape index: {}]
  %s2 = inlined_call_operand.vmem [shape: bf16[64,576], index: 2, kind: input, shape index: {}]
  %s3 = inlined_call_operand.vmem [shape: f32[64,1], index: 3, kind: input, shape index: {}]
  %s4 = inlined_call_operand.vmem [shape: bf16[64,288], index: 4, kind: input, shape index: {}]
  %s5 = inlined_call_operand.vmem [shape: f32[64,1], index: 5, kind: input, shape index: {}]
  %s6 = inlined_call_operand.vmem [shape: bf16[32,288], index: 6, kind: input, shape index: {}]
  %s7 = inlined_call_operand.vmem [shape: f32[32,1], index: 7, kind: input, shape index: {}]
  %s8 = inlined_call_operand.hbm [shape: bf16[64,288], index: 8, kind: input, shape index: {}]
  %s9 = inlined_call_operand.vmem [shape: f32[64,1], index: 9, kind: input, shape index: {}]
  %s10 = inlined_call_operand.hbm [shape: bf16[32,288], index: 10, kind: input, shape index: {}]
  %s11 = inlined_call_operand.vmem [shape: f32[32,1], index: 11, kind: input, shape index: {}]
  %s12 = inlined_call_operand.hbm [shape: bf16[32,288], index: 12, kind: input, shape index: {}]
  %s13 = inlined_call_operand.vmem [shape: f32[32,1], index: 13, kind: input, shape index: {}]
  %s14 = inlined_call_operand.hbm [shape: f32[2,16,384], index: 14, kind: output, shape index: {}]
  %s15 = sld [smem:[#allocation0]]
  $region109: #{tpu_custom_call.1} parent=0
    _
  %s17 = ssub.s32 1, %s15
  %s18 = scalar_select 0, %s17, %s15
  $region1: #{tpu_custom_call.1} parent=0
    #allocation4 [shape = 'u8[196608]{0}', space=vmem, size = 0x30000, scoped, tag = 'input window, operand 0']
    #allocation5 [shape = 's32[2]{0}', space=sflag, size = 0x8, scoped, tag = 'scoped memory for tpu_custom_call.1']
    #allocation6 [shape = 's32[2]{0}', space=sflag, size = 0x8, scoped, tag = 'scoped memory for tpu_custom_call.1']
    #allocation7 [shape = 'u8[1536]{0}', space=vmem, size = 0x800, scoped, tag = 'input window, operand 1, single buffered']
    #allocation8 [shape = 's32[1]{0}', space=sflag, size = 0x4, scoped, tag = 'scoped memory for tpu_custom_call.1']
    #allocation9 [shape = 'u8[49152]{0}', space=vmem, size = 0xc000, scoped, tag = 'input window, operand 8, single buffered']
    #allocation10 [shape = 'u8[24576]{0}', space=vmem, size = 0x6000, scoped, tag = 'input window, operand 10, single buffered']
    #allocation11 [shape = 's32[1]{0}', space=sflag, size = 0x4, scoped, tag = 'scoped memory for tpu_custom_call.1']
    #allocation12 [shape = 'u8[24576]{0}', space=vmem, size = 0x6000, scoped, tag = 'input window, operand 12, single buffered']
    #allocation13 [shape = 'u8[49152]{0}', space=vmem, size = 0xc000, scoped, tag = 'output window, operand 0']
    %19 = vsyncpa [#allocation5], 0
    %s20 = scalar_lea.sflag [#allocation5], 1
    %21 = vsyncpa %s20, 0
    %22 = vsyncpa [#allocation8], 0
    %23 = vsyncpa [#allocation11], 0
    %24 = vsyncpa [#allocation6], 0
    %s25 = scalar_lea.sflag [#allocation6], 1
    %26 = vsyncpa %s25, 0
    loop: start=0, step=1, limit=4
    $region2: #{tpu_custom_call.1} parent=1 // loop_pre_header
      _
    $region3: #{tpu_custom_call.1} parent=1 // loop_header
      %s28 = sphi 0, %s32
      %p29 = scmp.ge.s32.totalorder %s28, 4
      %s38 = sphi 0, %s40
      %s41 = sphi 0, %s38
      %s42 = sphi 0, %s41
      %s58 = sphi 0, %s42
      %s62 = sphi 0, %s62
      %s64 = sphi 0, %s62
      %s65 = sphi 0, %s64
      %s79 = sphi 0, %s65
      %s83 = sphi 0, %s83
      %s85 = sphi 0, %s83
      %s86 = sphi 0, %s85
      %s100 = sphi 0, %s86
      %s104 = sphi 0, %s104
      %s106 = sphi 0, %s104
      %s107 = sphi 0, %s106
      %s121 = sphi 0, %s107
      %s125 = sphi 0, %s125
      %s127 = sphi 0, %s125
      %s128 = sphi 0, %s127
      %s142 = sphi 0, %s128
      %s146 = sphi 0, %s146
      %s148 = sphi 0, %s146
      %s149 = sphi 0, %s148
      %s163 = sphi 0, %s149
      %s167 = sphi 0, %s167
      %s169 = sphi 0, %s167
      %s170 = sphi 0, %s169
      %s184 = sphi 0, %s170
      %s188 = sphi 0, %s188
      %s190 = sphi 0, %s188
      %s191 = sphi 0, %s190
      %s205 = sphi 0, %s191
      %s209 = sphi 0, %s209
      %s211 = sphi 0, %s209
      %s212 = sphi 0, %s211
      %s226 = sphi 0, %s212
      %s230 = sphi 0, %s230
      %s232 = sphi 0, %s230
      %s233 = sphi 0, %s232
      %s247 = sphi 0, %s233
      %s251 = sphi 0, %s251
      %s253 = sphi 0, %s251
      %s254 = sphi 0, %s253
      %s268 = sphi 0, %s254
      %s272 = sphi 0, %s272
      %s274 = sphi 0, %s272
      %s275 = sphi 0, %s274
      %s289 = sphi 0, %s275
      %s293 = sphi 0, %s293
      %s295 = sphi 0, %s293
      %s296 = sphi 0, %s295
      %s310 = sphi 0, %s296
      %s314 = sphi 0, %s314
      %s316 = sphi 0, %s314
      %s317 = sphi 0, %s316
      %s331 = sphi 0, %s317
      %s337 = sphi 0, %s339
      %s340 = sphi 0, %s337
      %s341 = sphi 0, %s340
      %s357 = sphi 0, %s341
    $region4: #{tpu_custom_call.1} parent=1 // loop_header_branch
      %31 = sbr.rel (%p29) target = $region8
    $region5: #{tpu_custom_call.1} parent=1 // loop_body
      %s33 = ssub.s32 %s28, 1
      %s34 = ssub.s32 %s28, 2
      %s35 = sadd.s32 %s28, 1
      %s36 = ssub.s32 %s28, %s35
      %p37 = scmp.eq.s32.totalorder %s36, 0
      %s39 = sadd.s32 %s38, 1
      %s40 = scalar_select %p37, %s38, %s39
      %p43 = pneg %p37
      %p44 = scmp.eq.s32.totalorder %s28, 1
      %p45 = por %p43, %p44
      %p46 = scmp.ne.s32.totalorder %s38, %s41
      %p47 = scmp.eq.s32.totalorder %s28, 0
      %p48 = por %p46, %p47
      %p49 = scmp.ne.s32.totalorder %s38, %s41
      %p50 = scmp.eq.s32.totalorder %s33, 1
      %p51 = por %p49, %p50
      %p52 = scmp.ne.s32.totalorder %s41, %s42
      %p53 = scmp.eq.s32.totalorder %s33, 0
      %p54 = por %p52, %p53
      %p55 = scmp.ne.s32.totalorder %s41, %s42
      %p56 = scmp.eq.s32.totalorder %s34, 1
      %p57 = por %p55, %p56
      %p59 = scmp.ne.s32.totalorder %s42, %s58
      %p60 = scmp.eq.s32.totalorder %s34, 0
      %p61 = por %p59, %p60
      %s63 = sadd.s32 %s62, 1
      %p66 = scmp.eq.s32.totalorder %s28, 1
      %p67 = scmp.ne.s32.totalorder %s62, %s64
      %p68 = scmp.eq.s32.totalorder %s28, 0
      %p69 = por %p67, %p68
      %p70 = scmp.ne.s32.totalorder %s62, %s64
      %p71 = scmp.eq.s32.totalorder %s33, 1
      %p72 = por %p70, %p71
      %p73 = scmp.ne.s32.totalorder %s64, %s65
      %p74 = scmp.eq.s32.totalorder %s33, 0
      %p75 = por %p73, %p74
      %p76 = scmp.ne.s32.totalorder %s64, %s65
      %p77 = scmp.eq.s32.totalorder %s34, 1
      %p78 = por %p76, %p77
      %p80 = scmp.ne.s32.totalorder %s65, %s79
      %p81 = scmp.eq.s32.totalorder %s34, 0
      %p82 = por %p80, %p81
      %s84 = sadd.s32 %s83, 1
      %p87 = scmp.eq.s32.totalorder %s28, 1
      %p88 = scmp.ne.s32.totalorder %s83, %s85
      %p89 = scmp.eq.s32.totalorder %s28, 0
      %p90 = por %p88, %p89
      %p91 = scmp.ne.s32.totalorder %s83, %s85
      %p92 = scmp.eq.s32.totalorder %s33, 1
      %p93 = por %p91, %p92
      %p94 = scmp.ne.s32.totalorder %s85, %s86
      %p95 = scmp.eq.s32.totalorder %s33, 0
      %p96 = por %p94, %p95
      %p97 = scmp.ne.s32.totalorder %s85, %s86
      %p98 = scmp.eq.s32.totalorder %s34, 1
      %p99 = por %p97, %p98
      %p101 = scmp.ne.s32.totalorder %s86, %s100
      %p102 = scmp.eq.s32.totalorder %s34, 0
      %p103 = por %p101, %p102
      %s105 = sadd.s32 %s104, 1
      %p108 = scmp.eq.s32.totalorder %s28, 1
      %p109 = scmp.ne.s32.totalorder %s104, %s106
      %p110 = scmp.eq.s32.totalorder %s28, 0
      %p111 = por %p109, %p110
      %p112 = scmp.ne.s32.totalorder %s104, %s106
      %p113 = scmp.eq.s32.totalorder %s33, 1
      %p114 = por %p112, %p113
      %p115 = scmp.ne.s32.totalorder %s106, %s107
      %p116 = scmp.eq.s32.totalorder %s33, 0
      %p117 = por %p115, %p116
      %p118 = scmp.ne.s32.totalorder %s106, %s107
      %p119 = scmp.eq.s32.totalorder %s34, 1
      %p120 = por %p118, %p119
      %p122 = scmp.ne.s32.totalorder %s107, %s121
      %p123 = scmp.eq.s32.totalorder %s34, 0
      %p124 = por %p122, %p123
      %s126 = sadd.s32 %s125, 1
      %p129 = scmp.eq.s32.totalorder %s28, 1
      %p130 = scmp.ne.s32.totalorder %s125, %s127
      %p131 = scmp.eq.s32.totalorder %s28, 0
      %p132 = por %p130, %p131
      %p133 = scmp.ne.s32.totalorder %s125, %s127
      %p134 = scmp.eq.s32.totalorder %s33, 1
      %p135 = por %p133, %p134
      %p136 = scmp.ne.s32.totalorder %s127, %s128
      %p137 = scmp.eq.s32.totalorder %s33, 0
      %p138 = por %p136, %p137
      %p139 = scmp.ne.s32.totalorder %s127, %s128
      %p140 = scmp.eq.s32.totalorder %s34, 1
      %p141 = por %p139, %p140
      %p143 = scmp.ne.s32.totalorder %s128, %s142
      %p144 = scmp.eq.s32.totalorder %s34, 0
      %p145 = por %p143, %p144
      %s147 = sadd.s32 %s146, 1
      %p150 = scmp.eq.s32.totalorder %s28, 1
      %p151 = scmp.ne.s32.totalorder %s146, %s148
      %p152 = scmp.eq.s32.totalorder %s28, 0
      %p153 = por %p151, %p152
      %p154 = scmp.ne.s32.totalorder %s146, %s148
      %p155 = scmp.eq.s32.totalorder %s33, 1
      %p156 = por %p154, %p155
      %p157 = scmp.ne.s32.totalorder %s148, %s149
      %p158 = scmp.eq.s32.totalorder %s33, 0
      %p159 = por %p157, %p158
      %p160 = scmp.ne.s32.totalorder %s148, %s149
      %p161 = scmp.eq.s32.totalorder %s34, 1
      %p162 = por %p160, %p161
      %p164 = scmp.ne.s32.totalorder %s149, %s163
      %p165 = scmp.eq.s32.totalorder %s34, 0
      %p166 = por %p164, %p165
      %s168 = sadd.s32 %s167, 1
      %p171 = scmp.eq.s32.totalorder %s28, 1
      %p172 = scmp.ne.s32.totalorder %s167, %s169
      %p173 = scmp.eq.s32.totalorder %s28, 0
      %p174 = por %p172, %p173
      %p175 = scmp.ne.s32.totalorder %s167, %s169
      %p176 = scmp.eq.s32.totalorder %s33, 1
      %p177 = por %p175, %p176
      %p178 = scmp.ne.s32.totalorder %s169, %s170
      %p179 = scmp.eq.s32.totalorder %s33, 0
      %p180 = por %p178, %p179
      %p181 = scmp.ne.s32.totalorder %s169, %s170
      %p182 = scmp.eq.s32.totalorder %s34, 1
      %p183 = por %p181, %p182
      %p185 = scmp.ne.s32.totalorder %s170, %s184
      %p186 = scmp.eq.s32.totalorder %s34, 0
      %p187 = por %p185, %p186
      %s189 = sadd.s32 %s188, 1
      %p192 = scmp.eq.s32.totalorder %s28, 1
      %p193 = scmp.ne.s32.totalorder %s188, %s190
      %p194 = scmp.eq.s32.totalorder %s28, 0
      %p195 = por %p193, %p194
      %p196 = scmp.ne.s32.totalorder %s188, %s190
      %p197 = scmp.eq.s32.totalorder %s33, 1
      %p198 = por %p196, %p197
      %p199 = scmp.ne.s32.totalorder %s190, %s191
      %p200 = scmp.eq.s32.totalorder %s33, 0
      %p201 = por %p199, %p200
      %p202 = scmp.ne.s32.totalorder %s190, %s191
      %p203 = scmp.eq.s32.totalorder %s34, 1
      %p204 = por %p202, %p203
      %p206 = scmp.ne.s32.totalorder %s191, %s205
      %p207 = scmp.eq.s32.totalorder %s34, 0
      %p208 = por %p206, %p207
      %s210 = sadd.s32 %s209, 1
      %p213 = scmp.eq.s32.totalorder %s28, 1
      %p214 = scmp.ne.s32.totalorder %s209, %s211
      %p215 = scmp.eq.s32.totalorder %s28, 0
      %p216 = por %p214, %p215
      %p217 = scmp.ne.s32.totalorder %s209, %s211
      %p218 = scmp.eq.s32.totalorder %s33, 1
      %p219 = por %p217, %p218
      %p220 = scmp.ne.s32.totalorder %s211, %s212
      %p221 = scmp.eq.s32.totalorder %s33, 0
      %p222 = por %p220, %p221
      %p223 = scmp.ne.s32.totalorder %s211, %s212
      %p224 = scmp.eq.s32.totalorder %s34, 1
      %p225 = por %p223, %p224
      %p227 = scmp.ne.s32.totalorder %s212, %s226
      %p228 = scmp.eq.s32.totalorder %s34, 0
      %p229 = por %p227, %p228
      %s231 = sadd.s32 %s230, 1
      %p234 = scmp.eq.s32.totalorder %s28, 1
      %p235 = scmp.ne.s32.totalorder %s230, %s232
      %p236 = scmp.eq.s32.totalorder %s28, 0
      %p237 = por %p235, %p236
      %p238 = scmp.ne.s32.totalorder %s230, %s232
      %p239 = scmp.eq.s32.totalorder %s33, 1
      %p240 = por %p238, %p239
      %p241 = scmp.ne.s32.totalorder %s232, %s233
      %p242 = scmp.eq.s32.totalorder %s33, 0
      %p243 = por %p241, %p242
      %p244 = scmp.ne.s32.totalorder %s232, %s233
      %p245 = scmp.eq.s32.totalorder %s34, 1
      %p246 = por %p244, %p245
      %p248 = scmp.ne.s32.totalorder %s233, %s247
      %p249 = scmp.eq.s32.totalorder %s34, 0
      %p250 = por %p248, %p249
      %s252 = sadd.s32 %s251, 1
      %p255 = scmp.eq.s32.totalorder %s28, 1
      %p256 = scmp.ne.s32.totalorder %s251, %s253
      %p257 = scmp.eq.s32.totalorder %s28, 0
      %p258 = por %p256, %p257
      %p259 = scmp.ne.s32.totalorder %s251, %s253
      %p260 = scmp.eq.s32.totalorder %s33, 1
      %p261 = por %p259, %p260
      %p262 = scmp.ne.s32.totalorder %s253, %s254
      %p263 = scmp.eq.s32.totalorder %s33, 0
      %p264 = por %p262, %p263
      %p265 = scmp.ne.s32.totalorder %s253, %s254
      %p266 = scmp.eq.s32.totalorder %s34, 1
      %p267 = por %p265, %p266
      %p269 = scmp.ne.s32.totalorder %s254, %s268
      %p270 = scmp.eq.s32.totalorder %s34, 0
      %p271 = por %p269, %p270
      %s273 = sadd.s32 %s272, 1
      %p276 = scmp.eq.s32.totalorder %s28, 1
      %p277 = scmp.ne.s32.totalorder %s272, %s274
      %p278 = scmp.eq.s32.totalorder %s28, 0
      %p279 = por %p277, %p278
      %p280 = scmp.ne.s32.totalorder %s272, %s274
      %p281 = scmp.eq.s32.totalorder %s33, 1
      %p282 = por %p280, %p281
      %p283 = scmp.ne.s32.totalorder %s274, %s275
      %p284 = scmp.eq.s32.totalorder %s33, 0
      %p285 = por %p283, %p284
      %p286 = scmp.ne.s32.totalorder %s274, %s275
      %p287 = scmp.eq.s32.totalorder %s34, 1
      %p288 = por %p286, %p287
      %p290 = scmp.ne.s32.totalorder %s275, %s289
      %p291 = scmp.eq.s32.totalorder %s34, 0
      %p292 = por %p290, %p291
      %s294 = sadd.s32 %s293, 1
      %p297 = scmp.eq.s32.totalorder %s28, 1
      %p298 = scmp.ne.s32.totalorder %s293, %s295
      %p299 = scmp.eq.s32.totalorder %s28, 0
      %p300 = por %p298, %p299
      %p301 = scmp.ne.s32.totalorder %s293, %s295
      %p302 = scmp.eq.s32.totalorder %s33, 1
      %p303 = por %p301, %p302
      %p304 = scmp.ne.s32.totalorder %s295, %s296
      %p305 = scmp.eq.s32.totalorder %s33, 0
      %p306 = por %p304, %p305
      %p307 = scmp.ne.s32.totalorder %s295, %s296
      %p308 = scmp.eq.s32.totalorder %s34, 1
      %p309 = por %p307, %p308
      %p311 = scmp.ne.s32.totalorder %s296, %s310
      %p312 = scmp.eq.s32.totalorder %s34, 0
      %p313 = por %p311, %p312
      %s315 = sadd.s32 %s314, 1
      %p318 = scmp.eq.s32.totalorder %s28, 1
      %p319 = scmp.ne.s32.totalorder %s314, %s316
      %p320 = scmp.eq.s32.totalorder %s28, 0
      %p321 = por %p319, %p320
      %p322 = scmp.ne.s32.totalorder %s314, %s316
      %p323 = scmp.eq.s32.totalorder %s33, 1
      %p324 = por %p322, %p323
      %p325 = scmp.ne.s32.totalorder %s316, %s317
      %p326 = scmp.eq.s32.totalorder %s33, 0
      %p327 = por %p325, %p326
      %p328 = scmp.ne.s32.totalorder %s316, %s317
      %p329 = scmp.eq.s32.totalorder %s34, 1
      %p330 = por %p328, %p329
      %p332 = scmp.ne.s32.totalorder %s317, %s331
      %p333 = scmp.eq.s32.totalorder %s34, 0
      %p334 = por %p332, %p333
      %s335 = ssub.s32 %s28, %s35
      %p336 = scmp.eq.s32.totalorder %s335, 0
      %s338 = sadd.s32 %s337, 1
      %s339 = scalar_select %p336, %s337, %s338
      %p342 = pneg %p336
      %p343 = scmp.eq.s32.totalorder %s28, 1
      %p344 = por %p342, %p343
      %p345 = scmp.ne.s32.totalorder %s337, %s340
      %p346 = scmp.eq.s32.totalorder %s28, 0
      %p347 = por %p345, %p346
      %p348 = scmp.ne.s32.totalorder %s337, %s340
      %p349 = scmp.eq.s32.totalorder %s33, 1
      %p350 = por %p348, %p349
      %p351 = scmp.ne.s32.totalorder %s340, %s341
      %p352 = scmp.eq.s32.totalorder %s33, 0
      %p353 = por %p351, %p352
      %p354 = scmp.ne.s32.totalorder %s340, %s341
      %p355 = scmp.eq.s32.totalorder %s34, 1
      %p356 = por %p354, %p355
      %p358 = scmp.ne.s32.totalorder %s341, %s357
      %p359 = scmp.eq.s32.totalorder %s34, 0
      %p360 = por %p358, %p359
      %p361 = scmp.le.s32.totalorder 1, %s28
      %p362 = scmp.lt.s32.totalorder %s28, 3
      %p363 = pnand %p361, %p362
      %p364 = pneg %p363
      // Predicated region
      $region9: #{tpu_custom_call.1} parent=5 // pred_check
        _
      $region10: #{tpu_custom_call.1} parent=5 // pred_check_branch
        %366 = sbr.rel (%p363) target = $region12
      $region11: #{tpu_custom_call.1} parent=5 // pred_region
        %s367 = ssub.s32 %s28, 1
        // Predicated region
        $region13: #{tpu_custom_call.1} parent=11 // pred_check
          %p368 = pneg %p75
        $region14: #{tpu_custom_call.1} parent=11 // pred_check_branch
          %370 = sbr.rel (%p368) target = $region16
        $region15: #{tpu_custom_call.1} parent=11 // pred_region
          %s372 = ssub.s32 48, 48
          %373 = vsyncadd [#allocation8], %s372
          %s375 = sshll.u32 [#allocation7], 4
          %s376 = int_to_ptr.vmem [resolvable:$true] %s375
          %378 = dma.hbm_to_vmem [thread:$0]  %s1, 48, %s376, [#allocation8]
        $region16: #{tpu_custom_call.1} parent=11 // pred_fallthru
          _
        // Predicated region
        $region17: #{tpu_custom_call.1} parent=11 // pred_check
          %p379 = pneg %p96
        $region18: #{tpu_custom_call.1} parent=11 // pred_check_branch
          %381 = sbr.rel (%p379) target = $region20
        $region19: #{tpu_custom_call.1} parent=11 // pred_region
          _
        $region20: #{tpu_custom_call.1} parent=11 // pred_fallthru
          _
        // Predicated region
        $region21: #{tpu_custom_call.1} parent=11 // pred_check
          %p382 = pneg %p117
        $region22: #{tpu_custom_call.1} parent=11 // pred_check_branch
          %384 = sbr.rel (%p382) target = $region24
        $region23: #{tpu_custom_call.1} parent=11 // pred_region
          _
        $region24: #{tpu_custom_call.1} parent=11 // pred_fallthru
          _
        // Predicated region
        $region25: #{tpu_custom_call.1} parent=11 // pred_check
          %p385 = pneg %p138
        $region26: #{tpu_custom_call.1} parent=11 // pred_check_branch
          %387 = sbr.rel (%p385) target = $region28
        $region27: #{tpu_custom_call.1} parent=11 // pred_region
          _
        $region28: #{tpu_custom_call.1} parent=11 // pred_fallthru
          _
        // Predicated region
        $region29: #{tpu_custom_call.1} parent=11 // pred_check
          %p388 = pneg %p159
        $region30: #{tpu_custom_call.1} parent=11 // pred_check_branch
          %390 = sbr.rel (%p388) target = $region32
        $region31: #{tpu_custom_call.1} parent=11 // pred_region
          _
        $region32: #{tpu_custom_call.1} parent=11 // pred_fallthru
          _
        // Predicated region
        $region33: #{tpu_custom_call.1} parent=11 // pred_check
          %p391 = pneg %p180
        $region34: #{tpu_custom_call.1} parent=11 // pred_check_branch
          %393 = sbr.rel (%p391) target = $region36
        $region35: #{tpu_custom_call.1} parent=11 // pred_region
          _
        $region36: #{tpu_custom_call.1} parent=11 // pred_fallthru
          _
        // Predicated region
        $region37: #{tpu_custom_call.1} parent=11 // pred_check
          %p394 = pneg %p201
        $region38: #{tpu_custom_call.1} parent=11 // pred_check_branch
          %396 = sbr.rel (%p394) target = $region40
        $region39: #{tpu_custom_call.1} parent=11 // pred_region
          _
        $region40: #{tpu_custom_call.1} parent=11 // pred_fallthru
          _
        // Predicated region
        $region41: #{tpu_custom_call.1} parent=11 // pred_check
          %p397 = pneg %p222
        $region42: #{tpu_custom_call.1} parent=11 // pred_check_branch
          %399 = sbr.rel (%p397) target = $region44
        $region43: #{tpu_custom_call.1} parent=11 // pred_region
          %s401 = ssub.s32 1536, 1536
          %402 = vsyncadd [#allocation8], %s401
          %s403 = sshll.u32 [#allocation9], 4
          %s404 = int_to_ptr.vmem [resolvable:$true] %s403
          %409 = dma.hbm_to_vmem [thread:$0]  %s8, 1536, %s404, [#allocation8], 192, 192, 12
        $region44: #{tpu_custom_call.1} parent=11 // pred_fallthru
          _
        // Predicated region
        $region45: #{tpu_custom_call.1} parent=11 // pred_check
          %p410 = pneg %p243
        $region46: #{tpu_custom_call.1} parent=11 // pred_check_branch
          %412 = sbr.rel (%p410) target = $region48
        $region47: #{tpu_custom_call.1} parent=11 // pred_region
          _
        $region48: #{tpu_custom_call.1} parent=11 // pred_fallthru
          _
        // Predicated region
        $region49: #{tpu_custom_call.1} parent=11 // pred_check
          %p413 = pneg %p264
        $region50: #{tpu_custom_call.1} parent=11 // pred_check_branch
          %415 = sbr.rel (%p413) target = $region52
        $region51: #{tpu_custom_call.1} parent=11 // pred_region
          %s417 = ssub.s32 768, 768
          %418 = vsyncadd [#allocation11], %s417
          %s419 = sshll.u32 [#allocation10], 4
          %s420 = int_to_ptr.vmem [resolvable:$true] %s419
          %425 = dma.hbm_to_vmem [thread:$0]  %s10, 768, %s420, [#allocation11], 192, 192, 12
        $region52: #{tpu_custom_call.1} parent=11 // pred_fallthru
          _
        // Predicated region
        $region53: #{tpu_custom_call.1} parent=11 // pred_check
          %p426 = pneg %p285
        $region54: #{tpu_custom_call.1} parent=11 // pred_check_branch
          %428 = sbr.rel (%p426) target = $region56
        $region55: #{tpu_custom_call.1} parent=11 // pred_region
          _
        $region56: #{tpu_custom_call.1} parent=11 // pred_fallthru
          _
        // Predicated region
        $region57: #{tpu_custom_call.1} parent=11 // pred_check
          %p429 = pneg %p306
        $region58: #{tpu_custom_call.1} parent=11 // pred_check_branch
          %431 = sbr.rel (%p429) target = $region60
        $region59: #{tpu_custom_call.1} parent=11 // pred_region
          %s433 = ssub.s32 768, 768
          %434 = vsyncadd [#allocation11], %s433
          %s435 = sshll.u32 [#allocation12], 4
          %s436 = int_to_ptr.vmem [resolvable:$true] %s435
          %441 = dma.hbm_to_vmem [thread:$0]  %s12, 768, %s436, [#allocation11], 192, 192, 12
        $region60: #{tpu_custom_call.1} parent=11 // pred_fallthru
          _
        // Predicated region
        $region61: #{tpu_custom_call.1} parent=11 // pred_check
          %p442 = pneg %p327
        $region62: #{tpu_custom_call.1} parent=11 // pred_check_branch
          %444 = sbr.rel (%p442) target = $region64
        $region63: #{tpu_custom_call.1} parent=11 // pred_region
          _
        $region64: #{tpu_custom_call.1} parent=11 // pred_fallthru
          _
      $region12: #{tpu_custom_call.1} parent=5 // pred_fallthru
        _
      %p445 = scmp.lt.s32.totalorder %s28, 2
      // Predicated region
      $region65: #{tpu_custom_call.1} parent=5 // pred_check
        %p446 = pneg %p445
      $region66: #{tpu_custom_call.1} parent=5 // pred_check_branch
        %448 = sbr.rel (%p446) target = $region68
      $region67: #{tpu_custom_call.1} parent=5 // pred_region
        // Predicated region
        $region69: #{tpu_custom_call.1} parent=67 // pred_check
          %p449 = pneg %p48
        $region70: #{tpu_custom_call.1} parent=67 // pred_check_branch
          %451 = sbr.rel (%p449) target = $region72
        $region71: #{tpu_custom_call.1} parent=67 // pred_region
          %s452 = sand.u32 %s38, 1
          %s453 = scalar_lea.sflag [#allocation5], %s452
          %s454 = sand.u32 %s38, 1
          %s455 = smul.addr %s454, 192
          %s456 = scalar_lea.vmem [#allocation4], %s455
          %s458 = ssub.s32 3072, 3072
          %459 = vsyncadd %s453, %s458
          %s460 = smul.addr %s28, 24
          %s461 = smul.addr %s460, 128
          %s462 = scalar_lea.hbm %s0, %s461
          %s463 = sshll.u32 %s456, 4
          %s464 = int_to_ptr.vmem [resolvable:$true] %s463
          %469 = dma.hbm_to_vmem [thread:$0]  %s462, 3072, %s464, %s453, 384, 384, 24
        $region72: #{tpu_custom_call.1} parent=67 // pred_fallthru
          _
      $region68: #{tpu_custom_call.1} parent=5 // pred_fallthru
        _
      %p470 = scmp.le.s32.totalorder 1, %s28
      %p471 = scmp.lt.s32.totalorder %s28, 3
      %p472 = pnand %p470, %p471
      %p473 = pneg %p472
      // Predicated region
      $region73: #{tpu_custom_call.1} parent=5 // pred_check
        _
      $region74: #{tpu_custom_call.1} parent=5 // pred_check_branch
        %475 = sbr.rel (%p472) target = $region76
      $region75: #{tpu_custom_call.1} parent=5 // pred_region
        %s476 = ssub.s32 %s28, 1
        %s477 = sand.u32 %s41, 1
        %s478 = scalar_lea.sflag [#allocation5], %s477
        %s479 = sand.u32 %s41, 1
        %s480 = smul.addr %s479, 192
        %s481 = scalar_lea.vmem [#allocation4], %s480
        // Predicated region
        $region77: #{tpu_custom_call.1} parent=75 // pred_check
          %p482 = pneg %p54
        $region78: #{tpu_custom_call.1} parent=75 // pred_check_branch
          %484 = sbr.rel (%p482) target = $region80
        $region79: #{tpu_custom_call.1} parent=75 // pred_region
          %485 = dma.done %s478, 3072
        $region80: #{tpu_custom_call.1} parent=75 // pred_fallthru
          _
        // Predicated region
        $region81: #{tpu_custom_call.1} parent=75 // pred_check
          %p486 = pneg %p75
        $region82: #{tpu_custom_call.1} parent=75 // pred_check_branch
          %488 = sbr.rel (%p486) target = $region84
        $region83: #{tpu_custom_call.1} parent=75 // pred_region
          %489 = dma.done [#allocation8], 48
        $region84: #{tpu_custom_call.1} parent=75 // pred_fallthru
          _
        // Predicated region
        $region85: #{tpu_custom_call.1} parent=75 // pred_check
          %p490 = pneg %p222
        $region86: #{tpu_custom_call.1} parent=75 // pred_check_branch
          %492 = sbr.rel (%p490) target = $region88
        $region87: #{tpu_custom_call.1} parent=75 // pred_region
          %493 = dma.done [#allocation8], 1536
        $region88: #{tpu_custom_call.1} parent=75 // pred_fallthru
          _
        // Predicated region
        $region89: #{tpu_custom_call.1} parent=75 // pred_check
          %p494 = pneg %p264
        $region90: #{tpu_custom_call.1} parent=75 // pred_check_branch
          %496 = sbr.rel (%p494) target = $region92
        $region91: #{tpu_custom_call.1} parent=75 // pred_region
          %497 = dma.done [#allocation11], 768
        $region92: #{tpu_custom_call.1} parent=75 // pred_fallthru
          _
        // Predicated region
        $region93: #{tpu_custom_call.1} parent=75 // pred_check
          %p498 = pneg %p306
        $region94: #{tpu_custom_call.1} parent=75 // pred_check_branch
          %500 = sbr.rel (%p498) target = $region96
        $region95: #{tpu_custom_call.1} parent=75 // pred_region
          %501 = dma.done [#allocation11], 768
        $region96: #{tpu_custom_call.1} parent=75 // pred_fallthru
          _
        %s502 = sand.u32 %s41, 1
        %s503 = scalar_lea.sflag [#allocation5], %s502
        %s504 = sand.u32 %s41, 1
        %s505 = smul.addr %s504, 192
        %s506 = scalar_lea.vmem [#allocation4], %s505
        %p507 = pneg %p54
        %p508 = pneg %p51
        %p509 = pneg %p75
        %p510 = pneg %p72
        %p511 = pneg %p96
        %p512 = pneg %p93
        %p513 = pneg %p117
        %p514 = pneg %p114
        %p515 = pneg %p138
        %p516 = pneg %p135
        %p517 = pneg %p159
        %p518 = pneg %p156
        %p519 = pneg %p180
        %p520 = pneg %p177
        %p521 = pneg %p201
        %p522 = pneg %p198
        %p523 = pneg %p222
        %p524 = pneg %p219
        %p525 = pneg %p243
        %p526 = pneg %p240
        %p527 = pneg %p264
        %p528 = pneg %p261
        %p529 = pneg %p285
        %p530 = pneg %p282
        %p531 = pneg %p306
        %p532 = pneg %p303
        %p533 = pneg %p327
        %p534 = pneg %p324
        %p535 = pneg %p353
        %p536 = pneg %p350
        %s537 = sand.u32 %s340, 1
        %s538 = scalar_lea.sflag [#allocation6], %s537
        %s539 = sand.u32 %s340, 1
        %s540 = smul.addr %s539, 48
        %s541 = scalar_lea.vmem [#allocation13], %s540
        %v543 = vld [vmem:[#allocation7] sm:$0x7]
        %v544 = vld [vmem:[%s481] sm:$0xff]
        %v545 = vld [vmem:[%s481 + $0x8] sm:$0xff]
        %v546 = vld [vmem:[%s481 + $0x10] sm:$0xff]
        %v547 = vld [vmem:[%s481 + $0x18] sm:$0xff]
        %v548 = vld [vmem:[%s481 + $0x20] sm:$0xff]
        %v549 = vld [vmem:[%s481 + $0x28] sm:$0xff]
        %v550 = vld [vmem:[%s481 + $0x30] sm:$0xff]
        %v551 = vld [vmem:[%s481 + $0x38] sm:$0xff]
        %v552 = vld [vmem:[%s481 + $0x40] sm:$0xff]
        %v553 = vld [vmem:[%s481 + $0x48] sm:$0xff]
        %v554 = vld [vmem:[%s481 + $0x50] sm:$0xff]
        %v555 = vld [vmem:[%s481 + $0x58] sm:$0xff]
        %v556 = vld [vmem:[%s481 + $0x60] sm:$0xff]
        %v557 = vld [vmem:[%s481 + $0x68] sm:$0xff]
        %v558 = vld [vmem:[%s481 + $0x70] sm:$0xff]
        %v559 = vld [vmem:[%s481 + $0x78] sm:$0xff]
        %v560 = vld [vmem:[%s481 + $0x80] sm:$0xff]
        %v561 = vld [vmem:[%s481 + $0x88] sm:$0xff]
        %v562 = vld [vmem:[%s481 + $0x90] sm:$0xff]
        %v563 = vld [vmem:[%s481 + $0x98] sm:$0xff]
        %v564 = vld [vmem:[%s481 + $0xa0] sm:$0xff]
        %v565 = vld [vmem:[%s481 + $0xa8] sm:$0xff]
        %v566 = vld [vmem:[%s481 + $0xb0] sm:$0xff]
        %v567 = vld [vmem:[%s481 + $0xb8] sm:$0xff]
        %568 = vst [vmem:[#allocation2] sm:$0xff] %v544
        %569 = vst [vmem:[#allocation2 + $0x8] sm:$0xff] %v545
        %570 = vst [vmem:[#allocation2 + $0x10] sm:$0xff] %v546
        %571 = vst [vmem:[#allocation2 + $0x18] sm:$0xff] %v547
        %572 = vst [vmem:[#allocation2 + $0x20] sm:$0xff] %v548
        %573 = vst [vmem:[#allocation2 + $0x28] sm:$0xff] %v549
        %574 = vst [vmem:[#allocation2 + $0x30] sm:$0xff] %v550
        %575 = vst [vmem:[#allocation2 + $0x38] sm:$0xff] %v551
        %576 = vst [vmem:[#allocation2 + $0x40] sm:$0xff] %v552
        %577 = vst [vmem:[#allocation2 + $0x48] sm:$0xff] %v553
        %578 = vst [vmem:[#allocation2 + $0x50] sm:$0xff] %v554
        %579 = vst [vmem:[#allocation2 + $0x58] sm:$0xff] %v555
        %580 = vst [vmem:[#allocation2 + $0x60] sm:$0xff] %v556
        %581 = vst [vmem:[#allocation2 + $0x68] sm:$0xff] %v557
        %582 = vst [vmem:[#allocation2 + $0x70] sm:$0xff] %v558
        %583 = vst [vmem:[#allocation2 + $0x78] sm:$0xff] %v559
        %584 = vst [vmem:[#allocation2 + $0x80] sm:$0xff] %v560
        %585 = vst [vmem:[#allocation2 + $0x88] sm:$0xff] %v561
        %586 = vst [vmem:[#allocation2 + $0x90] sm:$0xff] %v562
        %587 = vst [vmem:[#allocation2 + $0x98] sm:$0xff] %v563
        %588 = vst [vmem:[#allocation2 + $0xa0] sm:$0xff] %v564
        %589 = vst [vmem:[#allocation2 + $0xa8] sm:$0xff] %v565
        %590 = vst [vmem:[#allocation2 + $0xb0] sm:$0xff] %v566
        %591 = vst [vmem:[#allocation2 + $0xb8] sm:$0xff] %v567
        %v592 = vld [vmem:[#allocation2] sm:$0xff]
        %v593 = vld [vmem:[#allocation2 + $0x8] sm:$0xff]
        %v594 = vld [vmem:[#allocation2 + $0x10] sm:$0xff]
        %v595 = vld [vmem:[#allocation2 + $0x18] sm:$0xff]
        %v596 = vld [vmem:[#allocation2 + $0x20] sm:$0xff]
        %v597 = vld [vmem:[#allocation2 + $0x28] sm:$0xff]
        %v598 = vld [vmem:[#allocation2 + $0x30] sm:$0xff]
        %v599 = vld [vmem:[#allocation2 + $0x38] sm:$0xff]
        %v600 = vld [vmem:[#allocation2 + $0x40] sm:$0xff]
        %v601 = vld [vmem:[#allocation2 + $0x48] sm:$0xff]
        %v602 = vld [vmem:[#allocation2 + $0x50] sm:$0xff]
        %v603 = vld [vmem:[#allocation2 + $0x58] sm:$0xff]
        %v604 = vld [vmem:[#allocation2 + $0x60] sm:$0xff]
        %v605 = vld [vmem:[#allocation2 + $0x68] sm:$0xff]
        %v606 = vld [vmem:[#allocation2 + $0x70] sm:$0xff]
        %v607 = vld [vmem:[#allocation2 + $0x78] sm:$0xff]
        %v608 = vld [vmem:[#allocation2 + $0x80] sm:$0xff]
        %v609 = vld [vmem:[#allocation2 + $0x88] sm:$0xff]
        %v610 = vld [vmem:[#allocation2 + $0x90] sm:$0xff]
        %v611 = vld [vmem:[#allocation2 + $0x98] sm:$0xff]
        %v612 = vld [vmem:[#allocation2 + $0xa0] sm:$0xff]
        %v613 = vld [vmem:[#allocation2 + $0xa8] sm:$0xff]
        %v614 = vld [vmem:[#allocation2 + $0xb0] sm:$0xff]
        %v615 = vld [vmem:[#allocation2 + $0xb8] sm:$0xff]
        %616 = vrot.lane.b32.xlu0 %v592, 19
        %v617 = vpop.permute.xlu0 %616
        %618 = vrot.lane.b32.xlu0 %v595, 19
        %v619 = vpop.permute.xlu0 %618
        %620 = vrot.lane.b32.xlu0 %v598, 19
        %v621 = vpop.permute.xlu0 %620
        %622 = vrot.lane.b32.xlu0 %v601, 19
        %v623 = vpop.permute.xlu0 %622
        %624 = vrot.lane.b32.xlu0 %v604, 19
        %v625 = vpop.permute.xlu0 %624
        %626 = vrot.lane.b32.xlu0 %v607, 19
        %v627 = vpop.permute.xlu0 %626
        %628 = vrot.lane.b32.xlu0 %v610, 19
        %v629 = vpop.permute.xlu0 %628
        %630 = vrot.lane.b32.xlu0 %v613, 19
        %v631 = vpop.permute.xlu0 %630
        %632 = vrot.lane.b32.xlu0 %v593, 19
        %v633 = vpop.permute.xlu0 %632
        %634 = vrot.lane.b32.xlu0 %v596, 19
        %v635 = vpop.permute.xlu0 %634
        %636 = vrot.lane.b32.xlu0 %v599, 19
        %v637 = vpop.permute.xlu0 %636
        %638 = vrot.lane.b32.xlu0 %v602, 19
        %v639 = vpop.permute.xlu0 %638
        %640 = vrot.lane.b32.xlu0 %v605, 19
        %v641 = vpop.permute.xlu0 %640
        %642 = vrot.lane.b32.xlu0 %v608, 19
        %v643 = vpop.permute.xlu0 %642
        %644 = vrot.lane.b32.xlu0 %v611, 19
        %v645 = vpop.permute.xlu0 %644
        %646 = vrot.lane.b32.xlu0 %v614, 19
        %v647 = vpop.permute.xlu0 %646
        %648 = vrot.lane.b32.xlu0 %v594, 19
        %v649 = vpop.permute.xlu0 %648
        %650 = vrot.lane.b32.xlu0 %v597, 19
        %v651 = vpop.permute.xlu0 %650
        %652 = vrot.lane.b32.xlu0 %v600, 19
        %v653 = vpop.permute.xlu0 %652
        %654 = vrot.lane.b32.xlu0 %v603, 19
        %v655 = vpop.permute.xlu0 %654
        %656 = vrot.lane.b32.xlu0 %v606, 19
        %v657 = vpop.permute.xlu0 %656
        %658 = vrot.lane.b32.xlu0 %v609, 19
        %v659 = vpop.permute.xlu0 %658
        %660 = vrot.lane.b32.xlu0 %v612, 19
        %v661 = vpop.permute.xlu0 %660
        %662 = vrot.lane.b32.xlu0 %v615, 19
        %v663 = vpop.permute.xlu0 %662
        %v664 = vlaneseq
        %v665 = vand.u32 %v664, 127
        %vm666 = vcmp.lt.s32.totalorder %v665, 19
        %v667 = vsel %vm666, %v633, %v649
        %v668 = vsel %vm666, %v635, %v651
        %v669 = vsel %vm666, %v637, %v653
        %v670 = vsel %vm666, %v639, %v655
        %v671 = vsel %vm666, %v641, %v657
        %v672 = vsel %vm666, %v643, %v659
        %v673 = vsel %vm666, %v645, %v661
        %v674 = vsel %vm666, %v647, %v663
        %v675 = vsel %vm666, %v617, %v633
        %v676 = vsel %vm666, %v619, %v635
        %v677 = vsel %vm666, %v621, %v637
        %v678 = vsel %vm666, %v623, %v639
        %v679 = vsel %vm666, %v625, %v641
        %v680 = vsel %vm666, %v627, %v643
        %v681 = vsel %vm666, %v629, %v645
        %v682 = vsel %vm666, %v631, %v647
        %v683 = vsel %vm666, %v649, %v617
        %v684 = vsel %vm666, %v651, %v619
        %v685 = vsel %vm666, %v653, %v621
        %v686 = vsel %vm666, %v655, %v623
        %v687 = vsel %vm666, %v657, %v625
        %v688 = vsel %vm666, %v659, %v627
        %v689 = vsel %vm666, %v661, %v629
        %v690 = vsel %vm666, %v663, %v631
        %v691 = vpack.c.bf16 %v684, %v683
        %v692 = vpack.c.bf16 %v676, %v675
        %v693 = vpack.c.bf16 %v668, %v667
        %v694 = vpack.c.bf16 %v686, %v685
        %v695 = vpack.c.bf16 %v678, %v677
        %v696 = vpack.c.bf16 %v670, %v669
        %v697 = vpack.c.bf16 %v688, %v687
        %v698 = vpack.c.bf16 %v680, %v679
        %v699 = vpack.c.bf16 %v672, %v671
        %v700 = vpack.c.bf16 %v690, %v689
        %v701 = vpack.c.bf16 %v682, %v681
        %v702 = vpack.c.bf16 %v674, %v673
        %v715 = vunpack.c.l.b16 %v691
        %v716 = vunpack.c.l.b16 %v692
        %v717 = vunpack.c.l.b16 %v693
        %v718 = vunpack.c.h.b16 %v691
        %v719 = vunpack.c.h.b16 %v692
        %v720 = vunpack.c.h.b16 %v693
        %v721 = vunpack.c.l.b16 %v694
        %v722 = vunpack.c.l.b16 %v695
        %v723 = vunpack.c.l.b16 %v696
        %v724 = vunpack.c.h.b16 %v694
        %v725 = vunpack.c.h.b16 %v695
        %v726 = vunpack.c.h.b16 %v696
        %v727 = vunpack.c.l.b16 %v697
        %v728 = vunpack.c.l.b16 %v698
        %v729 = vunpack.c.l.b16 %v699
        %v730 = vunpack.c.h.b16 %v697
        %v731 = vunpack.c.h.b16 %v698
        %v732 = vunpack.c.h.b16 %v699
        %v733 = vunpack.c.l.b16 %v700
        %v734 = vunpack.c.l.b16 %v701
        %v735 = vunpack.c.l.b16 %v702
        %v736 = vunpack.c.h.b16 %v700
        %v737 = vunpack.c.h.b16 %v701
        %v738 = vunpack.c.h.b16 %v702
        %v739 = vpack.c.b16 %v716, %v715
        %v740 = vpack.c.b16 %v717, %v717
        %v741 = vpack.c.b16 %v719, %v718
        %v742 = vpack.c.b16 %v720, %v720
        %v743 = vpack.c.b16 %v722, %v721
        %v744 = vpack.c.b16 %v723, %v723
        %v745 = vpack.c.b16 %v725, %v724
        %v746 = vpack.c.b16 %v726, %v726
        %v747 = vpack.c.b16 %v728, %v727
        %v748 = vpack.c.b16 %v729, %v729
        %v749 = vpack.c.b16 %v731, %v730
        %v750 = vpack.c.b16 %v732, %v732
        %v751 = vpack.c.b16 %v734, %v733
        %v752 = vpack.c.b16 %v735, %v735
        %v753 = vpack.c.b16 %v737, %v736
        %v754 = vpack.c.b16 %v738, %v738
        %771 = vst [vmem:[#allocation3] sm:$0xff] %v739
        %772 = vst [vmem:[#allocation3 + $0x8] sm:$0xf] %v740
        %773 = vst [vmem:[#allocation3 + $0xc] sm:$0xff] %v741
        %774 = vst [vmem:[#allocation3 + $0x14] sm:$0xf] %v742
        %775 = vst [vmem:[#allocation3 + $0x18] sm:$0xff] %v743
        %776 = vst [vmem:[#allocation3 + $0x20] sm:$0xf] %v744
        %777 = vst [vmem:[#allocation3 + $0x24] sm:$0xff] %v745
        %778 = vst [vmem:[#allocation3 + $0x2c] sm:$0xf] %v746
        %779 = vst [vmem:[#allocation3 + $0x30] sm:$0xff] %v747
        %780 = vst [vmem:[#allocation3 + $0x38] sm:$0xf] %v748
        %781 = vst [vmem:[#allocation3 + $0x3c] sm:$0xff] %v749
        %782 = vst [vmem:[#allocation3 + $0x44] sm:$0xf] %v750
        %783 = vst [vmem:[#allocation3 + $0x48] sm:$0xff] %v751
        %784 = vst [vmem:[#allocation3 + $0x50] sm:$0xf] %v752
        %785 = vst [vmem:[#allocation3 + $0x54] sm:$0xff] %v753
        %786 = vst [vmem:[#allocation3 + $0x5c] sm:$0xf] %v754
        %787 = vrot.lane.b32.xlu0 %v592, 18
        %v788 = vpop.permute.xlu0 %787
        %789 = vrot.lane.b32.xlu0 %v595, 18
        %v790 = vpop.permute.xlu0 %789
        %791 = vrot.lane.b32.xlu0 %v598, 18
        %v792 = vpop.permute.xlu0 %791
        %793 = vrot.lane.b32.xlu0 %v601, 18
        %v794 = vpop.permute.xlu0 %793
        %795 = vrot.lane.b32.xlu0 %v604, 18
        %v796 = vpop.permute.xlu0 %795
        %797 = vrot.lane.b32.xlu0 %v607, 18
        %v798 = vpop.permute.xlu0 %797
        %799 = vrot.lane.b32.xlu0 %v610, 18
        %v800 = vpop.permute.xlu0 %799
        %801 = vrot.lane.b32.xlu0 %v613, 18
        %v802 = vpop.permute.xlu0 %801
        %803 = vrot.lane.b32.xlu0 %v593, 18
        %v804 = vpop.permute.xlu0 %803
        %805 = vrot.lane.b32.xlu0 %v596, 18
        %v806 = vpop.permute.xlu0 %805
        %807 = vrot.lane.b32.xlu0 %v599, 18
        %v808 = vpop.permute.xlu0 %807
        %809 = vrot.lane.b32.xlu0 %v602, 18
        %v810 = vpop.permute.xlu0 %809
        %811 = vrot.lane.b32.xlu0 %v605, 18
        %v812 = vpop.permute.xlu0 %811
        %813 = vrot.lane.b32.xlu0 %v608, 18
        %v814 = vpop.permute.xlu0 %813
        %815 = vrot.lane.b32.xlu0 %v611, 18
        %v816 = vpop.permute.xlu0 %815
        %817 = vrot.lane.b32.xlu0 %v614, 18
        %v818 = vpop.permute.xlu0 %817
        %819 = vrot.lane.b32.xlu0 %v594, 18
        %v820 = vpop.permute.xlu0 %819
        %821 = vrot.lane.b32.xlu0 %v597, 18
        %v822 = vpop.permute.xlu0 %821
        %823 = vrot.lane.b32.xlu0 %v600, 18
        %v824 = vpop.permute.xlu0 %823
        %825 = vrot.lane.b32.xlu0 %v603, 18
        %v826 = vpop.permute.xlu0 %825
        %827 = vrot.lane.b32.xlu0 %v606, 18
        %v828 = vpop.permute.xlu0 %827
        %829 = vrot.lane.b32.xlu0 %v609, 18
        %v830 = vpop.permute.xlu0 %829
        %831 = vrot.lane.b32.xlu0 %v612, 18
        %v832 = vpop.permute.xlu0 %831
        %833 = vrot.lane.b32.xlu0 %v615, 18
        %v834 = vpop.permute.xlu0 %833
        %vm835 = vcmp.lt.s32.totalorder %v665, 18
        %v836 = vsel %vm835, %v804, %v820
        %v837 = vsel %vm835, %v806, %v822
        %v838 = vsel %vm835, %v808, %v824
        %v839 = vsel %vm835, %v810, %v826
        %v840 = vsel %vm835, %v812, %v828
        %v841 = vsel %vm835, %v814, %v830
        %v842 = vsel %vm835, %v816, %v832
        %v843 = vsel %vm835, %v818, %v834
        %v844 = vsel %vm835, %v788, %v804
        %v845 = vsel %vm835, %v790, %v806
        %v846 = vsel %vm835, %v792, %v808
        %v847 = vsel %vm835, %v794, %v810
        %v848 = vsel %vm835, %v796, %v812
        %v849 = vsel %vm835, %v798, %v814
        %v850 = vsel %vm835, %v800, %v816
        %v851 = vsel %vm835, %v802, %v818
        %v852 = vsel %vm835, %v820, %v788
        %v853 = vsel %vm835, %v822, %v790
        %v854 = vsel %vm835, %v824, %v792
        %v855 = vsel %vm835, %v826, %v794
        %v856 = vsel %vm835, %v828, %v796
        %v857 = vsel %vm835, %v830, %v798
        %v858 = vsel %vm835, %v832, %v800
        %v859 = vsel %vm835, %v834, %v802
        %v860 = vpack.c.bf16 %v853, %v852
        %v861 = vpack.c.bf16 %v845, %v844
        %v862 = vpack.c.bf16 %v837, %v836
        %v863 = vpack.c.bf16 %v855, %v854
        %v864 = vpack.c.bf16 %v847, %v846
        %v865 = vpack.c.bf16 %v839, %v838
        %v866 = vpack.c.bf16 %v857, %v856
        %v867 = vpack.c.bf16 %v849, %v848
        %v868 = vpack.c.bf16 %v841, %v840
        %v869 = vpack.c.bf16 %v859, %v858
        %v870 = vpack.c.bf16 %v851, %v850
        %v871 = vpack.c.bf16 %v843, %v842
        %v884 = vunpack.c.l.b16 %v860
        %v885 = vunpack.c.l.b16 %v861
        %v886 = vunpack.c.l.b16 %v862
        %v887 = vunpack.c.h.b16 %v860
        %v888 = vunpack.c.h.b16 %v861
        %v889 = vunpack.c.h.b16 %v862
        %v890 = vunpack.c.l.b16 %v863
        %v891 = vunpack.c.l.b16 %v864
        %v892 = vunpack.c.l.b16 %v865
        %v893 = vunpack.c.h.b16 %v863
        %v894 = vunpack.c.h.b16 %v864
        %v895 = vunpack.c.h.b16 %v865
        %v896 = vunpack.c.l.b16 %v866
        %v897 = vunpack.c.l.b16 %v867
        %v898 = vunpack.c.l.b16 %v868
        %v899 = vunpack.c.h.b16 %v866
        %v900 = vunpack.c.h.b16 %v867
        %v901 = vunpack.c.h.b16 %v868
        %v902 = vunpack.c.l.b16 %v869
        %v903 = vunpack.c.l.b16 %v870
        %v904 = vunpack.c.l.b16 %v871
        %v905 = vunpack.c.h.b16 %v869
        %v906 = vunpack.c.h.b16 %v870
        %v907 = vunpack.c.h.b16 %v871
        %v908 = vpack.c.b16 %v885, %v884
        %v909 = vpack.c.b16 %v886, %v886
        %v910 = vpack.c.b16 %v888, %v887
        %v911 = vpack.c.b16 %v889, %v889
        %v912 = vpack.c.b16 %v891, %v890
        %v913 = vpack.c.b16 %v892, %v892
        %v914 = vpack.c.b16 %v894, %v893
        %v915 = vpack.c.b16 %v895, %v895
        %v916 = vpack.c.b16 %v897, %v896
        %v917 = vpack.c.b16 %v898, %v898
        %v918 = vpack.c.b16 %v900, %v899
        %v919 = vpack.c.b16 %v901, %v901
        %v920 = vpack.c.b16 %v903, %v902
        %v921 = vpack.c.b16 %v904, %v904
        %v922 = vpack.c.b16 %v906, %v905
        %v923 = vpack.c.b16 %v907, %v907
        %940 = vst [vmem:[#allocation3 + $0x60] sm:$0xff] %v908
        %941 = vst [vmem:[#allocation3 + $0x68] sm:$0xf] %v909
        %942 = vst [vmem:[#allocation3 + $0x6c] sm:$0xff] %v910
        %943 = vst [vmem:[#allocation3 + $0x74] sm:$0xf] %v911
        %944 = vst [vmem:[#allocation3 + $0x78] sm:$0xff] %v912
        %945 = vst [vmem:[#allocation3 + $0x80] sm:$0xf] %v913
        %946 = vst [vmem:[#allocation3 + $0x84] sm:$0xff] %v914
        %947 = vst [vmem:[#allocation3 + $0x8c] sm:$0xf] %v915
        %948 = vst [vmem:[#allocation3 + $0x90] sm:$0xff] %v916
        %949 = vst [vmem:[#allocation3 + $0x98] sm:$0xf] %v917
        %950 = vst [vmem:[#allocation3 + $0x9c] sm:$0xff] %v918
        %951 = vst [vmem:[#allocation3 + $0xa4] sm:$0xf] %v919
        %952 = vst [vmem:[#allocation3 + $0xa8] sm:$0xff] %v920
        %953 = vst [vmem:[#allocation3 + $0xb0] sm:$0xf] %v921
        %954 = vst [vmem:[#allocation3 + $0xb4] sm:$0xff] %v922
        %955 = vst [vmem:[#allocation3 + $0xbc] sm:$0xf] %v923
        %956 = vrot.lane.b32.xlu0 %v592, 17
        %v957 = vpop.permute.xlu0 %956
        %958 = vrot.lane.b32.xlu0 %v595, 17
        %v959 = vpop.permute.xlu0 %958
        %960 = vrot.lane.b32.xlu0 %v598, 17
        %v961 = vpop.permute.xlu0 %960
        %962 = vrot.lane.b32.xlu0 %v601, 17
        %v963 = vpop.permute.xlu0 %962
        %964 = vrot.lane.b32.xlu0 %v604, 17
        %v965 = vpop.permute.xlu0 %964
        %966 = vrot.lane.b32.xlu0 %v607, 17
        %v967 = vpop.permute.xlu0 %966
        %968 = vrot.lane.b32.xlu0 %v610, 17
        %v969 = vpop.permute.xlu0 %968
        %970 = vrot.lane.b32.xlu0 %v613, 17
        %v971 = vpop.permute.xlu0 %970
        %972 = vrot.lane.b32.xlu0 %v593, 17
        %v973 = vpop.permute.xlu0 %972
        %974 = vrot.lane.b32.xlu0 %v596, 17
        %v975 = vpop.permute.xlu0 %974
        %976 = vrot.lane.b32.xlu0 %v599, 17
        %v977 = vpop.permute.xlu0 %976
        %978 = vrot.lane.b32.xlu0 %v602, 17
        %v979 = vpop.permute.xlu0 %978
        %980 = vrot.lane.b32.xlu0 %v605, 17
        %v981 = vpop.permute.xlu0 %980
        %982 = vrot.lane.b32.xlu0 %v608, 17
        %v983 = vpop.permute.xlu0 %982
        %984 = vrot.lane.b32.xlu0 %v611, 17
        %v985 = vpop.permute.xlu0 %984
        %986 = vrot.lane.b32.xlu0 %v614, 17
        %v987 = vpop.permute.xlu0 %986
        %988 = vrot.lane.b32.xlu0 %v594, 17
        %v989 = vpop.permute.xlu0 %988
        %990 = vrot.lane.b32.xlu0 %v597, 17
        %v991 = vpop.permute.xlu0 %990
        %992 = vrot.lane.b32.xlu0 %v600, 17
        %v993 = vpop.permute.xlu0 %992
        %994 = vrot.lane.b32.xlu0 %v603, 17
        %v995 = vpop.permute.xlu0 %994
        %996 = vrot.lane.b32.xlu0 %v606, 17
        %v997 = vpop.permute.xlu0 %996
        %998 = vrot.lane.b32.xlu0 %v609, 17
        %v999 = vpop.permute.xlu0 %998
        %1000 = vrot.lane.b32.xlu0 %v612, 17
        %v1001 = vpop.permute.xlu0 %1000
        %1002 = vrot.lane.b32.xlu0 %v615, 17
        %v1003 = vpop.permute.xlu0 %1002
        %vm1004 = vcmp.lt.s32.totalorder %v665, 17
        %v1005 = vsel %vm1004, %v973, %v989
        %v1006 = vsel %vm1004, %v975, %v991
        %v1007 = vsel %vm1004, %v977, %v993
        %v1008 = vsel %vm1004, %v979, %v995
        %v1009 = vsel %vm1004, %v981, %v997
        %v1010 = vsel %vm1004, %v983, %v999
        %v1011 = vsel %vm1004, %v985, %v1001
        %v1012 = vsel %vm1004, %v987, %v1003
        %v1013 = vsel %vm1004, %v957, %v973
        %v1014 = vsel %vm1004, %v959, %v975
        %v1015 = vsel %vm1004, %v961, %v977
        %v1016 = vsel %vm1004, %v963, %v979
        %v1017 = vsel %vm1004, %v965, %v981
        %v1018 = vsel %vm1004, %v967, %v983
        %v1019 = vsel %vm1004, %v969, %v985
        %v1020 = vsel %vm1004, %v971, %v987
        %v1021 = vsel %vm1004, %v989, %v957
        %v1022 = vsel %vm1004, %v991, %v959
        %v1023 = vsel %vm1004, %v993, %v961
        %v1024 = vsel %vm1004, %v995, %v963
        %v1025 = vsel %vm1004, %v997, %v965
        %v1026 = vsel %vm1004, %v999, %v967
        %v1027 = vsel %vm1004, %v1001, %v969
        %v1028 = vsel %vm1004, %v1003, %v971
        %v1029 = vpack.c.bf16 %v1022, %v1021
        %v1030 = vpack.c.bf16 %v1014, %v1013
        %v1031 = vpack.c.bf16 %v1006, %v1005
        %v1032 = vpack.c.bf16 %v1024, %v1023
        %v1033 = vpack.c.bf16 %v1016, %v1015
        %v1034 = vpack.c.bf16 %v1008, %v1007
        %v1035 = vpack.c.bf16 %v1026, %v1025
        %v1036 = vpack.c.bf16 %v1018, %v1017
        %v1037 = vpack.c.bf16 %v1010, %v1009
        %v1038 = vpack.c.bf16 %v1028, %v1027
        %v1039 = vpack.c.bf16 %v1020, %v1019
        %v1040 = vpack.c.bf16 %v1012, %v1011
        %v1053 = vunpack.c.l.b16 %v1029
        %v1054 = vunpack.c.l.b16 %v1030
        %v1055 = vunpack.c.l.b16 %v1031
        %v1056 = vunpack.c.h.b16 %v1029
        %v1057 = vunpack.c.h.b16 %v1030
        %v1058 = vunpack.c.h.b16 %v1031
        %v1059 = vunpack.c.l.b16 %v1032
        %v1060 = vunpack.c.l.b16 %v1033
        %v1061 = vunpack.c.l.b16 %v1034
        %v1062 = vunpack.c.h.b16 %v1032
        %v1063 = vunpack.c.h.b16 %v1033
        %v1064 = vunpack.c.h.b16 %v1034
        %v1065 = vunpack.c.l.b16 %v1035
        %v1066 = vunpack.c.l.b16 %v1036
        %v1067 = vunpack.c.l.b16 %v1037
        %v1068 = vunpack.c.h.b16 %v1035
        %v1069 = vunpack.c.h.b16 %v1036
        %v1070 = vunpack.c.h.b16 %v1037
        %v1071 = vunpack.c.l.b16 %v1038
        %v1072 = vunpack.c.l.b16 %v1039
        %v1073 = vunpack.c.l.b16 %v1040
        %v1074 = vunpack.c.h.b16 %v1038
        %v1075 = vunpack.c.h.b16 %v1039
        %v1076 = vunpack.c.h.b16 %v1040
        %v1077 = vpack.c.b16 %v1054, %v1053
        %v1078 = vpack.c.b16 %v1055, %v1055
        %v1079 = vpack.c.b16 %v1057, %v1056
        %v1080 = vpack.c.b16 %v1058, %v1058
        %v1081 = vpack.c.b16 %v1060, %v1059
        %v1082 = vpack.c.b16 %v1061, %v1061
        %v1083 = vpack.c.b16 %v1063, %v1062
        %v1084 = vpack.c.b16 %v1064, %v1064
        %v1085 = vpack.c.b16 %v1066, %v1065
        %v1086 = vpack.c.b16 %v1067, %v1067
        %v1087 = vpack.c.b16 %v1069, %v1068
        %v1088 = vpack.c.b16 %v1070, %v1070
        %v1089 = vpack.c.b16 %v1072, %v1071
        %v1090 = vpack.c.b16 %v1073, %v1073
        %v1091 = vpack.c.b16 %v1075, %v1074
        %v1092 = vpack.c.b16 %v1076, %v1076
        %1109 = vst [vmem:[#allocation3 + $0xc0] sm:$0xff] %v1077
        %1110 = vst [vmem:[#allocation3 + $0xc8] sm:$0xf] %v1078
        %1111 = vst [vmem:[#allocation3 + $0xcc] sm:$0xff] %v1079
        %1112 = vst [vmem:[#allocation3 + $0xd4] sm:$0xf] %v1080
        %1113 = vst [vmem:[#allocation3 + $0xd8] sm:$0xff] %v1081
        %1114 = vst [vmem:[#allocation3 + $0xe0] sm:$0xf] %v1082
        %1115 = vst [vmem:[#allocation3 + $0xe4] sm:$0xff] %v1083
        %1116 = vst [vmem:[#allocation3 + $0xec] sm:$0xf] %v1084
        %1117 = vst [vmem:[#allocation3 + $0xf0] sm:$0xff] %v1085
        %1118 = vst [vmem:[#allocation3 + $0xf8] sm:$0xf] %v1086
        %1119 = vst [vmem:[#allocation3 + $0xfc] sm:$0xff] %v1087
        %1120 = vst [vmem:[#allocation3 + $0x104] sm:$0xf] %v1088
        %1121 = vst [vmem:[#allocation3 + $0x108] sm:$0xff] %v1089
        %1122 = vst [vmem:[#allocation3 + $0x110] sm:$0xf] %v1090
        %1123 = vst [vmem:[#allocation3 + $0x114] sm:$0xff] %v1091
        %1124 = vst [vmem:[#allocation3 + $0x11c] sm:$0xf] %v1092
        %1125 = vrot.lane.b32.xlu0 %v592, 1
        %v1126 = vpop.permute.xlu0 %1125
        %1127 = vrot.lane.b32.xlu0 %v595, 1
        %v1128 = vpop.permute.xlu0 %1127
        %1129 = vrot.lane.b32.xlu0 %v598, 1
        %v1130 = vpop.permute.xlu0 %1129
        %1131 = vrot.lane.b32.xlu0 %v601, 1
        %v1132 = vpop.permute.xlu0 %1131
        %1133 = vrot.lane.b32.xlu0 %v604, 1
        %v1134 = vpop.permute.xlu0 %1133
        %1135 = vrot.lane.b32.xlu0 %v607, 1
        %v1136 = vpop.permute.xlu0 %1135
        %1137 = vrot.lane.b32.xlu0 %v610, 1
        %v1138 = vpop.permute.xlu0 %1137
        %1139 = vrot.lane.b32.xlu0 %v613, 1
        %v1140 = vpop.permute.xlu0 %1139
        %1141 = vrot.lane.b32.xlu0 %v593, 1
        %v1142 = vpop.permute.xlu0 %1141
        %1143 = vrot.lane.b32.xlu0 %v596, 1
        %v1144 = vpop.permute.xlu0 %1143
        %1145 = vrot.lane.b32.xlu0 %v599, 1
        %v1146 = vpop.permute.xlu0 %1145
        %1147 = vrot.lane.b32.xlu0 %v602, 1
        %v1148 = vpop.permute.xlu0 %1147
        %1149 = vrot.lane.b32.xlu0 %v605, 1
        %v1150 = vpop.permute.xlu0 %1149
        %1151 = vrot.lane.b32.xlu0 %v608, 1
        %v1152 = vpop.permute.xlu0 %1151
        %1153 = vrot.lane.b32.xlu0 %v611, 1
        %v1154 = vpop.permute.xlu0 %1153
        %1155 = vrot.lane.b32.xlu0 %v614, 1
        %v1156 = vpop.permute.xlu0 %1155
        %1157 = vrot.lane.b32.xlu0 %v594, 1
        %v1158 = vpop.permute.xlu0 %1157
        %1159 = vrot.lane.b32.xlu0 %v597, 1
        %v1160 = vpop.permute.xlu0 %1159
        %1161 = vrot.lane.b32.xlu0 %v600, 1
        %v1162 = vpop.permute.xlu0 %1161
        %1163 = vrot.lane.b32.xlu0 %v603, 1
        %v1164 = vpop.permute.xlu0 %1163
        %1165 = vrot.lane.b32.xlu0 %v606, 1
        %v1166 = vpop.permute.xlu0 %1165
        %1167 = vrot.lane.b32.xlu0 %v609, 1
        %v1168 = vpop.permute.xlu0 %1167
        %1169 = vrot.lane.b32.xlu0 %v612, 1
        %v1170 = vpop.permute.xlu0 %1169
        %1171 = vrot.lane.b32.xlu0 %v615, 1
        %v1172 = vpop.permute.xlu0 %1171
        %vm1173 = vcmp.lt.s32.totalorder %v665, 1
        %v1174 = vsel %vm1173, %v1142, %v1158
        %v1175 = vsel %vm1173, %v1144, %v1160
        %v1176 = vsel %vm1173, %v1146, %v1162
        %v1177 = vsel %vm1173, %v1148, %v1164
        %v1178 = vsel %vm1173, %v1150, %v1166
        %v1179 = vsel %vm1173, %v1152, %v1168
        %v1180 = vsel %vm1173, %v1154, %v1170
        %v1181 = vsel %vm1173, %v1156, %v1172
        %v1182 = vsel %vm1173, %v1126, %v1142
        %v1183 = vsel %vm1173, %v1128, %v1144
        %v1184 = vsel %vm1173, %v1130, %v1146
        %v1185 = vsel %vm1173, %v1132, %v1148
        %v1186 = vsel %vm1173, %v1134, %v1150
        %v1187 = vsel %vm1173, %v1136, %v1152
        %v1188 = vsel %vm1173, %v1138, %v1154
        %v1189 = vsel %vm1173, %v1140, %v1156
        %v1190 = vsel %vm1173, %v1158, %v1126
        %v1191 = vsel %vm1173, %v1160, %v1128
        %v1192 = vsel %vm1173, %v1162, %v1130
        %v1193 = vsel %vm1173, %v1164, %v1132
        %v1194 = vsel %vm1173, %v1166, %v1134
        %v1195 = vsel %vm1173, %v1168, %v1136
        %v1196 = vsel %vm1173, %v1170, %v1138
        %v1197 = vsel %vm1173, %v1172, %v1140
        %v1198 = vpack.c.bf16 %v1191, %v1190
        %v1199 = vpack.c.bf16 %v1183, %v1182
        %v1200 = vpack.c.bf16 %v1175, %v1174
        %v1201 = vpack.c.bf16 %v1193, %v1192
        %v1202 = vpack.c.bf16 %v1185, %v1184
        %v1203 = vpack.c.bf16 %v1177, %v1176
        %v1204 = vpack.c.bf16 %v1195, %v1194
        %v1205 = vpack.c.bf16 %v1187, %v1186
        %v1206 = vpack.c.bf16 %v1179, %v1178
        %v1207 = vpack.c.bf16 %v1197, %v1196
        %v1208 = vpack.c.bf16 %v1189, %v1188
        %v1209 = vpack.c.bf16 %v1181, %v1180
        %v1222 = vunpack.c.l.b16 %v1198
        %v1223 = vunpack.c.l.b16 %v1199
        %v1224 = vunpack.c.l.b16 %v1200
        %v1225 = vunpack.c.h.b16 %v1198
        %v1226 = vunpack.c.h.b16 %v1199
        %v1227 = vunpack.c.h.b16 %v1200
        %v1228 = vunpack.c.l.b16 %v1201
        %v1229 = vunpack.c.l.b16 %v1202
        %v1230 = vunpack.c.l.b16 %v1203
        %v1231 = vunpack.c.h.b16 %v1201
        %v1232 = vunpack.c.h.b16 %v1202
        %v1233 = vunpack.c.h.b16 %v1203
        %v1234 = vunpack.c.l.b16 %v1204
        %v1235 = vunpack.c.l.b16 %v1205
        %v1236 = vunpack.c.l.b16 %v1206
        %v1237 = vunpack.c.h.b16 %v1204
        %v1238 = vunpack.c.h.b16 %v1205
        %v1239 = vunpack.c.h.b16 %v1206
        %v1240 = vunpack.c.l.b16 %v1207
        %v1241 = vunpack.c.l.b16 %v1208
        %v1242 = vunpack.c.l.b16 %v1209
        %v1243 = vunpack.c.h.b16 %v1207
        %v1244 = vunpack.c.h.b16 %v1208
        %v1245 = vunpack.c.h.b16 %v1209
        %v1246 = vpack.c.b16 %v1223, %v1222
        %v1247 = vpack.c.b16 %v1224, %v1224
        %v1248 = vpack.c.b16 %v1226, %v1225
        %v1249 = vpack.c.b16 %v1227, %v1227
        %v1250 = vpack.c.b16 %v1229, %v1228
        %v1251 = vpack.c.b16 %v1230, %v1230
        %v1252 = vpack.c.b16 %v1232, %v1231
        %v1253 = vpack.c.b16 %v1233, %v1233
        %v1254 = vpack.c.b16 %v1235, %v1234
        %v1255 = vpack.c.b16 %v1236, %v1236
        %v1256 = vpack.c.b16 %v1238, %v1237
        %v1257 = vpack.c.b16 %v1239, %v1239
        %v1258 = vpack.c.b16 %v1241, %v1240
        %v1259 = vpack.c.b16 %v1242, %v1242
        %v1260 = vpack.c.b16 %v1244, %v1243
        %v1261 = vpack.c.b16 %v1245, %v1245
        %1278 = vst [vmem:[#allocation3 + $0x120] sm:$0xff] %v1246
        %1279 = vst [vmem:[#allocation3 + $0x128] sm:$0xf] %v1247
        %1280 = vst [vmem:[#allocation3 + $0x12c] sm:$0xff] %v1248
        %1281 = vst [vmem:[#allocation3 + $0x134] sm:$0xf] %v1249
        %1282 = vst [vmem:[#allocation3 + $0x138] sm:$0xff] %v1250
        %1283 = vst [vmem:[#allocation3 + $0x140] sm:$0xf] %v1251
        %1284 = vst [vmem:[#allocation3 + $0x144] sm:$0xff] %v1252
        %1285 = vst [vmem:[#allocation3 + $0x14c] sm:$0xf] %v1253
        %1286 = vst [vmem:[#allocation3 + $0x150] sm:$0xff] %v1254
        %1287 = vst [vmem:[#allocation3 + $0x158] sm:$0xf] %v1255
        %1288 = vst [vmem:[#allocation3 + $0x15c] sm:$0xff] %v1256
        %1289 = vst [vmem:[#allocation3 + $0x164] sm:$0xf] %v1257
        %1290 = vst [vmem:[#allocation3 + $0x168] sm:$0xff] %v1258
        %1291 = vst [vmem:[#allocation3 + $0x170] sm:$0xf] %v1259
        %1292 = vst [vmem:[#allocation3 + $0x174] sm:$0xff] %v1260
        %1293 = vst [vmem:[#allocation3 + $0x17c] sm:$0xf] %v1261
        %v1294 = vpack.c.bf16 %v595, %v592
        %v1295 = vpack.c.bf16 %v596, %v593
        %v1296 = vpack.c.bf16 %v597, %v594
        %v1297 = vpack.c.bf16 %v601, %v598
        %v1298 = vpack.c.bf16 %v602, %v599
        %v1299 = vpack.c.bf16 %v603, %v600
        %v1300 = vpack.c.bf16 %v607, %v604
        %v1301 = vpack.c.bf16 %v608, %v605
        %v1302 = vpack.c.bf16 %v609, %v606
        %v1303 = vpack.c.bf16 %v613, %v610
        %v1304 = vpack.c.bf16 %v614, %v611
        %v1305 = vpack.c.bf16 %v615, %v612
        %v1318 = vunpack.c.l.b16 %v1294
        %v1319 = vunpack.c.l.b16 %v1295
        %v1320 = vunpack.c.l.b16 %v1296
        %v1321 = vunpack.c.h.b16 %v1294
        %v1322 = vunpack.c.h.b16 %v1295
        %v1323 = vunpack.c.h.b16 %v1296
        %v1324 = vunpack.c.l.b16 %v1297
        %v1325 = vunpack.c.l.b16 %v1298
        %v1326 = vunpack.c.l.b16 %v1299
        %v1327 = vunpack.c.h.b16 %v1297
        %v1328 = vunpack.c.h.b16 %v1298
        %v1329 = vunpack.c.h.b16 %v1299
        %v1330 = vunpack.c.l.b16 %v1300
        %v1331 = vunpack.c.l.b16 %v1301
        %v1332 = vunpack.c.l.b16 %v1302
        %v1333 = vunpack.c.h.b16 %v1300
        %v1334 = vunpack.c.h.b16 %v1301
        %v1335 = vunpack.c.h.b16 %v1302
        %v1336 = vunpack.c.l.b16 %v1303
        %v1337 = vunpack.c.l.b16 %v1304
        %v1338 = vunpack.c.l.b16 %v1305
        %v1339 = vunpack.c.h.b16 %v1303
        %v1340 = vunpack.c.h.b16 %v1304
        %v1341 = vunpack.c.h.b16 %v1305
        %v1342 = vpack.c.b16 %v1319, %v1318
        %v1343 = vpack.c.b16 %v1320, %v1320
        %v1344 = vpack.c.b16 %v1322, %v1321
        %v1345 = vpack.c.b16 %v1323, %v1323
        %v1346 = vpack.c.b16 %v1325, %v1324
        %v1347 = vpack.c.b16 %v1326, %v1326
        %v1348 = vpack.c.b16 %v1328, %v1327
        %v1349 = vpack.c.b16 %v1329, %v1329
        %v1350 = vpack.c.b16 %v1331, %v1330
        %v1351 = vpack.c.b16 %v1332, %v1332
        %v1352 = vpack.c.b16 %v1334, %v1333
        %v1353 = vpack.c.b16 %v1335, %v1335
        %v1354 = vpack.c.b16 %v1337, %v1336
        %v1355 = vpack.c.b16 %v1338, %v1338
        %v1356 = vpack.c.b16 %v1340, %v1339
        %v1357 = vpack.c.b16 %v1341, %v1341
        %1374 = vst [vmem:[#allocation3 + $0x180] sm:$0xff] %v1342
        %1375 = vst [vmem:[#allocation3 + $0x188] sm:$0xf] %v1343
        %1376 = vst [vmem:[#allocation3 + $0x18c] sm:$0xff] %v1344
        %1377 = vst [vmem:[#allocation3 + $0x194] sm:$0xf] %v1345
        %1378 = vst [vmem:[#allocation3 + $0x198] sm:$0xff] %v1346
        %1379 = vst [vmem:[#allocation3 + $0x1a0] sm:$0xf] %v1347
        %1380 = vst [vmem:[#allocation3 + $0x1a4] sm:$0xff] %v1348
        %1381 = vst [vmem:[#allocation3 + $0x1ac] sm:$0xf] %v1349
        %1382 = vst [vmem:[#allocation3 + $0x1b0] sm:$0xff] %v1350
        %1383 = vst [vmem:[#allocation3 + $0x1b8] sm:$0xf] %v1351
        %1384 = vst [vmem:[#allocation3 + $0x1bc] sm:$0xff] %v1352
        %1385 = vst [vmem:[#allocation3 + $0x1c4] sm:$0xf] %v1353
        %1386 = vst [vmem:[#allocation3 + $0x1c8] sm:$0xff] %v1354
        %1387 = vst [vmem:[#allocation3 + $0x1d0] sm:$0xf] %v1355
        %1388 = vst [vmem:[#allocation3 + $0x1d4] sm:$0xff] %v1356
        %1389 = vst [vmem:[#allocation3 + $0x1dc] sm:$0xf] %v1357
        %1390 = vrot.lane.b32.xlu0 %v592, 127
        %v1391 = vpop.permute.xlu0 %1390
        %1392 = vrot.lane.b32.xlu0 %v595, 127
        %v1393 = vpop.permute.xlu0 %1392
        %1394 = vrot.lane.b32.xlu0 %v598, 127
        %v1395 = vpop.permute.xlu0 %1394
        %1396 = vrot.lane.b32.xlu0 %v601, 127
        %v1397 = vpop.permute.xlu0 %1396
        %1398 = vrot.lane.b32.xlu0 %v604, 127
        %v1399 = vpop.permute.xlu0 %1398
        %1400 = vrot.lane.b32.xlu0 %v607, 127
        %v1401 = vpop.permute.xlu0 %1400
        %1402 = vrot.lane.b32.xlu0 %v610, 127
        %v1403 = vpop.permute.xlu0 %1402
        %1404 = vrot.lane.b32.xlu0 %v613, 127
        %v1405 = vpop.permute.xlu0 %1404
        %1406 = vrot.lane.b32.xlu0 %v593, 127
        %v1407 = vpop.permute.xlu0 %1406
        %1408 = vrot.lane.b32.xlu0 %v596, 127
        %v1409 = vpop.permute.xlu0 %1408
        %1410 = vrot.lane.b32.xlu0 %v599, 127
        %v1411 = vpop.permute.xlu0 %1410
        %1412 = vrot.lane.b32.xlu0 %v602, 127
        %v1413 = vpop.permute.xlu0 %1412
        %1414 = vrot.lane.b32.xlu0 %v605, 127
        %v1415 = vpop.permute.xlu0 %1414
        %1416 = vrot.lane.b32.xlu0 %v608, 127
        %v1417 = vpop.permute.xlu0 %1416
        %1418 = vrot.lane.b32.xlu0 %v611, 127
        %v1419 = vpop.permute.xlu0 %1418
        %1420 = vrot.lane.b32.xlu0 %v614, 127
        %v1421 = vpop.permute.xlu0 %1420
        %1422 = vrot.lane.b32.xlu0 %v594, 127
        %v1423 = vpop.permute.xlu0 %1422
        %1424 = vrot.lane.b32.xlu0 %v597, 127
        %v1425 = vpop.permute.xlu0 %1424
        %1426 = vrot.lane.b32.xlu0 %v600, 127
        %v1427 = vpop.permute.xlu0 %1426
        %1428 = vrot.lane.b32.xlu0 %v603, 127
        %v1429 = vpop.permute.xlu0 %1428
        %1430 = vrot.lane.b32.xlu0 %v606, 127
        %v1431 = vpop.permute.xlu0 %1430
        %1432 = vrot.lane.b32.xlu0 %v609, 127
        %v1433 = vpop.permute.xlu0 %1432
        %1434 = vrot.lane.b32.xlu0 %v612, 127
        %v1435 = vpop.permute.xlu0 %1434
        %1436 = vrot.lane.b32.xlu0 %v615, 127
        %v1437 = vpop.permute.xlu0 %1436
        %vm1438 = vcmp.lt.s32.totalorder %v665, 127
        %v1439 = vsel %vm1438, %v1407, %v1423
        %v1440 = vsel %vm1438, %v1409, %v1425
        %v1441 = vsel %vm1438, %v1411, %v1427
        %v1442 = vsel %vm1438, %v1413, %v1429
        %v1443 = vsel %vm1438, %v1415, %v1431
        %v1444 = vsel %vm1438, %v1417, %v1433
        %v1445 = vsel %vm1438, %v1419, %v1435
        %v1446 = vsel %vm1438, %v1421, %v1437
        %v1447 = vsel %vm1438, %v1391, %v1407
        %v1448 = vsel %vm1438, %v1393, %v1409
        %v1449 = vsel %vm1438, %v1395, %v1411
        %v1450 = vsel %vm1438, %v1397, %v1413
        %v1451 = vsel %vm1438, %v1399, %v1415
        %v1452 = vsel %vm1438, %v1401, %v1417
        %v1453 = vsel %vm1438, %v1403, %v1419
        %v1454 = vsel %vm1438, %v1405, %v1421
        %v1455 = vsel %vm1438, %v1423, %v1391
        %v1456 = vsel %vm1438, %v1425, %v1393
        %v1457 = vsel %vm1438, %v1427, %v1395
        %v1458 = vsel %vm1438, %v1429, %v1397
        %v1459 = vsel %vm1438, %v1431, %v1399
        %v1460 = vsel %vm1438, %v1433, %v1401
        %v1461 = vsel %vm1438, %v1435, %v1403
        %v1462 = vsel %vm1438, %v1437, %v1405
        %v1463 = vpack.c.bf16 %v1448, %v1447
        %v1464 = vpack.c.bf16 %v1440, %v1439
        %v1465 = vpack.c.bf16 %v1456, %v1455
        %v1466 = vpack.c.bf16 %v1450, %v1449
        %v1467 = vpack.c.bf16 %v1442, %v1441
        %v1468 = vpack.c.bf16 %v1458, %v1457
        %v1469 = vpack.c.bf16 %v1452, %v1451
        %v1470 = vpack.c.bf16 %v1444, %v1443
        %v1471 = vpack.c.bf16 %v1460, %v1459
        %v1472 = vpack.c.bf16 %v1454, %v1453
        %v1473 = vpack.c.bf16 %v1446, %v1445
        %v1474 = vpack.c.bf16 %v1462, %v1461
        %v1487 = vunpack.c.l.b16 %v1463
        %v1488 = vunpack.c.l.b16 %v1464
        %v1489 = vunpack.c.l.b16 %v1465
        %v1490 = vunpack.c.h.b16 %v1463
        %v1491 = vunpack.c.h.b16 %v1464
        %v1492 = vunpack.c.h.b16 %v1465
        %v1493 = vunpack.c.l.b16 %v1466
        %v1494 = vunpack.c.l.b16 %v1467
        %v1495 = vunpack.c.l.b16 %v1468
        %v1496 = vunpack.c.h.b16 %v1466
        %v1497 = vunpack.c.h.b16 %v1467
        %v1498 = vunpack.c.h.b16 %v1468
        %v1499 = vunpack.c.l.b16 %v1469
        %v1500 = vunpack.c.l.b16 %v1470
        %v1501 = vunpack.c.l.b16 %v1471
        %v1502 = vunpack.c.h.b16 %v1469
        %v1503 = vunpack.c.h.b16 %v1470
        %v1504 = vunpack.c.h.b16 %v1471
        %v1505 = vunpack.c.l.b16 %v1472
        %v1506 = vunpack.c.l.b16 %v1473
        %v1507 = vunpack.c.l.b16 %v1474
        %v1508 = vunpack.c.h.b16 %v1472
        %v1509 = vunpack.c.h.b16 %v1473
        %v1510 = vunpack.c.h.b16 %v1474
        %v1511 = vpack.c.b16 %v1488, %v1487
        %v1512 = vpack.c.b16 %v1489, %v1489
        %v1513 = vpack.c.b16 %v1491, %v1490
        %v1514 = vpack.c.b16 %v1492, %v1492
        %v1515 = vpack.c.b16 %v1494, %v1493
        %v1516 = vpack.c.b16 %v1495, %v1495
        %v1517 = vpack.c.b16 %v1497, %v1496
        %v1518 = vpack.c.b16 %v1498, %v1498
        %v1519 = vpack.c.b16 %v1500, %v1499
        %v1520 = vpack.c.b16 %v1501, %v1501
        %v1521 = vpack.c.b16 %v1503, %v1502
        %v1522 = vpack.c.b16 %v1504, %v1504
        %v1523 = vpack.c.b16 %v1506, %v1505
        %v1524 = vpack.c.b16 %v1507, %v1507
        %v1525 = vpack.c.b16 %v1509, %v1508
        %v1526 = vpack.c.b16 %v1510, %v1510
        %1543 = vst [vmem:[#allocation3 + $0x1e0] sm:$0xff] %v1511
        %1544 = vst [vmem:[#allocation3 + $0x1e8] sm:$0xf] %v1512
        %1545 = vst [vmem:[#allocation3 + $0x1ec] sm:$0xff] %v1513
        %1546 = vst [vmem:[#allocation3 + $0x1f4] sm:$0xf] %v1514
        %1547 = vst [vmem:[#allocation3 + $0x1f8] sm:$0xff] %v1515
        %1548 = vst [vmem:[#allocation3 + $0x200] sm:$0xf] %v1516
        %1549 = vst [vmem:[#allocation3 + $0x204] sm:$0xff] %v1517
        %1550 = vst [vmem:[#allocation3 + $0x20c] sm:$0xf] %v1518
        %1551 = vst [vmem:[#allocation3 + $0x210] sm:$0xff] %v1519
        %1552 = vst [vmem:[#allocation3 + $0x218] sm:$0xf] %v1520
        %1553 = vst [vmem:[#allocation3 + $0x21c] sm:$0xff] %v1521
        %1554 = vst [vmem:[#allocation3 + $0x224] sm:$0xf] %v1522
        %1555 = vst [vmem:[#allocation3 + $0x228] sm:$0xff] %v1523
        %1556 = vst [vmem:[#allocation3 + $0x230] sm:$0xf] %v1524
        %1557 = vst [vmem:[#allocation3 + $0x234] sm:$0xff] %v1525
        %1558 = vst [vmem:[#allocation3 + $0x23c] sm:$0xf] %v1526
        %1559 = vrot.lane.b32.xlu0 %v592, 111
        %v1560 = vpop.permute.xlu0 %1559
        %1561 = vrot.lane.b32.xlu0 %v595, 111
        %v1562 = vpop.permute.xlu0 %1561
        %1563 = vrot.lane.b32.xlu0 %v598, 111
        %v1564 = vpop.permute.xlu0 %1563
        %1565 = vrot.lane.b32.xlu0 %v601, 111
        %v1566 = vpop.permute.xlu0 %1565
        %1567 = vrot.lane.b32.xlu0 %v604, 111
        %v1568 = vpop.permute.xlu0 %1567
        %1569 = vrot.lane.b32.xlu0 %v607, 111
        %v1570 = vpop.permute.xlu0 %1569
        %1571 = vrot.lane.b32.xlu0 %v610, 111
        %v1572 = vpop.permute.xlu0 %1571
        %1573 = vrot.lane.b32.xlu0 %v613, 111
        %v1574 = vpop.permute.xlu0 %1573
        %1575 = vrot.lane.b32.xlu0 %v593, 111
        %v1576 = vpop.permute.xlu0 %1575
        %1577 = vrot.lane.b32.xlu0 %v596, 111
        %v1578 = vpop.permute.xlu0 %1577
        %1579 = vrot.lane.b32.xlu0 %v599, 111
        %v1580 = vpop.permute.xlu0 %1579
        %1581 = vrot.lane.b32.xlu0 %v602, 111
        %v1582 = vpop.permute.xlu0 %1581
        %1583 = vrot.lane.b32.xlu0 %v605, 111
        %v1584 = vpop.permute.xlu0 %1583
        %1585 = vrot.lane.b32.xlu0 %v608, 111
        %v1586 = vpop.permute.xlu0 %1585
        %1587 = vrot.lane.b32.xlu0 %v611, 111
        %v1588 = vpop.permute.xlu0 %1587
        %1589 = vrot.lane.b32.xlu0 %v614, 111
        %v1590 = vpop.permute.xlu0 %1589
        %1591 = vrot.lane.b32.xlu0 %v594, 111
        %v1592 = vpop.permute.xlu0 %1591
        %1593 = vrot.lane.b32.xlu0 %v597, 111
        %v1594 = vpop.permute.xlu0 %1593
        %1595 = vrot.lane.b32.xlu0 %v600, 111
        %v1596 = vpop.permute.xlu0 %1595
        %1597 = vrot.lane.b32.xlu0 %v603, 111
        %v1598 = vpop.permute.xlu0 %1597
        %1599 = vrot.lane.b32.xlu0 %v606, 111
        %v1600 = vpop.permute.xlu0 %1599
        %1601 = vrot.lane.b32.xlu0 %v609, 111
        %v1602 = vpop.permute.xlu0 %1601
        %1603 = vrot.lane.b32.xlu0 %v612, 111
        %v1604 = vpop.permute.xlu0 %1603
        %1605 = vrot.lane.b32.xlu0 %v615, 111
        %v1606 = vpop.permute.xlu0 %1605
        %vm1607 = vcmp.lt.s32.totalorder %v665, 111
        %v1608 = vsel %vm1607, %v1576, %v1592
        %v1609 = vsel %vm1607, %v1578, %v1594
        %v1610 = vsel %vm1607, %v1580, %v1596
        %v1611 = vsel %vm1607, %v1582, %v1598
        %v1612 = vsel %vm1607, %v1584, %v1600
        %v1613 = vsel %vm1607, %v1586, %v1602
        %v1614 = vsel %vm1607, %v1588, %v1604
        %v1615 = vsel %vm1607, %v1590, %v1606
        %v1616 = vsel %vm1607, %v1560, %v1576
        %v1617 = vsel %vm1607, %v1562, %v1578
        %v1618 = vsel %vm1607, %v1564, %v1580
        %v1619 = vsel %vm1607, %v1566, %v1582
        %v1620 = vsel %vm1607, %v1568, %v1584
        %v1621 = vsel %vm1607, %v1570, %v1586
        %v1622 = vsel %vm1607, %v1572, %v1588
        %v1623 = vsel %vm1607, %v1574, %v1590
        %v1624 = vsel %vm1607, %v1592, %v1560
        %v1625 = vsel %vm1607, %v1594, %v1562
        %v1626 = vsel %vm1607, %v1596, %v1564
        %v1627 = vsel %vm1607, %v1598, %v1566
        %v1628 = vsel %vm1607, %v1600, %v1568
        %v1629 = vsel %vm1607, %v1602, %v1570
        %v1630 = vsel %vm1607, %v1604, %v1572
        %v1631 = vsel %vm1607, %v1606, %v1574
        %v1632 = vpack.c.bf16 %v1617, %v1616
        %v1633 = vpack.c.bf16 %v1609, %v1608
        %v1634 = vpack.c.bf16 %v1625, %v1624
        %v1635 = vpack.c.bf16 %v1619, %v1618
        %v1636 = vpack.c.bf16 %v1611, %v1610
        %v1637 = vpack.c.bf16 %v1627, %v1626
        %v1638 = vpack.c.bf16 %v1621, %v1620
        %v1639 = vpack.c.bf16 %v1613, %v1612
        %v1640 = vpack.c.bf16 %v1629, %v1628
        %v1641 = vpack.c.bf16 %v1623, %v1622
        %v1642 = vpack.c.bf16 %v1615, %v1614
        %v1643 = vpack.c.bf16 %v1631, %v1630
        %v1656 = vunpack.c.l.b16 %v1632
        %v1657 = vunpack.c.l.b16 %v1633
        %v1658 = vunpack.c.l.b16 %v1634
        %v1659 = vunpack.c.h.b16 %v1632
        %v1660 = vunpack.c.h.b16 %v1633
        %v1661 = vunpack.c.h.b16 %v1634
        %v1662 = vunpack.c.l.b16 %v1635
        %v1663 = vunpack.c.l.b16 %v1636
        %v1664 = vunpack.c.l.b16 %v1637
        %v1665 = vunpack.c.h.b16 %v1635
        %v1666 = vunpack.c.h.b16 %v1636
        %v1667 = vunpack.c.h.b16 %v1637
        %v1668 = vunpack.c.l.b16 %v1638
        %v1669 = vunpack.c.l.b16 %v1639
        %v1670 = vunpack.c.l.b16 %v1640
        %v1671 = vunpack.c.h.b16 %v1638
        %v1672 = vunpack.c.h.b16 %v1639
        %v1673 = vunpack.c.h.b16 %v1640
        %v1674 = vunpack.c.l.b16 %v1641
        %v1675 = vunpack.c.l.b16 %v1642
        %v1676 = vunpack.c.l.b16 %v1643
        %v1677 = vunpack.c.h.b16 %v1641
        %v1678 = vunpack.c.h.b16 %v1642
        %v1679 = vunpack.c.h.b16 %v1643
        %v1680 = vpack.c.b16 %v1657, %v1656
        %v1681 = vpack.c.b16 %v1658, %v1658
        %v1682 = vpack.c.b16 %v1660, %v1659
        %v1683 = vpack.c.b16 %v1661, %v1661
        %v1684 = vpack.c.b16 %v1663, %v1662
        %v1685 = vpack.c.b16 %v1664, %v1664
        %v1686 = vpack.c.b16 %v1666, %v1665
        %v1687 = vpack.c.b16 %v1667, %v1667
        %v1688 = vpack.c.b16 %v1669, %v1668
        %v1689 = vpack.c.b16 %v1670, %v1670
        %v1690 = vpack.c.b16 %v1672, %v1671
        %v1691 = vpack.c.b16 %v1673, %v1673
        %v1692 = vpack.c.b16 %v1675, %v1674
        %v1693 = vpack.c.b16 %v1676, %v1676
        %v1694 = vpack.c.b16 %v1678, %v1677
        %v1695 = vpack.c.b16 %v1679, %v1679
        %1712 = vst [vmem:[#allocation3 + $0x240] sm:$0xff] %v1680
        %1713 = vst [vmem:[#allocation3 + $0x248] sm:$0xf] %v1681
        %1714 = vst [vmem:[#allocation3 + $0x24c] sm:$0xff] %v1682
        %1715 = vst [vmem:[#allocation3 + $0x254] sm:$0xf] %v1683
        %1716 = vst [vmem:[#allocation3 + $0x258] sm:$0xff] %v1684
        %1717 = vst [vmem:[#allocation3 + $0x260] sm:$0xf] %v1685
        %1718 = vst [vmem:[#allocation3 + $0x264] sm:$0xff] %v1686
        %1719 = vst [vmem:[#allocation3 + $0x26c] sm:$0xf] %v1687
        %1720 = vst [vmem:[#allocation3 + $0x270] sm:$0xff] %v1688
        %1721 = vst [vmem:[#allocation3 + $0x278] sm:$0xf] %v1689
        %1722 = vst [vmem:[#allocation3 + $0x27c] sm:$0xff] %v1690
        %1723 = vst [vmem:[#allocation3 + $0x284] sm:$0xf] %v1691
        %1724 = vst [vmem:[#allocation3 + $0x288] sm:$0xff] %v1692
        %1725 = vst [vmem:[#allocation3 + $0x290] sm:$0xf] %v1693
        %1726 = vst [vmem:[#allocation3 + $0x294] sm:$0xff] %v1694
        %1727 = vst [vmem:[#allocation3 + $0x29c] sm:$0xf] %v1695
        %1728 = vrot.lane.b32.xlu0 %v592, 110
        %v1729 = vpop.permute.xlu0 %1728
        %1730 = vrot.lane.b32.xlu0 %v595, 110
        %v1731 = vpop.permute.xlu0 %1730
        %1732 = vrot.lane.b32.xlu0 %v598, 110
        %v1733 = vpop.permute.xlu0 %1732
        %1734 = vrot.lane.b32.xlu0 %v601, 110
        %v1735 = vpop.permute.xlu0 %1734
        %1736 = vrot.lane.b32.xlu0 %v604, 110
        %v1737 = vpop.permute.xlu0 %1736
        %1738 = vrot.lane.b32.xlu0 %v607, 110
        %v1739 = vpop.permute.xlu0 %1738
        %1740 = vrot.lane.b32.xlu0 %v610, 110
        %v1741 = vpop.permute.xlu0 %1740
        %1742 = vrot.lane.b32.xlu0 %v613, 110
        %v1743 = vpop.permute.xlu0 %1742
        %1744 = vrot.lane.b32.xlu0 %v593, 110
        %v1745 = vpop.permute.xlu0 %1744
        %1746 = vrot.lane.b32.xlu0 %v596, 110
        %v1747 = vpop.permute.xlu0 %1746
        %1748 = vrot.lane.b32.xlu0 %v599, 110
        %v1749 = vpop.permute.xlu0 %1748
        %1750 = vrot.lane.b32.xlu0 %v602, 110
        %v1751 = vpop.permute.xlu0 %1750
        %1752 = vrot.lane.b32.xlu0 %v605, 110
        %v1753 = vpop.permute.xlu0 %1752
        %1754 = vrot.lane.b32.xlu0 %v608, 110
        %v1755 = vpop.permute.xlu0 %1754
        %1756 = vrot.lane.b32.xlu0 %v611, 110
        %v1757 = vpop.permute.xlu0 %1756
        %1758 = vrot.lane.b32.xlu0 %v614, 110
        %v1759 = vpop.permute.xlu0 %1758
        %1760 = vrot.lane.b32.xlu0 %v594, 110
        %v1761 = vpop.permute.xlu0 %1760
        %1762 = vrot.lane.b32.xlu0 %v597, 110
        %v1763 = vpop.permute.xlu0 %1762
        %1764 = vrot.lane.b32.xlu0 %v600, 110
        %v1765 = vpop.permute.xlu0 %1764
        %1766 = vrot.lane.b32.xlu0 %v603, 110
        %v1767 = vpop.permute.xlu0 %1766
        %1768 = vrot.lane.b32.xlu0 %v606, 110
        %v1769 = vpop.permute.xlu0 %1768
        %1770 = vrot.lane.b32.xlu0 %v609, 110
        %v1771 = vpop.permute.xlu0 %1770
        %1772 = vrot.lane.b32.xlu0 %v612, 110
        %v1773 = vpop.permute.xlu0 %1772
        %1774 = vrot.lane.b32.xlu0 %v615, 110
        %v1775 = vpop.permute.xlu0 %1774
        %vm1776 = vcmp.lt.s32.totalorder %v665, 110
        %v1777 = vsel %vm1776, %v1745, %v1761
        %v1778 = vsel %vm1776, %v1747, %v1763
        %v1779 = vsel %vm1776, %v1749, %v1765
        %v1780 = vsel %vm1776, %v1751, %v1767
        %v1781 = vsel %vm1776, %v1753, %v1769
        %v1782 = vsel %vm1776, %v1755, %v1771
        %v1783 = vsel %vm1776, %v1757, %v1773
        %v1784 = vsel %vm1776, %v1759, %v1775
        %v1785 = vsel %vm1776, %v1729, %v1745
        %v1786 = vsel %vm1776, %v1731, %v1747
        %v1787 = vsel %vm1776, %v1733, %v1749
        %v1788 = vsel %vm1776, %v1735, %v1751
        %v1789 = vsel %vm1776, %v1737, %v1753
        %v1790 = vsel %vm1776, %v1739, %v1755
        %v1791 = vsel %vm1776, %v1741, %v1757
        %v1792 = vsel %vm1776, %v1743, %v1759
        %v1793 = vsel %vm1776, %v1761, %v1729
        %v1794 = vsel %vm1776, %v1763, %v1731
        %v1795 = vsel %vm1776, %v1765, %v1733
        %v1796 = vsel %vm1776, %v1767, %v1735
        %v1797 = vsel %vm1776, %v1769, %v1737
        %v1798 = vsel %vm1776, %v1771, %v1739
        %v1799 = vsel %vm1776, %v1773, %v1741
        %v1800 = vsel %vm1776, %v1775, %v1743
        %v1801 = vpack.c.bf16 %v1786, %v1785
        %v1802 = vpack.c.bf16 %v1778, %v1777
        %v1803 = vpack.c.bf16 %v1794, %v1793
        %v1804 = vpack.c.bf16 %v1788, %v1787
        %v1805 = vpack.c.bf16 %v1780, %v1779
        %v1806 = vpack.c.bf16 %v1796, %v1795
        %v1807 = vpack.c.bf16 %v1790, %v1789
        %v1808 = vpack.c.bf16 %v1782, %v1781
        %v1809 = vpack.c.bf16 %v1798, %v1797
        %v1810 = vpack.c.bf16 %v1792, %v1791
        %v1811 = vpack.c.bf16 %v1784, %v1783
        %v1812 = vpack.c.bf16 %v1800, %v1799
        %v1825 = vunpack.c.l.b16 %v1801
        %v1826 = vunpack.c.l.b16 %v1802
        %v1827 = vunpack.c.l.b16 %v1803
        %v1828 = vunpack.c.h.b16 %v1801
        %v1829 = vunpack.c.h.b16 %v1802
        %v1830 = vunpack.c.h.b16 %v1803
        %v1831 = vunpack.c.l.b16 %v1804
        %v1832 = vunpack.c.l.b16 %v1805
        %v1833 = vunpack.c.l.b16 %v1806
        %v1834 = vunpack.c.h.b16 %v1804
        %v1835 = vunpack.c.h.b16 %v1805
        %v1836 = vunpack.c.h.b16 %v1806
        %v1837 = vunpack.c.l.b16 %v1807
        %v1838 = vunpack.c.l.b16 %v1808
        %v1839 = vunpack.c.l.b16 %v1809
        %v1840 = vunpack.c.h.b16 %v1807
        %v1841 = vunpack.c.h.b16 %v1808
        %v1842 = vunpack.c.h.b16 %v1809
        %v1843 = vunpack.c.l.b16 %v1810
        %v1844 = vunpack.c.l.b16 %v1811
        %v1845 = vunpack.c.l.b16 %v1812
        %v1846 = vunpack.c.h.b16 %v1810
        %v1847 = vunpack.c.h.b16 %v1811
        %v1848 = vunpack.c.h.b16 %v1812
        %v1849 = vpack.c.b16 %v1826, %v1825
        %v1850 = vpack.c.b16 %v1827, %v1827
        %v1851 = vpack.c.b16 %v1829, %v1828
        %v1852 = vpack.c.b16 %v1830, %v1830
        %v1853 = vpack.c.b16 %v1832, %v1831
        %v1854 = vpack.c.b16 %v1833, %v1833
        %v1855 = vpack.c.b16 %v1835, %v1834
        %v1856 = vpack.c.b16 %v1836, %v1836
        %v1857 = vpack.c.b16 %v1838, %v1837
        %v1858 = vpack.c.b16 %v1839, %v1839
        %v1859 = vpack.c.b16 %v1841, %v1840
        %v1860 = vpack.c.b16 %v1842, %v1842
        %v1861 = vpack.c.b16 %v1844, %v1843
        %v1862 = vpack.c.b16 %v1845, %v1845
        %v1863 = vpack.c.b16 %v1847, %v1846
        %v1864 = vpack.c.b16 %v1848, %v1848
        %1881 = vst [vmem:[#allocation3 + $0x2a0] sm:$0xff] %v1849
        %1882 = vst [vmem:[#allocation3 + $0x2a8] sm:$0xf] %v1850
        %1883 = vst [vmem:[#allocation3 + $0x2ac] sm:$0xff] %v1851
        %1884 = vst [vmem:[#allocation3 + $0x2b4] sm:$0xf] %v1852
        %1885 = vst [vmem:[#allocation3 + $0x2b8] sm:$0xff] %v1853
        %1886 = vst [vmem:[#allocation3 + $0x2c0] sm:$0xf] %v1854
        %1887 = vst [vmem:[#allocation3 + $0x2c4] sm:$0xff] %v1855
        %1888 = vst [vmem:[#allocation3 + $0x2cc] sm:$0xf] %v1856
        %1889 = vst [vmem:[#allocation3 + $0x2d0] sm:$0xff] %v1857
        %1890 = vst [vmem:[#allocation3 + $0x2d8] sm:$0xf] %v1858
        %1891 = vst [vmem:[#allocation3 + $0x2dc] sm:$0xff] %v1859
        %1892 = vst [vmem:[#allocation3 + $0x2e4] sm:$0xf] %v1860
        %1893 = vst [vmem:[#allocation3 + $0x2e8] sm:$0xff] %v1861
        %1894 = vst [vmem:[#allocation3 + $0x2f0] sm:$0xf] %v1862
        %1895 = vst [vmem:[#allocation3 + $0x2f4] sm:$0xff] %v1863
        %1896 = vst [vmem:[#allocation3 + $0x2fc] sm:$0xf] %v1864
        %1897 = vrot.lane.b32.xlu0 %v592, 109
        %v1898 = vpop.permute.xlu0 %1897
        %1899 = vrot.lane.b32.xlu0 %v595, 109
        %v1900 = vpop.permute.xlu0 %1899
        %1901 = vrot.lane.b32.xlu0 %v598, 109
        %v1902 = vpop.permute.xlu0 %1901
        %1903 = vrot.lane.b32.xlu0 %v601, 109
        %v1904 = vpop.permute.xlu0 %1903
        %1905 = vrot.lane.b32.xlu0 %v604, 109
        %v1906 = vpop.permute.xlu0 %1905
        %1907 = vrot.lane.b32.xlu0 %v607, 109
        %v1908 = vpop.permute.xlu0 %1907
        %1909 = vrot.lane.b32.xlu0 %v610, 109
        %v1910 = vpop.permute.xlu0 %1909
        %1911 = vrot.lane.b32.xlu0 %v613, 109
        %v1912 = vpop.permute.xlu0 %1911
        %1913 = vrot.lane.b32.xlu0 %v593, 109
        %v1914 = vpop.permute.xlu0 %1913
        %1915 = vrot.lane.b32.xlu0 %v596, 109
        %v1916 = vpop.permute.xlu0 %1915
        %1917 = vrot.lane.b32.xlu0 %v599, 109
        %v1918 = vpop.permute.xlu0 %1917
        %1919 = vrot.lane.b32.xlu0 %v602, 109
        %v1920 = vpop.permute.xlu0 %1919
        %1921 = vrot.lane.b32.xlu0 %v605, 109
        %v1922 = vpop.permute.xlu0 %1921
        %1923 = vrot.lane.b32.xlu0 %v608, 109
        %v1924 = vpop.permute.xlu0 %1923
        %1925 = vrot.lane.b32.xlu0 %v611, 109
        %v1926 = vpop.permute.xlu0 %1925
        %1927 = vrot.lane.b32.xlu0 %v614, 109
        %v1928 = vpop.permute.xlu0 %1927
        %1929 = vrot.lane.b32.xlu0 %v594, 109
        %v1930 = vpop.permute.xlu0 %1929
        %1931 = vrot.lane.b32.xlu0 %v597, 109
        %v1932 = vpop.permute.xlu0 %1931
        %1933 = vrot.lane.b32.xlu0 %v600, 109
        %v1934 = vpop.permute.xlu0 %1933
        %1935 = vrot.lane.b32.xlu0 %v603, 109
        %v1936 = vpop.permute.xlu0 %1935
        %1937 = vrot.lane.b32.xlu0 %v606, 109
        %v1938 = vpop.permute.xlu0 %1937
        %1939 = vrot.lane.b32.xlu0 %v609, 109
        %v1940 = vpop.permute.xlu0 %1939
        %1941 = vrot.lane.b32.xlu0 %v612, 109
        %v1942 = vpop.permute.xlu0 %1941
        %1943 = vrot.lane.b32.xlu0 %v615, 109
        %v1944 = vpop.permute.xlu0 %1943
        %vm1945 = vcmp.lt.s32.totalorder %v665, 109
        %v1946 = vsel %vm1945, %v1914, %v1930
        %v1947 = vsel %vm1945, %v1916, %v1932
        %v1948 = vsel %vm1945, %v1918, %v1934
        %v1949 = vsel %vm1945, %v1920, %v1936
        %v1950 = vsel %vm1945, %v1922, %v1938
        %v1951 = vsel %vm1945, %v1924, %v1940
        %v1952 = vsel %vm1945, %v1926, %v1942
        %v1953 = vsel %vm1945, %v1928, %v1944
        %v1954 = vsel %vm1945, %v1898, %v1914
        %v1955 = vsel %vm1945, %v1900, %v1916
        %v1956 = vsel %vm1945, %v1902, %v1918
        %v1957 = vsel %vm1945, %v1904, %v1920
        %v1958 = vsel %vm1945, %v1906, %v1922
        %v1959 = vsel %vm1945, %v1908, %v1924
        %v1960 = vsel %vm1945, %v1910, %v1926
        %v1961 = vsel %vm1945, %v1912, %v1928
        %v1962 = vsel %vm1945, %v1930, %v1898
        %v1963 = vsel %vm1945, %v1932, %v1900
        %v1964 = vsel %vm1945, %v1934, %v1902
        %v1965 = vsel %vm1945, %v1936, %v1904
        %v1966 = vsel %vm1945, %v1938, %v1906
        %v1967 = vsel %vm1945, %v1940, %v1908
        %v1968 = vsel %vm1945, %v1942, %v1910
        %v1969 = vsel %vm1945, %v1944, %v1912
        %v1970 = vpack.c.bf16 %v1955, %v1954
        %v1971 = vpack.c.bf16 %v1947, %v1946
        %v1972 = vpack.c.bf16 %v1963, %v1962
        %v1973 = vpack.c.bf16 %v1957, %v1956
        %v1974 = vpack.c.bf16 %v1949, %v1948
        %v1975 = vpack.c.bf16 %v1965, %v1964
        %v1976 = vpack.c.bf16 %v1959, %v1958
        %v1977 = vpack.c.bf16 %v1951, %v1950
        %v1978 = vpack.c.bf16 %v1967, %v1966
        %v1979 = vpack.c.bf16 %v1961, %v1960
        %v1980 = vpack.c.bf16 %v1953, %v1952
        %v1981 = vpack.c.bf16 %v1969, %v1968
        %v1994 = vunpack.c.l.b16 %v1970
        %v1995 = vunpack.c.l.b16 %v1971
        %v1996 = vunpack.c.l.b16 %v1972
        %v1997 = vunpack.c.h.b16 %v1970
        %v1998 = vunpack.c.h.b16 %v1971
        %v1999 = vunpack.c.h.b16 %v1972
        %v2000 = vunpack.c.l.b16 %v1973
        %v2001 = vunpack.c.l.b16 %v1974
        %v2002 = vunpack.c.l.b16 %v1975
        %v2003 = vunpack.c.h.b16 %v1973
        %v2004 = vunpack.c.h.b16 %v1974
        %v2005 = vunpack.c.h.b16 %v1975
        %v2006 = vunpack.c.l.b16 %v1976
        %v2007 = vunpack.c.l.b16 %v1977
        %v2008 = vunpack.c.l.b16 %v1978
        %v2009 = vunpack.c.h.b16 %v1976
        %v2010 = vunpack.c.h.b16 %v1977
        %v2011 = vunpack.c.h.b16 %v1978
        %v2012 = vunpack.c.l.b16 %v1979
        %v2013 = vunpack.c.l.b16 %v1980
        %v2014 = vunpack.c.l.b16 %v1981
        %v2015 = vunpack.c.h.b16 %v1979
        %v2016 = vunpack.c.h.b16 %v1980
        %v2017 = vunpack.c.h.b16 %v1981
        %v2018 = vpack.c.b16 %v1995, %v1994
        %v2019 = vpack.c.b16 %v1996, %v1996
        %v2020 = vpack.c.b16 %v1998, %v1997
        %v2021 = vpack.c.b16 %v1999, %v1999
        %v2022 = vpack.c.b16 %v2001, %v2000
        %v2023 = vpack.c.b16 %v2002, %v2002
        %v2024 = vpack.c.b16 %v2004, %v2003
        %v2025 = vpack.c.b16 %v2005, %v2005
        %v2026 = vpack.c.b16 %v2007, %v2006
        %v2027 = vpack.c.b16 %v2008, %v2008
        %v2028 = vpack.c.b16 %v2010, %v2009
        %v2029 = vpack.c.b16 %v2011, %v2011
        %v2030 = vpack.c.b16 %v2013, %v2012
        %v2031 = vpack.c.b16 %v2014, %v2014
        %v2032 = vpack.c.b16 %v2016, %v2015
        %v2033 = vpack.c.b16 %v2017, %v2017
        %2050 = vst [vmem:[#allocation3 + $0x300] sm:$0xff] %v2018
        %2051 = vst [vmem:[#allocation3 + $0x308] sm:$0xf] %v2019
        %2052 = vst [vmem:[#allocation3 + $0x30c] sm:$0xff] %v2020
        %2053 = vst [vmem:[#allocation3 + $0x314] sm:$0xf] %v2021
        %2054 = vst [vmem:[#allocation3 + $0x318] sm:$0xff] %v2022
        %2055 = vst [vmem:[#allocation3 + $0x320] sm:$0xf] %v2023
        %2056 = vst [vmem:[#allocation3 + $0x324] sm:$0xff] %v2024
        %2057 = vst [vmem:[#allocation3 + $0x32c] sm:$0xf] %v2025
        %2058 = vst [vmem:[#allocation3 + $0x330] sm:$0xff] %v2026
        %2059 = vst [vmem:[#allocation3 + $0x338] sm:$0xf] %v2027
        %2060 = vst [vmem:[#allocation3 + $0x33c] sm:$0xff] %v2028
        %2061 = vst [vmem:[#allocation3 + $0x344] sm:$0xf] %v2029
        %2062 = vst [vmem:[#allocation3 + $0x348] sm:$0xff] %v2030
        %2063 = vst [vmem:[#allocation3 + $0x350] sm:$0xf] %v2031
        %2064 = vst [vmem:[#allocation3 + $0x354] sm:$0xff] %v2032
        %2065 = vst [vmem:[#allocation3 + $0x35c] sm:$0xf] %v2033
        %v2066 = vld [vmem:[%s2] sm:$0xff]
        %v2067 = vld [vmem:[%s2 + $0x8] sm:$0xff]
        %v2068 = vld [vmem:[%s2 + $0x10] sm:$0xf]
        %v2069 = vld [vmem:[%s2 + $0x14] sm:$0xff]
        %v2070 = vld [vmem:[%s2 + $0x1c] sm:$0xff]
        %v2071 = vld [vmem:[%s2 + $0x24] sm:$0xf]
        %v2072 = vld [vmem:[%s2 + $0x28] sm:$0xff]
        %v2073 = vld [vmem:[%s2 + $0x30] sm:$0xff]
        %v2074 = vld [vmem:[%s2 + $0x38] sm:$0xf]
        %v2075 = vld [vmem:[%s2 + $0x3c] sm:$0xff]
        %v2076 = vld [vmem:[%s2 + $0x44] sm:$0xff]
        %v2077 = vld [vmem:[%s2 + $0x4c] sm:$0xf]
        %v2078 = vld [vmem:[%s2 + $0x50] sm:$0xff]
        %v2079 = vld [vmem:[%s2 + $0x58] sm:$0xff]
        %v2080 = vld [vmem:[%s2 + $0x60] sm:$0xf]
        %v2081 = vld [vmem:[%s2 + $0x64] sm:$0xff]
        %v2082 = vld [vmem:[%s2 + $0x6c] sm:$0xff]
        %v2083 = vld [vmem:[%s2 + $0x74] sm:$0xf]
        %v2084 = vld [vmem:[%s2 + $0x78] sm:$0xff]
        %v2085 = vld [vmem:[%s2 + $0x80] sm:$0xff]
        %v2086 = vld [vmem:[%s2 + $0x88] sm:$0xf]
        %v2087 = vld [vmem:[%s2 + $0x8c] sm:$0xff]
        %v2088 = vld [vmem:[%s2 + $0x94] sm:$0xff]
        %v2089 = vld [vmem:[%s2 + $0x9c] sm:$0xf]
        %v2090 = vld [vmem:[#allocation3] sm:$0xff]
        %v2091 = vld [vmem:[#allocation3 + $0x8] sm:$0xf]
        %v2092 = vld [vmem:[#allocation3 + $0xc] sm:$0xff]
        %v2093 = vld [vmem:[#allocation3 + $0x14] sm:$0xf]
        %v2094 = vld [vmem:[#allocation3 + $0x18] sm:$0xff]
        %v2095 = vld [vmem:[#allocation3 + $0x20] sm:$0xf]
        %v2096 = vld [vmem:[#allocation3 + $0x24] sm:$0xff]
        %v2097 = vld [vmem:[#allocation3 + $0x2c] sm:$0xf]
        %v2098 = vld [vmem:[#allocation3 + $0x30] sm:$0xff]
        %v2099 = vld [vmem:[#allocation3 + $0x38] sm:$0xf]
        %v2100 = vld [vmem:[#allocation3 + $0x3c] sm:$0xff]
        %v2101 = vld [vmem:[#allocation3 + $0x44] sm:$0xf]
        %v2102 = vld [vmem:[#allocation3 + $0x48] sm:$0xff]
        %v2103 = vld [vmem:[#allocation3 + $0x50] sm:$0xf]
        %v2104 = vld [vmem:[#allocation3 + $0x54] sm:$0xff]
        %v2105 = vld [vmem:[#allocation3 + $0x5c] sm:$0xf]
        %v2106 = vld [vmem:[#allocation3 + $0x60] sm:$0xff]
        %v2107 = vld [vmem:[#allocation3 + $0x68] sm:$0xf]
        %v2108 = vld [vmem:[#allocation3 + $0x6c] sm:$0xff]
        %v2109 = vld [vmem:[#allocation3 + $0x74] sm:$0xf]
        %v2110 = vld [vmem:[#allocation3 + $0x78] sm:$0xff]
        %v2111 = vld [vmem:[#allocation3 + $0x80] sm:$0xf]
        %v2112 = vld [vmem:[#allocation3 + $0x84] sm:$0xff]
        %v2113 = vld [vmem:[#allocation3 + $0x8c] sm:$0xf]
        %v2114 = vld [vmem:[#allocation3 + $0x90] sm:$0xff]
        %v2115 = vld [vmem:[#allocation3 + $0x98] sm:$0xf]
        %v2116 = vld [vmem:[#allocation3 + $0x9c] sm:$0xff]
        %v2117 = vld [vmem:[#allocation3 + $0xa4] sm:$0xf]
        %v2118 = vld [vmem:[#allocation3 + $0xa8] sm:$0xff]
        %v2119 = vld [vmem:[#allocation3 + $0xb0] sm:$0xf]
        %v2120 = vld [vmem:[#allocation3 + $0xb4] sm:$0xff]
        %v2121 = vld [vmem:[#allocation3 + $0xbc] sm:$0xf]
        %v2122 = vld [vmem:[#allocation3 + $0xc0] sm:$0xff]
        %v2123 = vld [vmem:[#allocation3 + $0xc8] sm:$0xf]
        %v2124 = vld [vmem:[#allocation3 + $0xcc] sm:$0xff]
        %v2125 = vld [vmem:[#allocation3 + $0xd4] sm:$0xf]
        %v2126 = vld [vmem:[#allocation3 + $0xd8] sm:$0xff]
        %v2127 = vld [vmem:[#allocation3 + $0xe0] sm:$0xf]
        %v2128 = vld [vmem:[#allocation3 + $0xe4] sm:$0xff]
        %v2129 = vld [vmem:[#allocation3 + $0xec] sm:$0xf]
        %v2130 = vld [vmem:[#allocation3 + $0xf0] sm:$0xff]
        %v2131 = vld [vmem:[#allocation3 + $0xf8] sm:$0xf]
        %v2132 = vld [vmem:[#allocation3 + $0xfc] sm:$0xff]
        %v2133 = vld [vmem:[#allocation3 + $0x104] sm:$0xf]
        %v2134 = vld [vmem:[#allocation3 + $0x108] sm:$0xff]
        %v2135 = vld [vmem:[#allocation3 + $0x110] sm:$0xf]
        %v2136 = vld [vmem:[#allocation3 + $0x114] sm:$0xff]
        %v2137 = vld [vmem:[#allocation3 + $0x11c] sm:$0xf]
        %v2138 = vld [vmem:[#allocation3 + $0x120] sm:$0xff]
        %v2139 = vld [vmem:[#allocation3 + $0x128] sm:$0xf]
        %v2140 = vld [vmem:[#allocation3 + $0x12c] sm:$0xff]
        %v2141 = vld [vmem:[#allocation3 + $0x134] sm:$0xf]
        %v2142 = vld [vmem:[#allocation3 + $0x138] sm:$0xff]
        %v2143 = vld [vmem:[#allocation3 + $0x140] sm:$0xf]
        %v2144 = vld [vmem:[#allocation3 + $0x144] sm:$0xff]
        %v2145 = vld [vmem:[#allocation3 + $0x14c] sm:$0xf]
        %v2146 = vld [vmem:[#allocation3 + $0x150] sm:$0xff]
        %v2147 = vld [vmem:[#allocation3 + $0x158] sm:$0xf]
        %v2148 = vld [vmem:[#allocation3 + $0x15c] sm:$0xff]
        %v2149 = vld [vmem:[#allocation3 + $0x164] sm:$0xf]
        %v2150 = vld [vmem:[#allocation3 + $0x168] sm:$0xff]
        %v2151 = vld [vmem:[#allocation3 + $0x170] sm:$0xf]
        %v2152 = vld [vmem:[#allocation3 + $0x174] sm:$0xff]
        %v2153 = vld [vmem:[#allocation3 + $0x17c] sm:$0xf]
        %v2154 = vld [vmem:[#allocation3 + $0x180] sm:$0xff]
        %v2155 = vld [vmem:[#allocation3 + $0x188] sm:$0xf]
        %v2156 = vld [vmem:[#allocation3 + $0x18c] sm:$0xff]
        %v2157 = vld [vmem:[#allocation3 + $0x194] sm:$0xf]
        %v2158 = vld [vmem:[#allocation3 + $0x198] sm:$0xff]
        %v2159 = vld [vmem:[#allocation3 + $0x1a0] sm:$0xf]
        %v2160 = vld [vmem:[#allocation3 + $0x1a4] sm:$0xff]
        %v2161 = vld [vmem:[#allocation3 + $0x1ac] sm:$0xf]
        %v2162 = vld [vmem:[#allocation3 + $0x1b0] sm:$0xff]
        %v2163 = vld [vmem:[#allocation3 + $0x1b8] sm:$0xf]
        %v2164 = vld [vmem:[#allocation3 + $0x1bc] sm:$0xff]
        %v2165 = vld [vmem:[#allocation3 + $0x1c4] sm:$0xf]
        %v2166 = vld [vmem:[#allocation3 + $0x1c8] sm:$0xff]
        %v2167 = vld [vmem:[#allocation3 + $0x1d0] sm:$0xf]
        %v2168 = vld [vmem:[#allocation3 + $0x1d4] sm:$0xff]
        %v2169 = vld [vmem:[#allocation3 + $0x1dc] sm:$0xf]
        %v2170 = vld [vmem:[#allocation3 + $0x1e0] sm:$0xff]
        %v2171 = vld [vmem:[#allocation3 + $0x1e8] sm:$0xf]
        %v2172 = vld [vmem:[#allocation3 + $0x1ec] sm:$0xff]
        %v2173 = vld [vmem:[#allocation3 + $0x1f4] sm:$0xf]
        %v2174 = vld [vmem:[#allocation3 + $0x1f8] sm:$0xff]
        %v2175 = vld [vmem:[#allocation3 + $0x200] sm:$0xf]
        %v2176 = vld [vmem:[#allocation3 + $0x204] sm:$0xff]
        %v2177 = vld [vmem:[#allocation3 + $0x20c] sm:$0xf]
        %v2178 = vld [vmem:[#allocation3 + $0x210] sm:$0xff]
        %v2179 = vld [vmem:[#allocation3 + $0x218] sm:$0xf]
        %v2180 = vld [vmem:[#allocation3 + $0x21c] sm:$0xff]
        %v2181 = vld [vmem:[#allocation3 + $0x224] sm:$0xf]
        %v2182 = vld [vmem:[#allocation3 + $0x228] sm:$0xff]
        %v2183 = vld [vmem:[#allocation3 + $0x230] sm:$0xf]
        %v2184 = vld [vmem:[#allocation3 + $0x234] sm:$0xff]
        %v2185 = vld [vmem:[#allocation3 + $0x23c] sm:$0xf]
        %v2186 = vld [vmem:[#allocation3 + $0x240] sm:$0xff]
        %v2187 = vld [vmem:[#allocation3 + $0x248] sm:$0xf]
        %v2188 = vld [vmem:[#allocation3 + $0x24c] sm:$0xff]
        %v2189 = vld [vmem:[#allocation3 + $0x254] sm:$0xf]
        %v2190 = vld [vmem:[#allocation3 + $0x258] sm:$0xff]
        %v2191 = vld [vmem:[#allocation3 + $0x260] sm:$0xf]
        %v2192 = vld [vmem:[#allocation3 + $0x264] sm:$0xff]
        %v2193 = vld [vmem:[#allocation3 + $0x26c] sm:$0xf]
        %v2194 = vld [vmem:[#allocation3 + $0x270] sm:$0xff]
        %v2195 = vld [vmem:[#allocation3 + $0x278] sm:$0xf]
        %v2196 = vld [vmem:[#allocation3 + $0x27c] sm:$0xff]
        %v2197 = vld [vmem:[#allocation3 + $0x284] sm:$0xf]
        %v2198 = vld [vmem:[#allocation3 + $0x288] sm:$0xff]
        %v2199 = vld [vmem:[#allocation3 + $0x290] sm:$0xf]
        %v2200 = vld [vmem:[#allocation3 + $0x294] sm:$0xff]
        %v2201 = vld [vmem:[#allocation3 + $0x29c] sm:$0xf]
        %v2202 = vld [vmem:[#allocation3 + $0x2a0] sm:$0xff]
        %v2203 = vld [vmem:[#allocation3 + $0x2a8] sm:$0xf]
        %v2204 = vld [vmem:[#allocation3 + $0x2ac] sm:$0xff]
        %v2205 = vld [vmem:[#allocation3 + $0x2b4] sm:$0xf]
        %v2206 = vld [vmem:[#allocation3 + $0x2b8] sm:$0xff]
        %v2207 = vld [vmem:[#allocation3 + $0x2c0] sm:$0xf]
        %v2208 = vld [vmem:[#allocation3 + $0x2c4] sm:$0xff]
        %v2209 = vld [vmem:[#allocation3 + $0x2cc] sm:$0xf]
        %v2210 = vld [vmem:[#allocation3 + $0x2d0] sm:$0xff]
        %v2211 = vld [vmem:[#allocation3 + $0x2d8] sm:$0xf]
        %v2212 = vld [vmem:[#allocation3 + $0x2dc] sm:$0xff]
        %v2213 = vld [vmem:[#allocation3 + $0x2e4] sm:$0xf]
        %v2214 = vld [vmem:[#allocation3 + $0x2e8] sm:$0xff]
        %v2215 = vld [vmem:[#allocation3 + $0x2f0] sm:$0xf]
        %v2216 = vld [vmem:[#allocation3 + $0x2f4] sm:$0xff]
        %v2217 = vld [vmem:[#allocation3 + $0x2fc] sm:$0xf]
        %v2218 = vld [vmem:[#allocation3 + $0x300] sm:$0xff]
        %v2219 = vld [vmem:[#allocation3 + $0x308] sm:$0xf]
        %v2220 = vld [vmem:[#allocation3 + $0x30c] sm:$0xff]
        %v2221 = vld [vmem:[#allocation3 + $0x314] sm:$0xf]
        %v2222 = vld [vmem:[#allocation3 + $0x318] sm:$0xff]
        %v2223 = vld [vmem:[#allocation3 + $0x320] sm:$0xf]
        %v2224 = vld [vmem:[#allocation3 + $0x324] sm:$0xff]
        %v2225 = vld [vmem:[#allocation3 + $0x32c] sm:$0xf]
        %v2226 = vld [vmem:[#allocation3 + $0x330] sm:$0xff]
        %v2227 = vld [vmem:[#allocation3 + $0x338] sm:$0xf]
        %v2228 = vld [vmem:[#allocation3 + $0x33c] sm:$0xff]
        %v2229 = vld [vmem:[#allocation3 + $0x344] sm:$0xf]
        %v2230 = vld [vmem:[#allocation3 + $0x348] sm:$0xff]
        %v2231 = vld [vmem:[#allocation3 + $0x350] sm:$0xf]
        %v2232 = vld [vmem:[#allocation3 + $0x354] sm:$0xff]
        %v2233 = vld [vmem:[#allocation3 + $0x35c] sm:$0xf]
        %v2234 = vld [vmem:[%s3] sm:$0xff]
        %v2235 = vld [vmem:[%s3 + $0x8] sm:$0xff]
        %v2236 = vld [vmem:[%s3 + $0x10] sm:$0xff]
        %v2237 = vld [vmem:[%s3 + $0x18] sm:$0xff]
        %v2238 = vld [vmem:[%s3 + $0x20] sm:$0xff]
        %v2239 = vld [vmem:[%s3 + $0x28] sm:$0xff]
        %v2240 = vld [vmem:[%s3 + $0x30] sm:$0xff]
        %v2241 = vld [vmem:[%s3 + $0x38] sm:$0xff]
        %2243 = vset.pattern.permute.xlu0 0
        %2244 = vperm.xlu0 %2243, %v2234
        %v2245 = vpop.permute.xlu0 %2244
        %2248 = vset.pattern.permute.xlu0 0
        %2249 = vperm.xlu0 %2248, %v2235
        %v2250 = vpop.permute.xlu0 %2249
        %2253 = vset.pattern.permute.xlu0 0
        %2254 = vperm.xlu0 %2253, %v2236
        %v2255 = vpop.permute.xlu0 %2254
        %2258 = vset.pattern.permute.xlu0 0
        %2259 = vperm.xlu0 %2258, %v2237
        %v2260 = vpop.permute.xlu0 %2259
        %2263 = vset.pattern.permute.xlu0 0
        %2264 = vperm.xlu0 %2263, %v2238
        %v2265 = vpop.permute.xlu0 %2264
        %2268 = vset.pattern.permute.xlu0 0
        %2269 = vperm.xlu0 %2268, %v2239
        %v2270 = vpop.permute.xlu0 %2269
        %2273 = vset.pattern.permute.xlu0 0
        %2274 = vperm.xlu0 %2273, %v2240
        %v2275 = vpop.permute.xlu0 %2274
        %2278 = vset.pattern.permute.xlu0 0
        %2279 = vperm.xlu0 %2278, %v2241
        %v2280 = vpop.permute.xlu0 %2279
        %v2306 = vunpack.c.l.b16 %v2066
        %v2307 = vunpack.c.h.b16 %v2066
        %v2308 = vunpack.c.l.b16 %v2067
        %v2309 = vunpack.c.h.b16 %v2067
        %v2310 = vunpack.c.l.b16 %v2068
        %v2311 = vunpack.c.l.b16 %v2069
        %v2312 = vunpack.c.h.b16 %v2069
        %v2313 = vunpack.c.l.b16 %v2070
        %v2314 = vunpack.c.h.b16 %v2070
        %v2315 = vunpack.c.l.b16 %v2071
        %v2316 = vunpack.c.l.b16 %v2072
        %v2317 = vunpack.c.h.b16 %v2072
        %v2318 = vunpack.c.l.b16 %v2073
        %v2319 = vunpack.c.h.b16 %v2073
        %v2320 = vunpack.c.l.b16 %v2074
        %v2321 = vunpack.c.l.b16 %v2075
        %v2322 = vunpack.c.h.b16 %v2075
        %v2323 = vunpack.c.l.b16 %v2076
        %v2324 = vunpack.c.h.b16 %v2076
        %v2325 = vunpack.c.l.b16 %v2077
        %v2326 = vunpack.c.l.b16 %v2078
        %v2327 = vunpack.c.h.b16 %v2078
        %v2328 = vunpack.c.l.b16 %v2079
        %v2329 = vunpack.c.h.b16 %v2079
        %v2330 = vunpack.c.l.b16 %v2080
        %v2331 = vunpack.c.l.b16 %v2081
        %v2332 = vunpack.c.h.b16 %v2081
        %v2333 = vunpack.c.l.b16 %v2082
        %v2334 = vunpack.c.h.b16 %v2082
        %v2335 = vunpack.c.l.b16 %v2083
        %v2336 = vunpack.c.l.b16 %v2084
        %v2337 = vunpack.c.h.b16 %v2084
        %v2338 = vunpack.c.l.b16 %v2085
        %v2339 = vunpack.c.h.b16 %v2085
        %v2340 = vunpack.c.l.b16 %v2086
        %v2341 = vunpack.c.l.b16 %v2087
        %v2342 = vunpack.c.h.b16 %v2087
        %v2343 = vunpack.c.l.b16 %v2088
        %v2344 = vunpack.c.h.b16 %v2088
        %v2345 = vunpack.c.l.b16 %v2089
        %v2346 = vpack.c.b16 %v2311, %v2306
        %v2347 = vpack.c.b16 %v2312, %v2307
        %v2348 = vpack.c.b16 %v2313, %v2308
        %v2349 = vpack.c.b16 %v2314, %v2309
        %v2350 = vpack.c.b16 %v2315, %v2310
        %v2351 = vpack.c.b16 %v2321, %v2316
        %v2352 = vpack.c.b16 %v2322, %v2317
        %v2353 = vpack.c.b16 %v2323, %v2318
        %v2354 = vpack.c.b16 %v2324, %v2319
        %v2355 = vpack.c.b16 %v2325, %v2320
        %v2356 = vpack.c.b16 %v2331, %v2326
        %v2357 = vpack.c.b16 %v2332, %v2327
        %v2358 = vpack.c.b16 %v2333, %v2328
        %v2359 = vpack.c.b16 %v2334, %v2329
        %v2360 = vpack.c.b16 %v2335, %v2330
        %v2361 = vpack.c.b16 %v2341, %v2336
        %v2362 = vpack.c.b16 %v2342, %v2337
        %v2363 = vpack.c.b16 %v2343, %v2338
        %v2364 = vpack.c.b16 %v2344, %v2339
        %v2365 = vpack.c.b16 %v2345, %v2340
        %v2526 = vunpack.c.l.b16 %v2090
        %v2527 = vunpack.c.h.b16 %v2090
        %v2528 = vunpack.c.l.b16 %v2091
        %v2529 = vunpack.c.l.b16 %v2092
        %v2530 = vunpack.c.h.b16 %v2092
        %v2531 = vunpack.c.l.b16 %v2093
        %v2532 = vunpack.c.l.b16 %v2094
        %v2533 = vunpack.c.h.b16 %v2094
        %v2534 = vunpack.c.l.b16 %v2095
        %v2535 = vunpack.c.l.b16 %v2096
        %v2536 = vunpack.c.h.b16 %v2096
        %v2537 = vunpack.c.l.b16 %v2097
        %v2538 = vunpack.c.l.b16 %v2098
        %v2539 = vunpack.c.h.b16 %v2098
        %v2540 = vunpack.c.l.b16 %v2099
        %v2541 = vunpack.c.l.b16 %v2100
        %v2542 = vunpack.c.h.b16 %v2100
        %v2543 = vunpack.c.l.b16 %v2101
        %v2544 = vunpack.c.l.b16 %v2102
        %v2545 = vunpack.c.h.b16 %v2102
        %v2546 = vunpack.c.l.b16 %v2103
        %v2547 = vunpack.c.l.b16 %v2104
        %v2548 = vunpack.c.h.b16 %v2104
        %v2549 = vunpack.c.l.b16 %v2105
        %v2550 = vunpack.c.l.b16 %v2106
        %v2551 = vunpack.c.h.b16 %v2106
        %v2552 = vunpack.c.l.b16 %v2107
        %v2553 = vunpack.c.l.b16 %v2108
        %v2554 = vunpack.c.h.b16 %v2108
        %v2555 = vunpack.c.l.b16 %v2109
        %v2556 = vunpack.c.l.b16 %v2110
        %v2557 = vunpack.c.h.b16 %v2110
        %v2558 = vunpack.c.l.b16 %v2111
        %v2559 = vunpack.c.l.b16 %v2112
        %v2560 = vunpack.c.h.b16 %v2112
        %v2561 = vunpack.c.l.b16 %v2113
        %v2562 = vunpack.c.l.b16 %v2114
        %v2563 = vunpack.c.h.b16 %v2114
        %v2564 = vunpack.c.l.b16 %v2115
        %v2565 = vunpack.c.l.b16 %v2116
        %v2566 = vunpack.c.h.b16 %v2116
        %v2567 = vunpack.c.l.b16 %v2117
        %v2568 = vunpack.c.l.b16 %v2118
        %v2569 = vunpack.c.h.b16 %v2118
        %v2570 = vunpack.c.l.b16 %v2119
        %v2571 = vunpack.c.l.b16 %v2120
        %v2572 = vunpack.c.h.b16 %v2120
        %v2573 = vunpack.c.l.b16 %v2121
        %v2574 = vunpack.c.l.b16 %v2122
        %v2575 = vunpack.c.h.b16 %v2122
        %v2576 = vunpack.c.l.b16 %v2123
        %v2577 = vunpack.c.l.b16 %v2124
        %v2578 = vunpack.c.h.b16 %v2124
        %v2579 = vunpack.c.l.b16 %v2125
        %v2580 = vunpack.c.l.b16 %v2126
        %v2581 = vunpack.c.h.b16 %v2126
        %v2582 = vunpack.c.l.b16 %v2127
        %v2583 = vunpack.c.l.b16 %v2128
        %v2584 = vunpack.c.h.b16 %v2128
        %v2585 = vunpack.c.l.b16 %v2129
        %v2586 = vunpack.c.l.b16 %v2130
        %v2587 = vunpack.c.h.b16 %v2130
        %v2588 = vunpack.c.l.b16 %v2131
        %v2589 = vunpack.c.l.b16 %v2132
        %v2590 = vunpack.c.h.b16 %v2132
        %v2591 = vunpack.c.l.b16 %v2133
        %v2592 = vunpack.c.l.b16 %v2134
        %v2593 = vunpack.c.h.b16 %v2134
        %v2594 = vunpack.c.l.b16 %v2135
        %v2595 = vunpack.c.l.b16 %v2136
        %v2596 = vunpack.c.h.b16 %v2136
        %v2597 = vunpack.c.l.b16 %v2137
        %v2598 = vunpack.c.l.b16 %v2138
        %v2599 = vunpack.c.h.b16 %v2138
        %v2600 = vunpack.c.l.b16 %v2139
        %v2601 = vunpack.c.l.b16 %v2140
        %v2602 = vunpack.c.h.b16 %v2140
        %v2603 = vunpack.c.l.b16 %v2141
        %v2604 = vunpack.c.l.b16 %v2142
        %v2605 = vunpack.c.h.b16 %v2142
        %v2606 = vunpack.c.l.b16 %v2143
        %v2607 = vunpack.c.l.b16 %v2144
        %v2608 = vunpack.c.h.b16 %v2144
        %v2609 = vunpack.c.l.b16 %v2145
        %v2610 = vunpack.c.l.b16 %v2146
        %v2611 = vunpack.c.h.b16 %v2146
        %v2612 = vunpack.c.l.b16 %v2147
        %v2613 = vunpack.c.l.b16 %v2148
        %v2614 = vunpack.c.h.b16 %v2148
        %v2615 = vunpack.c.l.b16 %v2149
        %v2616 = vunpack.c.l.b16 %v2150
        %v2617 = vunpack.c.h.b16 %v2150
        %v2618 = vunpack.c.l.b16 %v2151
        %v2619 = vunpack.c.l.b16 %v2152
        %v2620 = vunpack.c.h.b16 %v2152
        %v2621 = vunpack.c.l.b16 %v2153
        %v2622 = vunpack.c.l.b16 %v2154
        %v2623 = vunpack.c.h.b16 %v2154
        %v2624 = vunpack.c.l.b16 %v2155
        %v2625 = vunpack.c.l.b16 %v2156
        %v2626 = vunpack.c.h.b16 %v2156
        %v2627 = vunpack.c.l.b16 %v2157
        %v2628 = vunpack.c.l.b16 %v2158
        %v2629 = vunpack.c.h.b16 %v2158
        %v2630 = vunpack.c.l.b16 %v2159
        %v2631 = vunpack.c.l.b16 %v2160
        %v2632 = vunpack.c.h.b16 %v2160
        %v2633 = vunpack.c.l.b16 %v2161
        %v2634 = vunpack.c.l.b16 %v2162
        %v2635 = vunpack.c.h.b16 %v2162
        %v2636 = vunpack.c.l.b16 %v2163
        %v2637 = vunpack.c.l.b16 %v2164
        %v2638 = vunpack.c.h.b16 %v2164
        %v2639 = vunpack.c.l.b16 %v2165
        %v2640 = vunpack.c.l.b16 %v2166
        %v2641 = vunpack.c.h.b16 %v2166
        %v2642 = vunpack.c.l.b16 %v2167
        %v2643 = vunpack.c.l.b16 %v2168
        %v2644 = vunpack.c.h.b16 %v2168
        %v2645 = vunpack.c.l.b16 %v2169
        %v2646 = vunpack.c.l.b16 %v2170
        %v2647 = vunpack.c.h.b16 %v2170
        %v2648 = vunpack.c.l.b16 %v2171
        %v2649 = vunpack.c.l.b16 %v2172
        %v2650 = vunpack.c.h.b16 %v2172
        %v2651 = vunpack.c.l.b16 %v2173
        %v2652 = vunpack.c.l.b16 %v2174
        %v2653 = vunpack.c.h.b16 %v2174
        %v2654 = vunpack.c.l.b16 %v2175
        %v2655 = vunpack.c.l.b16 %v2176
        %v2656 = vunpack.c.h.b16 %v2176
        %v2657 = vunpack.c.l.b16 %v2177
        %v2658 = vunpack.c.l.b16 %v2178
        %v2659 = vunpack.c.h.b16 %v2178
        %v2660 = vunpack.c.l.b16 %v2179
        %v2661 = vunpack.c.l.b16 %v2180
        %v2662 = vunpack.c.h.b16 %v2180
        %v2663 = vunpack.c.l.b16 %v2181
        %v2664 = vunpack.c.l.b16 %v2182
        %v2665 = vunpack.c.h.b16 %v2182
        %v2666 = vunpack.c.l.b16 %v2183
        %v2667 = vunpack.c.l.b16 %v2184
        %v2668 = vunpack.c.h.b16 %v2184
        %v2669 = vunpack.c.l.b16 %v2185
        %v2670 = vunpack.c.l.b16 %v2186
        %v2671 = vunpack.c.h.b16 %v2186
        %v2672 = vunpack.c.l.b16 %v2187
        %v2673 = vunpack.c.l.b16 %v2188
        %v2674 = vunpack.c.h.b16 %v2188
        %v2675 = vunpack.c.l.b16 %v2189
        %v2676 = vunpack.c.l.b16 %v2190
        %v2677 = vunpack.c.h.b16 %v2190
        %v2678 = vunpack.c.l.b16 %v2191
        %v2679 = vunpack.c.l.b16 %v2192
        %v2680 = vunpack.c.h.b16 %v2192
        %v2681 = vunpack.c.l.b16 %v2193
        %v2682 = vunpack.c.l.b16 %v2194
        %v2683 = vunpack.c.h.b16 %v2194
        %v2684 = vunpack.c.l.b16 %v2195
        %v2685 = vunpack.c.l.b16 %v2196
        %v2686 = vunpack.c.h.b16 %v2196
        %v2687 = vunpack.c.l.b16 %v2197
        %v2688 = vunpack.c.l.b16 %v2198
        %v2689 = vunpack.c.h.b16 %v2198
        %v2690 = vunpack.c.l.b16 %v2199
        %v2691 = vunpack.c.l.b16 %v2200
        %v2692 = vunpack.c.h.b16 %v2200
        %v2693 = vunpack.c.l.b16 %v2201
        %v2694 = vunpack.c.l.b16 %v2202
        %v2695 = vunpack.c.h.b16 %v2202
        %v2696 = vunpack.c.l.b16 %v2203
        %v2697 = vunpack.c.l.b16 %v2204
        %v2698 = vunpack.c.h.b16 %v2204
        %v2699 = vunpack.c.l.b16 %v2205
        %v2700 = vunpack.c.l.b16 %v2206
        %v2701 = vunpack.c.h.b16 %v2206
        %v2702 = vunpack.c.l.b16 %v2207
        %v2703 = vunpack.c.l.b16 %v2208
        %v2704 = vunpack.c.h.b16 %v2208
        %v2705 = vunpack.c.l.b16 %v2209
        %v2706 = vunpack.c.l.b16 %v2210
        %v2707 = vunpack.c.h.b16 %v2210
        %v2708 = vunpack.c.l.b16 %v2211
        %v2709 = vunpack.c.l.b16 %v2212
        %v2710 = vunpack.c.h.b16 %v2212
        %v2711 = vunpack.c.l.b16 %v2213
        %v2712 = vunpack.c.l.b16 %v2214
        %v2713 = vunpack.c.h.b16 %v2214
        %v2714 = vunpack.c.l.b16 %v2215
        %v2715 = vunpack.c.l.b16 %v2216
        %v2716 = vunpack.c.h.b16 %v2216
        %v2717 = vunpack.c.l.b16 %v2217
        %v2718 = vunpack.c.l.b16 %v2218
        %v2719 = vunpack.c.h.b16 %v2218
        %v2720 = vunpack.c.l.b16 %v2219
        %v2721 = vunpack.c.l.b16 %v2220
        %v2722 = vunpack.c.h.b16 %v2220
        %v2723 = vunpack.c.l.b16 %v2221
        %v2724 = vunpack.c.l.b16 %v2222
        %v2725 = vunpack.c.h.b16 %v2222
        %v2726 = vunpack.c.l.b16 %v2223
        %v2727 = vunpack.c.l.b16 %v2224
        %v2728 = vunpack.c.h.b16 %v2224
        %v2729 = vunpack.c.l.b16 %v2225
        %v2730 = vunpack.c.l.b16 %v2226
        %v2731 = vunpack.c.h.b16 %v2226
        %v2732 = vunpack.c.l.b16 %v2227
        %v2733 = vunpack.c.l.b16 %v2228
        %v2734 = vunpack.c.h.b16 %v2228
        %v2735 = vunpack.c.l.b16 %v2229
        %v2736 = vunpack.c.l.b16 %v2230
        %v2737 = vunpack.c.h.b16 %v2230
        %v2738 = vunpack.c.l.b16 %v2231
        %v2739 = vunpack.c.l.b16 %v2232
        %v2740 = vunpack.c.h.b16 %v2232
        %v2741 = vunpack.c.l.b16 %v2233
        %v2742 = vpack.c.b16 %v2529, %v2526
        %v2743 = vpack.c.b16 %v2530, %v2527
        %v2744 = vpack.c.b16 %v2531, %v2528
        %v2745 = vpack.c.b16 %v2535, %v2532
        %v2746 = vpack.c.b16 %v2536, %v2533
        %v2747 = vpack.c.b16 %v2537, %v2534
        %v2748 = vpack.c.b16 %v2541, %v2538
        %v2749 = vpack.c.b16 %v2542, %v2539
        %v2750 = vpack.c.b16 %v2543, %v2540
        %v2751 = vpack.c.b16 %v2547, %v2544
        %v2752 = vpack.c.b16 %v2548, %v2545
        %v2753 = vpack.c.b16 %v2549, %v2546
        %v2754 = vpack.c.b16 %v2553, %v2550
        %v2755 = vpack.c.b16 %v2554, %v2551
        %v2756 = vpack.c.b16 %v2555, %v2552
        %v2757 = vpack.c.b16 %v2559, %v2556
        %v2758 = vpack.c.b16 %v2560, %v2557
        %v2759 = vpack.c.b16 %v2561, %v2558
        %v2760 = vpack.c.b16 %v2565, %v2562
        %v2761 = vpack.c.b16 %v2566, %v2563
        %v2762 = vpack.c.b16 %v2567, %v2564
        %v2763 = vpack.c.b16 %v2571, %v2568
        %v2764 = vpack.c.b16 %v2572, %v2569
        %v2765 = vpack.c.b16 %v2573, %v2570
        %v2766 = vpack.c.b16 %v2577, %v2574
        %v2767 = vpack.c.b16 %v2578, %v2575
        %v2768 = vpack.c.b16 %v2579, %v2576
        %v2769 = vpack.c.b16 %v2583, %v2580
        %v2770 = vpack.c.b16 %v2584, %v2581
        %v2771 = vpack.c.b16 %v2585, %v2582
        %v2772 = vpack.c.b16 %v2589, %v2586
        %v2773 = vpack.c.b16 %v2590, %v2587
        %v2774 = vpack.c.b16 %v2591, %v2588
        %v2775 = vpack.c.b16 %v2595, %v2592
        %v2776 = vpack.c.b16 %v2596, %v2593
        %v2777 = vpack.c.b16 %v2597, %v2594
        %v2778 = vpack.c.b16 %v2601, %v2598
        %v2779 = vpack.c.b16 %v2602, %v2599
        %v2780 = vpack.c.b16 %v2603, %v2600
        %v2781 = vpack.c.b16 %v2607, %v2604
        %v2782 = vpack.c.b16 %v2608, %v2605
        %v2783 = vpack.c.b16 %v2609, %v2606
        %v2784 = vpack.c.b16 %v2613, %v2610
        %v2785 = vpack.c.b16 %v2614, %v2611
        %v2786 = vpack.c.b16 %v2615, %v2612
        %v2787 = vpack.c.b16 %v2619, %v2616
        %v2788 = vpack.c.b16 %v2620, %v2617
        %v2789 = vpack.c.b16 %v2621, %v2618
        %v2790 = vpack.c.b16 %v2625, %v2622
        %v2791 = vpack.c.b16 %v2626, %v2623
        %v2792 = vpack.c.b16 %v2627, %v2624
        %v2793 = vpack.c.b16 %v2631, %v2628
        %v2794 = vpack.c.b16 %v2632, %v2629
        %v2795 = vpack.c.b16 %v2633, %v2630
        %v2796 = vpack.c.b16 %v2637, %v2634
        %v2797 = vpack.c.b16 %v2638, %v2635
        %v2798 = vpack.c.b16 %v2639, %v2636
        %v2799 = vpack.c.b16 %v2643, %v2640
        %v2800 = vpack.c.b16 %v2644, %v2641
        %v2801 = vpack.c.b16 %v2645, %v2642
        %v2802 = vpack.c.b16 %v2649, %v2646
        %v2803 = vpack.c.b16 %v2650, %v2647
        %v2804 = vpack.c.b16 %v2651, %v2648
        %v2805 = vpack.c.b16 %v2655, %v2652
        %v2806 = vpack.c.b16 %v2656, %v2653
        %v2807 = vpack.c.b16 %v2657, %v2654
        %v2808 = vpack.c.b16 %v2661, %v2658
        %v2809 = vpack.c.b16 %v2662, %v2659
        %v2810 = vpack.c.b16 %v2663, %v2660
        %v2811 = vpack.c.b16 %v2667, %v2664
        %v2812 = vpack.c.b16 %v2668, %v2665
        %v2813 = vpack.c.b16 %v2669, %v2666
        %v2814 = vpack.c.b16 %v2673, %v2670
        %v2815 = vpack.c.b16 %v2674, %v2671
        %v2816 = vpack.c.b16 %v2675, %v2672
        %v2817 = vpack.c.b16 %v2679, %v2676
        %v2818 = vpack.c.b16 %v2680, %v2677
        %v2819 = vpack.c.b16 %v2681, %v2678
        %v2820 = vpack.c.b16 %v2685, %v2682
        %v2821 = vpack.c.b16 %v2686, %v2683
        %v2822 = vpack.c.b16 %v2687, %v2684
        %v2823 = vpack.c.b16 %v2691, %v2688
        %v2824 = vpack.c.b16 %v2692, %v2689
        %v2825 = vpack.c.b16 %v2693, %v2690
        %v2826 = vpack.c.b16 %v2697, %v2694
        %v2827 = vpack.c.b16 %v2698, %v2695
        %v2828 = vpack.c.b16 %v2699, %v2696
        %v2829 = vpack.c.b16 %v2703, %v2700
        %v2830 = vpack.c.b16 %v2704, %v2701
        %v2831 = vpack.c.b16 %v2705, %v2702
        %v2832 = vpack.c.b16 %v2709, %v2706
        %v2833 = vpack.c.b16 %v2710, %v2707
        %v2834 = vpack.c.b16 %v2711, %v2708
        %v2835 = vpack.c.b16 %v2715, %v2712
        %v2836 = vpack.c.b16 %v2716, %v2713
        %v2837 = vpack.c.b16 %v2717, %v2714
        %v2838 = vpack.c.b16 %v2721, %v2718
        %v2839 = vpack.c.b16 %v2722, %v2719
        %v2840 = vpack.c.b16 %v2723, %v2720
        %v2841 = vpack.c.b16 %v2727, %v2724
        %v2842 = vpack.c.b16 %v2728, %v2725
        %v2843 = vpack.c.b16 %v2729, %v2726
        %v2844 = vpack.c.b16 %v2733, %v2730
        %v2845 = vpack.c.b16 %v2734, %v2731
        %v2846 = vpack.c.b16 %v2735, %v2732
        %v2847 = vpack.c.b16 %v2739, %v2736
        %v2848 = vpack.c.b16 %v2740, %v2737
        %v2849 = vpack.c.b16 %v2741, %v2738
        %vm2958 = vcmask 523264
        %v2960 = vsel %vm2958, %v2350, 0
        %v2963 = vsel %vm2958, %v2355, 0
        %v2966 = vsel %vm2958, %v2360, 0
        %v2969 = vsel %vm2958, %v2365, 0
        %2971 = vmatprep.subr.bf16.mxu0 %v2764
        %2972 = vmatpush1.bf16.msra.mxu0 %v2763
        %2973 = vmatprep.subr.bf16.mxu0 %v2761
        %2974 = vmatpush1.bf16.msra.mxu0 %v2760
        %2975 = vmatprep.subr.bf16.mxu0 %v2758
        %2976 = vmatpush1.bf16.msra.mxu0 %v2757
        %2977 = vmatprep.subr.bf16.mxu0 %v2755
        %2978 = vmatpush1.bf16.msra.mxu0 %v2754
        %2979 = vmatprep.subr.bf16.mxu0 %v2752
        %2980 = vmatpush1.bf16.msra.mxu0 %v2751
        %2981 = vmatprep.subr.bf16.mxu0 %v2749
        %2982 = vmatpush1.bf16.msra.mxu0 %v2748
        %2983 = vmatprep.subr.bf16.mxu0 %v2746
        %2984 = vmatpush1.bf16.msra.mxu0 %v2745
        %2985 = vmatprep.subr.bf16.mxu0 %v2743
        %2986 = vmatpush1.bf16.msra.mxu0 %v2742
        %2987 = vmatprep.subr.bf16.mxu0 %v2788
        %2988 = vmatpush2.bf16.msra.mxu0 %v2787
        %2989 = vmatprep.subr.bf16.mxu0 %v2785
        %2990 = vmatpush2.bf16.msra.mxu0 %v2784
        %2991 = vmatprep.subr.bf16.mxu0 %v2782
        %2992 = vmatpush2.bf16.msra.mxu0 %v2781
        %2993 = vmatprep.subr.bf16.mxu0 %v2779
        %2994 = vmatpush2.bf16.msra.mxu0 %v2778
        %2995 = vmatprep.subr.bf16.mxu0 %v2776
        %2996 = vmatpush2.bf16.msra.mxu0 %v2775
        %2997 = vmatprep.subr.bf16.mxu0 %v2773
        %2998 = vmatpush2.bf16.msra.mxu0 %v2772
        %2999 = vmatprep.subr.bf16.mxu0 %v2770
        %3000 = vmatpush2.bf16.msra.mxu0 %v2769
        %3001 = vmatprep.subr.bf16.mxu0 %v2767
        %3002 = vmatpush2.bf16.msra.mxu0 %v2766
        %3003 = vmatprep.mubr.bf16.mxu0 %v2347
        %3004 = vmatmul.mubr.bf16.gmra.mxu0 %v2346
        %v3005 = vpop.f32.mrf.mxu0
        %v3006 = vadd.f32 %v2245, %v3005
        %v3007 = vpop.f32.mrf.mxu0
        %v3008 = vadd.f32 %v2245, %v3007
        %v3009 = vpop.f32.mrf.mxu0
        %v3010 = vadd.f32 %v2250, %v3009
        %v3011 = vpop.f32.mrf.mxu0
        %v3012 = vadd.f32 %v2250, %v3011
        %3013 = vmatprep.mubr.bf16.mxu0 %v2352
        %3014 = vmatmul.mubr.bf16.gmra.mxu0 %v2351
        %v3015 = vpop.f32.mrf.mxu0
        %v3016 = vadd.f32 %v2255, %v3015
        %v3017 = vpop.f32.mrf.mxu0
        %v3018 = vadd.f32 %v2255, %v3017
        %v3019 = vpop.f32.mrf.mxu0
        %v3020 = vadd.f32 %v2260, %v3019
        %v3021 = vpop.f32.mrf.mxu0
        %v3022 = vadd.f32 %v2260, %v3021
        %3023 = vmatprep.mubr.bf16.mxu0 %v2357
        %3024 = vmatmul.mubr.bf16.gmra.mxu0 %v2356
        %v3025 = vpop.f32.mrf.mxu0
        %v3026 = vadd.f32 %v2265, %v3025
        %v3027 = vpop.f32.mrf.mxu0
        %v3028 = vadd.f32 %v2265, %v3027
        %v3029 = vpop.f32.mrf.mxu0
        %v3030 = vadd.f32 %v2270, %v3029
        %v3031 = vpop.f32.mrf.mxu0
        %v3032 = vadd.f32 %v2270, %v3031
        %3033 = vmatprep.mubr.bf16.mxu0 %v2362
        %3034 = vmatmul.mubr.bf16.gmra.mxu0 %v2361
        %v3035 = vpop.f32.mrf.mxu0
        %v3036 = vadd.f32 %v2275, %v3035
        %v3037 = vpop.f32.mrf.mxu0
        %v3038 = vadd.f32 %v2275, %v3037
        %v3039 = vpop.f32.mrf.mxu0
        %v3040 = vadd.f32 %v2280, %v3039
        %v3041 = vpop.f32.mrf.mxu0
        %v3042 = vadd.f32 %v2280, %v3041
        %3043 = vdwg.mxu0
        %3044 = vmatprep.subr.bf16.mxu0 %v2812
        %3045 = vmatpush1.bf16.msra.mxu0 %v2811
        %3046 = vmatprep.subr.bf16.mxu0 %v2809
        %3047 = vmatpush1.bf16.msra.mxu0 %v2808
        %3048 = vmatprep.subr.bf16.mxu0 %v2806
        %3049 = vmatpush1.bf16.msra.mxu0 %v2805
        %3050 = vmatprep.subr.bf16.mxu0 %v2803
        %3051 = vmatpush1.bf16.msra.mxu0 %v2802
        %3052 = vmatprep.subr.bf16.mxu0 %v2800
        %3053 = vmatpush1.bf16.msra.mxu0 %v2799
        %3054 = vmatprep.subr.bf16.mxu0 %v2797
        %3055 = vmatpush1.bf16.msra.mxu0 %v2796
        %3056 = vmatprep.subr.bf16.mxu0 %v2794
        %3057 = vmatpush1.bf16.msra.mxu0 %v2793
        %3058 = vmatprep.subr.bf16.mxu0 %v2791
        %3059 = vmatpush1.bf16.msra.mxu0 %v2790
        %3060 = vmatprep.subr.bf16.mxu0 %v2836
        %3061 = vmatpush2.bf16.msra.mxu0 %v2835
        %3062 = vmatprep.subr.bf16.mxu0 %v2833
        %3063 = vmatpush2.bf16.msra.mxu0 %v2832
        %3064 = vmatprep.subr.bf16.mxu0 %v2830
        %3065 = vmatpush2.bf16.msra.mxu0 %v2829
        %3066 = vmatprep.subr.bf16.mxu0 %v2827
        %3067 = vmatpush2.bf16.msra.mxu0 %v2826
        %3068 = vmatprep.subr.bf16.mxu0 %v2824
        %3069 = vmatpush2.bf16.msra.mxu0 %v2823
        %3070 = vmatprep.subr.bf16.mxu0 %v2821
        %3071 = vmatpush2.bf16.msra.mxu0 %v2820
        %3072 = vmatprep.subr.bf16.mxu0 %v2818
        %3073 = vmatpush2.bf16.msra.mxu0 %v2817
        %3074 = vmatprep.subr.bf16.mxu0 %v2815
        %3075 = vmatpush2.bf16.msra.mxu0 %v2814
        %3076 = vmatprep.mubr.bf16.mxu0 %v2349
        %3077 = vmatmul.mubr.bf16.gmra.mxu0 %v2348
        %v3078 = vpop.f32.mrf.mxu0
        %v3079 = vadd.f32 %v3006, %v3078
        %v3080 = vpop.f32.mrf.mxu0
        %v3081 = vadd.f32 %v3008, %v3080
        %v3082 = vpop.f32.mrf.mxu0
        %v3083 = vadd.f32 %v3010, %v3082
        %v3084 = vpop.f32.mrf.mxu0
        %v3085 = vadd.f32 %v3012, %v3084
        %3086 = vmatprep.mubr.bf16.mxu0 %v2354
        %3087 = vmatmul.mubr.bf16.gmra.mxu0 %v2353
        %v3088 = vpop.f32.mrf.mxu0
        %v3089 = vadd.f32 %v3016, %v3088
        %v3090 = vpop.f32.mrf.mxu0
        %v3091 = vadd.f32 %v3018, %v3090
        %v3092 = vpop.f32.mrf.mxu0
        %v3093 = vadd.f32 %v3020, %v3092
        %v3094 = vpop.f32.mrf.mxu0
        %v3095 = vadd.f32 %v3022, %v3094
        %3096 = vmatprep.mubr.bf16.mxu0 %v2359
        %3097 = vmatmul.mubr.bf16.gmra.mxu0 %v2358
        %v3098 = vpop.f32.mrf.mxu0
        %v3099 = vadd.f32 %v3026, %v3098
        %v3100 = vpop.f32.mrf.mxu0
        %v3101 = vadd.f32 %v3028, %v3100
        %v3102 = vpop.f32.mrf.mxu0
        %v3103 = vadd.f32 %v3030, %v3102
        %v3104 = vpop.f32.mrf.mxu0
        %v3105 = vadd.f32 %v3032, %v3104
        %3106 = vmatprep.mubr.bf16.mxu0 %v2364
        %3107 = vmatmul.mubr.bf16.gmra.mxu0 %v2363
        %v3108 = vpop.f32.mrf.mxu0
        %v3109 = vadd.f32 %v3036, %v3108
        %v3110 = vpop.f32.mrf.mxu0
        %v3111 = vadd.f32 %v3038, %v3110
        %v3112 = vpop.f32.mrf.mxu0
        %v3113 = vadd.f32 %v3040, %v3112
        %v3114 = vpop.f32.mrf.mxu0
        %v3115 = vadd.f32 %v3042, %v3114
        %3116 = vdwg.mxu0
        %3117 = vmatprep.subr.bf16.mxu0 0
        %3118 = vmatpush1.bf16.msra.mxu0 0
        %3119 = vmatprep.subr.bf16.mxu0 0
        %3120 = vmatpush1.bf16.msra.mxu0 0
        %3121 = vmatprep.subr.bf16.mxu0 0
        %3122 = vmatpush1.bf16.msra.mxu0 0
        %3123 = vmatprep.subr.bf16.mxu0 0
        %3124 = vmatpush1.bf16.msra.mxu0 0
        %3125 = vmatprep.subr.bf16.mxu0 %v2848
        %3126 = vmatpush1.bf16.msra.mxu0 %v2847
        %3127 = vmatprep.subr.bf16.mxu0 %v2845
        %3128 = vmatpush1.bf16.msra.mxu0 %v2844
        %3129 = vmatprep.subr.bf16.mxu0 %v2842
        %3130 = vmatpush1.bf16.msra.mxu0 %v2841
        %3131 = vmatprep.subr.bf16.mxu0 %v2839
        %3132 = vmatpush1.bf16.msra.mxu0 %v2838
        %3133 = vmatprep.subr.bf16.mxu0 0
        %3134 = vmatpush2.bf16.msra.mxu0 0
        %3135 = vmatprep.subr.bf16.mxu0 0
        %3136 = vmatpush2.bf16.msra.mxu0 0
        %3137 = vmatprep.subr.bf16.mxu0 0
        %3138 = vmatpush2.bf16.msra.mxu0 0
        %3139 = vmatprep.subr.bf16.mxu0 0
        %3140 = vmatpush2.bf16.msra.mxu0 0
        %3141 = vmatprep.subr.bf16.mxu0 0
        %3142 = vmatpush2.bf16.msra.mxu0 0
        %3143 = vmatprep.subr.bf16.mxu0 0
        %3144 = vmatpush2.bf16.msra.mxu0 0
        %3145 = vmatprep.subr.bf16.mxu0 0
        %3146 = vmatpush2.bf16.msra.mxu0 0
        %3147 = vmatprep.subr.bf16.mxu0 0
        %3148 = vmatpush2.bf16.msra.mxu0 0
        %3149 = vmatprep.mubr.bf16.mxu0 0
        %3150 = vmatmul.mubr.bf16.gmra.mxu0 %v2960
        %v3151 = vpop.f32.mrf.mxu0
        %v3152 = vadd.f32 %v3079, %v3151
        %v3153 = vpop.f32.mrf.mxu0
        %v3154 = vadd.f32 %v3081, %v3153
        %v3155 = vpop.f32.mrf.mxu0
        %v3156 = vadd.f32 %v3083, %v3155
        %v3157 = vpop.f32.mrf.mxu0
        %v3158 = vadd.f32 %v3085, %v3157
        %3159 = vmatprep.mubr.bf16.mxu0 0
        %3160 = vmatmul.mubr.bf16.gmra.mxu0 %v2963
        %v3161 = vpop.f32.mrf.mxu0
        %v3162 = vadd.f32 %v3089, %v3161
        %v3163 = vpop.f32.mrf.mxu0
        %v3164 = vadd.f32 %v3091, %v3163
        %v3165 = vpop.f32.mrf.mxu0
        %v3166 = vadd.f32 %v3093, %v3165
        %v3167 = vpop.f32.mrf.mxu0
        %v3168 = vadd.f32 %v3095, %v3167
        %3169 = vmatprep.mubr.bf16.mxu0 0
        %3170 = vmatmul.mubr.bf16.gmra.mxu0 %v2966
        %v3171 = vpop.f32.mrf.mxu0
        %v3172 = vadd.f32 %v3099, %v3171
        %v3173 = vpop.f32.mrf.mxu0
        %v3174 = vadd.f32 %v3101, %v3173
        %v3175 = vpop.f32.mrf.mxu0
        %v3176 = vadd.f32 %v3103, %v3175
        %v3177 = vpop.f32.mrf.mxu0
        %v3178 = vadd.f32 %v3105, %v3177
        %3179 = vmatprep.mubr.bf16.mxu0 0
        %3180 = vmatmul.mubr.bf16.gmra.mxu0 %v2969
        %v3181 = vpop.f32.mrf.mxu0
        %v3182 = vadd.f32 %v3109, %v3181
        %v3183 = vpop.f32.mrf.mxu0
        %v3184 = vadd.f32 %v3111, %v3183
        %v3185 = vpop.f32.mrf.mxu0
        %v3186 = vadd.f32 %v3113, %v3185
        %v3187 = vpop.f32.mrf.mxu0
        %v3188 = vadd.f32 %v3115, %v3187
        %3189 = vdwg.mxu0
        %3190 = vmatprep.subr.bf16.mxu0 0
        %3191 = vmatpush1.bf16.msra.mxu0 %v2765
        %3192 = vmatprep.subr.bf16.mxu0 0
        %3193 = vmatpush1.bf16.msra.mxu0 %v2762
        %3194 = vmatprep.subr.bf16.mxu0 0
        %3195 = vmatpush1.bf16.msra.mxu0 %v2759
        %3196 = vmatprep.subr.bf16.mxu0 0
        %3197 = vmatpush1.bf16.msra.mxu0 %v2756
        %3198 = vmatprep.subr.bf16.mxu0 0
        %3199 = vmatpush1.bf16.msra.mxu0 %v2753
        %3200 = vmatprep.subr.bf16.mxu0 0
        %3201 = vmatpush1.bf16.msra.mxu0 %v2750
        %3202 = vmatprep.subr.bf16.mxu0 0
        %3203 = vmatpush1.bf16.msra.mxu0 %v2747
        %3204 = vmatprep.subr.bf16.mxu0 0
        %3205 = vmatpush1.bf16.msra.mxu0 %v2744
        %3206 = vmatprep.subr.bf16.mxu0 0
        %3207 = vmatpush2.bf16.msra.mxu0 %v2789
        %3208 = vmatprep.subr.bf16.mxu0 0
        %3209 = vmatpush2.bf16.msra.mxu0 %v2786
        %3210 = vmatprep.subr.bf16.mxu0 0
        %3211 = vmatpush2.bf16.msra.mxu0 %v2783
        %3212 = vmatprep.subr.bf16.mxu0 0
        %3213 = vmatpush2.bf16.msra.mxu0 %v2780
        %3214 = vmatprep.subr.bf16.mxu0 0
        %3215 = vmatpush2.bf16.msra.mxu0 %v2777
        %3216 = vmatprep.subr.bf16.mxu0 0
        %3217 = vmatpush2.bf16.msra.mxu0 %v2774
        %3218 = vmatprep.subr.bf16.mxu0 0
        %3219 = vmatpush2.bf16.msra.mxu0 %v2771
        %3220 = vmatprep.subr.bf16.mxu0 0
        %3221 = vmatpush2.bf16.msra.mxu0 %v2768
        %3222 = vmatprep.mubr.bf16.mxu0 %v2347
        %3223 = vmatmul.mubr.bf16.gmra.mxu0 %v2346
        %v3224 = vpop.f32.mrf.mxu0
        %v3225 = vadd.f32 %v2245, %v3224
        %v3226 = vpop.f32.mrf.mxu0
        %v3227 = vpop.f32.mrf.mxu0
        %v3228 = vadd.f32 %v2250, %v3227
        %v3229 = vpop.f32.mrf.mxu0
        %3230 = vmatprep.mubr.bf16.mxu0 %v2352
        %3231 = vmatmul.mubr.bf16.gmra.mxu0 %v2351
        %v3232 = vpop.f32.mrf.mxu0
        %v3233 = vadd.f32 %v2255, %v3232
        %v3234 = vpop.f32.mrf.mxu0
        %v3235 = vpop.f32.mrf.mxu0
        %v3236 = vadd.f32 %v2260, %v3235
        %v3237 = vpop.f32.mrf.mxu0
        %3238 = vmatprep.mubr.bf16.mxu0 %v2357
        %3239 = vmatmul.mubr.bf16.gmra.mxu0 %v2356
        %v3240 = vpop.f32.mrf.mxu0
        %v3241 = vadd.f32 %v2265, %v3240
        %v3242 = vpop.f32.mrf.mxu0
        %v3243 = vpop.f32.mrf.mxu0
        %v3244 = vadd.f32 %v2270, %v3243
        %v3245 = vpop.f32.mrf.mxu0
        %3246 = vmatprep.mubr.bf16.mxu0 %v2362
        %3247 = vmatmul.mubr.bf16.gmra.mxu0 %v2361
        %v3248 = vpop.f32.mrf.mxu0
        %v3249 = vadd.f32 %v2275, %v3248
        %v3250 = vpop.f32.mrf.mxu0
        %v3251 = vpop.f32.mrf.mxu0
        %v3252 = vadd.f32 %v2280, %v3251
        %v3253 = vpop.f32.mrf.mxu0
        %3254 = vdwg.mxu0
        %3255 = vmatprep.subr.bf16.mxu0 0
        %3256 = vmatpush1.bf16.msra.mxu0 %v2813
        %3257 = vmatprep.subr.bf16.mxu0 0
        %3258 = vmatpush1.bf16.msra.mxu0 %v2810
        %3259 = vmatprep.subr.bf16.mxu0 0
        %3260 = vmatpush1.bf16.msra.mxu0 %v2807
        %3261 = vmatprep.subr.bf16.mxu0 0
        %3262 = vmatpush1.bf16.msra.mxu0 %v2804
        %3263 = vmatprep.subr.bf16.mxu0 0
        %3264 = vmatpush1.bf16.msra.mxu0 %v2801
        %3265 = vmatprep.subr.bf16.mxu0 0
        %3266 = vmatpush1.bf16.msra.mxu0 %v2798
        %3267 = vmatprep.subr.bf16.mxu0 0
        %3268 = vmatpush1.bf16.msra.mxu0 %v2795
        %3269 = vmatprep.subr.bf16.mxu0 0
        %3270 = vmatpush1.bf16.msra.mxu0 %v2792
        %3271 = vmatprep.subr.bf16.mxu0 0
        %3272 = vmatpush2.bf16.msra.mxu0 %v2837
        %3273 = vmatprep.subr.bf16.mxu0 0
        %3274 = vmatpush2.bf16.msra.mxu0 %v2834
        %3275 = vmatprep.subr.bf16.mxu0 0
        %3276 = vmatpush2.bf16.msra.mxu0 %v2831
        %3277 = vmatprep.subr.bf16.mxu0 0
        %3278 = vmatpush2.bf16.msra.mxu0 %v2828
        %3279 = vmatprep.subr.bf16.mxu0 0
        %3280 = vmatpush2.bf16.msra.mxu0 %v2825
        %3281 = vmatprep.subr.bf16.mxu0 0
        %3282 = vmatpush2.bf16.msra.mxu0 %v2822
        %3283 = vmatprep.subr.bf16.mxu0 0
        %3284 = vmatpush2.bf16.msra.mxu0 %v2819
        %3285 = vmatprep.subr.bf16.mxu0 0
        %3286 = vmatpush2.bf16.msra.mxu0 %v2816
        %3287 = vmatprep.mubr.bf16.mxu0 %v2349
        %3288 = vmatmul.mubr.bf16.gmra.mxu0 %v2348
        %v3289 = vpop.f32.mrf.mxu0
        %v3290 = vadd.f32 %v3225, %v3289
        %v3291 = vpop.f32.mrf.mxu0
        %v3292 = vpop.f32.mrf.mxu0
        %v3293 = vadd.f32 %v3228, %v3292
        %v3294 = vpop.f32.mrf.mxu0
        %3295 = vmatprep.mubr.bf16.mxu0 %v2354
        %3296 = vmatmul.mubr.bf16.gmra.mxu0 %v2353
        %v3297 = vpop.f32.mrf.mxu0
        %v3298 = vadd.f32 %v3233, %v3297
        %v3299 = vpop.f32.mrf.mxu0
        %v3300 = vpop.f32.mrf.mxu0
        %v3301 = vadd.f32 %v3236, %v3300
        %v3302 = vpop.f32.mrf.mxu0
        %3303 = vmatprep.mubr.bf16.mxu0 %v2359
        %3304 = vmatmul.mubr.bf16.gmra.mxu0 %v2358
        %v3305 = vpop.f32.mrf.mxu0
        %v3306 = vadd.f32 %v3241, %v3305
        %v3307 = vpop.f32.mrf.mxu0
        %v3308 = vpop.f32.mrf.mxu0
        %v3309 = vadd.f32 %v3244, %v3308
        %v3310 = vpop.f32.mrf.mxu0
        %3311 = vmatprep.mubr.bf16.mxu0 %v2364
        %3312 = vmatmul.mubr.bf16.gmra.mxu0 %v2363
        %v3313 = vpop.f32.mrf.mxu0
        %v3314 = vadd.f32 %v3249, %v3313
        %v3315 = vpop.f32.mrf.mxu0
        %v3316 = vpop.f32.mrf.mxu0
        %v3317 = vadd.f32 %v3252, %v3316
        %v3318 = vpop.f32.mrf.mxu0
        %3319 = vdwg.mxu0
        %3320 = vmatprep.subr.bf16.mxu0 0
        %3321 = vmatpush1.bf16.msra.mxu0 0
        %3322 = vmatprep.subr.bf16.mxu0 0
        %3323 = vmatpush1.bf16.msra.mxu0 0
        %3324 = vmatprep.subr.bf16.mxu0 0
        %3325 = vmatpush1.bf16.msra.mxu0 0
        %3326 = vmatprep.subr.bf16.mxu0 0
        %3327 = vmatpush1.bf16.msra.mxu0 0
        %3328 = vmatprep.subr.bf16.mxu0 0
        %3329 = vmatpush1.bf16.msra.mxu0 %v2849
        %3330 = vmatprep.subr.bf16.mxu0 0
        %3331 = vmatpush1.bf16.msra.mxu0 %v2846
        %3332 = vmatprep.subr.bf16.mxu0 0
        %3333 = vmatpush1.bf16.msra.mxu0 %v2843
        %3334 = vmatprep.subr.bf16.mxu0 0
        %3335 = vmatpush1.bf16.msra.mxu0 %v2840
        %3336 = vmatprep.subr.bf16.mxu0 0
        %3337 = vmatpush2.bf16.msra.mxu0 0
        %3338 = vmatprep.subr.bf16.mxu0 0
        %3339 = vmatpush2.bf16.msra.mxu0 0
        %3340 = vmatprep.subr.bf16.mxu0 0
        %3341 = vmatpush2.bf16.msra.mxu0 0
        %3342 = vmatprep.subr.bf16.mxu0 0
        %3343 = vmatpush2.bf16.msra.mxu0 0
        %3344 = vmatprep.subr.bf16.mxu0 0
        %3345 = vmatpush2.bf16.msra.mxu0 0
        %3346 = vmatprep.subr.bf16.mxu0 0
        %3347 = vmatpush2.bf16.msra.mxu0 0
        %3348 = vmatprep.subr.bf16.mxu0 0
        %3349 = vmatpush2.bf16.msra.mxu0 0
        %3350 = vmatprep.subr.bf16.mxu0 0
        %3351 = vmatpush2.bf16.msra.mxu0 0
        %3352 = vmatprep.mubr.bf16.mxu0 0
        %3353 = vmatmul.mubr.bf16.gmra.mxu0 %v2960
        %v3354 = vpop.f32.mrf.mxu0
        %v3355 = vadd.f32 %v3290, %v3354
        %v3356 = vpop.f32.mrf.mxu0
        %v3357 = vpop.f32.mrf.mxu0
        %v3358 = vadd.f32 %v3293, %v3357
        %v3359 = vpop.f32.mrf.mxu0
        %3360 = vmatprep.mubr.bf16.mxu0 0
        %3361 = vmatmul.mubr.bf16.gmra.mxu0 %v2963
        %v3362 = vpop.f32.mrf.mxu0
        %v3363 = vadd.f32 %v3298, %v3362
        %v3364 = vpop.f32.mrf.mxu0
        %v3365 = vpop.f32.mrf.mxu0
        %v3366 = vadd.f32 %v3301, %v3365
        %v3367 = vpop.f32.mrf.mxu0
        %3368 = vmatprep.mubr.bf16.mxu0 0
        %3369 = vmatmul.mubr.bf16.gmra.mxu0 %v2966
        %v3370 = vpop.f32.mrf.mxu0
        %v3371 = vadd.f32 %v3306, %v3370
        %v3372 = vpop.f32.mrf.mxu0
        %v3373 = vpop.f32.mrf.mxu0
        %v3374 = vadd.f32 %v3309, %v3373
        %v3375 = vpop.f32.mrf.mxu0
        %3376 = vmatprep.mubr.bf16.mxu0 0
        %3377 = vmatmul.mubr.bf16.gmra.mxu0 %v2969
        %v3378 = vpop.f32.mrf.mxu0
        %v3379 = vadd.f32 %v3314, %v3378
        %v3380 = vpop.f32.mrf.mxu0
        %v3381 = vpop.f32.mrf.mxu0
        %v3382 = vadd.f32 %v3317, %v3381
        %v3383 = vpop.f32.mrf.mxu0
        %3384 = vdwg.mxu0
        %v3385 = vxor.u32 %v3172, 2147483648
        %v3386 = vxor.u32 %v3174, 2147483648
        %v3387 = vxor.u32 %v3371, 2147483648
        %v3388 = vxor.u32 %v3176, 2147483648
        %v3389 = vxor.u32 %v3178, 2147483648
        %v3390 = vxor.u32 %v3374, 2147483648
        %v3391 = vxor.u32 %v3182, 2147483648
        %v3392 = vxor.u32 %v3184, 2147483648
        %v3393 = vxor.u32 %v3379, 2147483648
        %v3394 = vxor.u32 %v3186, 2147483648
        %v3395 = vxor.u32 %v3188, 2147483648
        %v3396 = vxor.u32 %v3382, 2147483648
        %v3397 = vmul.f32 %v3385, 1.442695
        %v3398 = vpow.pop %v3397
        %v3399 = vmul.f32 %v3386, 1.442695
        %v3400 = vpow.pop %v3399
        %v3401 = vmul.f32 %v3387, 1.442695
        %v3402 = vpow.pop %v3401
        %v3403 = vmul.f32 %v3388, 1.442695
        %v3404 = vpow.pop %v3403
        %v3405 = vmul.f32 %v3389, 1.442695
        %v3406 = vpow.pop %v3405
        %v3407 = vmul.f32 %v3390, 1.442695
        %v3408 = vpow.pop %v3407
        %v3409 = vmul.f32 %v3391, 1.442695
        %v3410 = vpow.pop %v3409
        %v3411 = vmul.f32 %v3392, 1.442695
        %v3412 = vpow.pop %v3411
        %v3413 = vmul.f32 %v3393, 1.442695
        %v3414 = vpow.pop %v3413
        %v3415 = vmul.f32 %v3394, 1.442695
        %v3416 = vpow.pop %v3415
        %v3417 = vmul.f32 %v3395, 1.442695
        %v3418 = vpow.pop %v3417
        %v3419 = vmul.f32 %v3396, 1.442695
        %v3420 = vpow.pop %v3419
        %v3421 = vadd.f32 %v3398, 1.0
        %v3422 = vadd.f32 %v3400, 1.0
        %v3423 = vadd.f32 %v3402, 1.0
        %v3424 = vadd.f32 %v3404, 1.0
        %v3425 = vadd.f32 %v3406, 1.0
        %v3426 = vadd.f32 %v3408, 1.0
        %v3427 = vadd.f32 %v3410, 1.0
        %v3428 = vadd.f32 %v3412, 1.0
        %v3429 = vadd.f32 %v3414, 1.0
        %v3430 = vadd.f32 %v3416, 1.0
        %v3431 = vadd.f32 %v3418, 1.0
        %v3432 = vadd.f32 %v3420, 1.0
        %v3433 = vrcp.pop %v3421
        %v3434 = vmul.f32 1.0, %v3433
        %v3435 = vrcp.pop %v3422
        %v3436 = vmul.f32 1.0, %v3435
        %v3437 = vrcp.pop %v3423
        %v3438 = vmul.f32 1.0, %v3437
        %v3439 = vrcp.pop %v3424
        %v3440 = vmul.f32 1.0, %v3439
        %v3441 = vrcp.pop %v3425
        %v3442 = vmul.f32 1.0, %v3441
        %v3443 = vrcp.pop %v3426
        %v3444 = vmul.f32 1.0, %v3443
        %v3445 = vrcp.pop %v3427
        %v3446 = vmul.f32 1.0, %v3445
        %v3447 = vrcp.pop %v3428
        %v3448 = vmul.f32 1.0, %v3447
        %v3449 = vrcp.pop %v3429
        %v3450 = vmul.f32 1.0, %v3449
        %v3451 = vrcp.pop %v3430
        %v3452 = vmul.f32 1.0, %v3451
        %v3453 = vrcp.pop %v3431
        %v3454 = vmul.f32 1.0, %v3453
        %v3455 = vrcp.pop %v3432
        %v3456 = vmul.f32 1.0, %v3455
        %v3457 = vmul.f32 %v3152, %v3434
        %v3458 = vmul.f32 %v3154, %v3436
        %v3459 = vmul.f32 %v3355, %v3438
        %v3460 = vmul.f32 %v3156, %v3440
        %v3461 = vmul.f32 %v3158, %v3442
        %v3462 = vmul.f32 %v3358, %v3444
        %v3463 = vmul.f32 %v3162, %v3446
        %v3464 = vmul.f32 %v3164, %v3448
        %v3465 = vmul.f32 %v3363, %v3450
        %v3466 = vmul.f32 %v3166, %v3452
        %v3467 = vmul.f32 %v3168, %v3454
        %v3468 = vmul.f32 %v3366, %v3456
        %v3470 = vlaneseq
        %v3471 = vshrl.u32 %v3470, 7
        %v3472 = vsub.s32 0, %v3471
        %v3473 = vrot.slane %v543, %v3472
        %v3474 = vlaneseq
        %v3475 = vshrl.u32 %v3474, 7
        %v3476 = vsub.s32 1, %v3475
        %v3477 = vrot.slane %v543, %v3476
        %v3478 = vlaneseq
        %v3479 = vshrl.u32 %v3478, 7
        %v3480 = vsub.s32 2, %v3479
        %v3481 = vrot.slane %v543, %v3480
        %v3485 = vmul.f32 %v3457, %v3473
        %v3486 = vmul.f32 %v3458, %v3477
        %v3487 = vmul.f32 %v3459, %v3481
        %v3488 = vmul.f32 %v3460, %v3473
        %v3489 = vmul.f32 %v3461, %v3477
        %v3490 = vmul.f32 %v3462, %v3481
        %v3491 = vmul.f32 %v3463, %v3473
        %v3492 = vmul.f32 %v3464, %v3477
        %v3493 = vmul.f32 %v3465, %v3481
        %v3494 = vmul.f32 %v3466, %v3473
        %v3495 = vmul.f32 %v3467, %v3477
        %v3496 = vmul.f32 %v3468, %v3481
        %3497 = vst [vmem:[#allocation2] sm:$0xff] %v3485
        %3498 = vst [vmem:[#allocation2 + $0x8] sm:$0xff] %v3486
        %3499 = vst [vmem:[#allocation2 + $0x10] sm:$0xff] %v3487
        %3500 = vst [vmem:[#allocation2 + $0x18] sm:$0xff] %v3488
        %3501 = vst [vmem:[#allocation2 + $0x20] sm:$0xff] %v3489
        %3502 = vst [vmem:[#allocation2 + $0x28] sm:$0xff] %v3490
        %3503 = vst [vmem:[#allocation2 + $0x30] sm:$0xff] %v3491
        %3504 = vst [vmem:[#allocation2 + $0x38] sm:$0xff] %v3492
        %3505 = vst [vmem:[#allocation2 + $0x40] sm:$0xff] %v3493
        %3506 = vst [vmem:[#allocation2 + $0x48] sm:$0xff] %v3494
        %3507 = vst [vmem:[#allocation2 + $0x50] sm:$0xff] %v3495
        %3508 = vst [vmem:[#allocation2 + $0x58] sm:$0xff] %v3496
        %v3509 = vld [vmem:[#allocation2] sm:$0xff]
        %v3510 = vld [vmem:[#allocation2 + $0x8] sm:$0xff]
        %v3511 = vld [vmem:[#allocation2 + $0x10] sm:$0xff]
        %v3512 = vld [vmem:[#allocation2 + $0x18] sm:$0xff]
        %v3513 = vld [vmem:[#allocation2 + $0x20] sm:$0xff]
        %v3514 = vld [vmem:[#allocation2 + $0x28] sm:$0xff]
        %v3515 = vld [vmem:[#allocation2 + $0x30] sm:$0xff]
        %v3516 = vld [vmem:[#allocation2 + $0x38] sm:$0xff]
        %v3517 = vld [vmem:[#allocation2 + $0x40] sm:$0xff]
        %v3518 = vld [vmem:[#allocation2 + $0x48] sm:$0xff]
        %v3519 = vld [vmem:[#allocation2 + $0x50] sm:$0xff]
        %v3520 = vld [vmem:[#allocation2 + $0x58] sm:$0xff]
        %3521 = vrot.lane.b32.xlu0 %v3509, 19
        %v3522 = vpop.permute.xlu0 %3521
        %3523 = vrot.lane.b32.xlu0 %v3512, 19
        %v3524 = vpop.permute.xlu0 %3523
        %3525 = vrot.lane.b32.xlu0 %v3515, 19
        %v3526 = vpop.permute.xlu0 %3525
        %3527 = vrot.lane.b32.xlu0 %v3518, 19
        %v3528 = vpop.permute.xlu0 %3527
        %3529 = vrot.lane.b32.xlu0 %v3510, 19
        %v3530 = vpop.permute.xlu0 %3529
        %3531 = vrot.lane.b32.xlu0 %v3513, 19
        %v3532 = vpop.permute.xlu0 %3531
        %3533 = vrot.lane.b32.xlu0 %v3516, 19
        %v3534 = vpop.permute.xlu0 %3533
        %3535 = vrot.lane.b32.xlu0 %v3519, 19
        %v3536 = vpop.permute.xlu0 %3535
        %3537 = vrot.lane.b32.xlu0 %v3511, 19
        %v3538 = vpop.permute.xlu0 %3537
        %3539 = vrot.lane.b32.xlu0 %v3514, 19
        %v3540 = vpop.permute.xlu0 %3539
        %3541 = vrot.lane.b32.xlu0 %v3517, 19
        %v3542 = vpop.permute.xlu0 %3541
        %3543 = vrot.lane.b32.xlu0 %v3520, 19
        %v3544 = vpop.permute.xlu0 %3543
        %v3545 = vsel %vm666, %v3530, %v3538
        %v3546 = vsel %vm666, %v3532, %v3540
        %v3547 = vsel %vm666, %v3534, %v3542
        %v3548 = vsel %vm666, %v3536, %v3544
        %v3549 = vsel %vm666, %v3522, %v3530
        %v3550 = vsel %vm666, %v3524, %v3532
        %v3551 = vsel %vm666, %v3526, %v3534
        %v3552 = vsel %vm666, %v3528, %v3536
        %v3553 = vsel %vm666, %v3538, %v3522
        %v3554 = vsel %vm666, %v3540, %v3524
        %v3555 = vsel %vm666, %v3542, %v3526
        %v3556 = vsel %vm666, %v3544, %v3528
        %v3557 = vpack.c.bf16 %v3554, %v3553
        %v3558 = vpack.c.bf16 %v3550, %v3549
        %v3559 = vpack.c.bf16 %v3546, %v3545
        %v3560 = vpack.c.bf16 %v3556, %v3555
        %v3561 = vpack.c.bf16 %v3552, %v3551
        %v3562 = vpack.c.bf16 %v3548, %v3547
        %v3569 = vunpack.c.l.b16 %v3557
        %v3570 = vunpack.c.l.b16 %v3558
        %v3571 = vunpack.c.l.b16 %v3559
        %v3572 = vunpack.c.h.b16 %v3557
        %v3573 = vunpack.c.h.b16 %v3558
        %v3574 = vunpack.c.h.b16 %v3559
        %v3575 = vunpack.c.l.b16 %v3560
        %v3576 = vunpack.c.l.b16 %v3561
        %v3577 = vunpack.c.l.b16 %v3562
        %v3578 = vunpack.c.h.b16 %v3560
        %v3579 = vunpack.c.h.b16 %v3561
        %v3580 = vunpack.c.h.b16 %v3562
        %v3581 = vpack.c.b16 %v3570, %v3569
        %v3582 = vpack.c.b16 %v3571, %v3571
        %v3583 = vpack.c.b16 %v3573, %v3572
        %v3584 = vpack.c.b16 %v3574, %v3574
        %v3585 = vpack.c.b16 %v3576, %v3575
        %v3586 = vpack.c.b16 %v3577, %v3577
        %v3587 = vpack.c.b16 %v3579, %v3578
        %v3588 = vpack.c.b16 %v3580, %v3580
        %3597 = vst [vmem:[#allocation3] sm:$0xff] %v3581
        %3598 = vst [vmem:[#allocation3 + $0x8] sm:$0xf] %v3582
        %3599 = vst [vmem:[#allocation3 + $0xc] sm:$0xff] %v3583
        %3600 = vst [vmem:[#allocation3 + $0x14] sm:$0xf] %v3584
        %3601 = vst [vmem:[#allocation3 + $0x18] sm:$0xff] %v3585
        %3602 = vst [vmem:[#allocation3 + $0x20] sm:$0xf] %v3586
        %3603 = vst [vmem:[#allocation3 + $0x24] sm:$0xff] %v3587
        %3604 = vst [vmem:[#allocation3 + $0x2c] sm:$0xf] %v3588
        %3605 = vrot.lane.b32.xlu0 %v3509, 18
        %v3606 = vpop.permute.xlu0 %3605
        %3607 = vrot.lane.b32.xlu0 %v3512, 18
        %v3608 = vpop.permute.xlu0 %3607
        %3609 = vrot.lane.b32.xlu0 %v3515, 18
        %v3610 = vpop.permute.xlu0 %3609
        %3611 = vrot.lane.b32.xlu0 %v3518, 18
        %v3612 = vpop.permute.xlu0 %3611
        %3613 = vrot.lane.b32.xlu0 %v3510, 18
        %v3614 = vpop.permute.xlu0 %3613
        %3615 = vrot.lane.b32.xlu0 %v3513, 18
        %v3616 = vpop.permute.xlu0 %3615
        %3617 = vrot.lane.b32.xlu0 %v3516, 18
        %v3618 = vpop.permute.xlu0 %3617
        %3619 = vrot.lane.b32.xlu0 %v3519, 18
        %v3620 = vpop.permute.xlu0 %3619
        %3621 = vrot.lane.b32.xlu0 %v3511, 18
        %v3622 = vpop.permute.xlu0 %3621
        %3623 = vrot.lane.b32.xlu0 %v3514, 18
        %v3624 = vpop.permute.xlu0 %3623
        %3625 = vrot.lane.b32.xlu0 %v3517, 18
        %v3626 = vpop.permute.xlu0 %3625
        %3627 = vrot.lane.b32.xlu0 %v3520, 18
        %v3628 = vpop.permute.xlu0 %3627
        %v3629 = vsel %vm835, %v3614, %v3622
        %v3630 = vsel %vm835, %v3616, %v3624
        %v3631 = vsel %vm835, %v3618, %v3626
        %v3632 = vsel %vm835, %v3620, %v3628
        %v3633 = vsel %vm835, %v3606, %v3614
        %v3634 = vsel %vm835, %v3608, %v3616
        %v3635 = vsel %vm835, %v3610, %v3618
        %v3636 = vsel %vm835, %v3612, %v3620
        %v3637 = vsel %vm835, %v3622, %v3606
        %v3638 = vsel %vm835, %v3624, %v3608
        %v3639 = vsel %vm835, %v3626, %v3610
        %v3640 = vsel %vm835, %v3628, %v3612
        %v3641 = vpack.c.bf16 %v3638, %v3637
        %v3642 = vpack.c.bf16 %v3634, %v3633
        %v3643 = vpack.c.bf16 %v3630, %v3629
        %v3644 = vpack.c.bf16 %v3640, %v3639
        %v3645 = vpack.c.bf16 %v3636, %v3635
        %v3646 = vpack.c.bf16 %v3632, %v3631
        %v3653 = vunpack.c.l.b16 %v3641
        %v3654 = vunpack.c.l.b16 %v3642
        %v3655 = vunpack.c.l.b16 %v3643
        %v3656 = vunpack.c.h.b16 %v3641
        %v3657 = vunpack.c.h.b16 %v3642
        %v3658 = vunpack.c.h.b16 %v3643
        %v3659 = vunpack.c.l.b16 %v3644
        %v3660 = vunpack.c.l.b16 %v3645
        %v3661 = vunpack.c.l.b16 %v3646
        %v3662 = vunpack.c.h.b16 %v3644
        %v3663 = vunpack.c.h.b16 %v3645
        %v3664 = vunpack.c.h.b16 %v3646
        %v3665 = vpack.c.b16 %v3654, %v3653
        %v3666 = vpack.c.b16 %v3655, %v3655
        %v3667 = vpack.c.b16 %v3657, %v3656
        %v3668 = vpack.c.b16 %v3658, %v3658
        %v3669 = vpack.c.b16 %v3660, %v3659
        %v3670 = vpack.c.b16 %v3661, %v3661
        %v3671 = vpack.c.b16 %v3663, %v3662
        %v3672 = vpack.c.b16 %v3664, %v3664
        %3681 = vst [vmem:[#allocation3 + $0x30] sm:$0xff] %v3665
        %3682 = vst [vmem:[#allocation3 + $0x38] sm:$0xf] %v3666
        %3683 = vst [vmem:[#allocation3 + $0x3c] sm:$0xff] %v3667
        %3684 = vst [vmem:[#allocation3 + $0x44] sm:$0xf] %v3668
        %3685 = vst [vmem:[#allocation3 + $0x48] sm:$0xff] %v3669
        %3686 = vst [vmem:[#allocation3 + $0x50] sm:$0xf] %v3670
        %3687 = vst [vmem:[#allocation3 + $0x54] sm:$0xff] %v3671
        %3688 = vst [vmem:[#allocation3 + $0x5c] sm:$0xf] %v3672
        %3689 = vrot.lane.b32.xlu0 %v3509, 17
        %v3690 = vpop.permute.xlu0 %3689
        %3691 = vrot.lane.b32.xlu0 %v3512, 17
        %v3692 = vpop.permute.xlu0 %3691
        %3693 = vrot.lane.b32.xlu0 %v3515, 17
        %v3694 = vpop.permute.xlu0 %3693
        %3695 = vrot.lane.b32.xlu0 %v3518, 17
        %v3696 = vpop.permute.xlu0 %3695
        %3697 = vrot.lane.b32.xlu0 %v3510, 17
        %v3698 = vpop.permute.xlu0 %3697
        %3699 = vrot.lane.b32.xlu0 %v3513, 17
        %v3700 = vpop.permute.xlu0 %3699
        %3701 = vrot.lane.b32.xlu0 %v3516, 17
        %v3702 = vpop.permute.xlu0 %3701
        %3703 = vrot.lane.b32.xlu0 %v3519, 17
        %v3704 = vpop.permute.xlu0 %3703
        %3705 = vrot.lane.b32.xlu0 %v3511, 17
        %v3706 = vpop.permute.xlu0 %3705
        %3707 = vrot.lane.b32.xlu0 %v3514, 17
        %v3708 = vpop.permute.xlu0 %3707
        %3709 = vrot.lane.b32.xlu0 %v3517, 17
        %v3710 = vpop.permute.xlu0 %3709
        %3711 = vrot.lane.b32.xlu0 %v3520, 17
        %v3712 = vpop.permute.xlu0 %3711
        %v3713 = vsel %vm1004, %v3698, %v3706
        %v3714 = vsel %vm1004, %v3700, %v3708
        %v3715 = vsel %vm1004, %v3702, %v3710
        %v3716 = vsel %vm1004, %v3704, %v3712
        %v3717 = vsel %vm1004, %v3690, %v3698
        %v3718 = vsel %vm1004, %v3692, %v3700
        %v3719 = vsel %vm1004, %v3694, %v3702
        %v3720 = vsel %vm1004, %v3696, %v3704
        %v3721 = vsel %vm1004, %v3706, %v3690
        %v3722 = vsel %vm1004, %v3708, %v3692
        %v3723 = vsel %vm1004, %v3710, %v3694
        %v3724 = vsel %vm1004, %v3712, %v3696
        %v3725 = vpack.c.bf16 %v3722, %v3721
        %v3726 = vpack.c.bf16 %v3718, %v3717
        %v3727 = vpack.c.bf16 %v3714, %v3713
        %v3728 = vpack.c.bf16 %v3724, %v3723
        %v3729 = vpack.c.bf16 %v3720, %v3719
        %v3730 = vpack.c.bf16 %v3716, %v3715
        %v3737 = vunpack.c.l.b16 %v3725
        %v3738 = vunpack.c.l.b16 %v3726
        %v3739 = vunpack.c.l.b16 %v3727
        %v3740 = vunpack.c.h.b16 %v3725
        %v3741 = vunpack.c.h.b16 %v3726
        %v3742 = vunpack.c.h.b16 %v3727
        %v3743 = vunpack.c.l.b16 %v3728
        %v3744 = vunpack.c.l.b16 %v3729
        %v3745 = vunpack.c.l.b16 %v3730
        %v3746 = vunpack.c.h.b16 %v3728
        %v3747 = vunpack.c.h.b16 %v3729
        %v3748 = vunpack.c.h.b16 %v3730
        %v3749 = vpack.c.b16 %v3738, %v3737
        %v3750 = vpack.c.b16 %v3739, %v3739
        %v3751 = vpack.c.b16 %v3741, %v3740
        %v3752 = vpack.c.b16 %v3742, %v3742
        %v3753 = vpack.c.b16 %v3744, %v3743
        %v3754 = vpack.c.b16 %v3745, %v3745
        %v3755 = vpack.c.b16 %v3747, %v3746
        %v3756 = vpack.c.b16 %v3748, %v3748
        %3765 = vst [vmem:[#allocation3 + $0x60] sm:$0xff] %v3749
        %3766 = vst [vmem:[#allocation3 + $0x68] sm:$0xf] %v3750
        %3767 = vst [vmem:[#allocation3 + $0x6c] sm:$0xff] %v3751
        %3768 = vst [vmem:[#allocation3 + $0x74] sm:$0xf] %v3752
        %3769 = vst [vmem:[#allocation3 + $0x78] sm:$0xff] %v3753
        %3770 = vst [vmem:[#allocation3 + $0x80] sm:$0xf] %v3754
        %3771 = vst [vmem:[#allocation3 + $0x84] sm:$0xff] %v3755
        %3772 = vst [vmem:[#allocation3 + $0x8c] sm:$0xf] %v3756
        %3773 = vrot.lane.b32.xlu0 %v3509, 1
        %v3774 = vpop.permute.xlu0 %3773
        %3775 = vrot.lane.b32.xlu0 %v3512, 1
        %v3776 = vpop.permute.xlu0 %3775
        %3777 = vrot.lane.b32.xlu0 %v3515, 1
        %v3778 = vpop.permute.xlu0 %3777
        %3779 = vrot.lane.b32.xlu0 %v3518, 1
        %v3780 = vpop.permute.xlu0 %3779
        %3781 = vrot.lane.b32.xlu0 %v3510, 1
        %v3782 = vpop.permute.xlu0 %3781
        %3783 = vrot.lane.b32.xlu0 %v3513, 1
        %v3784 = vpop.permute.xlu0 %3783
        %3785 = vrot.lane.b32.xlu0 %v3516, 1
        %v3786 = vpop.permute.xlu0 %3785
        %3787 = vrot.lane.b32.xlu0 %v3519, 1
        %v3788 = vpop.permute.xlu0 %3787
        %3789 = vrot.lane.b32.xlu0 %v3511, 1
        %v3790 = vpop.permute.xlu0 %3789
        %3791 = vrot.lane.b32.xlu0 %v3514, 1
        %v3792 = vpop.permute.xlu0 %3791
        %3793 = vrot.lane.b32.xlu0 %v3517, 1
        %v3794 = vpop.permute.xlu0 %3793
        %3795 = vrot.lane.b32.xlu0 %v3520, 1
        %v3796 = vpop.permute.xlu0 %3795
        %v3797 = vsel %vm1173, %v3782, %v3790
        %v3798 = vsel %vm1173, %v3784, %v3792
        %v3799 = vsel %vm1173, %v3786, %v3794
        %v3800 = vsel %vm1173, %v3788, %v3796
        %v3801 = vsel %vm1173, %v3774, %v3782
        %v3802 = vsel %vm1173, %v3776, %v3784
        %v3803 = vsel %vm1173, %v3778, %v3786
        %v3804 = vsel %vm1173, %v3780, %v3788
        %v3805 = vsel %vm1173, %v3790, %v3774
        %v3806 = vsel %vm1173, %v3792, %v3776
        %v3807 = vsel %vm1173, %v3794, %v3778
        %v3808 = vsel %vm1173, %v3796, %v3780
        %v3809 = vpack.c.bf16 %v3806, %v3805
        %v3810 = vpack.c.bf16 %v3802, %v3801
        %v3811 = vpack.c.bf16 %v3798, %v3797
        %v3812 = vpack.c.bf16 %v3808, %v3807
        %v3813 = vpack.c.bf16 %v3804, %v3803
        %v3814 = vpack.c.bf16 %v3800, %v3799
        %v3821 = vunpack.c.l.b16 %v3809
        %v3822 = vunpack.c.l.b16 %v3810
        %v3823 = vunpack.c.l.b16 %v3811
        %v3824 = vunpack.c.h.b16 %v3809
        %v3825 = vunpack.c.h.b16 %v3810
        %v3826 = vunpack.c.h.b16 %v3811
        %v3827 = vunpack.c.l.b16 %v3812
        %v3828 = vunpack.c.l.b16 %v3813
        %v3829 = vunpack.c.l.b16 %v3814
        %v3830 = vunpack.c.h.b16 %v3812
        %v3831 = vunpack.c.h.b16 %v3813
        %v3832 = vunpack.c.h.b16 %v3814
        %v3833 = vpack.c.b16 %v3822, %v3821
        %v3834 = vpack.c.b16 %v3823, %v3823
        %v3835 = vpack.c.b16 %v3825, %v3824
        %v3836 = vpack.c.b16 %v3826, %v3826
        %v3837 = vpack.c.b16 %v3828, %v3827
        %v3838 = vpack.c.b16 %v3829, %v3829
        %v3839 = vpack.c.b16 %v3831, %v3830
        %v3840 = vpack.c.b16 %v3832, %v3832
        %3849 = vst [vmem:[#allocation3 + $0x90] sm:$0xff] %v3833
        %3850 = vst [vmem:[#allocation3 + $0x98] sm:$0xf] %v3834
        %3851 = vst [vmem:[#allocation3 + $0x9c] sm:$0xff] %v3835
        %3852 = vst [vmem:[#allocation3 + $0xa4] sm:$0xf] %v3836
        %3853 = vst [vmem:[#allocation3 + $0xa8] sm:$0xff] %v3837
        %3854 = vst [vmem:[#allocation3 + $0xb0] sm:$0xf] %v3838
        %3855 = vst [vmem:[#allocation3 + $0xb4] sm:$0xff] %v3839
        %3856 = vst [vmem:[#allocation3 + $0xbc] sm:$0xf] %v3840
        %v3857 = vpack.c.bf16 %v3512, %v3509
        %v3858 = vpack.c.bf16 %v3513, %v3510
        %v3859 = vpack.c.bf16 %v3514, %v3511
        %v3860 = vpack.c.bf16 %v3518, %v3515
        %v3861 = vpack.c.bf16 %v3519, %v3516
        %v3862 = vpack.c.bf16 %v3520, %v3517
        %v3869 = vunpack.c.l.b16 %v3857
        %v3870 = vunpack.c.l.b16 %v3858
        %v3871 = vunpack.c.l.b16 %v3859
        %v3872 = vunpack.c.h.b16 %v3857
        %v3873 = vunpack.c.h.b16 %v3858
        %v3874 = vunpack.c.h.b16 %v3859
        %v3875 = vunpack.c.l.b16 %v3860
        %v3876 = vunpack.c.l.b16 %v3861
        %v3877 = vunpack.c.l.b16 %v3862
        %v3878 = vunpack.c.h.b16 %v3860
        %v3879 = vunpack.c.h.b16 %v3861
        %v3880 = vunpack.c.h.b16 %v3862
        %v3881 = vpack.c.b16 %v3870, %v3869
        %v3882 = vpack.c.b16 %v3871, %v3871
        %v3883 = vpack.c.b16 %v3873, %v3872
        %v3884 = vpack.c.b16 %v3874, %v3874
        %v3885 = vpack.c.b16 %v3876, %v3875
        %v3886 = vpack.c.b16 %v3877, %v3877
        %v3887 = vpack.c.b16 %v3879, %v3878
        %v3888 = vpack.c.b16 %v3880, %v3880
        %3897 = vst [vmem:[#allocation3 + $0xc0] sm:$0xff] %v3881
        %3898 = vst [vmem:[#allocation3 + $0xc8] sm:$0xf] %v3882
        %3899 = vst [vmem:[#allocation3 + $0xcc] sm:$0xff] %v3883
        %3900 = vst [vmem:[#allocation3 + $0xd4] sm:$0xf] %v3884
        %3901 = vst [vmem:[#allocation3 + $0xd8] sm:$0xff] %v3885
        %3902 = vst [vmem:[#allocation3 + $0xe0] sm:$0xf] %v3886
        %3903 = vst [vmem:[#allocation3 + $0xe4] sm:$0xff] %v3887
        %3904 = vst [vmem:[#allocation3 + $0xec] sm:$0xf] %v3888
        %3905 = vrot.lane.b32.xlu0 %v3509, 127
        %v3906 = vpop.permute.xlu0 %3905
        %3907 = vrot.lane.b32.xlu0 %v3512, 127
        %v3908 = vpop.permute.xlu0 %3907
        %3909 = vrot.lane.b32.xlu0 %v3515, 127
        %v3910 = vpop.permute.xlu0 %3909
        %3911 = vrot.lane.b32.xlu0 %v3518, 127
        %v3912 = vpop.permute.xlu0 %3911
        %3913 = vrot.lane.b32.xlu0 %v3510, 127
        %v3914 = vpop.permute.xlu0 %3913
        %3915 = vrot.lane.b32.xlu0 %v3513, 127
        %v3916 = vpop.permute.xlu0 %3915
        %3917 = vrot.lane.b32.xlu0 %v3516, 127
        %v3918 = vpop.permute.xlu0 %3917
        %3919 = vrot.lane.b32.xlu0 %v3519, 127
        %v3920 = vpop.permute.xlu0 %3919
        %3921 = vrot.lane.b32.xlu0 %v3511, 127
        %v3922 = vpop.permute.xlu0 %3921
        %3923 = vrot.lane.b32.xlu0 %v3514, 127
        %v3924 = vpop.permute.xlu0 %3923
        %3925 = vrot.lane.b32.xlu0 %v3517, 127
        %v3926 = vpop.permute.xlu0 %3925
        %3927 = vrot.lane.b32.xlu0 %v3520, 127
        %v3928 = vpop.permute.xlu0 %3927
        %v3929 = vsel %vm1438, %v3914, %v3922
        %v3930 = vsel %vm1438, %v3916, %v3924
        %v3931 = vsel %vm1438, %v3918, %v3926
        %v3932 = vsel %vm1438, %v3920, %v3928
        %v3933 = vsel %vm1438, %v3906, %v3914
        %v3934 = vsel %vm1438, %v3908, %v3916
        %v3935 = vsel %vm1438, %v3910, %v3918
        %v3936 = vsel %vm1438, %v3912, %v3920
        %v3937 = vsel %vm1438, %v3922, %v3906
        %v3938 = vsel %vm1438, %v3924, %v3908
        %v3939 = vsel %vm1438, %v3926, %v3910
        %v3940 = vsel %vm1438, %v3928, %v3912
        %v3941 = vpack.c.bf16 %v3934, %v3933
        %v3942 = vpack.c.bf16 %v3930, %v3929
        %v3943 = vpack.c.bf16 %v3938, %v3937
        %v3944 = vpack.c.bf16 %v3936, %v3935
        %v3945 = vpack.c.bf16 %v3932, %v3931
        %v3946 = vpack.c.bf16 %v3940, %v3939
        %v3953 = vunpack.c.l.b16 %v3941
        %v3954 = vunpack.c.l.b16 %v3942
        %v3955 = vunpack.c.l.b16 %v3943
        %v3956 = vunpack.c.h.b16 %v3941
        %v3957 = vunpack.c.h.b16 %v3942
        %v3958 = vunpack.c.h.b16 %v3943
        %v3959 = vunpack.c.l.b16 %v3944
        %v3960 = vunpack.c.l.b16 %v3945
        %v3961 = vunpack.c.l.b16 %v3946
        %v3962 = vunpack.c.h.b16 %v3944
        %v3963 = vunpack.c.h.b16 %v3945
        %v3964 = vunpack.c.h.b16 %v3946
        %v3965 = vpack.c.b16 %v3954, %v3953
        %v3966 = vpack.c.b16 %v3955, %v3955
        %v3967 = vpack.c.b16 %v3957, %v3956
        %v3968 = vpack.c.b16 %v3958, %v3958
        %v3969 = vpack.c.b16 %v3960, %v3959
        %v3970 = vpack.c.b16 %v3961, %v3961
        %v3971 = vpack.c.b16 %v3963, %v3962
        %v3972 = vpack.c.b16 %v3964, %v3964
        %3981 = vst [vmem:[#allocation3 + $0xf0] sm:$0xff] %v3965
        %3982 = vst [vmem:[#allocation3 + $0xf8] sm:$0xf] %v3966
        %3983 = vst [vmem:[#allocation3 + $0xfc] sm:$0xff] %v3967
        %3984 = vst [vmem:[#allocation3 + $0x104] sm:$0xf] %v3968
        %3985 = vst [vmem:[#allocation3 + $0x108] sm:$0xff] %v3969
        %3986 = vst [vmem:[#allocation3 + $0x110] sm:$0xf] %v3970
        %3987 = vst [vmem:[#allocation3 + $0x114] sm:$0xff] %v3971
        %3988 = vst [vmem:[#allocation3 + $0x11c] sm:$0xf] %v3972
        %3989 = vrot.lane.b32.xlu0 %v3509, 111
        %v3990 = vpop.permute.xlu0 %3989
        %3991 = vrot.lane.b32.xlu0 %v3512, 111
        %v3992 = vpop.permute.xlu0 %3991
        %3993 = vrot.lane.b32.xlu0 %v3515, 111
        %v3994 = vpop.permute.xlu0 %3993
        %3995 = vrot.lane.b32.xlu0 %v3518, 111
        %v3996 = vpop.permute.xlu0 %3995
        %3997 = vrot.lane.b32.xlu0 %v3510, 111
        %v3998 = vpop.permute.xlu0 %3997
        %3999 = vrot.lane.b32.xlu0 %v3513, 111
        %v4000 = vpop.permute.xlu0 %3999
        %4001 = vrot.lane.b32.xlu0 %v3516, 111
        %v4002 = vpop.permute.xlu0 %4001
        %4003 = vrot.lane.b32.xlu0 %v3519, 111
        %v4004 = vpop.permute.xlu0 %4003
        %4005 = vrot.lane.b32.xlu0 %v3511, 111
        %v4006 = vpop.permute.xlu0 %4005
        %4007 = vrot.lane.b32.xlu0 %v3514, 111
        %v4008 = vpop.permute.xlu0 %4007
        %4009 = vrot.lane.b32.xlu0 %v3517, 111
        %v4010 = vpop.permute.xlu0 %4009
        %4011 = vrot.lane.b32.xlu0 %v3520, 111
        %v4012 = vpop.permute.xlu0 %4011
        %v4013 = vsel %vm1607, %v3998, %v4006
        %v4014 = vsel %vm1607, %v4000, %v4008
        %v4015 = vsel %vm1607, %v4002, %v4010
        %v4016 = vsel %vm1607, %v4004, %v4012
        %v4017 = vsel %vm1607, %v3990, %v3998
        %v4018 = vsel %vm1607, %v3992, %v4000
        %v4019 = vsel %vm1607, %v3994, %v4002
        %v4020 = vsel %vm1607, %v3996, %v4004
        %v4021 = vsel %vm1607, %v4006, %v3990
        %v4022 = vsel %vm1607, %v4008, %v3992
        %v4023 = vsel %vm1607, %v4010, %v3994
        %v4024 = vsel %vm1607, %v4012, %v3996
        %v4025 = vpack.c.bf16 %v4018, %v4017
        %v4026 = vpack.c.bf16 %v4014, %v4013
        %v4027 = vpack.c.bf16 %v4022, %v4021
        %v4028 = vpack.c.bf16 %v4020, %v4019
        %v4029 = vpack.c.bf16 %v4016, %v4015
        %v4030 = vpack.c.bf16 %v4024, %v4023
        %v4037 = vunpack.c.l.b16 %v4025
        %v4038 = vunpack.c.l.b16 %v4026
        %v4039 = vunpack.c.l.b16 %v4027
        %v4040 = vunpack.c.h.b16 %v4025
        %v4041 = vunpack.c.h.b16 %v4026
        %v4042 = vunpack.c.h.b16 %v4027
        %v4043 = vunpack.c.l.b16 %v4028
        %v4044 = vunpack.c.l.b16 %v4029
        %v4045 = vunpack.c.l.b16 %v4030
        %v4046 = vunpack.c.h.b16 %v4028
        %v4047 = vunpack.c.h.b16 %v4029
        %v4048 = vunpack.c.h.b16 %v4030
        %v4049 = vpack.c.b16 %v4038, %v4037
        %v4050 = vpack.c.b16 %v4039, %v4039
        %v4051 = vpack.c.b16 %v4041, %v4040
        %v4052 = vpack.c.b16 %v4042, %v4042
        %v4053 = vpack.c.b16 %v4044, %v4043
        %v4054 = vpack.c.b16 %v4045, %v4045
        %v4055 = vpack.c.b16 %v4047, %v4046
        %v4056 = vpack.c.b16 %v4048, %v4048
        %4065 = vst [vmem:[#allocation3 + $0x120] sm:$0xff] %v4049
        %4066 = vst [vmem:[#allocation3 + $0x128] sm:$0xf] %v4050
        %4067 = vst [vmem:[#allocation3 + $0x12c] sm:$0xff] %v4051
        %4068 = vst [vmem:[#allocation3 + $0x134] sm:$0xf] %v4052
        %4069 = vst [vmem:[#allocation3 + $0x138] sm:$0xff] %v4053
        %4070 = vst [vmem:[#allocation3 + $0x140] sm:$0xf] %v4054
        %4071 = vst [vmem:[#allocation3 + $0x144] sm:$0xff] %v4055
        %4072 = vst [vmem:[#allocation3 + $0x14c] sm:$0xf] %v4056
        %4073 = vrot.lane.b32.xlu0 %v3509, 110
        %v4074 = vpop.permute.xlu0 %4073
        %4075 = vrot.lane.b32.xlu0 %v3512, 110
        %v4076 = vpop.permute.xlu0 %4075
        %4077 = vrot.lane.b32.xlu0 %v3515, 110
        %v4078 = vpop.permute.xlu0 %4077
        %4079 = vrot.lane.b32.xlu0 %v3518, 110
        %v4080 = vpop.permute.xlu0 %4079
        %4081 = vrot.lane.b32.xlu0 %v3510, 110
        %v4082 = vpop.permute.xlu0 %4081
        %4083 = vrot.lane.b32.xlu0 %v3513, 110
        %v4084 = vpop.permute.xlu0 %4083
        %4085 = vrot.lane.b32.xlu0 %v3516, 110
        %v4086 = vpop.permute.xlu0 %4085
        %4087 = vrot.lane.b32.xlu0 %v3519, 110
        %v4088 = vpop.permute.xlu0 %4087
        %4089 = vrot.lane.b32.xlu0 %v3511, 110
        %v4090 = vpop.permute.xlu0 %4089
        %4091 = vrot.lane.b32.xlu0 %v3514, 110
        %v4092 = vpop.permute.xlu0 %4091
        %4093 = vrot.lane.b32.xlu0 %v3517, 110
        %v4094 = vpop.permute.xlu0 %4093
        %4095 = vrot.lane.b32.xlu0 %v3520, 110
        %v4096 = vpop.permute.xlu0 %4095
        %v4097 = vsel %vm1776, %v4082, %v4090
        %v4098 = vsel %vm1776, %v4084, %v4092
        %v4099 = vsel %vm1776, %v4086, %v4094
        %v4100 = vsel %vm1776, %v4088, %v4096
        %v4101 = vsel %vm1776, %v4074, %v4082
        %v4102 = vsel %vm1776, %v4076, %v4084
        %v4103 = vsel %vm1776, %v4078, %v4086
        %v4104 = vsel %vm1776, %v4080, %v4088
        %v4105 = vsel %vm1776, %v4090, %v4074
        %v4106 = vsel %vm1776, %v4092, %v4076
        %v4107 = vsel %vm1776, %v4094, %v4078
        %v4108 = vsel %vm1776, %v4096, %v4080
        %v4109 = vpack.c.bf16 %v4102, %v4101
        %v4110 = vpack.c.bf16 %v4098, %v4097
        %v4111 = vpack.c.bf16 %v4106, %v4105
        %v4112 = vpack.c.bf16 %v4104, %v4103
        %v4113 = vpack.c.bf16 %v4100, %v4099
        %v4114 = vpack.c.bf16 %v4108, %v4107
        %v4121 = vunpack.c.l.b16 %v4109
        %v4122 = vunpack.c.l.b16 %v4110
        %v4123 = vunpack.c.l.b16 %v4111
        %v4124 = vunpack.c.h.b16 %v4109
        %v4125 = vunpack.c.h.b16 %v4110
        %v4126 = vunpack.c.h.b16 %v4111
        %v4127 = vunpack.c.l.b16 %v4112
        %v4128 = vunpack.c.l.b16 %v4113
        %v4129 = vunpack.c.l.b16 %v4114
        %v4130 = vunpack.c.h.b16 %v4112
        %v4131 = vunpack.c.h.b16 %v4113
        %v4132 = vunpack.c.h.b16 %v4114
        %v4133 = vpack.c.b16 %v4122, %v4121
        %v4134 = vpack.c.b16 %v4123, %v4123
        %v4135 = vpack.c.b16 %v4125, %v4124
        %v4136 = vpack.c.b16 %v4126, %v4126
        %v4137 = vpack.c.b16 %v4128, %v4127
        %v4138 = vpack.c.b16 %v4129, %v4129
        %v4139 = vpack.c.b16 %v4131, %v4130
        %v4140 = vpack.c.b16 %v4132, %v4132
        %4149 = vst [vmem:[#allocation3 + $0x150] sm:$0xff] %v4133
        %4150 = vst [vmem:[#allocation3 + $0x158] sm:$0xf] %v4134
        %4151 = vst [vmem:[#allocation3 + $0x15c] sm:$0xff] %v4135
        %4152 = vst [vmem:[#allocation3 + $0x164] sm:$0xf] %v4136
        %4153 = vst [vmem:[#allocation3 + $0x168] sm:$0xff] %v4137
        %4154 = vst [vmem:[#allocation3 + $0x170] sm:$0xf] %v4138
        %4155 = vst [vmem:[#allocation3 + $0x174] sm:$0xff] %v4139
        %4156 = vst [vmem:[#allocation3 + $0x17c] sm:$0xf] %v4140
        %4157 = vrot.lane.b32.xlu0 %v3509, 109
        %v4158 = vpop.permute.xlu0 %4157
        %4159 = vrot.lane.b32.xlu0 %v3512, 109
        %v4160 = vpop.permute.xlu0 %4159
        %4161 = vrot.lane.b32.xlu0 %v3515, 109
        %v4162 = vpop.permute.xlu0 %4161
        %4163 = vrot.lane.b32.xlu0 %v3518, 109
        %v4164 = vpop.permute.xlu0 %4163
        %4165 = vrot.lane.b32.xlu0 %v3510, 109
        %v4166 = vpop.permute.xlu0 %4165
        %4167 = vrot.lane.b32.xlu0 %v3513, 109
        %v4168 = vpop.permute.xlu0 %4167
        %4169 = vrot.lane.b32.xlu0 %v3516, 109
        %v4170 = vpop.permute.xlu0 %4169
        %4171 = vrot.lane.b32.xlu0 %v3519, 109
        %v4172 = vpop.permute.xlu0 %4171
        %4173 = vrot.lane.b32.xlu0 %v3511, 109
        %v4174 = vpop.permute.xlu0 %4173
        %4175 = vrot.lane.b32.xlu0 %v3514, 109
        %v4176 = vpop.permute.xlu0 %4175
        %4177 = vrot.lane.b32.xlu0 %v3517, 109
        %v4178 = vpop.permute.xlu0 %4177
        %4179 = vrot.lane.b32.xlu0 %v3520, 109
        %v4180 = vpop.permute.xlu0 %4179
        %v4181 = vsel %vm1945, %v4166, %v4174
        %v4182 = vsel %vm1945, %v4168, %v4176
        %v4183 = vsel %vm1945, %v4170, %v4178
        %v4184 = vsel %vm1945, %v4172, %v4180
        %v4185 = vsel %vm1945, %v4158, %v4166
        %v4186 = vsel %vm1945, %v4160, %v4168
        %v4187 = vsel %vm1945, %v4162, %v4170
        %v4188 = vsel %vm1945, %v4164, %v4172
        %v4189 = vsel %vm1945, %v4174, %v4158
        %v4190 = vsel %vm1945, %v4176, %v4160
        %v4191 = vsel %vm1945, %v4178, %v4162
        %v4192 = vsel %vm1945, %v4180, %v4164
        %v4193 = vpack.c.bf16 %v4186, %v4185
        %v4194 = vpack.c.bf16 %v4182, %v4181
        %v4195 = vpack.c.bf16 %v4190, %v4189
        %v4196 = vpack.c.bf16 %v4188, %v4187
        %v4197 = vpack.c.bf16 %v4184, %v4183
        %v4198 = vpack.c.bf16 %v4192, %v4191
        %v4205 = vunpack.c.l.b16 %v4193
        %v4206 = vunpack.c.l.b16 %v4194
        %v4207 = vunpack.c.l.b16 %v4195
        %v4208 = vunpack.c.h.b16 %v4193
        %v4209 = vunpack.c.h.b16 %v4194
        %v4210 = vunpack.c.h.b16 %v4195
        %v4211 = vunpack.c.l.b16 %v4196
        %v4212 = vunpack.c.l.b16 %v4197
        %v4213 = vunpack.c.l.b16 %v4198
        %v4214 = vunpack.c.h.b16 %v4196
        %v4215 = vunpack.c.h.b16 %v4197
        %v4216 = vunpack.c.h.b16 %v4198
        %v4217 = vpack.c.b16 %v4206, %v4205
        %v4218 = vpack.c.b16 %v4207, %v4207
        %v4219 = vpack.c.b16 %v4209, %v4208
        %v4220 = vpack.c.b16 %v4210, %v4210
        %v4221 = vpack.c.b16 %v4212, %v4211
        %v4222 = vpack.c.b16 %v4213, %v4213
        %v4223 = vpack.c.b16 %v4215, %v4214
        %v4224 = vpack.c.b16 %v4216, %v4216
        %4233 = vst [vmem:[#allocation3 + $0x180] sm:$0xff] %v4217
        %4234 = vst [vmem:[#allocation3 + $0x188] sm:$0xf] %v4218
        %4235 = vst [vmem:[#allocation3 + $0x18c] sm:$0xff] %v4219
        %4236 = vst [vmem:[#allocation3 + $0x194] sm:$0xf] %v4220
        %4237 = vst [vmem:[#allocation3 + $0x198] sm:$0xff] %v4221
        %4238 = vst [vmem:[#allocation3 + $0x1a0] sm:$0xf] %v4222
        %4239 = vst [vmem:[#allocation3 + $0x1a4] sm:$0xff] %v4223
        %4240 = vst [vmem:[#allocation3 + $0x1ac] sm:$0xf] %v4224
        %v4241 = vld [vmem:[%s4] sm:$0xff]
        %v4242 = vld [vmem:[%s4 + $0x8] sm:$0xf]
        %v4243 = vld [vmem:[%s4 + $0xc] sm:$0xff]
        %v4244 = vld [vmem:[%s4 + $0x14] sm:$0xf]
        %v4245 = vld [vmem:[%s4 + $0x18] sm:$0xff]
        %v4246 = vld [vmem:[%s4 + $0x20] sm:$0xf]
        %v4247 = vld [vmem:[%s4 + $0x24] sm:$0xff]
        %v4248 = vld [vmem:[%s4 + $0x2c] sm:$0xf]
        %v4249 = vld [vmem:[%s4 + $0x30] sm:$0xff]
        %v4250 = vld [vmem:[%s4 + $0x38] sm:$0xf]
        %v4251 = vld [vmem:[%s4 + $0x3c] sm:$0xff]
        %v4252 = vld [vmem:[%s4 + $0x44] sm:$0xf]
        %v4253 = vld [vmem:[%s4 + $0x48] sm:$0xff]
        %v4254 = vld [vmem:[%s4 + $0x50] sm:$0xf]
        %v4255 = vld [vmem:[%s4 + $0x54] sm:$0xff]
        %v4256 = vld [vmem:[%s4 + $0x5c] sm:$0xf]
        %v4257 = vld [vmem:[#allocation3] sm:$0xff]
        %v4258 = vld [vmem:[#allocation3 + $0x8] sm:$0xf]
        %v4259 = vld [vmem:[#allocation3 + $0xc] sm:$0xff]
        %v4260 = vld [vmem:[#allocation3 + $0x14] sm:$0xf]
        %v4261 = vld [vmem:[#allocation3 + $0x18] sm:$0xff]
        %v4262 = vld [vmem:[#allocation3 + $0x20] sm:$0xf]
        %v4263 = vld [vmem:[#allocation3 + $0x24] sm:$0xff]
        %v4264 = vld [vmem:[#allocation3 + $0x2c] sm:$0xf]
        %v4265 = vld [vmem:[#allocation3 + $0x30] sm:$0xff]
        %v4266 = vld [vmem:[#allocation3 + $0x38] sm:$0xf]
        %v4267 = vld [vmem:[#allocation3 + $0x3c] sm:$0xff]
        %v4268 = vld [vmem:[#allocation3 + $0x44] sm:$0xf]
        %v4269 = vld [vmem:[#allocation3 + $0x48] sm:$0xff]
        %v4270 = vld [vmem:[#allocation3 + $0x50] sm:$0xf]
        %v4271 = vld [vmem:[#allocation3 + $0x54] sm:$0xff]
        %v4272 = vld [vmem:[#allocation3 + $0x5c] sm:$0xf]
        %v4273 = vld [vmem:[#allocation3 + $0x60] sm:$0xff]
        %v4274 = vld [vmem:[#allocation3 + $0x68] sm:$0xf]
        %v4275 = vld [vmem:[#allocation3 + $0x6c] sm:$0xff]
        %v4276 = vld [vmem:[#allocation3 + $0x74] sm:$0xf]
        %v4277 = vld [vmem:[#allocation3 + $0x78] sm:$0xff]
        %v4278 = vld [vmem:[#allocation3 + $0x80] sm:$0xf]
        %v4279 = vld [vmem:[#allocation3 + $0x84] sm:$0xff]
        %v4280 = vld [vmem:[#allocation3 + $0x8c] sm:$0xf]
        %v4281 = vld [vmem:[#allocation3 + $0x90] sm:$0xff]
        %v4282 = vld [vmem:[#allocation3 + $0x98] sm:$0xf]
        %v4283 = vld [vmem:[#allocation3 + $0x9c] sm:$0xff]
        %v4284 = vld [vmem:[#allocation3 + $0xa4] sm:$0xf]
        %v4285 = vld [vmem:[#allocation3 + $0xa8] sm:$0xff]
        %v4286 = vld [vmem:[#allocation3 + $0xb0] sm:$0xf]
        %v4287 = vld [vmem:[#allocation3 + $0xb4] sm:$0xff]
        %v4288 = vld [vmem:[#allocation3 + $0xbc] sm:$0xf]
        %v4289 = vld [vmem:[#allocation3 + $0xc0] sm:$0xff]
        %v4290 = vld [vmem:[#allocation3 + $0xc8] sm:$0xf]
        %v4291 = vld [vmem:[#allocation3 + $0xcc] sm:$0xff]
        %v4292 = vld [vmem:[#allocation3 + $0xd4] sm:$0xf]
        %v4293 = vld [vmem:[#allocation3 + $0xd8] sm:$0xff]
        %v4294 = vld [vmem:[#allocation3 + $0xe0] sm:$0xf]
        %v4295 = vld [vmem:[#allocation3 + $0xe4] sm:$0xff]
        %v4296 = vld [vmem:[#allocation3 + $0xec] sm:$0xf]
        %v4297 = vld [vmem:[#allocation3 + $0xf0] sm:$0xff]
        %v4298 = vld [vmem:[#allocation3 + $0xf8] sm:$0xf]
        %v4299 = vld [vmem:[#allocation3 + $0xfc] sm:$0xff]
        %v4300 = vld [vmem:[#allocation3 + $0x104] sm:$0xf]
        %v4301 = vld [vmem:[#allocation3 + $0x108] sm:$0xff]
        %v4302 = vld [vmem:[#allocation3 + $0x110] sm:$0xf]
        %v4303 = vld [vmem:[#allocation3 + $0x114] sm:$0xff]
        %v4304 = vld [vmem:[#allocation3 + $0x11c] sm:$0xf]
        %v4305 = vld [vmem:[#allocation3 + $0x120] sm:$0xff]
        %v4306 = vld [vmem:[#allocation3 + $0x128] sm:$0xf]
        %v4307 = vld [vmem:[#allocation3 + $0x12c] sm:$0xff]
        %v4308 = vld [vmem:[#allocation3 + $0x134] sm:$0xf]
        %v4309 = vld [vmem:[#allocation3 + $0x138] sm:$0xff]
        %v4310 = vld [vmem:[#allocation3 + $0x140] sm:$0xf]
        %v4311 = vld [vmem:[#allocation3 + $0x144] sm:$0xff]
        %v4312 = vld [vmem:[#allocation3 + $0x14c] sm:$0xf]
        %v4313 = vld [vmem:[#allocation3 + $0x150] sm:$0xff]
        %v4314 = vld [vmem:[#allocation3 + $0x158] sm:$0xf]
        %v4315 = vld [vmem:[#allocation3 + $0x15c] sm:$0xff]
        %v4316 = vld [vmem:[#allocation3 + $0x164] sm:$0xf]
        %v4317 = vld [vmem:[#allocation3 + $0x168] sm:$0xff]
        %v4318 = vld [vmem:[#allocation3 + $0x170] sm:$0xf]
        %v4319 = vld [vmem:[#allocation3 + $0x174] sm:$0xff]
        %v4320 = vld [vmem:[#allocation3 + $0x17c] sm:$0xf]
        %v4321 = vld [vmem:[#allocation3 + $0x180] sm:$0xff]
        %v4322 = vld [vmem:[#allocation3 + $0x188] sm:$0xf]
        %v4323 = vld [vmem:[#allocation3 + $0x18c] sm:$0xff]
        %v4324 = vld [vmem:[#allocation3 + $0x194] sm:$0xf]
        %v4325 = vld [vmem:[#allocation3 + $0x198] sm:$0xff]
        %v4326 = vld [vmem:[#allocation3 + $0x1a0] sm:$0xf]
        %v4327 = vld [vmem:[#allocation3 + $0x1a4] sm:$0xff]
        %v4328 = vld [vmem:[#allocation3 + $0x1ac] sm:$0xf]
        %v4329 = vld [vmem:[%s5] sm:$0xff]
        %v4330 = vld [vmem:[%s5 + $0x8] sm:$0xff]
        %v4331 = vld [vmem:[%s5 + $0x10] sm:$0xff]
        %v4332 = vld [vmem:[%s5 + $0x18] sm:$0xff]
        %v4333 = vld [vmem:[%s5 + $0x20] sm:$0xff]
        %v4334 = vld [vmem:[%s5 + $0x28] sm:$0xff]
        %v4335 = vld [vmem:[%s5 + $0x30] sm:$0xff]
        %v4336 = vld [vmem:[%s5 + $0x38] sm:$0xff]
        %4338 = vset.pattern.permute.xlu0 0
        %4339 = vperm.xlu0 %4338, %v4329
        %v4340 = vpop.permute.xlu0 %4339
        %4343 = vset.pattern.permute.xlu0 0
        %4344 = vperm.xlu0 %4343, %v4330
        %v4345 = vpop.permute.xlu0 %4344
        %4348 = vset.pattern.permute.xlu0 0
        %4349 = vperm.xlu0 %4348, %v4331
        %v4350 = vpop.permute.xlu0 %4349
        %4353 = vset.pattern.permute.xlu0 0
        %4354 = vperm.xlu0 %4353, %v4332
        %v4355 = vpop.permute.xlu0 %4354
        %4358 = vset.pattern.permute.xlu0 0
        %4359 = vperm.xlu0 %4358, %v4333
        %v4360 = vpop.permute.xlu0 %4359
        %4363 = vset.pattern.permute.xlu0 0
        %4364 = vperm.xlu0 %4363, %v4334
        %v4365 = vpop.permute.xlu0 %4364
        %4368 = vset.pattern.permute.xlu0 0
        %4369 = vperm.xlu0 %4368, %v4335
        %v4370 = vpop.permute.xlu0 %4369
        %4373 = vset.pattern.permute.xlu0 0
        %4374 = vperm.xlu0 %4373, %v4336
        %v4375 = vpop.permute.xlu0 %4374
        %v4393 = vunpack.c.l.b16 %v4241
        %v4394 = vunpack.c.h.b16 %v4241
        %v4395 = vunpack.c.l.b16 %v4242
        %v4396 = vunpack.c.l.b16 %v4243
        %v4397 = vunpack.c.h.b16 %v4243
        %v4398 = vunpack.c.l.b16 %v4244
        %v4399 = vunpack.c.l.b16 %v4245
        %v4400 = vunpack.c.h.b16 %v4245
        %v4401 = vunpack.c.l.b16 %v4246
        %v4402 = vunpack.c.l.b16 %v4247
        %v4403 = vunpack.c.h.b16 %v4247
        %v4404 = vunpack.c.l.b16 %v4248
        %v4405 = vunpack.c.l.b16 %v4249
        %v4406 = vunpack.c.h.b16 %v4249
        %v4407 = vunpack.c.l.b16 %v4250
        %v4408 = vunpack.c.l.b16 %v4251
        %v4409 = vunpack.c.h.b16 %v4251
        %v4410 = vunpack.c.l.b16 %v4252
        %v4411 = vunpack.c.l.b16 %v4253
        %v4412 = vunpack.c.h.b16 %v4253
        %v4413 = vunpack.c.l.b16 %v4254
        %v4414 = vunpack.c.l.b16 %v4255
        %v4415 = vunpack.c.h.b16 %v4255
        %v4416 = vunpack.c.l.b16 %v4256
        %v4417 = vpack.c.b16 %v4396, %v4393
        %v4418 = vpack.c.b16 %v4397, %v4394
        %v4419 = vpack.c.b16 %v4398, %v4395
        %v4420 = vpack.c.b16 %v4402, %v4399
        %v4421 = vpack.c.b16 %v4403, %v4400
        %v4422 = vpack.c.b16 %v4404, %v4401
        %v4423 = vpack.c.b16 %v4408, %v4405
        %v4424 = vpack.c.b16 %v4409, %v4406
        %v4425 = vpack.c.b16 %v4410, %v4407
        %v4426 = vpack.c.b16 %v4414, %v4411
        %v4427 = vpack.c.b16 %v4415, %v4412
        %v4428 = vpack.c.b16 %v4416, %v4413
        %v4509 = vunpack.c.l.b16 %v4257
        %v4510 = vunpack.c.h.b16 %v4257
        %v4511 = vunpack.c.l.b16 %v4258
        %v4512 = vunpack.c.l.b16 %v4259
        %v4513 = vunpack.c.h.b16 %v4259
        %v4514 = vunpack.c.l.b16 %v4260
        %v4515 = vunpack.c.l.b16 %v4261
        %v4516 = vunpack.c.h.b16 %v4261
        %v4517 = vunpack.c.l.b16 %v4262
        %v4518 = vunpack.c.l.b16 %v4263
        %v4519 = vunpack.c.h.b16 %v4263
        %v4520 = vunpack.c.l.b16 %v4264
        %v4521 = vunpack.c.l.b16 %v4265
        %v4522 = vunpack.c.h.b16 %v4265
        %v4523 = vunpack.c.l.b16 %v4266
        %v4524 = vunpack.c.l.b16 %v4267
        %v4525 = vunpack.c.h.b16 %v4267
        %v4526 = vunpack.c.l.b16 %v4268
        %v4527 = vunpack.c.l.b16 %v4269
        %v4528 = vunpack.c.h.b16 %v4269
        %v4529 = vunpack.c.l.b16 %v4270
        %v4530 = vunpack.c.l.b16 %v4271
        %v4531 = vunpack.c.h.b16 %v4271
        %v4532 = vunpack.c.l.b16 %v4272
        %v4533 = vunpack.c.l.b16 %v4273
        %v4534 = vunpack.c.h.b16 %v4273
        %v4535 = vunpack.c.l.b16 %v4274
        %v4536 = vunpack.c.l.b16 %v4275
        %v4537 = vunpack.c.h.b16 %v4275
        %v4538 = vunpack.c.l.b16 %v4276
        %v4539 = vunpack.c.l.b16 %v4277
        %v4540 = vunpack.c.h.b16 %v4277
        %v4541 = vunpack.c.l.b16 %v4278
        %v4542 = vunpack.c.l.b16 %v4279
        %v4543 = vunpack.c.h.b16 %v4279
        %v4544 = vunpack.c.l.b16 %v4280
        %v4545 = vunpack.c.l.b16 %v4281
        %v4546 = vunpack.c.h.b16 %v4281
        %v4547 = vunpack.c.l.b16 %v4282
        %v4548 = vunpack.c.l.b16 %v4283
        %v4549 = vunpack.c.h.b16 %v4283
        %v4550 = vunpack.c.l.b16 %v4284
        %v4551 = vunpack.c.l.b16 %v4285
        %v4552 = vunpack.c.h.b16 %v4285
        %v4553 = vunpack.c.l.b16 %v4286
        %v4554 = vunpack.c.l.b16 %v4287
        %v4555 = vunpack.c.h.b16 %v4287
        %v4556 = vunpack.c.l.b16 %v4288
        %v4557 = vunpack.c.l.b16 %v4289
        %v4558 = vunpack.c.h.b16 %v4289
        %v4559 = vunpack.c.l.b16 %v4290
        %v4560 = vunpack.c.l.b16 %v4291
        %v4561 = vunpack.c.h.b16 %v4291
        %v4562 = vunpack.c.l.b16 %v4292
        %v4563 = vunpack.c.l.b16 %v4293
        %v4564 = vunpack.c.h.b16 %v4293
        %v4565 = vunpack.c.l.b16 %v4294
        %v4566 = vunpack.c.l.b16 %v4295
        %v4567 = vunpack.c.h.b16 %v4295
        %v4568 = vunpack.c.l.b16 %v4296
        %v4569 = vunpack.c.l.b16 %v4297
        %v4570 = vunpack.c.h.b16 %v4297
        %v4571 = vunpack.c.l.b16 %v4298
        %v4572 = vunpack.c.l.b16 %v4299
        %v4573 = vunpack.c.h.b16 %v4299
        %v4574 = vunpack.c.l.b16 %v4300
        %v4575 = vunpack.c.l.b16 %v4301
        %v4576 = vunpack.c.h.b16 %v4301
        %v4577 = vunpack.c.l.b16 %v4302
        %v4578 = vunpack.c.l.b16 %v4303
        %v4579 = vunpack.c.h.b16 %v4303
        %v4580 = vunpack.c.l.b16 %v4304
        %v4581 = vunpack.c.l.b16 %v4305
        %v4582 = vunpack.c.h.b16 %v4305
        %v4583 = vunpack.c.l.b16 %v4306
        %v4584 = vunpack.c.l.b16 %v4307
        %v4585 = vunpack.c.h.b16 %v4307
        %v4586 = vunpack.c.l.b16 %v4308
        %v4587 = vunpack.c.l.b16 %v4309
        %v4588 = vunpack.c.h.b16 %v4309
        %v4589 = vunpack.c.l.b16 %v4310
        %v4590 = vunpack.c.l.b16 %v4311
        %v4591 = vunpack.c.h.b16 %v4311
        %v4592 = vunpack.c.l.b16 %v4312
        %v4593 = vunpack.c.l.b16 %v4313
        %v4594 = vunpack.c.h.b16 %v4313
        %v4595 = vunpack.c.l.b16 %v4314
        %v4596 = vunpack.c.l.b16 %v4315
        %v4597 = vunpack.c.h.b16 %v4315
        %v4598 = vunpack.c.l.b16 %v4316
        %v4599 = vunpack.c.l.b16 %v4317
        %v4600 = vunpack.c.h.b16 %v4317
        %v4601 = vunpack.c.l.b16 %v4318
        %v4602 = vunpack.c.l.b16 %v4319
        %v4603 = vunpack.c.h.b16 %v4319
        %v4604 = vunpack.c.l.b16 %v4320
        %v4605 = vunpack.c.l.b16 %v4321
        %v4606 = vunpack.c.h.b16 %v4321
        %v4607 = vunpack.c.l.b16 %v4322
        %v4608 = vunpack.c.l.b16 %v4323
        %v4609 = vunpack.c.h.b16 %v4323
        %v4610 = vunpack.c.l.b16 %v4324
        %v4611 = vunpack.c.l.b16 %v4325
        %v4612 = vunpack.c.h.b16 %v4325
        %v4613 = vunpack.c.l.b16 %v4326
        %v4614 = vunpack.c.l.b16 %v4327
        %v4615 = vunpack.c.h.b16 %v4327
        %v4616 = vunpack.c.l.b16 %v4328
        %v4617 = vpack.c.b16 %v4512, %v4509
        %v4618 = vpack.c.b16 %v4513, %v4510
        %v4619 = vpack.c.b16 %v4514, %v4511
        %v4620 = vpack.c.b16 %v4518, %v4515
        %v4621 = vpack.c.b16 %v4519, %v4516
        %v4622 = vpack.c.b16 %v4520, %v4517
        %v4623 = vpack.c.b16 %v4524, %v4521
        %v4624 = vpack.c.b16 %v4525, %v4522
        %v4625 = vpack.c.b16 %v4526, %v4523
        %v4626 = vpack.c.b16 %v4530, %v4527
        %v4627 = vpack.c.b16 %v4531, %v4528
        %v4628 = vpack.c.b16 %v4532, %v4529
        %v4629 = vpack.c.b16 %v4536, %v4533
        %v4630 = vpack.c.b16 %v4537, %v4534
        %v4631 = vpack.c.b16 %v4538, %v4535
        %v4632 = vpack.c.b16 %v4542, %v4539
        %v4633 = vpack.c.b16 %v4543, %v4540
        %v4634 = vpack.c.b16 %v4544, %v4541
        %v4635 = vpack.c.b16 %v4548, %v4545
        %v4636 = vpack.c.b16 %v4549, %v4546
        %v4637 = vpack.c.b16 %v4550, %v4547
        %v4638 = vpack.c.b16 %v4554, %v4551
        %v4639 = vpack.c.b16 %v4555, %v4552
        %v4640 = vpack.c.b16 %v4556, %v4553
        %v4641 = vpack.c.b16 %v4560, %v4557
        %v4642 = vpack.c.b16 %v4561, %v4558
        %v4643 = vpack.c.b16 %v4562, %v4559
        %v4644 = vpack.c.b16 %v4566, %v4563
        %v4645 = vpack.c.b16 %v4567, %v4564
        %v4646 = vpack.c.b16 %v4568, %v4565
        %v4647 = vpack.c.b16 %v4572, %v4569
        %v4648 = vpack.c.b16 %v4573, %v4570
        %v4649 = vpack.c.b16 %v4574, %v4571
        %v4650 = vpack.c.b16 %v4578, %v4575
        %v4651 = vpack.c.b16 %v4579, %v4576
        %v4652 = vpack.c.b16 %v4580, %v4577
        %v4653 = vpack.c.b16 %v4584, %v4581
        %v4654 = vpack.c.b16 %v4585, %v4582
        %v4655 = vpack.c.b16 %v4586, %v4583
        %v4656 = vpack.c.b16 %v4590, %v4587
        %v4657 = vpack.c.b16 %v4591, %v4588
        %v4658 = vpack.c.b16 %v4592, %v4589
        %v4659 = vpack.c.b16 %v4596, %v4593
        %v4660 = vpack.c.b16 %v4597, %v4594
        %v4661 = vpack.c.b16 %v4598, %v4595
        %v4662 = vpack.c.b16 %v4602, %v4599
        %v4663 = vpack.c.b16 %v4603, %v4600
        %v4664 = vpack.c.b16 %v4604, %v4601
        %v4665 = vpack.c.b16 %v4608, %v4605
        %v4666 = vpack.c.b16 %v4609, %v4606
        %v4667 = vpack.c.b16 %v4610, %v4607
        %v4668 = vpack.c.b16 %v4614, %v4611
        %v4669 = vpack.c.b16 %v4615, %v4612
        %v4670 = vpack.c.b16 %v4616, %v4613
        %vm4725 = vcmask 261120
        %v4727 = vsel %vm4725, %v4419, 0
        %v4730 = vsel %vm4725, %v4422, 0
        %v4733 = vsel %vm4725, %v4425, 0
        %v4736 = vsel %vm4725, %v4428, 0
        %4738 = vmatprep.subr.bf16.mxu0 %v4639
        %4739 = vmatpush1.bf16.msra.mxu0 %v4638
        %4740 = vmatprep.subr.bf16.mxu0 %v4636
        %4741 = vmatpush1.bf16.msra.mxu0 %v4635
        %4742 = vmatprep.subr.bf16.mxu0 %v4633
        %4743 = vmatpush1.bf16.msra.mxu0 %v4632
        %4744 = vmatprep.subr.bf16.mxu0 %v4630
        %4745 = vmatpush1.bf16.msra.mxu0 %v4629
        %4746 = vmatprep.subr.bf16.mxu0 %v4627
        %4747 = vmatpush1.bf16.msra.mxu0 %v4626
        %4748 = vmatprep.subr.bf16.mxu0 %v4624
        %4749 = vmatpush1.bf16.msra.mxu0 %v4623
        %4750 = vmatprep.subr.bf16.mxu0 %v4621
        %4751 = vmatpush1.bf16.msra.mxu0 %v4620
        %4752 = vmatprep.subr.bf16.mxu0 %v4618
        %4753 = vmatpush1.bf16.msra.mxu0 %v4617
        %4754 = vmatprep.subr.bf16.mxu0 %v4663
        %4755 = vmatpush2.bf16.msra.mxu0 %v4662
        %4756 = vmatprep.subr.bf16.mxu0 %v4660
        %4757 = vmatpush2.bf16.msra.mxu0 %v4659
        %4758 = vmatprep.subr.bf16.mxu0 %v4657
        %4759 = vmatpush2.bf16.msra.mxu0 %v4656
        %4760 = vmatprep.subr.bf16.mxu0 %v4654
        %4761 = vmatpush2.bf16.msra.mxu0 %v4653
        %4762 = vmatprep.subr.bf16.mxu0 %v4651
        %4763 = vmatpush2.bf16.msra.mxu0 %v4650
        %4764 = vmatprep.subr.bf16.mxu0 %v4648
        %4765 = vmatpush2.bf16.msra.mxu0 %v4647
        %4766 = vmatprep.subr.bf16.mxu0 %v4645
        %4767 = vmatpush2.bf16.msra.mxu0 %v4644
        %4768 = vmatprep.subr.bf16.mxu0 %v4642
        %4769 = vmatpush2.bf16.msra.mxu0 %v4641
        %4770 = vmatprep.mubr.bf16.mxu0 %v4418
        %4771 = vmatmul.mubr.bf16.gmra.mxu0 %v4417
        %v4772 = vpop.f32.mrf.mxu0
        %v4773 = vadd.f32 %v4340, %v4772
        %v4774 = vpop.f32.mrf.mxu0
        %v4775 = vadd.f32 %v4340, %v4774
        %v4776 = vpop.f32.mrf.mxu0
        %v4777 = vadd.f32 %v4345, %v4776
        %v4778 = vpop.f32.mrf.mxu0
        %v4779 = vadd.f32 %v4345, %v4778
        %4780 = vmatprep.mubr.bf16.mxu0 %v4421
        %4781 = vmatmul.mubr.bf16.gmra.mxu0 %v4420
        %v4782 = vpop.f32.mrf.mxu0
        %v4783 = vadd.f32 %v4350, %v4782
        %v4784 = vpop.f32.mrf.mxu0
        %v4785 = vadd.f32 %v4350, %v4784
        %v4786 = vpop.f32.mrf.mxu0
        %v4787 = vadd.f32 %v4355, %v4786
        %v4788 = vpop.f32.mrf.mxu0
        %v4789 = vadd.f32 %v4355, %v4788
        %4790 = vmatprep.mubr.bf16.mxu0 %v4424
        %4791 = vmatmul.mubr.bf16.gmra.mxu0 %v4423
        %v4792 = vpop.f32.mrf.mxu0
        %v4793 = vadd.f32 %v4360, %v4792
        %v4794 = vpop.f32.mrf.mxu0
        %v4795 = vadd.f32 %v4360, %v4794
        %v4796 = vpop.f32.mrf.mxu0
        %v4797 = vadd.f32 %v4365, %v4796
        %v4798 = vpop.f32.mrf.mxu0
        %v4799 = vadd.f32 %v4365, %v4798
        %4800 = vmatprep.mubr.bf16.mxu0 %v4427
        %4801 = vmatmul.mubr.bf16.gmra.mxu0 %v4426
        %v4802 = vpop.f32.mrf.mxu0
        %v4803 = vadd.f32 %v4370, %v4802
        %v4804 = vpop.f32.mrf.mxu0
        %v4805 = vadd.f32 %v4370, %v4804
        %v4806 = vpop.f32.mrf.mxu0
        %v4807 = vadd.f32 %v4375, %v4806
        %v4808 = vpop.f32.mrf.mxu0
        %v4809 = vadd.f32 %v4375, %v4808
        %4810 = vdwg.mxu0
        %4811 = vmatprep.subr.bf16.mxu0 0
        %4812 = vmatpush1.bf16.msra.mxu0 0
        %4813 = vmatprep.subr.bf16.mxu0 0
        %4814 = vmatpush1.bf16.msra.mxu0 0
        %4815 = vmatprep.subr.bf16.mxu0 0
        %4816 = vmatpush1.bf16.msra.mxu0 0
        %4817 = vmatprep.subr.bf16.mxu0 0
        %4818 = vmatpush1.bf16.msra.mxu0 0
        %4819 = vmatprep.subr.bf16.mxu0 0
        %4820 = vmatpush1.bf16.msra.mxu0 0
        %4821 = vmatprep.subr.bf16.mxu0 0
        %4822 = vmatpush1.bf16.msra.mxu0 0
        %4823 = vmatprep.subr.bf16.mxu0 %v4669
        %4824 = vmatpush1.bf16.msra.mxu0 %v4668
        %4825 = vmatprep.subr.bf16.mxu0 %v4666
        %4826 = vmatpush1.bf16.msra.mxu0 %v4665
        %4827 = vmatprep.subr.bf16.mxu0 0
        %4828 = vmatpush2.bf16.msra.mxu0 0
        %4829 = vmatprep.subr.bf16.mxu0 0
        %4830 = vmatpush2.bf16.msra.mxu0 0
        %4831 = vmatprep.subr.bf16.mxu0 0
        %4832 = vmatpush2.bf16.msra.mxu0 0
        %4833 = vmatprep.subr.bf16.mxu0 0
        %4834 = vmatpush2.bf16.msra.mxu0 0
        %4835 = vmatprep.subr.bf16.mxu0 0
        %4836 = vmatpush2.bf16.msra.mxu0 0
        %4837 = vmatprep.subr.bf16.mxu0 0
        %4838 = vmatpush2.bf16.msra.mxu0 0
        %4839 = vmatprep.subr.bf16.mxu0 0
        %4840 = vmatpush2.bf16.msra.mxu0 0
        %4841 = vmatprep.subr.bf16.mxu0 0
        %4842 = vmatpush2.bf16.msra.mxu0 0
        %4843 = vmatprep.mubr.bf16.mxu0 0
        %4844 = vmatmul.mubr.bf16.gmra.mxu0 %v4727
        %v4845 = vpop.f32.mrf.mxu0
        %v4846 = vadd.f32 %v4773, %v4845
        %v4847 = vpop.f32.mrf.mxu0
        %v4848 = vadd.f32 %v4775, %v4847
        %v4849 = vpop.f32.mrf.mxu0
        %v4850 = vadd.f32 %v4777, %v4849
        %v4851 = vpop.f32.mrf.mxu0
        %v4852 = vadd.f32 %v4779, %v4851
        %4853 = vmatprep.mubr.bf16.mxu0 0
        %4854 = vmatmul.mubr.bf16.gmra.mxu0 %v4730
        %v4855 = vpop.f32.mrf.mxu0
        %v4856 = vadd.f32 %v4783, %v4855
        %v4857 = vpop.f32.mrf.mxu0
        %v4858 = vadd.f32 %v4785, %v4857
        %v4859 = vpop.f32.mrf.mxu0
        %v4860 = vadd.f32 %v4787, %v4859
        %v4861 = vpop.f32.mrf.mxu0
        %v4862 = vadd.f32 %v4789, %v4861
        %4863 = vmatprep.mubr.bf16.mxu0 0
        %4864 = vmatmul.mubr.bf16.gmra.mxu0 %v4733
        %v4865 = vpop.f32.mrf.mxu0
        %v4866 = vadd.f32 %v4793, %v4865
        %v4867 = vpop.f32.mrf.mxu0
        %v4868 = vadd.f32 %v4795, %v4867
        %v4869 = vpop.f32.mrf.mxu0
        %v4870 = vadd.f32 %v4797, %v4869
        %v4871 = vpop.f32.mrf.mxu0
        %v4872 = vadd.f32 %v4799, %v4871
        %4873 = vmatprep.mubr.bf16.mxu0 0
        %4874 = vmatmul.mubr.bf16.gmra.mxu0 %v4736
        %v4875 = vpop.f32.mrf.mxu0
        %v4876 = vadd.f32 %v4803, %v4875
        %v4877 = vpop.f32.mrf.mxu0
        %v4878 = vadd.f32 %v4805, %v4877
        %v4879 = vpop.f32.mrf.mxu0
        %v4880 = vadd.f32 %v4807, %v4879
        %v4881 = vpop.f32.mrf.mxu0
        %v4882 = vadd.f32 %v4809, %v4881
        %4883 = vdwg.mxu0
        %4884 = vmatprep.subr.bf16.mxu0 0
        %4885 = vmatpush1.bf16.msra.mxu0 %v4640
        %4886 = vmatprep.subr.bf16.mxu0 0
        %4887 = vmatpush1.bf16.msra.mxu0 %v4637
        %4888 = vmatprep.subr.bf16.mxu0 0
        %4889 = vmatpush1.bf16.msra.mxu0 %v4634
        %4890 = vmatprep.subr.bf16.mxu0 0
        %4891 = vmatpush1.bf16.msra.mxu0 %v4631
        %4892 = vmatprep.subr.bf16.mxu0 0
        %4893 = vmatpush1.bf16.msra.mxu0 %v4628
        %4894 = vmatprep.subr.bf16.mxu0 0
        %4895 = vmatpush1.bf16.msra.mxu0 %v4625
        %4896 = vmatprep.subr.bf16.mxu0 0
        %4897 = vmatpush1.bf16.msra.mxu0 %v4622
        %4898 = vmatprep.subr.bf16.mxu0 0
        %4899 = vmatpush1.bf16.msra.mxu0 %v4619
        %4900 = vmatprep.subr.bf16.mxu0 0
        %4901 = vmatpush2.bf16.msra.mxu0 %v4664
        %4902 = vmatprep.subr.bf16.mxu0 0
        %4903 = vmatpush2.bf16.msra.mxu0 %v4661
        %4904 = vmatprep.subr.bf16.mxu0 0
        %4905 = vmatpush2.bf16.msra.mxu0 %v4658
        %4906 = vmatprep.subr.bf16.mxu0 0
        %4907 = vmatpush2.bf16.msra.mxu0 %v4655
        %4908 = vmatprep.subr.bf16.mxu0 0
        %4909 = vmatpush2.bf16.msra.mxu0 %v4652
        %4910 = vmatprep.subr.bf16.mxu0 0
        %4911 = vmatpush2.bf16.msra.mxu0 %v4649
        %4912 = vmatprep.subr.bf16.mxu0 0
        %4913 = vmatpush2.bf16.msra.mxu0 %v4646
        %4914 = vmatprep.subr.bf16.mxu0 0
        %4915 = vmatpush2.bf16.msra.mxu0 %v4643
        %4916 = vmatprep.mubr.bf16.mxu0 %v4418
        %4917 = vmatmul.mubr.bf16.gmra.mxu0 %v4417
        %v4918 = vpop.f32.mrf.mxu0
        %v4919 = vadd.f32 %v4340, %v4918
        %v4920 = vpop.f32.mrf.mxu0
        %v4921 = vpop.f32.mrf.mxu0
        %v4922 = vadd.f32 %v4345, %v4921
        %v4923 = vpop.f32.mrf.mxu0
        %4924 = vmatprep.mubr.bf16.mxu0 %v4421
        %4925 = vmatmul.mubr.bf16.gmra.mxu0 %v4420
        %v4926 = vpop.f32.mrf.mxu0
        %v4927 = vadd.f32 %v4350, %v4926
        %v4928 = vpop.f32.mrf.mxu0
        %v4929 = vpop.f32.mrf.mxu0
        %v4930 = vadd.f32 %v4355, %v4929
        %v4931 = vpop.f32.mrf.mxu0
        %4932 = vmatprep.mubr.bf16.mxu0 %v4424
        %4933 = vmatmul.mubr.bf16.gmra.mxu0 %v4423
        %v4934 = vpop.f32.mrf.mxu0
        %v4935 = vadd.f32 %v4360, %v4934
        %v4936 = vpop.f32.mrf.mxu0
        %v4937 = vpop.f32.mrf.mxu0
        %v4938 = vadd.f32 %v4365, %v4937
        %v4939 = vpop.f32.mrf.mxu0
        %4940 = vmatprep.mubr.bf16.mxu0 %v4427
        %4941 = vmatmul.mubr.bf16.gmra.mxu0 %v4426
        %v4942 = vpop.f32.mrf.mxu0
        %v4943 = vadd.f32 %v4370, %v4942
        %v4944 = vpop.f32.mrf.mxu0
        %v4945 = vpop.f32.mrf.mxu0
        %v4946 = vadd.f32 %v4375, %v4945
        %v4947 = vpop.f32.mrf.mxu0
        %4948 = vdwg.mxu0
        %4949 = vmatprep.subr.bf16.mxu0 0
        %4950 = vmatpush1.bf16.msra.mxu0 0
        %4951 = vmatprep.subr.bf16.mxu0 0
        %4952 = vmatpush1.bf16.msra.mxu0 0
        %4953 = vmatprep.subr.bf16.mxu0 0
        %4954 = vmatpush1.bf16.msra.mxu0 0
        %4955 = vmatprep.subr.bf16.mxu0 0
        %4956 = vmatpush1.bf16.msra.mxu0 0
        %4957 = vmatprep.subr.bf16.mxu0 0
        %4958 = vmatpush1.bf16.msra.mxu0 0
        %4959 = vmatprep.subr.bf16.mxu0 0
        %4960 = vmatpush1.bf16.msra.mxu0 0
        %4961 = vmatprep.subr.bf16.mxu0 0
        %4962 = vmatpush1.bf16.msra.mxu0 %v4670
        %4963 = vmatprep.subr.bf16.mxu0 0
        %4964 = vmatpush1.bf16.msra.mxu0 %v4667
        %4965 = vmatprep.subr.bf16.mxu0 0
        %4966 = vmatpush2.bf16.msra.mxu0 0
        %4967 = vmatprep.subr.bf16.mxu0 0
        %4968 = vmatpush2.bf16.msra.mxu0 0
        %4969 = vmatprep.subr.bf16.mxu0 0
        %4970 = vmatpush2.bf16.msra.mxu0 0
        %4971 = vmatprep.subr.bf16.mxu0 0
        %4972 = vmatpush2.bf16.msra.mxu0 0
        %4973 = vmatprep.subr.bf16.mxu0 0
        %4974 = vmatpush2.bf16.msra.mxu0 0
        %4975 = vmatprep.subr.bf16.mxu0 0
        %4976 = vmatpush2.bf16.msra.mxu0 0
        %4977 = vmatprep.subr.bf16.mxu0 0
        %4978 = vmatpush2.bf16.msra.mxu0 0
        %4979 = vmatprep.subr.bf16.mxu0 0
        %4980 = vmatpush2.bf16.msra.mxu0 0
        %4981 = vmatprep.mubr.bf16.mxu0 0
        %4982 = vmatmul.mubr.bf16.gmra.mxu0 %v4727
        %v4983 = vpop.f32.mrf.mxu0
        %v4984 = vadd.f32 %v4919, %v4983
        %v4985 = vpop.f32.mrf.mxu0
        %v4986 = vpop.f32.mrf.mxu0
        %v4987 = vadd.f32 %v4922, %v4986
        %v4988 = vpop.f32.mrf.mxu0
        %4989 = vmatprep.mubr.bf16.mxu0 0
        %4990 = vmatmul.mubr.bf16.gmra.mxu0 %v4730
        %v4991 = vpop.f32.mrf.mxu0
        %v4992 = vadd.f32 %v4927, %v4991
        %v4993 = vpop.f32.mrf.mxu0
        %v4994 = vpop.f32.mrf.mxu0
        %v4995 = vadd.f32 %v4930, %v4994
        %v4996 = vpop.f32.mrf.mxu0
        %4997 = vmatprep.mubr.bf16.mxu0 0
        %4998 = vmatmul.mubr.bf16.gmra.mxu0 %v4733
        %v4999 = vpop.f32.mrf.mxu0
        %v5000 = vadd.f32 %v4935, %v4999
        %v5001 = vpop.f32.mrf.mxu0
        %v5002 = vpop.f32.mrf.mxu0
        %v5003 = vadd.f32 %v4938, %v5002
        %v5004 = vpop.f32.mrf.mxu0
        %5005 = vmatprep.mubr.bf16.mxu0 0
        %5006 = vmatmul.mubr.bf16.gmra.mxu0 %v4736
        %v5007 = vpop.f32.mrf.mxu0
        %v5008 = vadd.f32 %v4943, %v5007
        %v5009 = vpop.f32.mrf.mxu0
        %v5010 = vpop.f32.mrf.mxu0
        %v5011 = vadd.f32 %v4946, %v5010
        %v5012 = vpop.f32.mrf.mxu0
        %5013 = vdwg.mxu0
        %v5014 = vxor.u32 %v4866, 2147483648
        %v5015 = vxor.u32 %v4868, 2147483648
        %v5016 = vxor.u32 %v5000, 2147483648
        %v5017 = vxor.u32 %v4870, 2147483648
        %v5018 = vxor.u32 %v4872, 2147483648
        %v5019 = vxor.u32 %v5003, 2147483648
        %v5020 = vxor.u32 %v4876, 2147483648
        %v5021 = vxor.u32 %v4878, 2147483648
        %v5022 = vxor.u32 %v5008, 2147483648
        %v5023 = vxor.u32 %v4880, 2147483648
        %v5024 = vxor.u32 %v4882, 2147483648
        %v5025 = vxor.u32 %v5011, 2147483648
        %v5026 = vmul.f32 %v5014, 1.442695
        %v5027 = vpow.pop %v5026
        %v5028 = vmul.f32 %v5015, 1.442695
        %v5029 = vpow.pop %v5028
        %v5030 = vmul.f32 %v5016, 1.442695
        %v5031 = vpow.pop %v5030
        %v5032 = vmul.f32 %v5017, 1.442695
        %v5033 = vpow.pop %v5032
        %v5034 = vmul.f32 %v5018, 1.442695
        %v5035 = vpow.pop %v5034
        %v5036 = vmul.f32 %v5019, 1.442695
        %v5037 = vpow.pop %v5036
        %v5038 = vmul.f32 %v5020, 1.442695
        %v5039 = vpow.pop %v5038
        %v5040 = vmul.f32 %v5021, 1.442695
        %v5041 = vpow.pop %v5040
        %v5042 = vmul.f32 %v5022, 1.442695
        %v5043 = vpow.pop %v5042
        %v5044 = vmul.f32 %v5023, 1.442695
        %v5045 = vpow.pop %v5044
        %v5046 = vmul.f32 %v5024, 1.442695
        %v5047 = vpow.pop %v5046
        %v5048 = vmul.f32 %v5025, 1.442695
        %v5049 = vpow.pop %v5048
        %v5050 = vadd.f32 %v5027, 1.0
        %v5051 = vadd.f32 %v5029, 1.0
        %v5052 = vadd.f32 %v5031, 1.0
        %v5053 = vadd.f32 %v5033, 1.0
        %v5054 = vadd.f32 %v5035, 1.0
        %v5055 = vadd.f32 %v5037, 1.0
        %v5056 = vadd.f32 %v5039, 1.0
        %v5057 = vadd.f32 %v5041, 1.0
        %v5058 = vadd.f32 %v5043, 1.0
        %v5059 = vadd.f32 %v5045, 1.0
        %v5060 = vadd.f32 %v5047, 1.0
        %v5061 = vadd.f32 %v5049, 1.0
        %v5062 = vrcp.pop %v5050
        %v5063 = vmul.f32 1.0, %v5062
        %v5064 = vrcp.pop %v5051
        %v5065 = vmul.f32 1.0, %v5064
        %v5066 = vrcp.pop %v5052
        %v5067 = vmul.f32 1.0, %v5066
        %v5068 = vrcp.pop %v5053
        %v5069 = vmul.f32 1.0, %v5068
        %v5070 = vrcp.pop %v5054
        %v5071 = vmul.f32 1.0, %v5070
        %v5072 = vrcp.pop %v5055
        %v5073 = vmul.f32 1.0, %v5072
        %v5074 = vrcp.pop %v5056
        %v5075 = vmul.f32 1.0, %v5074
        %v5076 = vrcp.pop %v5057
        %v5077 = vmul.f32 1.0, %v5076
        %v5078 = vrcp.pop %v5058
        %v5079 = vmul.f32 1.0, %v5078
        %v5080 = vrcp.pop %v5059
        %v5081 = vmul.f32 1.0, %v5080
        %v5082 = vrcp.pop %v5060
        %v5083 = vmul.f32 1.0, %v5082
        %v5084 = vrcp.pop %v5061
        %v5085 = vmul.f32 1.0, %v5084
        %v5086 = vmul.f32 %v4846, %v5063
        %v5087 = vmul.f32 %v4848, %v5065
        %v5088 = vmul.f32 %v4984, %v5067
        %v5089 = vmul.f32 %v4850, %v5069
        %v5090 = vmul.f32 %v4852, %v5071
        %v5091 = vmul.f32 %v4987, %v5073
        %v5092 = vmul.f32 %v4856, %v5075
        %v5093 = vmul.f32 %v4858, %v5077
        %v5094 = vmul.f32 %v4992, %v5079
        %v5095 = vmul.f32 %v4860, %v5081
        %v5096 = vmul.f32 %v4862, %v5083
        %v5097 = vmul.f32 %v4995, %v5085
        %v5098 = vmul.f32 %v5086, %v3473
        %v5099 = vmul.f32 %v5087, %v3477
        %v5100 = vmul.f32 %v5088, %v3481
        %v5101 = vmul.f32 %v5089, %v3473
        %v5102 = vmul.f32 %v5090, %v3477
        %v5103 = vmul.f32 %v5091, %v3481
        %v5104 = vmul.f32 %v5092, %v3473
        %v5105 = vmul.f32 %v5093, %v3477
        %v5106 = vmul.f32 %v5094, %v3481
        %v5107 = vmul.f32 %v5095, %v3473
        %v5108 = vmul.f32 %v5096, %v3477
        %v5109 = vmul.f32 %v5097, %v3481
        %5110 = vst [vmem:[#allocation2 + $0x60] sm:$0xff] %v5098
        %5111 = vst [vmem:[#allocation2 + $0x68] sm:$0xff] %v5099
        %5112 = vst [vmem:[#allocation2 + $0x70] sm:$0xff] %v5100
        %5113 = vst [vmem:[#allocation2 + $0x78] sm:$0xff] %v5101
        %5114 = vst [vmem:[#allocation2 + $0x80] sm:$0xff] %v5102
        %5115 = vst [vmem:[#allocation2 + $0x88] sm:$0xff] %v5103
        %5116 = vst [vmem:[#allocation2 + $0x90] sm:$0xff] %v5104
        %5117 = vst [vmem:[#allocation2 + $0x98] sm:$0xff] %v5105
        %5118 = vst [vmem:[#allocation2 + $0xa0] sm:$0xff] %v5106
        %5119 = vst [vmem:[#allocation2 + $0xa8] sm:$0xff] %v5107
        %5120 = vst [vmem:[#allocation2 + $0xb0] sm:$0xff] %v5108
        %5121 = vst [vmem:[#allocation2 + $0xb8] sm:$0xff] %v5109
        %v5122 = vld [vmem:[#allocation2 + $0x60] sm:$0xff]
        %v5123 = vld [vmem:[#allocation2 + $0x68] sm:$0xff]
        %v5124 = vld [vmem:[#allocation2 + $0x70] sm:$0xff]
        %v5125 = vld [vmem:[#allocation2 + $0x78] sm:$0xff]
        %v5126 = vld [vmem:[#allocation2 + $0x80] sm:$0xff]
        %v5127 = vld [vmem:[#allocation2 + $0x88] sm:$0xff]
        %v5128 = vld [vmem:[#allocation2 + $0x90] sm:$0xff]
        %v5129 = vld [vmem:[#allocation2 + $0x98] sm:$0xff]
        %v5130 = vld [vmem:[#allocation2 + $0xa0] sm:$0xff]
        %v5131 = vld [vmem:[#allocation2 + $0xa8] sm:$0xff]
        %v5132 = vld [vmem:[#allocation2 + $0xb0] sm:$0xff]
        %v5133 = vld [vmem:[#allocation2 + $0xb8] sm:$0xff]
        %5134 = vrot.lane.b32.xlu0 %v5122, 19
        %v5135 = vpop.permute.xlu0 %5134
        %5136 = vrot.lane.b32.xlu0 %v5125, 19
        %v5137 = vpop.permute.xlu0 %5136
        %5138 = vrot.lane.b32.xlu0 %v5128, 19
        %v5139 = vpop.permute.xlu0 %5138
        %5140 = vrot.lane.b32.xlu0 %v5131, 19
        %v5141 = vpop.permute.xlu0 %5140
        %5142 = vrot.lane.b32.xlu0 %v5123, 19
        %v5143 = vpop.permute.xlu0 %5142
        %5144 = vrot.lane.b32.xlu0 %v5126, 19
        %v5145 = vpop.permute.xlu0 %5144
        %5146 = vrot.lane.b32.xlu0 %v5129, 19
        %v5147 = vpop.permute.xlu0 %5146
        %5148 = vrot.lane.b32.xlu0 %v5132, 19
        %v5149 = vpop.permute.xlu0 %5148
        %5150 = vrot.lane.b32.xlu0 %v5124, 19
        %v5151 = vpop.permute.xlu0 %5150
        %5152 = vrot.lane.b32.xlu0 %v5127, 19
        %v5153 = vpop.permute.xlu0 %5152
        %5154 = vrot.lane.b32.xlu0 %v5130, 19
        %v5155 = vpop.permute.xlu0 %5154
        %5156 = vrot.lane.b32.xlu0 %v5133, 19
        %v5157 = vpop.permute.xlu0 %5156
        %v5158 = vsel %vm666, %v5143, %v5151
        %v5159 = vsel %vm666, %v5145, %v5153
        %v5160 = vsel %vm666, %v5147, %v5155
        %v5161 = vsel %vm666, %v5149, %v5157
        %v5162 = vsel %vm666, %v5135, %v5143
        %v5163 = vsel %vm666, %v5137, %v5145
        %v5164 = vsel %vm666, %v5139, %v5147
        %v5165 = vsel %vm666, %v5141, %v5149
        %v5166 = vsel %vm666, %v5151, %v5135
        %v5167 = vsel %vm666, %v5153, %v5137
        %v5168 = vsel %vm666, %v5155, %v5139
        %v5169 = vsel %vm666, %v5157, %v5141
        %v5170 = vpack.c.bf16 %v5167, %v5166
        %v5171 = vpack.c.bf16 %v5163, %v5162
        %v5172 = vpack.c.bf16 %v5159, %v5158
        %v5173 = vpack.c.bf16 %v5169, %v5168
        %v5174 = vpack.c.bf16 %v5165, %v5164
        %v5175 = vpack.c.bf16 %v5161, %v5160
        %v5182 = vunpack.c.l.b16 %v5170
        %v5183 = vunpack.c.l.b16 %v5171
        %v5184 = vunpack.c.l.b16 %v5172
        %v5185 = vunpack.c.h.b16 %v5170
        %v5186 = vunpack.c.h.b16 %v5171
        %v5187 = vunpack.c.h.b16 %v5172
        %v5188 = vunpack.c.l.b16 %v5173
        %v5189 = vunpack.c.l.b16 %v5174
        %v5190 = vunpack.c.l.b16 %v5175
        %v5191 = vunpack.c.h.b16 %v5173
        %v5192 = vunpack.c.h.b16 %v5174
        %v5193 = vunpack.c.h.b16 %v5175
        %v5194 = vpack.c.b16 %v5183, %v5182
        %v5195 = vpack.c.b16 %v5184, %v5184
        %v5196 = vpack.c.b16 %v5186, %v5185
        %v5197 = vpack.c.b16 %v5187, %v5187
        %v5198 = vpack.c.b16 %v5189, %v5188
        %v5199 = vpack.c.b16 %v5190, %v5190
        %v5200 = vpack.c.b16 %v5192, %v5191
        %v5201 = vpack.c.b16 %v5193, %v5193
        %5210 = vst [vmem:[#allocation3] sm:$0xff] %v5194
        %5211 = vst [vmem:[#allocation3 + $0x8] sm:$0xf] %v5195
        %5212 = vst [vmem:[#allocation3 + $0xc] sm:$0xff] %v5196
        %5213 = vst [vmem:[#allocation3 + $0x14] sm:$0xf] %v5197
        %5214 = vst [vmem:[#allocation3 + $0x18] sm:$0xff] %v5198
        %5215 = vst [vmem:[#allocation3 + $0x20] sm:$0xf] %v5199
        %5216 = vst [vmem:[#allocation3 + $0x24] sm:$0xff] %v5200
        %5217 = vst [vmem:[#allocation3 + $0x2c] sm:$0xf] %v5201
        %5218 = vrot.lane.b32.xlu0 %v5122, 18
        %v5219 = vpop.permute.xlu0 %5218
        %5220 = vrot.lane.b32.xlu0 %v5125, 18
        %v5221 = vpop.permute.xlu0 %5220
        %5222 = vrot.lane.b32.xlu0 %v5128, 18
        %v5223 = vpop.permute.xlu0 %5222
        %5224 = vrot.lane.b32.xlu0 %v5131, 18
        %v5225 = vpop.permute.xlu0 %5224
        %5226 = vrot.lane.b32.xlu0 %v5123, 18
        %v5227 = vpop.permute.xlu0 %5226
        %5228 = vrot.lane.b32.xlu0 %v5126, 18
        %v5229 = vpop.permute.xlu0 %5228
        %5230 = vrot.lane.b32.xlu0 %v5129, 18
        %v5231 = vpop.permute.xlu0 %5230
        %5232 = vrot.lane.b32.xlu0 %v5132, 18
        %v5233 = vpop.permute.xlu0 %5232
        %5234 = vrot.lane.b32.xlu0 %v5124, 18
        %v5235 = vpop.permute.xlu0 %5234
        %5236 = vrot.lane.b32.xlu0 %v5127, 18
        %v5237 = vpop.permute.xlu0 %5236
        %5238 = vrot.lane.b32.xlu0 %v5130, 18
        %v5239 = vpop.permute.xlu0 %5238
        %5240 = vrot.lane.b32.xlu0 %v5133, 18
        %v5241 = vpop.permute.xlu0 %5240
        %v5242 = vsel %vm835, %v5227, %v5235
        %v5243 = vsel %vm835, %v5229, %v5237
        %v5244 = vsel %vm835, %v5231, %v5239
        %v5245 = vsel %vm835, %v5233, %v5241
        %v5246 = vsel %vm835, %v5219, %v5227
        %v5247 = vsel %vm835, %v5221, %v5229
        %v5248 = vsel %vm835, %v5223, %v5231
        %v5249 = vsel %vm835, %v5225, %v5233
        %v5250 = vsel %vm835, %v5235, %v5219
        %v5251 = vsel %vm835, %v5237, %v5221
        %v5252 = vsel %vm835, %v5239, %v5223
        %v5253 = vsel %vm835, %v5241, %v5225
        %v5254 = vpack.c.bf16 %v5251, %v5250
        %v5255 = vpack.c.bf16 %v5247, %v5246
        %v5256 = vpack.c.bf16 %v5243, %v5242
        %v5257 = vpack.c.bf16 %v5253, %v5252
        %v5258 = vpack.c.bf16 %v5249, %v5248
        %v5259 = vpack.c.bf16 %v5245, %v5244
        %v5266 = vunpack.c.l.b16 %v5254
        %v5267 = vunpack.c.l.b16 %v5255
        %v5268 = vunpack.c.l.b16 %v5256
        %v5269 = vunpack.c.h.b16 %v5254
        %v5270 = vunpack.c.h.b16 %v5255
        %v5271 = vunpack.c.h.b16 %v5256
        %v5272 = vunpack.c.l.b16 %v5257
        %v5273 = vunpack.c.l.b16 %v5258
        %v5274 = vunpack.c.l.b16 %v5259
        %v5275 = vunpack.c.h.b16 %v5257
        %v5276 = vunpack.c.h.b16 %v5258
        %v5277 = vunpack.c.h.b16 %v5259
        %v5278 = vpack.c.b16 %v5267, %v5266
        %v5279 = vpack.c.b16 %v5268, %v5268
        %v5280 = vpack.c.b16 %v5270, %v5269
        %v5281 = vpack.c.b16 %v5271, %v5271
        %v5282 = vpack.c.b16 %v5273, %v5272
        %v5283 = vpack.c.b16 %v5274, %v5274
        %v5284 = vpack.c.b16 %v5276, %v5275
        %v5285 = vpack.c.b16 %v5277, %v5277
        %5294 = vst [vmem:[#allocation3 + $0x30] sm:$0xff] %v5278
        %5295 = vst [vmem:[#allocation3 + $0x38] sm:$0xf] %v5279
        %5296 = vst [vmem:[#allocation3 + $0x3c] sm:$0xff] %v5280
        %5297 = vst [vmem:[#allocation3 + $0x44] sm:$0xf] %v5281
        %5298 = vst [vmem:[#allocation3 + $0x48] sm:$0xff] %v5282
        %5299 = vst [vmem:[#allocation3 + $0x50] sm:$0xf] %v5283
        %5300 = vst [vmem:[#allocation3 + $0x54] sm:$0xff] %v5284
        %5301 = vst [vmem:[#allocation3 + $0x5c] sm:$0xf] %v5285
        %5302 = vrot.lane.b32.xlu0 %v5122, 17
        %v5303 = vpop.permute.xlu0 %5302
        %5304 = vrot.lane.b32.xlu0 %v5125, 17
        %v5305 = vpop.permute.xlu0 %5304
        %5306 = vrot.lane.b32.xlu0 %v5128, 17
        %v5307 = vpop.permute.xlu0 %5306
        %5308 = vrot.lane.b32.xlu0 %v5131, 17
        %v5309 = vpop.permute.xlu0 %5308
        %5310 = vrot.lane.b32.xlu0 %v5123, 17
        %v5311 = vpop.permute.xlu0 %5310
        %5312 = vrot.lane.b32.xlu0 %v5126, 17
        %v5313 = vpop.permute.xlu0 %5312
        %5314 = vrot.lane.b32.xlu0 %v5129, 17
        %v5315 = vpop.permute.xlu0 %5314
        %5316 = vrot.lane.b32.xlu0 %v5132, 17
        %v5317 = vpop.permute.xlu0 %5316
        %5318 = vrot.lane.b32.xlu0 %v5124, 17
        %v5319 = vpop.permute.xlu0 %5318
        %5320 = vrot.lane.b32.xlu0 %v5127, 17
        %v5321 = vpop.permute.xlu0 %5320
        %5322 = vrot.lane.b32.xlu0 %v5130, 17
        %v5323 = vpop.permute.xlu0 %5322
        %5324 = vrot.lane.b32.xlu0 %v5133, 17
        %v5325 = vpop.permute.xlu0 %5324
        %v5326 = vsel %vm1004, %v5311, %v5319
        %v5327 = vsel %vm1004, %v5313, %v5321
        %v5328 = vsel %vm1004, %v5315, %v5323
        %v5329 = vsel %vm1004, %v5317, %v5325
        %v5330 = vsel %vm1004, %v5303, %v5311
        %v5331 = vsel %vm1004, %v5305, %v5313
        %v5332 = vsel %vm1004, %v5307, %v5315
        %v5333 = vsel %vm1004, %v5309, %v5317
        %v5334 = vsel %vm1004, %v5319, %v5303
        %v5335 = vsel %vm1004, %v5321, %v5305
        %v5336 = vsel %vm1004, %v5323, %v5307
        %v5337 = vsel %vm1004, %v5325, %v5309
        %v5338 = vpack.c.bf16 %v5335, %v5334
        %v5339 = vpack.c.bf16 %v5331, %v5330
        %v5340 = vpack.c.bf16 %v5327, %v5326
        %v5341 = vpack.c.bf16 %v5337, %v5336
        %v5342 = vpack.c.bf16 %v5333, %v5332
        %v5343 = vpack.c.bf16 %v5329, %v5328
        %v5350 = vunpack.c.l.b16 %v5338
        %v5351 = vunpack.c.l.b16 %v5339
        %v5352 = vunpack.c.l.b16 %v5340
        %v5353 = vunpack.c.h.b16 %v5338
        %v5354 = vunpack.c.h.b16 %v5339
        %v5355 = vunpack.c.h.b16 %v5340
        %v5356 = vunpack.c.l.b16 %v5341
        %v5357 = vunpack.c.l.b16 %v5342
        %v5358 = vunpack.c.l.b16 %v5343
        %v5359 = vunpack.c.h.b16 %v5341
        %v5360 = vunpack.c.h.b16 %v5342
        %v5361 = vunpack.c.h.b16 %v5343
        %v5362 = vpack.c.b16 %v5351, %v5350
        %v5363 = vpack.c.b16 %v5352, %v5352
        %v5364 = vpack.c.b16 %v5354, %v5353
        %v5365 = vpack.c.b16 %v5355, %v5355
        %v5366 = vpack.c.b16 %v5357, %v5356
        %v5367 = vpack.c.b16 %v5358, %v5358
        %v5368 = vpack.c.b16 %v5360, %v5359
        %v5369 = vpack.c.b16 %v5361, %v5361
        %5378 = vst [vmem:[#allocation3 + $0x60] sm:$0xff] %v5362
        %5379 = vst [vmem:[#allocation3 + $0x68] sm:$0xf] %v5363
        %5380 = vst [vmem:[#allocation3 + $0x6c] sm:$0xff] %v5364
        %5381 = vst [vmem:[#allocation3 + $0x74] sm:$0xf] %v5365
        %5382 = vst [vmem:[#allocation3 + $0x78] sm:$0xff] %v5366
        %5383 = vst [vmem:[#allocation3 + $0x80] sm:$0xf] %v5367
        %5384 = vst [vmem:[#allocation3 + $0x84] sm:$0xff] %v5368
        %5385 = vst [vmem:[#allocation3 + $0x8c] sm:$0xf] %v5369
        %5386 = vrot.lane.b32.xlu0 %v5122, 1
        %v5387 = vpop.permute.xlu0 %5386
        %5388 = vrot.lane.b32.xlu0 %v5125, 1
        %v5389 = vpop.permute.xlu0 %5388
        %5390 = vrot.lane.b32.xlu0 %v5128, 1
        %v5391 = vpop.permute.xlu0 %5390
        %5392 = vrot.lane.b32.xlu0 %v5131, 1
        %v5393 = vpop.permute.xlu0 %5392
        %5394 = vrot.lane.b32.xlu0 %v5123, 1
        %v5395 = vpop.permute.xlu0 %5394
        %5396 = vrot.lane.b32.xlu0 %v5126, 1
        %v5397 = vpop.permute.xlu0 %5396
        %5398 = vrot.lane.b32.xlu0 %v5129, 1
        %v5399 = vpop.permute.xlu0 %5398
        %5400 = vrot.lane.b32.xlu0 %v5132, 1
        %v5401 = vpop.permute.xlu0 %5400
        %5402 = vrot.lane.b32.xlu0 %v5124, 1
        %v5403 = vpop.permute.xlu0 %5402
        %5404 = vrot.lane.b32.xlu0 %v5127, 1
        %v5405 = vpop.permute.xlu0 %5404
        %5406 = vrot.lane.b32.xlu0 %v5130, 1
        %v5407 = vpop.permute.xlu0 %5406
        %5408 = vrot.lane.b32.xlu0 %v5133, 1
        %v5409 = vpop.permute.xlu0 %5408
        %v5410 = vsel %vm1173, %v5395, %v5403
        %v5411 = vsel %vm1173, %v5397, %v5405
        %v5412 = vsel %vm1173, %v5399, %v5407
        %v5413 = vsel %vm1173, %v5401, %v5409
        %v5414 = vsel %vm1173, %v5387, %v5395
        %v5415 = vsel %vm1173, %v5389, %v5397
        %v5416 = vsel %vm1173, %v5391, %v5399
        %v5417 = vsel %vm1173, %v5393, %v5401
        %v5418 = vsel %vm1173, %v5403, %v5387
        %v5419 = vsel %vm1173, %v5405, %v5389
        %v5420 = vsel %vm1173, %v5407, %v5391
        %v5421 = vsel %vm1173, %v5409, %v5393
        %v5422 = vpack.c.bf16 %v5419, %v5418
        %v5423 = vpack.c.bf16 %v5415, %v5414
        %v5424 = vpack.c.bf16 %v5411, %v5410
        %v5425 = vpack.c.bf16 %v5421, %v5420
        %v5426 = vpack.c.bf16 %v5417, %v5416
        %v5427 = vpack.c.bf16 %v5413, %v5412
        %v5434 = vunpack.c.l.b16 %v5422
        %v5435 = vunpack.c.l.b16 %v5423
        %v5436 = vunpack.c.l.b16 %v5424
        %v5437 = vunpack.c.h.b16 %v5422
        %v5438 = vunpack.c.h.b16 %v5423
        %v5439 = vunpack.c.h.b16 %v5424
        %v5440 = vunpack.c.l.b16 %v5425
        %v5441 = vunpack.c.l.b16 %v5426
        %v5442 = vunpack.c.l.b16 %v5427
        %v5443 = vunpack.c.h.b16 %v5425
        %v5444 = vunpack.c.h.b16 %v5426
        %v5445 = vunpack.c.h.b16 %v5427
        %v5446 = vpack.c.b16 %v5435, %v5434
        %v5447 = vpack.c.b16 %v5436, %v5436
        %v5448 = vpack.c.b16 %v5438, %v5437
        %v5449 = vpack.c.b16 %v5439, %v5439
        %v5450 = vpack.c.b16 %v5441, %v5440
        %v5451 = vpack.c.b16 %v5442, %v5442
        %v5452 = vpack.c.b16 %v5444, %v5443
        %v5453 = vpack.c.b16 %v5445, %v5445
        %5462 = vst [vmem:[#allocation3 + $0x90] sm:$0xff] %v5446
        %5463 = vst [vmem:[#allocation3 + $0x98] sm:$0xf] %v5447
        %5464 = vst [vmem:[#allocation3 + $0x9c] sm:$0xff] %v5448
        %5465 = vst [vmem:[#allocation3 + $0xa4] sm:$0xf] %v5449
        %5466 = vst [vmem:[#allocation3 + $0xa8] sm:$0xff] %v5450
        %5467 = vst [vmem:[#allocation3 + $0xb0] sm:$0xf] %v5451
        %5468 = vst [vmem:[#allocation3 + $0xb4] sm:$0xff] %v5452
        %5469 = vst [vmem:[#allocation3 + $0xbc] sm:$0xf] %v5453
        %v5470 = vpack.c.bf16 %v5125, %v5122
        %v5471 = vpack.c.bf16 %v5126, %v5123
        %v5472 = vpack.c.bf16 %v5127, %v5124
        %v5473 = vpack.c.bf16 %v5131, %v5128
        %v5474 = vpack.c.bf16 %v5132, %v5129
        %v5475 = vpack.c.bf16 %v5133, %v5130
        %v5482 = vunpack.c.l.b16 %v5470
        %v5483 = vunpack.c.l.b16 %v5471
        %v5484 = vunpack.c.l.b16 %v5472
        %v5485 = vunpack.c.h.b16 %v5470
        %v5486 = vunpack.c.h.b16 %v5471
        %v5487 = vunpack.c.h.b16 %v5472
        %v5488 = vunpack.c.l.b16 %v5473
        %v5489 = vunpack.c.l.b16 %v5474
        %v5490 = vunpack.c.l.b16 %v5475
        %v5491 = vunpack.c.h.b16 %v5473
        %v5492 = vunpack.c.h.b16 %v5474
        %v5493 = vunpack.c.h.b16 %v5475
        %v5494 = vpack.c.b16 %v5483, %v5482
        %v5495 = vpack.c.b16 %v5484, %v5484
        %v5496 = vpack.c.b16 %v5486, %v5485
        %v5497 = vpack.c.b16 %v5487, %v5487
        %v5498 = vpack.c.b16 %v5489, %v5488
        %v5499 = vpack.c.b16 %v5490, %v5490
        %v5500 = vpack.c.b16 %v5492, %v5491
        %v5501 = vpack.c.b16 %v5493, %v5493
        %5510 = vst [vmem:[#allocation3 + $0xc0] sm:$0xff] %v5494
        %5511 = vst [vmem:[#allocation3 + $0xc8] sm:$0xf] %v5495
        %5512 = vst [vmem:[#allocation3 + $0xcc] sm:$0xff] %v5496
        %5513 = vst [vmem:[#allocation3 + $0xd4] sm:$0xf] %v5497
        %5514 = vst [vmem:[#allocation3 + $0xd8] sm:$0xff] %v5498
        %5515 = vst [vmem:[#allocation3 + $0xe0] sm:$0xf] %v5499
        %5516 = vst [vmem:[#allocation3 + $0xe4] sm:$0xff] %v5500
        %5517 = vst [vmem:[#allocation3 + $0xec] sm:$0xf] %v5501
        %5518 = vrot.lane.b32.xlu0 %v5122, 127
        %v5519 = vpop.permute.xlu0 %5518
        %5520 = vrot.lane.b32.xlu0 %v5125, 127
        %v5521 = vpop.permute.xlu0 %5520
        %5522 = vrot.lane.b32.xlu0 %v5128, 127
        %v5523 = vpop.permute.xlu0 %5522
        %5524 = vrot.lane.b32.xlu0 %v5131, 127
        %v5525 = vpop.permute.xlu0 %5524
        %5526 = vrot.lane.b32.xlu0 %v5123, 127
        %v5527 = vpop.permute.xlu0 %5526
        %5528 = vrot.lane.b32.xlu0 %v5126, 127
        %v5529 = vpop.permute.xlu0 %5528
        %5530 = vrot.lane.b32.xlu0 %v5129, 127
        %v5531 = vpop.permute.xlu0 %5530
        %5532 = vrot.lane.b32.xlu0 %v5132, 127
        %v5533 = vpop.permute.xlu0 %5532
        %5534 = vrot.lane.b32.xlu0 %v5124, 127
        %v5535 = vpop.permute.xlu0 %5534
        %5536 = vrot.lane.b32.xlu0 %v5127, 127
        %v5537 = vpop.permute.xlu0 %5536
        %5538 = vrot.lane.b32.xlu0 %v5130, 127
        %v5539 = vpop.permute.xlu0 %5538
        %5540 = vrot.lane.b32.xlu0 %v5133, 127
        %v5541 = vpop.permute.xlu0 %5540
        %v5542 = vsel %vm1438, %v5527, %v5535
        %v5543 = vsel %vm1438, %v5529, %v5537
        %v5544 = vsel %vm1438, %v5531, %v5539
        %v5545 = vsel %vm1438, %v5533, %v5541
        %v5546 = vsel %vm1438, %v5519, %v5527
        %v5547 = vsel %vm1438, %v5521, %v5529
        %v5548 = vsel %vm1438, %v5523, %v5531
        %v5549 = vsel %vm1438, %v5525, %v5533
        %v5550 = vsel %vm1438, %v5535, %v5519
        %v5551 = vsel %vm1438, %v5537, %v5521
        %v5552 = vsel %vm1438, %v5539, %v5523
        %v5553 = vsel %vm1438, %v5541, %v5525
        %v5554 = vpack.c.bf16 %v5547, %v5546
        %v5555 = vpack.c.bf16 %v5543, %v5542
        %v5556 = vpack.c.bf16 %v5551, %v5550
        %v5557 = vpack.c.bf16 %v5549, %v5548
        %v5558 = vpack.c.bf16 %v5545, %v5544
        %v5559 = vpack.c.bf16 %v5553, %v5552
        %v5566 = vunpack.c.l.b16 %v5554
        %v5567 = vunpack.c.l.b16 %v5555
        %v5568 = vunpack.c.l.b16 %v5556
        %v5569 = vunpack.c.h.b16 %v5554
        %v5570 = vunpack.c.h.b16 %v5555
        %v5571 = vunpack.c.h.b16 %v5556
        %v5572 = vunpack.c.l.b16 %v5557
        %v5573 = vunpack.c.l.b16 %v5558
        %v5574 = vunpack.c.l.b16 %v5559
        %v5575 = vunpack.c.h.b16 %v5557
        %v5576 = vunpack.c.h.b16 %v5558
        %v5577 = vunpack.c.h.b16 %v5559
        %v5578 = vpack.c.b16 %v5567, %v5566
        %v5579 = vpack.c.b16 %v5568, %v5568
        %v5580 = vpack.c.b16 %v5570, %v5569
        %v5581 = vpack.c.b16 %v5571, %v5571
        %v5582 = vpack.c.b16 %v5573, %v5572
        %v5583 = vpack.c.b16 %v5574, %v5574
        %v5584 = vpack.c.b16 %v5576, %v5575
        %v5585 = vpack.c.b16 %v5577, %v5577
        %5594 = vst [vmem:[#allocation3 + $0xf0] sm:$0xff] %v5578
        %5595 = vst [vmem:[#allocation3 + $0xf8] sm:$0xf] %v5579
        %5596 = vst [vmem:[#allocation3 + $0xfc] sm:$0xff] %v5580
        %5597 = vst [vmem:[#allocation3 + $0x104] sm:$0xf] %v5581
        %5598 = vst [vmem:[#allocation3 + $0x108] sm:$0xff] %v5582
        %5599 = vst [vmem:[#allocation3 + $0x110] sm:$0xf] %v5583
        %5600 = vst [vmem:[#allocation3 + $0x114] sm:$0xff] %v5584
        %5601 = vst [vmem:[#allocation3 + $0x11c] sm:$0xf] %v5585
        %5602 = vrot.lane.b32.xlu0 %v5122, 111
        %v5603 = vpop.permute.xlu0 %5602
        %5604 = vrot.lane.b32.xlu0 %v5125, 111
        %v5605 = vpop.permute.xlu0 %5604
        %5606 = vrot.lane.b32.xlu0 %v5128, 111
        %v5607 = vpop.permute.xlu0 %5606
        %5608 = vrot.lane.b32.xlu0 %v5131, 111
        %v5609 = vpop.permute.xlu0 %5608
        %5610 = vrot.lane.b32.xlu0 %v5123, 111
        %v5611 = vpop.permute.xlu0 %5610
        %5612 = vrot.lane.b32.xlu0 %v5126, 111
        %v5613 = vpop.permute.xlu0 %5612
        %5614 = vrot.lane.b32.xlu0 %v5129, 111
        %v5615 = vpop.permute.xlu0 %5614
        %5616 = vrot.lane.b32.xlu0 %v5132, 111
        %v5617 = vpop.permute.xlu0 %5616
        %5618 = vrot.lane.b32.xlu0 %v5124, 111
        %v5619 = vpop.permute.xlu0 %5618
        %5620 = vrot.lane.b32.xlu0 %v5127, 111
        %v5621 = vpop.permute.xlu0 %5620
        %5622 = vrot.lane.b32.xlu0 %v5130, 111
        %v5623 = vpop.permute.xlu0 %5622
        %5624 = vrot.lane.b32.xlu0 %v5133, 111
        %v5625 = vpop.permute.xlu0 %5624
        %v5626 = vsel %vm1607, %v5611, %v5619
        %v5627 = vsel %vm1607, %v5613, %v5621
        %v5628 = vsel %vm1607, %v5615, %v5623
        %v5629 = vsel %vm1607, %v5617, %v5625
        %v5630 = vsel %vm1607, %v5603, %v5611
        %v5631 = vsel %vm1607, %v5605, %v5613
        %v5632 = vsel %vm1607, %v5607, %v5615
        %v5633 = vsel %vm1607, %v5609, %v5617
        %v5634 = vsel %vm1607, %v5619, %v5603
        %v5635 = vsel %vm1607, %v5621, %v5605
        %v5636 = vsel %vm1607, %v5623, %v5607
        %v5637 = vsel %vm1607, %v5625, %v5609
        %v5638 = vpack.c.bf16 %v5631, %v5630
        %v5639 = vpack.c.bf16 %v5627, %v5626
        %v5640 = vpack.c.bf16 %v5635, %v5634
        %v5641 = vpack.c.bf16 %v5633, %v5632
        %v5642 = vpack.c.bf16 %v5629, %v5628
        %v5643 = vpack.c.bf16 %v5637, %v5636
        %v5650 = vunpack.c.l.b16 %v5638
        %v5651 = vunpack.c.l.b16 %v5639
        %v5652 = vunpack.c.l.b16 %v5640
        %v5653 = vunpack.c.h.b16 %v5638
        %v5654 = vunpack.c.h.b16 %v5639
        %v5655 = vunpack.c.h.b16 %v5640
        %v5656 = vunpack.c.l.b16 %v5641
        %v5657 = vunpack.c.l.b16 %v5642
        %v5658 = vunpack.c.l.b16 %v5643
        %v5659 = vunpack.c.h.b16 %v5641
        %v5660 = vunpack.c.h.b16 %v5642
        %v5661 = vunpack.c.h.b16 %v5643
        %v5662 = vpack.c.b16 %v5651, %v5650
        %v5663 = vpack.c.b16 %v5652, %v5652
        %v5664 = vpack.c.b16 %v5654, %v5653
        %v5665 = vpack.c.b16 %v5655, %v5655
        %v5666 = vpack.c.b16 %v5657, %v5656
        %v5667 = vpack.c.b16 %v5658, %v5658
        %v5668 = vpack.c.b16 %v5660, %v5659
        %v5669 = vpack.c.b16 %v5661, %v5661
        %5678 = vst [vmem:[#allocation3 + $0x120] sm:$0xff] %v5662
        %5679 = vst [vmem:[#allocation3 + $0x128] sm:$0xf] %v5663
        %5680 = vst [vmem:[#allocation3 + $0x12c] sm:$0xff] %v5664
        %5681 = vst [vmem:[#allocation3 + $0x134] sm:$0xf] %v5665
        %5682 = vst [vmem:[#allocation3 + $0x138] sm:$0xff] %v5666
        %5683 = vst [vmem:[#allocation3 + $0x140] sm:$0xf] %v5667
        %5684 = vst [vmem:[#allocation3 + $0x144] sm:$0xff] %v5668
        %5685 = vst [vmem:[#allocation3 + $0x14c] sm:$0xf] %v5669
        %5686 = vrot.lane.b32.xlu0 %v5122, 110
        %v5687 = vpop.permute.xlu0 %5686
        %5688 = vrot.lane.b32.xlu0 %v5125, 110
        %v5689 = vpop.permute.xlu0 %5688
        %5690 = vrot.lane.b32.xlu0 %v5128, 110
        %v5691 = vpop.permute.xlu0 %5690
        %5692 = vrot.lane.b32.xlu0 %v5131, 110
        %v5693 = vpop.permute.xlu0 %5692
        %5694 = vrot.lane.b32.xlu0 %v5123, 110
        %v5695 = vpop.permute.xlu0 %5694
        %5696 = vrot.lane.b32.xlu0 %v5126, 110
        %v5697 = vpop.permute.xlu0 %5696
        %5698 = vrot.lane.b32.xlu0 %v5129, 110
        %v5699 = vpop.permute.xlu0 %5698
        %5700 = vrot.lane.b32.xlu0 %v5132, 110
        %v5701 = vpop.permute.xlu0 %5700
        %5702 = vrot.lane.b32.xlu0 %v5124, 110
        %v5703 = vpop.permute.xlu0 %5702
        %5704 = vrot.lane.b32.xlu0 %v5127, 110
        %v5705 = vpop.permute.xlu0 %5704
        %5706 = vrot.lane.b32.xlu0 %v5130, 110
        %v5707 = vpop.permute.xlu0 %5706
        %5708 = vrot.lane.b32.xlu0 %v5133, 110
        %v5709 = vpop.permute.xlu0 %5708
        %v5710 = vsel %vm1776, %v5695, %v5703
        %v5711 = vsel %vm1776, %v5697, %v5705
        %v5712 = vsel %vm1776, %v5699, %v5707
        %v5713 = vsel %vm1776, %v5701, %v5709
        %v5714 = vsel %vm1776, %v5687, %v5695
        %v5715 = vsel %vm1776, %v5689, %v5697
        %v5716 = vsel %vm1776, %v5691, %v5699
        %v5717 = vsel %vm1776, %v5693, %v5701
        %v5718 = vsel %vm1776, %v5703, %v5687
        %v5719 = vsel %vm1776, %v5705, %v5689
        %v5720 = vsel %vm1776, %v5707, %v5691
        %v5721 = vsel %vm1776, %v5709, %v5693
        %v5722 = vpack.c.bf16 %v5715, %v5714
        %v5723 = vpack.c.bf16 %v5711, %v5710
        %v5724 = vpack.c.bf16 %v5719, %v5718
        %v5725 = vpack.c.bf16 %v5717, %v5716
        %v5726 = vpack.c.bf16 %v5713, %v5712
        %v5727 = vpack.c.bf16 %v5721, %v5720
        %v5734 = vunpack.c.l.b16 %v5722
        %v5735 = vunpack.c.l.b16 %v5723
        %v5736 = vunpack.c.l.b16 %v5724
        %v5737 = vunpack.c.h.b16 %v5722
        %v5738 = vunpack.c.h.b16 %v5723
        %v5739 = vunpack.c.h.b16 %v5724
        %v5740 = vunpack.c.l.b16 %v5725
        %v5741 = vunpack.c.l.b16 %v5726
        %v5742 = vunpack.c.l.b16 %v5727
        %v5743 = vunpack.c.h.b16 %v5725
        %v5744 = vunpack.c.h.b16 %v5726
        %v5745 = vunpack.c.h.b16 %v5727
        %v5746 = vpack.c.b16 %v5735, %v5734
        %v5747 = vpack.c.b16 %v5736, %v5736
        %v5748 = vpack.c.b16 %v5738, %v5737
        %v5749 = vpack.c.b16 %v5739, %v5739
        %v5750 = vpack.c.b16 %v5741, %v5740
        %v5751 = vpack.c.b16 %v5742, %v5742
        %v5752 = vpack.c.b16 %v5744, %v5743
        %v5753 = vpack.c.b16 %v5745, %v5745
        %5762 = vst [vmem:[#allocation3 + $0x150] sm:$0xff] %v5746
        %5763 = vst [vmem:[#allocation3 + $0x158] sm:$0xf] %v5747
        %5764 = vst [vmem:[#allocation3 + $0x15c] sm:$0xff] %v5748
        %5765 = vst [vmem:[#allocation3 + $0x164] sm:$0xf] %v5749
        %5766 = vst [vmem:[#allocation3 + $0x168] sm:$0xff] %v5750
        %5767 = vst [vmem:[#allocation3 + $0x170] sm:$0xf] %v5751
        %5768 = vst [vmem:[#allocation3 + $0x174] sm:$0xff] %v5752
        %5769 = vst [vmem:[#allocation3 + $0x17c] sm:$0xf] %v5753
        %5770 = vrot.lane.b32.xlu0 %v5122, 109
        %v5771 = vpop.permute.xlu0 %5770
        %5772 = vrot.lane.b32.xlu0 %v5125, 109
        %v5773 = vpop.permute.xlu0 %5772
        %5774 = vrot.lane.b32.xlu0 %v5128, 109
        %v5775 = vpop.permute.xlu0 %5774
        %5776 = vrot.lane.b32.xlu0 %v5131, 109
        %v5777 = vpop.permute.xlu0 %5776
        %5778 = vrot.lane.b32.xlu0 %v5123, 109
        %v5779 = vpop.permute.xlu0 %5778
        %5780 = vrot.lane.b32.xlu0 %v5126, 109
        %v5781 = vpop.permute.xlu0 %5780
        %5782 = vrot.lane.b32.xlu0 %v5129, 109
        %v5783 = vpop.permute.xlu0 %5782
        %5784 = vrot.lane.b32.xlu0 %v5132, 109
        %v5785 = vpop.permute.xlu0 %5784
        %5786 = vrot.lane.b32.xlu0 %v5124, 109
        %v5787 = vpop.permute.xlu0 %5786
        %5788 = vrot.lane.b32.xlu0 %v5127, 109
        %v5789 = vpop.permute.xlu0 %5788
        %5790 = vrot.lane.b32.xlu0 %v5130, 109
        %v5791 = vpop.permute.xlu0 %5790
        %5792 = vrot.lane.b32.xlu0 %v5133, 109
        %v5793 = vpop.permute.xlu0 %5792
        %v5794 = vsel %vm1945, %v5779, %v5787
        %v5795 = vsel %vm1945, %v5781, %v5789
        %v5796 = vsel %vm1945, %v5783, %v5791
        %v5797 = vsel %vm1945, %v5785, %v5793
        %v5798 = vsel %vm1945, %v5771, %v5779
        %v5799 = vsel %vm1945, %v5773, %v5781
        %v5800 = vsel %vm1945, %v5775, %v5783
        %v5801 = vsel %vm1945, %v5777, %v5785
        %v5802 = vsel %vm1945, %v5787, %v5771
        %v5803 = vsel %vm1945, %v5789, %v5773
        %v5804 = vsel %vm1945, %v5791, %v5775
        %v5805 = vsel %vm1945, %v5793, %v5777
        %v5806 = vpack.c.bf16 %v5799, %v5798
        %v5807 = vpack.c.bf16 %v5795, %v5794
        %v5808 = vpack.c.bf16 %v5803, %v5802
        %v5809 = vpack.c.bf16 %v5801, %v5800
        %v5810 = vpack.c.bf16 %v5797, %v5796
        %v5811 = vpack.c.bf16 %v5805, %v5804
        %v5818 = vunpack.c.l.b16 %v5806
        %v5819 = vunpack.c.l.b16 %v5807
        %v5820 = vunpack.c.l.b16 %v5808
        %v5821 = vunpack.c.h.b16 %v5806
        %v5822 = vunpack.c.h.b16 %v5807
        %v5823 = vunpack.c.h.b16 %v5808
        %v5824 = vunpack.c.l.b16 %v5809
        %v5825 = vunpack.c.l.b16 %v5810
        %v5826 = vunpack.c.l.b16 %v5811
        %v5827 = vunpack.c.h.b16 %v5809
        %v5828 = vunpack.c.h.b16 %v5810
        %v5829 = vunpack.c.h.b16 %v5811
        %v5830 = vpack.c.b16 %v5819, %v5818
        %v5831 = vpack.c.b16 %v5820, %v5820
        %v5832 = vpack.c.b16 %v5822, %v5821
        %v5833 = vpack.c.b16 %v5823, %v5823
        %v5834 = vpack.c.b16 %v5825, %v5824
        %v5835 = vpack.c.b16 %v5826, %v5826
        %v5836 = vpack.c.b16 %v5828, %v5827
        %v5837 = vpack.c.b16 %v5829, %v5829
        %5846 = vst [vmem:[#allocation3 + $0x180] sm:$0xff] %v5830
        %5847 = vst [vmem:[#allocation3 + $0x188] sm:$0xf] %v5831
        %5848 = vst [vmem:[#allocation3 + $0x18c] sm:$0xff] %v5832
        %5849 = vst [vmem:[#allocation3 + $0x194] sm:$0xf] %v5833
        %5850 = vst [vmem:[#allocation3 + $0x198] sm:$0xff] %v5834
        %5851 = vst [vmem:[#allocation3 + $0x1a0] sm:$0xf] %v5835
        %5852 = vst [vmem:[#allocation3 + $0x1a4] sm:$0xff] %v5836
        %5853 = vst [vmem:[#allocation3 + $0x1ac] sm:$0xf] %v5837
        %v5854 = vld [vmem:[%s6] sm:$0xff]
        %v5855 = vld [vmem:[%s6 + $0x8] sm:$0xf]
        %v5856 = vld [vmem:[%s6 + $0xc] sm:$0xff]
        %v5857 = vld [vmem:[%s6 + $0x14] sm:$0xf]
        %v5858 = vld [vmem:[%s6 + $0x18] sm:$0xff]
        %v5859 = vld [vmem:[%s6 + $0x20] sm:$0xf]
        %v5860 = vld [vmem:[%s6 + $0x24] sm:$0xff]
        %v5861 = vld [vmem:[%s6 + $0x2c] sm:$0xf]
        %v5862 = vld [vmem:[#allocation3] sm:$0xff]
        %v5863 = vld [vmem:[#allocation3 + $0x8] sm:$0xf]
        %v5864 = vld [vmem:[#allocation3 + $0xc] sm:$0xff]
        %v5865 = vld [vmem:[#allocation3 + $0x14] sm:$0xf]
        %v5866 = vld [vmem:[#allocation3 + $0x18] sm:$0xff]
        %v5867 = vld [vmem:[#allocation3 + $0x20] sm:$0xf]
        %v5868 = vld [vmem:[#allocation3 + $0x24] sm:$0xff]
        %v5869 = vld [vmem:[#allocation3 + $0x2c] sm:$0xf]
        %v5870 = vld [vmem:[#allocation3 + $0x30] sm:$0xff]
        %v5871 = vld [vmem:[#allocation3 + $0x38] sm:$0xf]
        %v5872 = vld [vmem:[#allocation3 + $0x3c] sm:$0xff]
        %v5873 = vld [vmem:[#allocation3 + $0x44] sm:$0xf]
        %v5874 = vld [vmem:[#allocation3 + $0x48] sm:$0xff]
        %v5875 = vld [vmem:[#allocation3 + $0x50] sm:$0xf]
        %v5876 = vld [vmem:[#allocation3 + $0x54] sm:$0xff]
        %v5877 = vld [vmem:[#allocation3 + $0x5c] sm:$0xf]
        %v5878 = vld [vmem:[#allocation3 + $0x60] sm:$0xff]
        %v5879 = vld [vmem:[#allocation3 + $0x68] sm:$0xf]
        %v5880 = vld [vmem:[#allocation3 + $0x6c] sm:$0xff]
        %v5881 = vld [vmem:[#allocation3 + $0x74] sm:$0xf]
        %v5882 = vld [vmem:[#allocation3 + $0x78] sm:$0xff]
        %v5883 = vld [vmem:[#allocation3 + $0x80] sm:$0xf]
        %v5884 = vld [vmem:[#allocation3 + $0x84] sm:$0xff]
        %v5885 = vld [vmem:[#allocation3 + $0x8c] sm:$0xf]
        %v5886 = vld [vmem:[#allocation3 + $0x90] sm:$0xff]
        %v5887 = vld [vmem:[#allocation3 + $0x98] sm:$0xf]
        %v5888 = vld [vmem:[#allocation3 + $0x9c] sm:$0xff]
        %v5889 = vld [vmem:[#allocation3 + $0xa4] sm:$0xf]
        %v5890 = vld [vmem:[#allocation3 + $0xa8] sm:$0xff]
        %v5891 = vld [vmem:[#allocation3 + $0xb0] sm:$0xf]
        %v5892 = vld [vmem:[#allocation3 + $0xb4] sm:$0xff]
        %v5893 = vld [vmem:[#allocation3 + $0xbc] sm:$0xf]
        %v5894 = vld [vmem:[#allocation3 + $0xc0] sm:$0xff]
        %v5895 = vld [vmem:[#allocation3 + $0xc8] sm:$0xf]
        %v5896 = vld [vmem:[#allocation3 + $0xcc] sm:$0xff]
        %v5897 = vld [vmem:[#allocation3 + $0xd4] sm:$0xf]
        %v5898 = vld [vmem:[#allocation3 + $0xd8] sm:$0xff]
        %v5899 = vld [vmem:[#allocation3 + $0xe0] sm:$0xf]
        %v5900 = vld [vmem:[#allocation3 + $0xe4] sm:$0xff]
        %v5901 = vld [vmem:[#allocation3 + $0xec] sm:$0xf]
        %v5902 = vld [vmem:[#allocation3 + $0xf0] sm:$0xff]
        %v5903 = vld [vmem:[#allocation3 + $0xf8] sm:$0xf]
        %v5904 = vld [vmem:[#allocation3 + $0xfc] sm:$0xff]
        %v5905 = vld [vmem:[#allocation3 + $0x104] sm:$0xf]
        %v5906 = vld [vmem:[#allocation3 + $0x108] sm:$0xff]
        %v5907 = vld [vmem:[#allocation3 + $0x110] sm:$0xf]
        %v5908 = vld [vmem:[#allocation3 + $0x114] sm:$0xff]
        %v5909 = vld [vmem:[#allocation3 + $0x11c] sm:$0xf]
        %v5910 = vld [vmem:[#allocation3 + $0x120] sm:$0xff]
        %v5911 = vld [vmem:[#allocation3 + $0x128] sm:$0xf]
        %v5912 = vld [vmem:[#allocation3 + $0x12c] sm:$0xff]
        %v5913 = vld [vmem:[#allocation3 + $0x134] sm:$0xf]
        %v5914 = vld [vmem:[#allocation3 + $0x138] sm:$0xff]
        %v5915 = vld [vmem:[#allocation3 + $0x140] sm:$0xf]
        %v5916 = vld [vmem:[#allocation3 + $0x144] sm:$0xff]
        %v5917 = vld [vmem:[#allocation3 + $0x14c] sm:$0xf]
        %v5918 = vld [vmem:[#allocation3 + $0x150] sm:$0xff]
        %v5919 = vld [vmem:[#allocation3 + $0x158] sm:$0xf]
        %v5920 = vld [vmem:[#allocation3 + $0x15c] sm:$0xff]
        %v5921 = vld [vmem:[#allocation3 + $0x164] sm:$0xf]
        %v5922 = vld [vmem:[#allocation3 + $0x168] sm:$0xff]
        %v5923 = vld [vmem:[#allocation3 + $0x170] sm:$0xf]
        %v5924 = vld [vmem:[#allocation3 + $0x174] sm:$0xff]
        %v5925 = vld [vmem:[#allocation3 + $0x17c] sm:$0xf]
        %v5926 = vld [vmem:[#allocation3 + $0x180] sm:$0xff]
        %v5927 = vld [vmem:[#allocation3 + $0x188] sm:$0xf]
        %v5928 = vld [vmem:[#allocation3 + $0x18c] sm:$0xff]
        %v5929 = vld [vmem:[#allocation3 + $0x194] sm:$0xf]
        %v5930 = vld [vmem:[#allocation3 + $0x198] sm:$0xff]
        %v5931 = vld [vmem:[#allocation3 + $0x1a0] sm:$0xf]
        %v5932 = vld [vmem:[#allocation3 + $0x1a4] sm:$0xff]
        %v5933 = vld [vmem:[#allocation3 + $0x1ac] sm:$0xf]
        %v5934 = vld [vmem:[%s7] sm:$0xff]
        %v5935 = vld [vmem:[%s7 + $0x8] sm:$0xff]
        %v5936 = vld [vmem:[%s7 + $0x10] sm:$0xff]
        %v5937 = vld [vmem:[%s7 + $0x18] sm:$0xff]
        %5939 = vset.pattern.permute.xlu0 0
        %5940 = vperm.xlu0 %5939, %v5934
        %v5941 = vpop.permute.xlu0 %5940
        %5944 = vset.pattern.permute.xlu0 0
        %5945 = vperm.xlu0 %5944, %v5935
        %v5946 = vpop.permute.xlu0 %5945
        %5949 = vset.pattern.permute.xlu0 0
        %5950 = vperm.xlu0 %5949, %v5936
        %v5951 = vpop.permute.xlu0 %5950
        %5954 = vset.pattern.permute.xlu0 0
        %5955 = vperm.xlu0 %5954, %v5937
        %v5956 = vpop.permute.xlu0 %5955
        %v5966 = vunpack.c.l.b16 %v5854
        %v5967 = vunpack.c.h.b16 %v5854
        %v5968 = vunpack.c.l.b16 %v5855
        %v5969 = vunpack.c.l.b16 %v5856
        %v5970 = vunpack.c.h.b16 %v5856
        %v5971 = vunpack.c.l.b16 %v5857
        %v5972 = vunpack.c.l.b16 %v5858
        %v5973 = vunpack.c.h.b16 %v5858
        %v5974 = vunpack.c.l.b16 %v5859
        %v5975 = vunpack.c.l.b16 %v5860
        %v5976 = vunpack.c.h.b16 %v5860
        %v5977 = vunpack.c.l.b16 %v5861
        %v5978 = vpack.c.b16 %v5969, %v5966
        %v5979 = vpack.c.b16 %v5970, %v5967
        %v5980 = vpack.c.b16 %v5971, %v5968
        %v5981 = vpack.c.b16 %v5975, %v5972
        %v5982 = vpack.c.b16 %v5976, %v5973
        %v5983 = vpack.c.b16 %v5977, %v5974
        %v6060 = vunpack.c.l.b16 %v5862
        %v6061 = vunpack.c.h.b16 %v5862
        %v6062 = vunpack.c.l.b16 %v5863
        %v6063 = vunpack.c.l.b16 %v5864
        %v6064 = vunpack.c.h.b16 %v5864
        %v6065 = vunpack.c.l.b16 %v5865
        %v6066 = vunpack.c.l.b16 %v5866
        %v6067 = vunpack.c.h.b16 %v5866
        %v6068 = vunpack.c.l.b16 %v5867
        %v6069 = vunpack.c.l.b16 %v5868
        %v6070 = vunpack.c.h.b16 %v5868
        %v6071 = vunpack.c.l.b16 %v5869
        %v6072 = vunpack.c.l.b16 %v5870
        %v6073 = vunpack.c.h.b16 %v5870
        %v6074 = vunpack.c.l.b16 %v5871
        %v6075 = vunpack.c.l.b16 %v5872
        %v6076 = vunpack.c.h.b16 %v5872
        %v6077 = vunpack.c.l.b16 %v5873
        %v6078 = vunpack.c.l.b16 %v5874
        %v6079 = vunpack.c.h.b16 %v5874
        %v6080 = vunpack.c.l.b16 %v5875
        %v6081 = vunpack.c.l.b16 %v5876
        %v6082 = vunpack.c.h.b16 %v5876
        %v6083 = vunpack.c.l.b16 %v5877
        %v6084 = vunpack.c.l.b16 %v5878
        %v6085 = vunpack.c.h.b16 %v5878
        %v6086 = vunpack.c.l.b16 %v5879
        %v6087 = vunpack.c.l.b16 %v5880
        %v6088 = vunpack.c.h.b16 %v5880
        %v6089 = vunpack.c.l.b16 %v5881
        %v6090 = vunpack.c.l.b16 %v5882
        %v6091 = vunpack.c.h.b16 %v5882
        %v6092 = vunpack.c.l.b16 %v5883
        %v6093 = vunpack.c.l.b16 %v5884
        %v6094 = vunpack.c.h.b16 %v5884
        %v6095 = vunpack.c.l.b16 %v5885
        %v6096 = vunpack.c.l.b16 %v5886
        %v6097 = vunpack.c.h.b16 %v5886
        %v6098 = vunpack.c.l.b16 %v5887
        %v6099 = vunpack.c.l.b16 %v5888
        %v6100 = vunpack.c.h.b16 %v5888
        %v6101 = vunpack.c.l.b16 %v5889
        %v6102 = vunpack.c.l.b16 %v5890
        %v6103 = vunpack.c.h.b16 %v5890
        %v6104 = vunpack.c.l.b16 %v5891
        %v6105 = vunpack.c.l.b16 %v5892
        %v6106 = vunpack.c.h.b16 %v5892
        %v6107 = vunpack.c.l.b16 %v5893
        %v6108 = vunpack.c.l.b16 %v5894
        %v6109 = vunpack.c.h.b16 %v5894
        %v6110 = vunpack.c.l.b16 %v5895
        %v6111 = vunpack.c.l.b16 %v5896
        %v6112 = vunpack.c.h.b16 %v5896
        %v6113 = vunpack.c.l.b16 %v5897
        %v6114 = vunpack.c.l.b16 %v5898
        %v6115 = vunpack.c.h.b16 %v5898
        %v6116 = vunpack.c.l.b16 %v5899
        %v6117 = vunpack.c.l.b16 %v5900
        %v6118 = vunpack.c.h.b16 %v5900
        %v6119 = vunpack.c.l.b16 %v5901
        %v6120 = vunpack.c.l.b16 %v5902
        %v6121 = vunpack.c.h.b16 %v5902
        %v6122 = vunpack.c.l.b16 %v5903
        %v6123 = vunpack.c.l.b16 %v5904
        %v6124 = vunpack.c.h.b16 %v5904
        %v6125 = vunpack.c.l.b16 %v5905
        %v6126 = vunpack.c.l.b16 %v5906
        %v6127 = vunpack.c.h.b16 %v5906
        %v6128 = vunpack.c.l.b16 %v5907
        %v6129 = vunpack.c.l.b16 %v5908
        %v6130 = vunpack.c.h.b16 %v5908
        %v6131 = vunpack.c.l.b16 %v5909
        %v6132 = vunpack.c.l.b16 %v5910
        %v6133 = vunpack.c.h.b16 %v5910
        %v6134 = vunpack.c.l.b16 %v5911
        %v6135 = vunpack.c.l.b16 %v5912
        %v6136 = vunpack.c.h.b16 %v5912
        %v6137 = vunpack.c.l.b16 %v5913
        %v6138 = vunpack.c.l.b16 %v5914
        %v6139 = vunpack.c.h.b16 %v5914
        %v6140 = vunpack.c.l.b16 %v5915
        %v6141 = vunpack.c.l.b16 %v5916
        %v6142 = vunpack.c.h.b16 %v5916
        %v6143 = vunpack.c.l.b16 %v5917
        %v6144 = vunpack.c.l.b16 %v5918
        %v6145 = vunpack.c.h.b16 %v5918
        %v6146 = vunpack.c.l.b16 %v5919
        %v6147 = vunpack.c.l.b16 %v5920
        %v6148 = vunpack.c.h.b16 %v5920
        %v6149 = vunpack.c.l.b16 %v5921
        %v6150 = vunpack.c.l.b16 %v5922
        %v6151 = vunpack.c.h.b16 %v5922
        %v6152 = vunpack.c.l.b16 %v5923
        %v6153 = vunpack.c.l.b16 %v5924
        %v6154 = vunpack.c.h.b16 %v5924
        %v6155 = vunpack.c.l.b16 %v5925
        %v6156 = vunpack.c.l.b16 %v5926
        %v6157 = vunpack.c.h.b16 %v5926
        %v6158 = vunpack.c.l.b16 %v5927
        %v6159 = vunpack.c.l.b16 %v5928
        %v6160 = vunpack.c.h.b16 %v5928
        %v6161 = vunpack.c.l.b16 %v5929
        %v6162 = vunpack.c.l.b16 %v5930
        %v6163 = vunpack.c.h.b16 %v5930
        %v6164 = vunpack.c.l.b16 %v5931
        %v6165 = vunpack.c.l.b16 %v5932
        %v6166 = vunpack.c.h.b16 %v5932
        %v6167 = vunpack.c.l.b16 %v5933
        %v6168 = vpack.c.b16 %v6063, %v6060
        %v6169 = vpack.c.b16 %v6064, %v6061
        %v6170 = vpack.c.b16 %v6065, %v6062
        %v6171 = vpack.c.b16 %v6069, %v6066
        %v6172 = vpack.c.b16 %v6070, %v6067
        %v6173 = vpack.c.b16 %v6071, %v6068
        %v6174 = vpack.c.b16 %v6075, %v6072
        %v6175 = vpack.c.b16 %v6076, %v6073
        %v6176 = vpack.c.b16 %v6077, %v6074
        %v6177 = vpack.c.b16 %v6081, %v6078
        %v6178 = vpack.c.b16 %v6082, %v6079
        %v6179 = vpack.c.b16 %v6083, %v6080
        %v6180 = vpack.c.b16 %v6087, %v6084
        %v6181 = vpack.c.b16 %v6088, %v6085
        %v6182 = vpack.c.b16 %v6089, %v6086
        %v6183 = vpack.c.b16 %v6093, %v6090
        %v6184 = vpack.c.b16 %v6094, %v6091
        %v6185 = vpack.c.b16 %v6095, %v6092
        %v6186 = vpack.c.b16 %v6099, %v6096
        %v6187 = vpack.c.b16 %v6100, %v6097
        %v6188 = vpack.c.b16 %v6101, %v6098
        %v6189 = vpack.c.b16 %v6105, %v6102
        %v6190 = vpack.c.b16 %v6106, %v6103
        %v6191 = vpack.c.b16 %v6107, %v6104
        %v6192 = vpack.c.b16 %v6111, %v6108
        %v6193 = vpack.c.b16 %v6112, %v6109
        %v6194 = vpack.c.b16 %v6113, %v6110
        %v6195 = vpack.c.b16 %v6117, %v6114
        %v6196 = vpack.c.b16 %v6118, %v6115
        %v6197 = vpack.c.b16 %v6119, %v6116
        %v6198 = vpack.c.b16 %v6123, %v6120
        %v6199 = vpack.c.b16 %v6124, %v6121
        %v6200 = vpack.c.b16 %v6125, %v6122
        %v6201 = vpack.c.b16 %v6129, %v6126
        %v6202 = vpack.c.b16 %v6130, %v6127
        %v6203 = vpack.c.b16 %v6131, %v6128
        %v6204 = vpack.c.b16 %v6135, %v6132
        %v6205 = vpack.c.b16 %v6136, %v6133
        %v6206 = vpack.c.b16 %v6137, %v6134
        %v6207 = vpack.c.b16 %v6141, %v6138
        %v6208 = vpack.c.b16 %v6142, %v6139
        %v6209 = vpack.c.b16 %v6143, %v6140
        %v6210 = vpack.c.b16 %v6147, %v6144
        %v6211 = vpack.c.b16 %v6148, %v6145
        %v6212 = vpack.c.b16 %v6149, %v6146
        %v6213 = vpack.c.b16 %v6153, %v6150
        %v6214 = vpack.c.b16 %v6154, %v6151
        %v6215 = vpack.c.b16 %v6155, %v6152
        %v6216 = vpack.c.b16 %v6159, %v6156
        %v6217 = vpack.c.b16 %v6160, %v6157
        %v6218 = vpack.c.b16 %v6161, %v6158
        %v6219 = vpack.c.b16 %v6165, %v6162
        %v6220 = vpack.c.b16 %v6166, %v6163
        %v6221 = vpack.c.b16 %v6167, %v6164
        %v6277 = vsel %vm4725, %v5980, 0
        %v6280 = vsel %vm4725, %v5983, 0
        %6282 = vmatprep.subr.bf16.mxu0 %v6190
        %6283 = vmatpush1.bf16.msra.mxu0 %v6189
        %6284 = vmatprep.subr.bf16.mxu0 %v6187
        %6285 = vmatpush1.bf16.msra.mxu0 %v6186
        %6286 = vmatprep.subr.bf16.mxu0 %v6184
        %6287 = vmatpush1.bf16.msra.mxu0 %v6183
        %6288 = vmatprep.subr.bf16.mxu0 %v6181
        %6289 = vmatpush1.bf16.msra.mxu0 %v6180
        %6290 = vmatprep.subr.bf16.mxu0 %v6178
        %6291 = vmatpush1.bf16.msra.mxu0 %v6177
        %6292 = vmatprep.subr.bf16.mxu0 %v6175
        %6293 = vmatpush1.bf16.msra.mxu0 %v6174
        %6294 = vmatprep.subr.bf16.mxu0 %v6172
        %6295 = vmatpush1.bf16.msra.mxu0 %v6171
        %6296 = vmatprep.subr.bf16.mxu0 %v6169
        %6297 = vmatpush1.bf16.msra.mxu0 %v6168
        %6298 = vmatprep.subr.bf16.mxu0 %v6214
        %6299 = vmatpush2.bf16.msra.mxu0 %v6213
        %6300 = vmatprep.subr.bf16.mxu0 %v6211
        %6301 = vmatpush2.bf16.msra.mxu0 %v6210
        %6302 = vmatprep.subr.bf16.mxu0 %v6208
        %6303 = vmatpush2.bf16.msra.mxu0 %v6207
        %6304 = vmatprep.subr.bf16.mxu0 %v6205
        %6305 = vmatpush2.bf16.msra.mxu0 %v6204
        %6306 = vmatprep.subr.bf16.mxu0 %v6202
        %6307 = vmatpush2.bf16.msra.mxu0 %v6201
        %6308 = vmatprep.subr.bf16.mxu0 %v6199
        %6309 = vmatpush2.bf16.msra.mxu0 %v6198
        %6310 = vmatprep.subr.bf16.mxu0 %v6196
        %6311 = vmatpush2.bf16.msra.mxu0 %v6195
        %6312 = vmatprep.subr.bf16.mxu0 %v6193
        %6313 = vmatpush2.bf16.msra.mxu0 %v6192
        %6314 = vmatprep.mubr.bf16.mxu0 %v5979
        %6315 = vmatmul.mubr.bf16.gmra.mxu0 %v5978
        %v6316 = vpop.f32.mrf.mxu0
        %v6317 = vadd.f32 %v5941, %v6316
        %v6318 = vpop.f32.mrf.mxu0
        %v6319 = vadd.f32 %v5941, %v6318
        %v6320 = vpop.f32.mrf.mxu0
        %v6321 = vadd.f32 %v5946, %v6320
        %v6322 = vpop.f32.mrf.mxu0
        %v6323 = vadd.f32 %v5946, %v6322
        %6324 = vmatprep.mubr.bf16.mxu0 %v5982
        %6325 = vmatmul.mubr.bf16.gmra.mxu0 %v5981
        %v6326 = vpop.f32.mrf.mxu0
        %v6327 = vadd.f32 %v5951, %v6326
        %v6328 = vpop.f32.mrf.mxu0
        %v6329 = vadd.f32 %v5951, %v6328
        %v6330 = vpop.f32.mrf.mxu0
        %v6331 = vadd.f32 %v5956, %v6330
        %v6332 = vpop.f32.mrf.mxu0
        %v6333 = vadd.f32 %v5956, %v6332
        %6334 = vdwg.mxu0
        %6335 = vmatprep.subr.bf16.mxu0 0
        %6336 = vmatpush1.bf16.msra.mxu0 0
        %6337 = vmatprep.subr.bf16.mxu0 0
        %6338 = vmatpush1.bf16.msra.mxu0 0
        %6339 = vmatprep.subr.bf16.mxu0 0
        %6340 = vmatpush1.bf16.msra.mxu0 0
        %6341 = vmatprep.subr.bf16.mxu0 0
        %6342 = vmatpush1.bf16.msra.mxu0 0
        %6343 = vmatprep.subr.bf16.mxu0 0
        %6344 = vmatpush1.bf16.msra.mxu0 0
        %6345 = vmatprep.subr.bf16.mxu0 0
        %6346 = vmatpush1.bf16.msra.mxu0 0
        %6347 = vmatprep.subr.bf16.mxu0 %v6220
        %6348 = vmatpush1.bf16.msra.mxu0 %v6219
        %6349 = vmatprep.subr.bf16.mxu0 %v6217
        %6350 = vmatpush1.bf16.msra.mxu0 %v6216
        %6351 = vmatprep.subr.bf16.mxu0 0
        %6352 = vmatpush2.bf16.msra.mxu0 0
        %6353 = vmatprep.subr.bf16.mxu0 0
        %6354 = vmatpush2.bf16.msra.mxu0 0
        %6355 = vmatprep.subr.bf16.mxu0 0
        %6356 = vmatpush2.bf16.msra.mxu0 0
        %6357 = vmatprep.subr.bf16.mxu0 0
        %6358 = vmatpush2.bf16.msra.mxu0 0
        %6359 = vmatprep.subr.bf16.mxu0 0
        %6360 = vmatpush2.bf16.msra.mxu0 0
        %6361 = vmatprep.subr.bf16.mxu0 0
        %6362 = vmatpush2.bf16.msra.mxu0 0
        %6363 = vmatprep.subr.bf16.mxu0 0
        %6364 = vmatpush2.bf16.msra.mxu0 0
        %6365 = vmatprep.subr.bf16.mxu0 0
        %6366 = vmatpush2.bf16.msra.mxu0 0
        %6367 = vmatprep.mubr.bf16.mxu0 0
        %6368 = vmatmul.mubr.bf16.gmra.mxu0 %v6277
        %v6369 = vpop.f32.mrf.mxu0
        %v6370 = vadd.f32 %v6317, %v6369
        %v6371 = vpop.f32.mrf.mxu0
        %v6372 = vadd.f32 %v6319, %v6371
        %v6373 = vpop.f32.mrf.mxu0
        %v6374 = vadd.f32 %v6321, %v6373
        %v6375 = vpop.f32.mrf.mxu0
        %v6376 = vadd.f32 %v6323, %v6375
        %6377 = vmatprep.mubr.bf16.mxu0 0
        %6378 = vmatmul.mubr.bf16.gmra.mxu0 %v6280
        %v6379 = vpop.f32.mrf.mxu0
        %v6380 = vadd.f32 %v6327, %v6379
        %v6381 = vpop.f32.mrf.mxu0
        %v6382 = vadd.f32 %v6329, %v6381
        %v6383 = vpop.f32.mrf.mxu0
        %v6384 = vadd.f32 %v6331, %v6383
        %v6385 = vpop.f32.mrf.mxu0
        %v6386 = vadd.f32 %v6333, %v6385
        %6387 = vdwg.mxu0
        %6388 = vmatprep.subr.bf16.mxu0 0
        %6389 = vmatpush1.bf16.msra.mxu0 %v6191
        %6390 = vmatprep.subr.bf16.mxu0 0
        %6391 = vmatpush1.bf16.msra.mxu0 %v6188
        %6392 = vmatprep.subr.bf16.mxu0 0
        %6393 = vmatpush1.bf16.msra.mxu0 %v6185
        %6394 = vmatprep.subr.bf16.mxu0 0
        %6395 = vmatpush1.bf16.msra.mxu0 %v6182
        %6396 = vmatprep.subr.bf16.mxu0 0
        %6397 = vmatpush1.bf16.msra.mxu0 %v6179
        %6398 = vmatprep.subr.bf16.mxu0 0
        %6399 = vmatpush1.bf16.msra.mxu0 %v6176
        %6400 = vmatprep.subr.bf16.mxu0 0
        %6401 = vmatpush1.bf16.msra.mxu0 %v6173
        %6402 = vmatprep.subr.bf16.mxu0 0
        %6403 = vmatpush1.bf16.msra.mxu0 %v6170
        %6404 = vmatprep.subr.bf16.mxu0 0
        %6405 = vmatpush2.bf16.msra.mxu0 %v6215
        %6406 = vmatprep.subr.bf16.mxu0 0
        %6407 = vmatpush2.bf16.msra.mxu0 %v6212
        %6408 = vmatprep.subr.bf16.mxu0 0
        %6409 = vmatpush2.bf16.msra.mxu0 %v6209
        %6410 = vmatprep.subr.bf16.mxu0 0
        %6411 = vmatpush2.bf16.msra.mxu0 %v6206
        %6412 = vmatprep.subr.bf16.mxu0 0
        %6413 = vmatpush2.bf16.msra.mxu0 %v6203
        %6414 = vmatprep.subr.bf16.mxu0 0
        %6415 = vmatpush2.bf16.msra.mxu0 %v6200
        %6416 = vmatprep.subr.bf16.mxu0 0
        %6417 = vmatpush2.bf16.msra.mxu0 %v6197
        %6418 = vmatprep.subr.bf16.mxu0 0
        %6419 = vmatpush2.bf16.msra.mxu0 %v6194
        %6420 = vmatprep.mubr.bf16.mxu0 %v5979
        %6421 = vmatmul.mubr.bf16.gmra.mxu0 %v5978
        %v6422 = vpop.f32.mrf.mxu0
        %v6423 = vadd.f32 %v5941, %v6422
        %v6424 = vpop.f32.mrf.mxu0
        %v6425 = vpop.f32.mrf.mxu0
        %v6426 = vadd.f32 %v5946, %v6425
        %v6427 = vpop.f32.mrf.mxu0
        %6428 = vmatprep.mubr.bf16.mxu0 %v5982
        %6429 = vmatmul.mubr.bf16.gmra.mxu0 %v5981
        %v6430 = vpop.f32.mrf.mxu0
        %v6431 = vadd.f32 %v5951, %v6430
        %v6432 = vpop.f32.mrf.mxu0
        %v6433 = vpop.f32.mrf.mxu0
        %v6434 = vadd.f32 %v5956, %v6433
        %v6435 = vpop.f32.mrf.mxu0
        %6436 = vdwg.mxu0
        %6437 = vmatprep.subr.bf16.mxu0 0
        %6438 = vmatpush1.bf16.msra.mxu0 0
        %6439 = vmatprep.subr.bf16.mxu0 0
        %6440 = vmatpush1.bf16.msra.mxu0 0
        %6441 = vmatprep.subr.bf16.mxu0 0
        %6442 = vmatpush1.bf16.msra.mxu0 0
        %6443 = vmatprep.subr.bf16.mxu0 0
        %6444 = vmatpush1.bf16.msra.mxu0 0
        %6445 = vmatprep.subr.bf16.mxu0 0
        %6446 = vmatpush1.bf16.msra.mxu0 0
        %6447 = vmatprep.subr.bf16.mxu0 0
        %6448 = vmatpush1.bf16.msra.mxu0 0
        %6449 = vmatprep.subr.bf16.mxu0 0
        %6450 = vmatpush1.bf16.msra.mxu0 %v6221
        %6451 = vmatprep.subr.bf16.mxu0 0
        %6452 = vmatpush1.bf16.msra.mxu0 %v6218
        %6453 = vmatprep.subr.bf16.mxu0 0
        %6454 = vmatpush2.bf16.msra.mxu0 0
        %6455 = vmatprep.subr.bf16.mxu0 0
        %6456 = vmatpush2.bf16.msra.mxu0 0
        %6457 = vmatprep.subr.bf16.mxu0 0
        %6458 = vmatpush2.bf16.msra.mxu0 0
        %6459 = vmatprep.subr.bf16.mxu0 0
        %6460 = vmatpush2.bf16.msra.mxu0 0
        %6461 = vmatprep.subr.bf16.mxu0 0
        %6462 = vmatpush2.bf16.msra.mxu0 0
        %6463 = vmatprep.subr.bf16.mxu0 0
        %6464 = vmatpush2.bf16.msra.mxu0 0
        %6465 = vmatprep.subr.bf16.mxu0 0
        %6466 = vmatpush2.bf16.msra.mxu0 0
        %6467 = vmatprep.subr.bf16.mxu0 0
        %6468 = vmatpush2.bf16.msra.mxu0 0
        %6469 = vmatprep.mubr.bf16.mxu0 0
        %6470 = vmatmul.mubr.bf16.gmra.mxu0 %v6277
        %v6471 = vpop.f32.mrf.mxu0
        %v6472 = vadd.f32 %v6423, %v6471
        %v6473 = vpop.f32.mrf.mxu0
        %v6474 = vpop.f32.mrf.mxu0
        %v6475 = vadd.f32 %v6426, %v6474
        %v6476 = vpop.f32.mrf.mxu0
        %6477 = vmatprep.mubr.bf16.mxu0 0
        %6478 = vmatmul.mubr.bf16.gmra.mxu0 %v6280
        %v6479 = vpop.f32.mrf.mxu0
        %v6480 = vadd.f32 %v6431, %v6479
        %v6481 = vpop.f32.mrf.mxu0
        %v6482 = vpop.f32.mrf.mxu0
        %v6483 = vadd.f32 %v6434, %v6482
        %v6484 = vpop.f32.mrf.mxu0
        %6485 = vdwg.mxu0
        %v6486 = vmul.f32 %v6370, %v3473
        %v6487 = vmul.f32 %v6372, %v3477
        %v6488 = vmul.f32 %v6472, %v3481
        %v6489 = vmul.f32 %v6374, %v3473
        %v6490 = vmul.f32 %v6376, %v3477
        %v6491 = vmul.f32 %v6475, %v3481
        %v6492 = vmul.f32 %v6380, %v3473
        %v6493 = vmul.f32 %v6382, %v3477
        %v6494 = vmul.f32 %v6480, %v3481
        %v6495 = vmul.f32 %v6384, %v3473
        %v6496 = vmul.f32 %v6386, %v3477
        %v6497 = vmul.f32 %v6483, %v3481
        %v6498 = vld [vmem:[#allocation2] sm:$0xff]
        %v6499 = vld [vmem:[#allocation2 + $0x8] sm:$0xff]
        %v6500 = vld [vmem:[#allocation2 + $0x10] sm:$0xff]
        %v6501 = vld [vmem:[#allocation2 + $0x18] sm:$0xff]
        %v6502 = vld [vmem:[#allocation2 + $0x20] sm:$0xff]
        %v6503 = vld [vmem:[#allocation2 + $0x28] sm:$0xff]
        %v6504 = vld [vmem:[#allocation2 + $0x30] sm:$0xff]
        %v6505 = vld [vmem:[#allocation2 + $0x38] sm:$0xff]
        %v6506 = vld [vmem:[#allocation2 + $0x40] sm:$0xff]
        %v6507 = vld [vmem:[#allocation2 + $0x48] sm:$0xff]
        %v6508 = vld [vmem:[#allocation2 + $0x50] sm:$0xff]
        %v6509 = vld [vmem:[#allocation2 + $0x58] sm:$0xff]
        %v6510 = vadd.f32 %v6486, %v6498
        %v6511 = vadd.f32 %v6487, %v6499
        %v6512 = vadd.f32 %v6488, %v6500
        %v6513 = vadd.f32 %v6489, %v6501
        %v6514 = vadd.f32 %v6490, %v6502
        %v6515 = vadd.f32 %v6491, %v6503
        %v6516 = vadd.f32 %v6492, %v6504
        %v6517 = vadd.f32 %v6493, %v6505
        %v6518 = vadd.f32 %v6494, %v6506
        %v6519 = vadd.f32 %v6495, %v6507
        %v6520 = vadd.f32 %v6496, %v6508
        %v6521 = vadd.f32 %v6497, %v6509
        %6522 = vst [vmem:[#allocation2] sm:$0xff] %v6510
        %6523 = vst [vmem:[#allocation2 + $0x8] sm:$0xff] %v6511
        %6524 = vst [vmem:[#allocation2 + $0x10] sm:$0xff] %v6512
        %6525 = vst [vmem:[#allocation2 + $0x18] sm:$0xff] %v6513
        %6526 = vst [vmem:[#allocation2 + $0x20] sm:$0xff] %v6514
        %6527 = vst [vmem:[#allocation2 + $0x28] sm:$0xff] %v6515
        %6528 = vst [vmem:[#allocation2 + $0x30] sm:$0xff] %v6516
        %6529 = vst [vmem:[#allocation2 + $0x38] sm:$0xff] %v6517
        %6530 = vst [vmem:[#allocation2 + $0x40] sm:$0xff] %v6518
        %6531 = vst [vmem:[#allocation2 + $0x48] sm:$0xff] %v6519
        %6532 = vst [vmem:[#allocation2 + $0x50] sm:$0xff] %v6520
        %6533 = vst [vmem:[#allocation2 + $0x58] sm:$0xff] %v6521
        %v6534 = vld [vmem:[#allocation2] sm:$0xff]
        %v6535 = vld [vmem:[#allocation2 + $0x8] sm:$0xff]
        %v6536 = vld [vmem:[#allocation2 + $0x10] sm:$0xff]
        %v6537 = vld [vmem:[#allocation2 + $0x18] sm:$0xff]
        %v6538 = vld [vmem:[#allocation2 + $0x20] sm:$0xff]
        %v6539 = vld [vmem:[#allocation2 + $0x28] sm:$0xff]
        %v6540 = vld [vmem:[#allocation2 + $0x30] sm:$0xff]
        %v6541 = vld [vmem:[#allocation2 + $0x38] sm:$0xff]
        %v6542 = vld [vmem:[#allocation2 + $0x40] sm:$0xff]
        %v6543 = vld [vmem:[#allocation2 + $0x48] sm:$0xff]
        %v6544 = vld [vmem:[#allocation2 + $0x50] sm:$0xff]
        %v6545 = vld [vmem:[#allocation2 + $0x58] sm:$0xff]
        %6546 = vrot.lane.b32.xlu0 %v6534, 19
        %v6547 = vpop.permute.xlu0 %6546
        %6548 = vrot.lane.b32.xlu0 %v6537, 19
        %v6549 = vpop.permute.xlu0 %6548
        %6550 = vrot.lane.b32.xlu0 %v6540, 19
        %v6551 = vpop.permute.xlu0 %6550
        %6552 = vrot.lane.b32.xlu0 %v6543, 19
        %v6553 = vpop.permute.xlu0 %6552
        %6554 = vrot.lane.b32.xlu0 %v6535, 19
        %v6555 = vpop.permute.xlu0 %6554
        %6556 = vrot.lane.b32.xlu0 %v6538, 19
        %v6557 = vpop.permute.xlu0 %6556
        %6558 = vrot.lane.b32.xlu0 %v6541, 19
        %v6559 = vpop.permute.xlu0 %6558
        %6560 = vrot.lane.b32.xlu0 %v6544, 19
        %v6561 = vpop.permute.xlu0 %6560
        %6562 = vrot.lane.b32.xlu0 %v6536, 19
        %v6563 = vpop.permute.xlu0 %6562
        %6564 = vrot.lane.b32.xlu0 %v6539, 19
        %v6565 = vpop.permute.xlu0 %6564
        %6566 = vrot.lane.b32.xlu0 %v6542, 19
        %v6567 = vpop.permute.xlu0 %6566
        %6568 = vrot.lane.b32.xlu0 %v6545, 19
        %v6569 = vpop.permute.xlu0 %6568
        %v6570 = vsel %vm666, %v6555, %v6563
        %v6571 = vsel %vm666, %v6557, %v6565
        %v6572 = vsel %vm666, %v6559, %v6567
        %v6573 = vsel %vm666, %v6561, %v6569
        %v6574 = vsel %vm666, %v6547, %v6555
        %v6575 = vsel %vm666, %v6549, %v6557
        %v6576 = vsel %vm666, %v6551, %v6559
        %v6577 = vsel %vm666, %v6553, %v6561
        %v6578 = vsel %vm666, %v6563, %v6547
        %v6579 = vsel %vm666, %v6565, %v6549
        %v6580 = vsel %vm666, %v6567, %v6551
        %v6581 = vsel %vm666, %v6569, %v6553
        %v6582 = vpack.c.bf16 %v6579, %v6578
        %v6583 = vpack.c.bf16 %v6575, %v6574
        %v6584 = vpack.c.bf16 %v6571, %v6570
        %v6585 = vpack.c.bf16 %v6581, %v6580
        %v6586 = vpack.c.bf16 %v6577, %v6576
        %v6587 = vpack.c.bf16 %v6573, %v6572
        %v6594 = vunpack.c.l.b16 %v6582
        %v6595 = vunpack.c.l.b16 %v6583
        %v6596 = vunpack.c.l.b16 %v6584
        %v6597 = vunpack.c.h.b16 %v6582
        %v6598 = vunpack.c.h.b16 %v6583
        %v6599 = vunpack.c.h.b16 %v6584
        %v6600 = vunpack.c.l.b16 %v6585
        %v6601 = vunpack.c.l.b16 %v6586
        %v6602 = vunpack.c.l.b16 %v6587
        %v6603 = vunpack.c.h.b16 %v6585
        %v6604 = vunpack.c.h.b16 %v6586
        %v6605 = vunpack.c.h.b16 %v6587
        %v6606 = vpack.c.b16 %v6595, %v6594
        %v6607 = vpack.c.b16 %v6596, %v6596
        %v6608 = vpack.c.b16 %v6598, %v6597
        %v6609 = vpack.c.b16 %v6599, %v6599
        %v6610 = vpack.c.b16 %v6601, %v6600
        %v6611 = vpack.c.b16 %v6602, %v6602
        %v6612 = vpack.c.b16 %v6604, %v6603
        %v6613 = vpack.c.b16 %v6605, %v6605
        %6622 = vst [vmem:[#allocation3] sm:$0xff] %v6606
        %6623 = vst [vmem:[#allocation3 + $0x8] sm:$0xf] %v6607
        %6624 = vst [vmem:[#allocation3 + $0xc] sm:$0xff] %v6608
        %6625 = vst [vmem:[#allocation3 + $0x14] sm:$0xf] %v6609
        %6626 = vst [vmem:[#allocation3 + $0x18] sm:$0xff] %v6610
        %6627 = vst [vmem:[#allocation3 + $0x20] sm:$0xf] %v6611
        %6628 = vst [vmem:[#allocation3 + $0x24] sm:$0xff] %v6612
        %6629 = vst [vmem:[#allocation3 + $0x2c] sm:$0xf] %v6613
        %6630 = vrot.lane.b32.xlu0 %v6534, 18
        %v6631 = vpop.permute.xlu0 %6630
        %6632 = vrot.lane.b32.xlu0 %v6537, 18
        %v6633 = vpop.permute.xlu0 %6632
        %6634 = vrot.lane.b32.xlu0 %v6540, 18
        %v6635 = vpop.permute.xlu0 %6634
        %6636 = vrot.lane.b32.xlu0 %v6543, 18
        %v6637 = vpop.permute.xlu0 %6636
        %6638 = vrot.lane.b32.xlu0 %v6535, 18
        %v6639 = vpop.permute.xlu0 %6638
        %6640 = vrot.lane.b32.xlu0 %v6538, 18
        %v6641 = vpop.permute.xlu0 %6640
        %6642 = vrot.lane.b32.xlu0 %v6541, 18
        %v6643 = vpop.permute.xlu0 %6642
        %6644 = vrot.lane.b32.xlu0 %v6544, 18
        %v6645 = vpop.permute.xlu0 %6644
        %6646 = vrot.lane.b32.xlu0 %v6536, 18
        %v6647 = vpop.permute.xlu0 %6646
        %6648 = vrot.lane.b32.xlu0 %v6539, 18
        %v6649 = vpop.permute.xlu0 %6648
        %6650 = vrot.lane.b32.xlu0 %v6542, 18
        %v6651 = vpop.permute.xlu0 %6650
        %6652 = vrot.lane.b32.xlu0 %v6545, 18
        %v6653 = vpop.permute.xlu0 %6652
        %v6654 = vsel %vm835, %v6639, %v6647
        %v6655 = vsel %vm835, %v6641, %v6649
        %v6656 = vsel %vm835, %v6643, %v6651
        %v6657 = vsel %vm835, %v6645, %v6653
        %v6658 = vsel %vm835, %v6631, %v6639
        %v6659 = vsel %vm835, %v6633, %v6641
        %v6660 = vsel %vm835, %v6635, %v6643
        %v6661 = vsel %vm835, %v6637, %v6645
        %v6662 = vsel %vm835, %v6647, %v6631
        %v6663 = vsel %vm835, %v6649, %v6633
        %v6664 = vsel %vm835, %v6651, %v6635
        %v6665 = vsel %vm835, %v6653, %v6637
        %v6666 = vpack.c.bf16 %v6663, %v6662
        %v6667 = vpack.c.bf16 %v6659, %v6658
        %v6668 = vpack.c.bf16 %v6655, %v6654
        %v6669 = vpack.c.bf16 %v6665, %v6664
        %v6670 = vpack.c.bf16 %v6661, %v6660
        %v6671 = vpack.c.bf16 %v6657, %v6656
        %v6678 = vunpack.c.l.b16 %v6666
        %v6679 = vunpack.c.l.b16 %v6667
        %v6680 = vunpack.c.l.b16 %v6668
        %v6681 = vunpack.c.h.b16 %v6666
        %v6682 = vunpack.c.h.b16 %v6667
        %v6683 = vunpack.c.h.b16 %v6668
        %v6684 = vunpack.c.l.b16 %v6669
        %v6685 = vunpack.c.l.b16 %v6670
        %v6686 = vunpack.c.l.b16 %v6671
        %v6687 = vunpack.c.h.b16 %v6669
        %v6688 = vunpack.c.h.b16 %v6670
        %v6689 = vunpack.c.h.b16 %v6671
        %v6690 = vpack.c.b16 %v6679, %v6678
        %v6691 = vpack.c.b16 %v6680, %v6680
        %v6692 = vpack.c.b16 %v6682, %v6681
        %v6693 = vpack.c.b16 %v6683, %v6683
        %v6694 = vpack.c.b16 %v6685, %v6684
        %v6695 = vpack.c.b16 %v6686, %v6686
        %v6696 = vpack.c.b16 %v6688, %v6687
        %v6697 = vpack.c.b16 %v6689, %v6689
        %6706 = vst [vmem:[#allocation3 + $0x30] sm:$0xff] %v6690
        %6707 = vst [vmem:[#allocation3 + $0x38] sm:$0xf] %v6691
        %6708 = vst [vmem:[#allocation3 + $0x3c] sm:$0xff] %v6692
        %6709 = vst [vmem:[#allocation3 + $0x44] sm:$0xf] %v6693
        %6710 = vst [vmem:[#allocation3 + $0x48] sm:$0xff] %v6694
        %6711 = vst [vmem:[#allocation3 + $0x50] sm:$0xf] %v6695
        %6712 = vst [vmem:[#allocation3 + $0x54] sm:$0xff] %v6696
        %6713 = vst [vmem:[#allocation3 + $0x5c] sm:$0xf] %v6697
        %6714 = vrot.lane.b32.xlu0 %v6534, 17
        %v6715 = vpop.permute.xlu0 %6714
        %6716 = vrot.lane.b32.xlu0 %v6537, 17
        %v6717 = vpop.permute.xlu0 %6716
        %6718 = vrot.lane.b32.xlu0 %v6540, 17
        %v6719 = vpop.permute.xlu0 %6718
        %6720 = vrot.lane.b32.xlu0 %v6543, 17
        %v6721 = vpop.permute.xlu0 %6720
        %6722 = vrot.lane.b32.xlu0 %v6535, 17
        %v6723 = vpop.permute.xlu0 %6722
        %6724 = vrot.lane.b32.xlu0 %v6538, 17
        %v6725 = vpop.permute.xlu0 %6724
        %6726 = vrot.lane.b32.xlu0 %v6541, 17
        %v6727 = vpop.permute.xlu0 %6726
        %6728 = vrot.lane.b32.xlu0 %v6544, 17
        %v6729 = vpop.permute.xlu0 %6728
        %6730 = vrot.lane.b32.xlu0 %v6536, 17
        %v6731 = vpop.permute.xlu0 %6730
        %6732 = vrot.lane.b32.xlu0 %v6539, 17
        %v6733 = vpop.permute.xlu0 %6732
        %6734 = vrot.lane.b32.xlu0 %v6542, 17
        %v6735 = vpop.permute.xlu0 %6734
        %6736 = vrot.lane.b32.xlu0 %v6545, 17
        %v6737 = vpop.permute.xlu0 %6736
        %v6738 = vsel %vm1004, %v6723, %v6731
        %v6739 = vsel %vm1004, %v6725, %v6733
        %v6740 = vsel %vm1004, %v6727, %v6735
        %v6741 = vsel %vm1004, %v6729, %v6737
        %v6742 = vsel %vm1004, %v6715, %v6723
        %v6743 = vsel %vm1004, %v6717, %v6725
        %v6744 = vsel %vm1004, %v6719, %v6727
        %v6745 = vsel %vm1004, %v6721, %v6729
        %v6746 = vsel %vm1004, %v6731, %v6715
        %v6747 = vsel %vm1004, %v6733, %v6717
        %v6748 = vsel %vm1004, %v6735, %v6719
        %v6749 = vsel %vm1004, %v6737, %v6721
        %v6750 = vpack.c.bf16 %v6747, %v6746
        %v6751 = vpack.c.bf16 %v6743, %v6742
        %v6752 = vpack.c.bf16 %v6739, %v6738
        %v6753 = vpack.c.bf16 %v6749, %v6748
        %v6754 = vpack.c.bf16 %v6745, %v6744
        %v6755 = vpack.c.bf16 %v6741, %v6740
        %v6762 = vunpack.c.l.b16 %v6750
        %v6763 = vunpack.c.l.b16 %v6751
        %v6764 = vunpack.c.l.b16 %v6752
        %v6765 = vunpack.c.h.b16 %v6750
        %v6766 = vunpack.c.h.b16 %v6751
        %v6767 = vunpack.c.h.b16 %v6752
        %v6768 = vunpack.c.l.b16 %v6753
        %v6769 = vunpack.c.l.b16 %v6754
        %v6770 = vunpack.c.l.b16 %v6755
        %v6771 = vunpack.c.h.b16 %v6753
        %v6772 = vunpack.c.h.b16 %v6754
        %v6773 = vunpack.c.h.b16 %v6755
        %v6774 = vpack.c.b16 %v6763, %v6762
        %v6775 = vpack.c.b16 %v6764, %v6764
        %v6776 = vpack.c.b16 %v6766, %v6765
        %v6777 = vpack.c.b16 %v6767, %v6767
        %v6778 = vpack.c.b16 %v6769, %v6768
        %v6779 = vpack.c.b16 %v6770, %v6770
        %v6780 = vpack.c.b16 %v6772, %v6771
        %v6781 = vpack.c.b16 %v6773, %v6773
        %6790 = vst [vmem:[#allocation3 + $0x60] sm:$0xff] %v6774
        %6791 = vst [vmem:[#allocation3 + $0x68] sm:$0xf] %v6775
        %6792 = vst [vmem:[#allocation3 + $0x6c] sm:$0xff] %v6776
        %6793 = vst [vmem:[#allocation3 + $0x74] sm:$0xf] %v6777
        %6794 = vst [vmem:[#allocation3 + $0x78] sm:$0xff] %v6778
        %6795 = vst [vmem:[#allocation3 + $0x80] sm:$0xf] %v6779
        %6796 = vst [vmem:[#allocation3 + $0x84] sm:$0xff] %v6780
        %6797 = vst [vmem:[#allocation3 + $0x8c] sm:$0xf] %v6781
        %6798 = vrot.lane.b32.xlu0 %v6534, 1
        %v6799 = vpop.permute.xlu0 %6798
        %6800 = vrot.lane.b32.xlu0 %v6537, 1
        %v6801 = vpop.permute.xlu0 %6800
        %6802 = vrot.lane.b32.xlu0 %v6540, 1
        %v6803 = vpop.permute.xlu0 %6802
        %6804 = vrot.lane.b32.xlu0 %v6543, 1
        %v6805 = vpop.permute.xlu0 %6804
        %6806 = vrot.lane.b32.xlu0 %v6535, 1
        %v6807 = vpop.permute.xlu0 %6806
        %6808 = vrot.lane.b32.xlu0 %v6538, 1
        %v6809 = vpop.permute.xlu0 %6808
        %6810 = vrot.lane.b32.xlu0 %v6541, 1
        %v6811 = vpop.permute.xlu0 %6810
        %6812 = vrot.lane.b32.xlu0 %v6544, 1
        %v6813 = vpop.permute.xlu0 %6812
        %6814 = vrot.lane.b32.xlu0 %v6536, 1
        %v6815 = vpop.permute.xlu0 %6814
        %6816 = vrot.lane.b32.xlu0 %v6539, 1
        %v6817 = vpop.permute.xlu0 %6816
        %6818 = vrot.lane.b32.xlu0 %v6542, 1
        %v6819 = vpop.permute.xlu0 %6818
        %6820 = vrot.lane.b32.xlu0 %v6545, 1
        %v6821 = vpop.permute.xlu0 %6820
        %v6822 = vsel %vm1173, %v6807, %v6815
        %v6823 = vsel %vm1173, %v6809, %v6817
        %v6824 = vsel %vm1173, %v6811, %v6819
        %v6825 = vsel %vm1173, %v6813, %v6821
        %v6826 = vsel %vm1173, %v6799, %v6807
        %v6827 = vsel %vm1173, %v6801, %v6809
        %v6828 = vsel %vm1173, %v6803, %v6811
        %v6829 = vsel %vm1173, %v6805, %v6813
        %v6830 = vsel %vm1173, %v6815, %v6799
        %v6831 = vsel %vm1173, %v6817, %v6801
        %v6832 = vsel %vm1173, %v6819, %v6803
        %v6833 = vsel %vm1173, %v6821, %v6805
        %v6834 = vpack.c.bf16 %v6831, %v6830
        %v6835 = vpack.c.bf16 %v6827, %v6826
        %v6836 = vpack.c.bf16 %v6823, %v6822
        %v6837 = vpack.c.bf16 %v6833, %v6832
        %v6838 = vpack.c.bf16 %v6829, %v6828
        %v6839 = vpack.c.bf16 %v6825, %v6824
        %v6846 = vunpack.c.l.b16 %v6834
        %v6847 = vunpack.c.l.b16 %v6835
        %v6848 = vunpack.c.l.b16 %v6836
        %v6849 = vunpack.c.h.b16 %v6834
        %v6850 = vunpack.c.h.b16 %v6835
        %v6851 = vunpack.c.h.b16 %v6836
        %v6852 = vunpack.c.l.b16 %v6837
        %v6853 = vunpack.c.l.b16 %v6838
        %v6854 = vunpack.c.l.b16 %v6839
        %v6855 = vunpack.c.h.b16 %v6837
        %v6856 = vunpack.c.h.b16 %v6838
        %v6857 = vunpack.c.h.b16 %v6839
        %v6858 = vpack.c.b16 %v6847, %v6846
        %v6859 = vpack.c.b16 %v6848, %v6848
        %v6860 = vpack.c.b16 %v6850, %v6849
        %v6861 = vpack.c.b16 %v6851, %v6851
        %v6862 = vpack.c.b16 %v6853, %v6852
        %v6863 = vpack.c.b16 %v6854, %v6854
        %v6864 = vpack.c.b16 %v6856, %v6855
        %v6865 = vpack.c.b16 %v6857, %v6857
        %6874 = vst [vmem:[#allocation3 + $0x90] sm:$0xff] %v6858
        %6875 = vst [vmem:[#allocation3 + $0x98] sm:$0xf] %v6859
        %6876 = vst [vmem:[#allocation3 + $0x9c] sm:$0xff] %v6860
        %6877 = vst [vmem:[#allocation3 + $0xa4] sm:$0xf] %v6861
        %6878 = vst [vmem:[#allocation3 + $0xa8] sm:$0xff] %v6862
        %6879 = vst [vmem:[#allocation3 + $0xb0] sm:$0xf] %v6863
        %6880 = vst [vmem:[#allocation3 + $0xb4] sm:$0xff] %v6864
        %6881 = vst [vmem:[#allocation3 + $0xbc] sm:$0xf] %v6865
        %v6882 = vpack.c.bf16 %v6537, %v6534
        %v6883 = vpack.c.bf16 %v6538, %v6535
        %v6884 = vpack.c.bf16 %v6539, %v6536
        %v6885 = vpack.c.bf16 %v6543, %v6540
        %v6886 = vpack.c.bf16 %v6544, %v6541
        %v6887 = vpack.c.bf16 %v6545, %v6542
        %v6894 = vunpack.c.l.b16 %v6882
        %v6895 = vunpack.c.l.b16 %v6883
        %v6896 = vunpack.c.l.b16 %v6884
        %v6897 = vunpack.c.h.b16 %v6882
        %v6898 = vunpack.c.h.b16 %v6883
        %v6899 = vunpack.c.h.b16 %v6884
        %v6900 = vunpack.c.l.b16 %v6885
        %v6901 = vunpack.c.l.b16 %v6886
        %v6902 = vunpack.c.l.b16 %v6887
        %v6903 = vunpack.c.h.b16 %v6885
        %v6904 = vunpack.c.h.b16 %v6886
        %v6905 = vunpack.c.h.b16 %v6887
        %v6906 = vpack.c.b16 %v6895, %v6894
        %v6907 = vpack.c.b16 %v6896, %v6896
        %v6908 = vpack.c.b16 %v6898, %v6897
        %v6909 = vpack.c.b16 %v6899, %v6899
        %v6910 = vpack.c.b16 %v6901, %v6900
        %v6911 = vpack.c.b16 %v6902, %v6902
        %v6912 = vpack.c.b16 %v6904, %v6903
        %v6913 = vpack.c.b16 %v6905, %v6905
        %6922 = vst [vmem:[#allocation3 + $0xc0] sm:$0xff] %v6906
        %6923 = vst [vmem:[#allocation3 + $0xc8] sm:$0xf] %v6907
        %6924 = vst [vmem:[#allocation3 + $0xcc] sm:$0xff] %v6908
        %6925 = vst [vmem:[#allocation3 + $0xd4] sm:$0xf] %v6909
        %6926 = vst [vmem:[#allocation3 + $0xd8] sm:$0xff] %v6910
        %6927 = vst [vmem:[#allocation3 + $0xe0] sm:$0xf] %v6911
        %6928 = vst [vmem:[#allocation3 + $0xe4] sm:$0xff] %v6912
        %6929 = vst [vmem:[#allocation3 + $0xec] sm:$0xf] %v6913
        %6930 = vrot.lane.b32.xlu0 %v6534, 127
        %v6931 = vpop.permute.xlu0 %6930
        %6932 = vrot.lane.b32.xlu0 %v6537, 127
        %v6933 = vpop.permute.xlu0 %6932
        %6934 = vrot.lane.b32.xlu0 %v6540, 127
        %v6935 = vpop.permute.xlu0 %6934
        %6936 = vrot.lane.b32.xlu0 %v6543, 127
        %v6937 = vpop.permute.xlu0 %6936
        %6938 = vrot.lane.b32.xlu0 %v6535, 127
        %v6939 = vpop.permute.xlu0 %6938
        %6940 = vrot.lane.b32.xlu0 %v6538, 127
        %v6941 = vpop.permute.xlu0 %6940
        %6942 = vrot.lane.b32.xlu0 %v6541, 127
        %v6943 = vpop.permute.xlu0 %6942
        %6944 = vrot.lane.b32.xlu0 %v6544, 127
        %v6945 = vpop.permute.xlu0 %6944
        %6946 = vrot.lane.b32.xlu0 %v6536, 127
        %v6947 = vpop.permute.xlu0 %6946
        %6948 = vrot.lane.b32.xlu0 %v6539, 127
        %v6949 = vpop.permute.xlu0 %6948
        %6950 = vrot.lane.b32.xlu0 %v6542, 127
        %v6951 = vpop.permute.xlu0 %6950
        %6952 = vrot.lane.b32.xlu0 %v6545, 127
        %v6953 = vpop.permute.xlu0 %6952
        %v6954 = vsel %vm1438, %v6939, %v6947
        %v6955 = vsel %vm1438, %v6941, %v6949
        %v6956 = vsel %vm1438, %v6943, %v6951
        %v6957 = vsel %vm1438, %v6945, %v6953
        %v6958 = vsel %vm1438, %v6931, %v6939
        %v6959 = vsel %vm1438, %v6933, %v6941
        %v6960 = vsel %vm1438, %v6935, %v6943
        %v6961 = vsel %vm1438, %v6937, %v6945
        %v6962 = vsel %vm1438, %v6947, %v6931
        %v6963 = vsel %vm1438, %v6949, %v6933
        %v6964 = vsel %vm1438, %v6951, %v6935
        %v6965 = vsel %vm1438, %v6953, %v6937
        %v6966 = vpack.c.bf16 %v6959, %v6958
        %v6967 = vpack.c.bf16 %v6955, %v6954
        %v6968 = vpack.c.bf16 %v6963, %v6962
        %v6969 = vpack.c.bf16 %v6961, %v6960
        %v6970 = vpack.c.bf16 %v6957, %v6956
        %v6971 = vpack.c.bf16 %v6965, %v6964
        %v6978 = vunpack.c.l.b16 %v6966
        %v6979 = vunpack.c.l.b16 %v6967
        %v6980 = vunpack.c.l.b16 %v6968
        %v6981 = vunpack.c.h.b16 %v6966
        %v6982 = vunpack.c.h.b16 %v6967
        %v6983 = vunpack.c.h.b16 %v6968
        %v6984 = vunpack.c.l.b16 %v6969
        %v6985 = vunpack.c.l.b16 %v6970
        %v6986 = vunpack.c.l.b16 %v6971
        %v6987 = vunpack.c.h.b16 %v6969
        %v6988 = vunpack.c.h.b16 %v6970
        %v6989 = vunpack.c.h.b16 %v6971
        %v6990 = vpack.c.b16 %v6979, %v6978
        %v6991 = vpack.c.b16 %v6980, %v6980
        %v6992 = vpack.c.b16 %v6982, %v6981
        %v6993 = vpack.c.b16 %v6983, %v6983
        %v6994 = vpack.c.b16 %v6985, %v6984
        %v6995 = vpack.c.b16 %v6986, %v6986
        %v6996 = vpack.c.b16 %v6988, %v6987
        %v6997 = vpack.c.b16 %v6989, %v6989
        %7006 = vst [vmem:[#allocation3 + $0xf0] sm:$0xff] %v6990
        %7007 = vst [vmem:[#allocation3 + $0xf8] sm:$0xf] %v6991
        %7008 = vst [vmem:[#allocation3 + $0xfc] sm:$0xff] %v6992
        %7009 = vst [vmem:[#allocation3 + $0x104] sm:$0xf] %v6993
        %7010 = vst [vmem:[#allocation3 + $0x108] sm:$0xff] %v6994
        %7011 = vst [vmem:[#allocation3 + $0x110] sm:$0xf] %v6995
        %7012 = vst [vmem:[#allocation3 + $0x114] sm:$0xff] %v6996
        %7013 = vst [vmem:[#allocation3 + $0x11c] sm:$0xf] %v6997
        %7014 = vrot.lane.b32.xlu0 %v6534, 111
        %v7015 = vpop.permute.xlu0 %7014
        %7016 = vrot.lane.b32.xlu0 %v6537, 111
        %v7017 = vpop.permute.xlu0 %7016
        %7018 = vrot.lane.b32.xlu0 %v6540, 111
        %v7019 = vpop.permute.xlu0 %7018
        %7020 = vrot.lane.b32.xlu0 %v6543, 111
        %v7021 = vpop.permute.xlu0 %7020
        %7022 = vrot.lane.b32.xlu0 %v6535, 111
        %v7023 = vpop.permute.xlu0 %7022
        %7024 = vrot.lane.b32.xlu0 %v6538, 111
        %v7025 = vpop.permute.xlu0 %7024
        %7026 = vrot.lane.b32.xlu0 %v6541, 111
        %v7027 = vpop.permute.xlu0 %7026
        %7028 = vrot.lane.b32.xlu0 %v6544, 111
        %v7029 = vpop.permute.xlu0 %7028
        %7030 = vrot.lane.b32.xlu0 %v6536, 111
        %v7031 = vpop.permute.xlu0 %7030
        %7032 = vrot.lane.b32.xlu0 %v6539, 111
        %v7033 = vpop.permute.xlu0 %7032
        %7034 = vrot.lane.b32.xlu0 %v6542, 111
        %v7035 = vpop.permute.xlu0 %7034
        %7036 = vrot.lane.b32.xlu0 %v6545, 111
        %v7037 = vpop.permute.xlu0 %7036
        %v7038 = vsel %vm1607, %v7023, %v7031
        %v7039 = vsel %vm1607, %v7025, %v7033
        %v7040 = vsel %vm1607, %v7027, %v7035
        %v7041 = vsel %vm1607, %v7029, %v7037
        %v7042 = vsel %vm1607, %v7015, %v7023
        %v7043 = vsel %vm1607, %v7017, %v7025
        %v7044 = vsel %vm1607, %v7019, %v7027
        %v7045 = vsel %vm1607, %v7021, %v7029
        %v7046 = vsel %vm1607, %v7031, %v7015
        %v7047 = vsel %vm1607, %v7033, %v7017
        %v7048 = vsel %vm1607, %v7035, %v7019
        %v7049 = vsel %vm1607, %v7037, %v7021
        %v7050 = vpack.c.bf16 %v7043, %v7042
        %v7051 = vpack.c.bf16 %v7039, %v7038
        %v7052 = vpack.c.bf16 %v7047, %v7046
        %v7053 = vpack.c.bf16 %v7045, %v7044
        %v7054 = vpack.c.bf16 %v7041, %v7040
        %v7055 = vpack.c.bf16 %v7049, %v7048
        %v7062 = vunpack.c.l.b16 %v7050
        %v7063 = vunpack.c.l.b16 %v7051
        %v7064 = vunpack.c.l.b16 %v7052
        %v7065 = vunpack.c.h.b16 %v7050
        %v7066 = vunpack.c.h.b16 %v7051
        %v7067 = vunpack.c.h.b16 %v7052
        %v7068 = vunpack.c.l.b16 %v7053
        %v7069 = vunpack.c.l.b16 %v7054
        %v7070 = vunpack.c.l.b16 %v7055
        %v7071 = vunpack.c.h.b16 %v7053
        %v7072 = vunpack.c.h.b16 %v7054
        %v7073 = vunpack.c.h.b16 %v7055
        %v7074 = vpack.c.b16 %v7063, %v7062
        %v7075 = vpack.c.b16 %v7064, %v7064
        %v7076 = vpack.c.b16 %v7066, %v7065
        %v7077 = vpack.c.b16 %v7067, %v7067
        %v7078 = vpack.c.b16 %v7069, %v7068
        %v7079 = vpack.c.b16 %v7070, %v7070
        %v7080 = vpack.c.b16 %v7072, %v7071
        %v7081 = vpack.c.b16 %v7073, %v7073
        %7090 = vst [vmem:[#allocation3 + $0x120] sm:$0xff] %v7074
        %7091 = vst [vmem:[#allocation3 + $0x128] sm:$0xf] %v7075
        %7092 = vst [vmem:[#allocation3 + $0x12c] sm:$0xff] %v7076
        %7093 = vst [vmem:[#allocation3 + $0x134] sm:$0xf] %v7077
        %7094 = vst [vmem:[#allocation3 + $0x138] sm:$0xff] %v7078
        %7095 = vst [vmem:[#allocation3 + $0x140] sm:$0xf] %v7079
        %7096 = vst [vmem:[#allocation3 + $0x144] sm:$0xff] %v7080
        %7097 = vst [vmem:[#allocation3 + $0x14c] sm:$0xf] %v7081
        %7098 = vrot.lane.b32.xlu0 %v6534, 110
        %v7099 = vpop.permute.xlu0 %7098
        %7100 = vrot.lane.b32.xlu0 %v6537, 110
        %v7101 = vpop.permute.xlu0 %7100
        %7102 = vrot.lane.b32.xlu0 %v6540, 110
        %v7103 = vpop.permute.xlu0 %7102
        %7104 = vrot.lane.b32.xlu0 %v6543, 110
        %v7105 = vpop.permute.xlu0 %7104
        %7106 = vrot.lane.b32.xlu0 %v6535, 110
        %v7107 = vpop.permute.xlu0 %7106
        %7108 = vrot.lane.b32.xlu0 %v6538, 110
        %v7109 = vpop.permute.xlu0 %7108
        %7110 = vrot.lane.b32.xlu0 %v6541, 110
        %v7111 = vpop.permute.xlu0 %7110
        %7112 = vrot.lane.b32.xlu0 %v6544, 110
        %v7113 = vpop.permute.xlu0 %7112
        %7114 = vrot.lane.b32.xlu0 %v6536, 110
        %v7115 = vpop.permute.xlu0 %7114
        %7116 = vrot.lane.b32.xlu0 %v6539, 110
        %v7117 = vpop.permute.xlu0 %7116
        %7118 = vrot.lane.b32.xlu0 %v6542, 110
        %v7119 = vpop.permute.xlu0 %7118
        %7120 = vrot.lane.b32.xlu0 %v6545, 110
        %v7121 = vpop.permute.xlu0 %7120
        %v7122 = vsel %vm1776, %v7107, %v7115
        %v7123 = vsel %vm1776, %v7109, %v7117
        %v7124 = vsel %vm1776, %v7111, %v7119
        %v7125 = vsel %vm1776, %v7113, %v7121
        %v7126 = vsel %vm1776, %v7099, %v7107
        %v7127 = vsel %vm1776, %v7101, %v7109
        %v7128 = vsel %vm1776, %v7103, %v7111
        %v7129 = vsel %vm1776, %v7105, %v7113
        %v7130 = vsel %vm1776, %v7115, %v7099
        %v7131 = vsel %vm1776, %v7117, %v7101
        %v7132 = vsel %vm1776, %v7119, %v7103
        %v7133 = vsel %vm1776, %v7121, %v7105
        %v7134 = vpack.c.bf16 %v7127, %v7126
        %v7135 = vpack.c.bf16 %v7123, %v7122
        %v7136 = vpack.c.bf16 %v7131, %v7130
        %v7137 = vpack.c.bf16 %v7129, %v7128
        %v7138 = vpack.c.bf16 %v7125, %v7124
        %v7139 = vpack.c.bf16 %v7133, %v7132
        %v7146 = vunpack.c.l.b16 %v7134
        %v7147 = vunpack.c.l.b16 %v7135
        %v7148 = vunpack.c.l.b16 %v7136
        %v7149 = vunpack.c.h.b16 %v7134
        %v7150 = vunpack.c.h.b16 %v7135
        %v7151 = vunpack.c.h.b16 %v7136
        %v7152 = vunpack.c.l.b16 %v7137
        %v7153 = vunpack.c.l.b16 %v7138
        %v7154 = vunpack.c.l.b16 %v7139
        %v7155 = vunpack.c.h.b16 %v7137
        %v7156 = vunpack.c.h.b16 %v7138
        %v7157 = vunpack.c.h.b16 %v7139
        %v7158 = vpack.c.b16 %v7147, %v7146
        %v7159 = vpack.c.b16 %v7148, %v7148
        %v7160 = vpack.c.b16 %v7150, %v7149
        %v7161 = vpack.c.b16 %v7151, %v7151
        %v7162 = vpack.c.b16 %v7153, %v7152
        %v7163 = vpack.c.b16 %v7154, %v7154
        %v7164 = vpack.c.b16 %v7156, %v7155
        %v7165 = vpack.c.b16 %v7157, %v7157
        %7174 = vst [vmem:[#allocation3 + $0x150] sm:$0xff] %v7158
        %7175 = vst [vmem:[#allocation3 + $0x158] sm:$0xf] %v7159
        %7176 = vst [vmem:[#allocation3 + $0x15c] sm:$0xff] %v7160
        %7177 = vst [vmem:[#allocation3 + $0x164] sm:$0xf] %v7161
        %7178 = vst [vmem:[#allocation3 + $0x168] sm:$0xff] %v7162
        %7179 = vst [vmem:[#allocation3 + $0x170] sm:$0xf] %v7163
        %7180 = vst [vmem:[#allocation3 + $0x174] sm:$0xff] %v7164
        %7181 = vst [vmem:[#allocation3 + $0x17c] sm:$0xf] %v7165
        %7182 = vrot.lane.b32.xlu0 %v6534, 109
        %v7183 = vpop.permute.xlu0 %7182
        %7184 = vrot.lane.b32.xlu0 %v6537, 109
        %v7185 = vpop.permute.xlu0 %7184
        %7186 = vrot.lane.b32.xlu0 %v6540, 109
        %v7187 = vpop.permute.xlu0 %7186
        %7188 = vrot.lane.b32.xlu0 %v6543, 109
        %v7189 = vpop.permute.xlu0 %7188
        %7190 = vrot.lane.b32.xlu0 %v6535, 109
        %v7191 = vpop.permute.xlu0 %7190
        %7192 = vrot.lane.b32.xlu0 %v6538, 109
        %v7193 = vpop.permute.xlu0 %7192
        %7194 = vrot.lane.b32.xlu0 %v6541, 109
        %v7195 = vpop.permute.xlu0 %7194
        %7196 = vrot.lane.b32.xlu0 %v6544, 109
        %v7197 = vpop.permute.xlu0 %7196
        %7198 = vrot.lane.b32.xlu0 %v6536, 109
        %v7199 = vpop.permute.xlu0 %7198
        %7200 = vrot.lane.b32.xlu0 %v6539, 109
        %v7201 = vpop.permute.xlu0 %7200
        %7202 = vrot.lane.b32.xlu0 %v6542, 109
        %v7203 = vpop.permute.xlu0 %7202
        %7204 = vrot.lane.b32.xlu0 %v6545, 109
        %v7205 = vpop.permute.xlu0 %7204
        %v7206 = vsel %vm1945, %v7191, %v7199
        %v7207 = vsel %vm1945, %v7193, %v7201
        %v7208 = vsel %vm1945, %v7195, %v7203
        %v7209 = vsel %vm1945, %v7197, %v7205
        %v7210 = vsel %vm1945, %v7183, %v7191
        %v7211 = vsel %vm1945, %v7185, %v7193
        %v7212 = vsel %vm1945, %v7187, %v7195
        %v7213 = vsel %vm1945, %v7189, %v7197
        %v7214 = vsel %vm1945, %v7199, %v7183
        %v7215 = vsel %vm1945, %v7201, %v7185
        %v7216 = vsel %vm1945, %v7203, %v7187
        %v7217 = vsel %vm1945, %v7205, %v7189
        %v7218 = vpack.c.bf16 %v7211, %v7210
        %v7219 = vpack.c.bf16 %v7207, %v7206
        %v7220 = vpack.c.bf16 %v7215, %v7214
        %v7221 = vpack.c.bf16 %v7213, %v7212
        %v7222 = vpack.c.bf16 %v7209, %v7208
        %v7223 = vpack.c.bf16 %v7217, %v7216
        %v7230 = vunpack.c.l.b16 %v7218
        %v7231 = vunpack.c.l.b16 %v7219
        %v7232 = vunpack.c.l.b16 %v7220
        %v7233 = vunpack.c.h.b16 %v7218
        %v7234 = vunpack.c.h.b16 %v7219
        %v7235 = vunpack.c.h.b16 %v7220
        %v7236 = vunpack.c.l.b16 %v7221
        %v7237 = vunpack.c.l.b16 %v7222
        %v7238 = vunpack.c.l.b16 %v7223
        %v7239 = vunpack.c.h.b16 %v7221
        %v7240 = vunpack.c.h.b16 %v7222
        %v7241 = vunpack.c.h.b16 %v7223
        %v7242 = vpack.c.b16 %v7231, %v7230
        %v7243 = vpack.c.b16 %v7232, %v7232
        %v7244 = vpack.c.b16 %v7234, %v7233
        %v7245 = vpack.c.b16 %v7235, %v7235
        %v7246 = vpack.c.b16 %v7237, %v7236
        %v7247 = vpack.c.b16 %v7238, %v7238
        %v7248 = vpack.c.b16 %v7240, %v7239
        %v7249 = vpack.c.b16 %v7241, %v7241
        %7258 = vst [vmem:[#allocation3 + $0x180] sm:$0xff] %v7242
        %7259 = vst [vmem:[#allocation3 + $0x188] sm:$0xf] %v7243
        %7260 = vst [vmem:[#allocation3 + $0x18c] sm:$0xff] %v7244
        %7261 = vst [vmem:[#allocation3 + $0x194] sm:$0xf] %v7245
        %7262 = vst [vmem:[#allocation3 + $0x198] sm:$0xff] %v7246
        %7263 = vst [vmem:[#allocation3 + $0x1a0] sm:$0xf] %v7247
        %7264 = vst [vmem:[#allocation3 + $0x1a4] sm:$0xff] %v7248
        %7265 = vst [vmem:[#allocation3 + $0x1ac] sm:$0xf] %v7249
        %v7266 = vld [vmem:[#allocation9] sm:$0xff]
        %v7267 = vld [vmem:[#allocation9 + $0x8] sm:$0xf]
        %v7268 = vld [vmem:[#allocation9 + $0xc] sm:$0xff]
        %v7269 = vld [vmem:[#allocation9 + $0x14] sm:$0xf]
        %v7270 = vld [vmem:[#allocation9 + $0x18] sm:$0xff]
        %v7271 = vld [vmem:[#allocation9 + $0x20] sm:$0xf]
        %v7272 = vld [vmem:[#allocation9 + $0x24] sm:$0xff]
        %v7273 = vld [vmem:[#allocation9 + $0x2c] sm:$0xf]
        %v7274 = vld [vmem:[#allocation9 + $0x30] sm:$0xff]
        %v7275 = vld [vmem:[#allocation9 + $0x38] sm:$0xf]
        %v7276 = vld [vmem:[#allocation9 + $0x3c] sm:$0xff]
        %v7277 = vld [vmem:[#allocation9 + $0x44] sm:$0xf]
        %v7278 = vld [vmem:[#allocation9 + $0x48] sm:$0xff]
        %v7279 = vld [vmem:[#allocation9 + $0x50] sm:$0xf]
        %v7280 = vld [vmem:[#allocation9 + $0x54] sm:$0xff]
        %v7281 = vld [vmem:[#allocation9 + $0x5c] sm:$0xf]
        %v7282 = vld [vmem:[#allocation3] sm:$0xff]
        %v7283 = vld [vmem:[#allocation3 + $0x8] sm:$0xf]
        %v7284 = vld [vmem:[#allocation3 + $0xc] sm:$0xff]
        %v7285 = vld [vmem:[#allocation3 + $0x14] sm:$0xf]
        %v7286 = vld [vmem:[#allocation3 + $0x18] sm:$0xff]
        %v7287 = vld [vmem:[#allocation3 + $0x20] sm:$0xf]
        %v7288 = vld [vmem:[#allocation3 + $0x24] sm:$0xff]
        %v7289 = vld [vmem:[#allocation3 + $0x2c] sm:$0xf]
        %v7290 = vld [vmem:[#allocation3 + $0x30] sm:$0xff]
        %v7291 = vld [vmem:[#allocation3 + $0x38] sm:$0xf]
        %v7292 = vld [vmem:[#allocation3 + $0x3c] sm:$0xff]
        %v7293 = vld [vmem:[#allocation3 + $0x44] sm:$0xf]
        %v7294 = vld [vmem:[#allocation3 + $0x48] sm:$0xff]
        %v7295 = vld [vmem:[#allocation3 + $0x50] sm:$0xf]
        %v7296 = vld [vmem:[#allocation3 + $0x54] sm:$0xff]
        %v7297 = vld [vmem:[#allocation3 + $0x5c] sm:$0xf]
        %v7298 = vld [vmem:[#allocation3 + $0x60] sm:$0xff]
        %v7299 = vld [vmem:[#allocation3 + $0x68] sm:$0xf]
        %v7300 = vld [vmem:[#allocation3 + $0x6c] sm:$0xff]
        %v7301 = vld [vmem:[#allocation3 + $0x74] sm:$0xf]
        %v7302 = vld [vmem:[#allocation3 + $0x78] sm:$0xff]
        %v7303 = vld [vmem:[#allocation3 + $0x80] sm:$0xf]
        %v7304 = vld [vmem:[#allocation3 + $0x84] sm:$0xff]
        %v7305 = vld [vmem:[#allocation3 + $0x8c] sm:$0xf]
        %v7306 = vld [vmem:[#allocation3 + $0x90] sm:$0xff]
        %v7307 = vld [vmem:[#allocation3 + $0x98] sm:$0xf]
        %v7308 = vld [vmem:[#allocation3 + $0x9c] sm:$0xff]
        %v7309 = vld [vmem:[#allocation3 + $0xa4] sm:$0xf]
        %v7310 = vld [vmem:[#allocation3 + $0xa8] sm:$0xff]
        %v7311 = vld [vmem:[#allocation3 + $0xb0] sm:$0xf]
        %v7312 = vld [vmem:[#allocation3 + $0xb4] sm:$0xff]
        %v7313 = vld [vmem:[#allocation3 + $0xbc] sm:$0xf]
        %v7314 = vld [vmem:[#allocation3 + $0xc0] sm:$0xff]
        %v7315 = vld [vmem:[#allocation3 + $0xc8] sm:$0xf]
        %v7316 = vld [vmem:[#allocation3 + $0xcc] sm:$0xff]
        %v7317 = vld [vmem:[#allocation3 + $0xd4] sm:$0xf]
        %v7318 = vld [vmem:[#allocation3 + $0xd8] sm:$0xff]
        %v7319 = vld [vmem:[#allocation3 + $0xe0] sm:$0xf]
        %v7320 = vld [vmem:[#allocation3 + $0xe4] sm:$0xff]
        %v7321 = vld [vmem:[#allocation3 + $0xec] sm:$0xf]
        %v7322 = vld [vmem:[#allocation3 + $0xf0] sm:$0xff]
        %v7323 = vld [vmem:[#allocation3 + $0xf8] sm:$0xf]
        %v7324 = vld [vmem:[#allocation3 + $0xfc] sm:$0xff]
        %v7325 = vld [vmem:[#allocation3 + $0x104] sm:$0xf]
        %v7326 = vld [vmem:[#allocation3 + $0x108] sm:$0xff]
        %v7327 = vld [vmem:[#allocation3 + $0x110] sm:$0xf]
        %v7328 = vld [vmem:[#allocation3 + $0x114] sm:$0xff]
        %v7329 = vld [vmem:[#allocation3 + $0x11c] sm:$0xf]
        %v7330 = vld [vmem:[#allocation3 + $0x120] sm:$0xff]
        %v7331 = vld [vmem:[#allocation3 + $0x128] sm:$0xf]
        %v7332 = vld [vmem:[#allocation3 + $0x12c] sm:$0xff]
        %v7333 = vld [vmem:[#allocation3 + $0x134] sm:$0xf]
        %v7334 = vld [vmem:[#allocation3 + $0x138] sm:$0xff]
        %v7335 = vld [vmem:[#allocation3 + $0x140] sm:$0xf]
        %v7336 = vld [vmem:[#allocation3 + $0x144] sm:$0xff]
        %v7337 = vld [vmem:[#allocation3 + $0x14c] sm:$0xf]
        %v7338 = vld [vmem:[#allocation3 + $0x150] sm:$0xff]
        %v7339 = vld [vmem:[#allocation3 + $0x158] sm:$0xf]
        %v7340 = vld [vmem:[#allocation3 + $0x15c] sm:$0xff]
        %v7341 = vld [vmem:[#allocation3 + $0x164] sm:$0xf]
        %v7342 = vld [vmem:[#allocation3 + $0x168] sm:$0xff]
        %v7343 = vld [vmem:[#allocation3 + $0x170] sm:$0xf]
        %v7344 = vld [vmem:[#allocation3 + $0x174] sm:$0xff]
        %v7345 = vld [vmem:[#allocation3 + $0x17c] sm:$0xf]
        %v7346 = vld [vmem:[#allocation3 + $0x180] sm:$0xff]
        %v7347 = vld [vmem:[#allocation3 + $0x188] sm:$0xf]
        %v7348 = vld [vmem:[#allocation3 + $0x18c] sm:$0xff]
        %v7349 = vld [vmem:[#allocation3 + $0x194] sm:$0xf]
        %v7350 = vld [vmem:[#allocation3 + $0x198] sm:$0xff]
        %v7351 = vld [vmem:[#allocation3 + $0x1a0] sm:$0xf]
        %v7352 = vld [vmem:[#allocation3 + $0x1a4] sm:$0xff]
        %v7353 = vld [vmem:[#allocation3 + $0x1ac] sm:$0xf]
        %v7354 = vld [vmem:[%s9] sm:$0xff]
        %v7355 = vld [vmem:[%s9 + $0x8] sm:$0xff]
        %v7356 = vld [vmem:[%s9 + $0x10] sm:$0xff]
        %v7357 = vld [vmem:[%s9 + $0x18] sm:$0xff]
        %v7358 = vld [vmem:[%s9 + $0x20] sm:$0xff]
        %v7359 = vld [vmem:[%s9 + $0x28] sm:$0xff]
        %v7360 = vld [vmem:[%s9 + $0x30] sm:$0xff]
        %v7361 = vld [vmem:[%s9 + $0x38] sm:$0xff]
        %7363 = vset.pattern.permute.xlu0 0
        %7364 = vperm.xlu0 %7363, %v7354
        %v7365 = vpop.permute.xlu0 %7364
        %7368 = vset.pattern.permute.xlu0 0
        %7369 = vperm.xlu0 %7368, %v7355
        %v7370 = vpop.permute.xlu0 %7369
        %7373 = vset.pattern.permute.xlu0 0
        %7374 = vperm.xlu0 %7373, %v7356
        %v7375 = vpop.permute.xlu0 %7374
        %7378 = vset.pattern.permute.xlu0 0
        %7379 = vperm.xlu0 %7378, %v7357
        %v7380 = vpop.permute.xlu0 %7379
        %7383 = vset.pattern.permute.xlu0 0
        %7384 = vperm.xlu0 %7383, %v7358
        %v7385 = vpop.permute.xlu0 %7384
        %7388 = vset.pattern.permute.xlu0 0
        %7389 = vperm.xlu0 %7388, %v7359
        %v7390 = vpop.permute.xlu0 %7389
        %7393 = vset.pattern.permute.xlu0 0
        %7394 = vperm.xlu0 %7393, %v7360
        %v7395 = vpop.permute.xlu0 %7394
        %7398 = vset.pattern.permute.xlu0 0
        %7399 = vperm.xlu0 %7398, %v7361
        %v7400 = vpop.permute.xlu0 %7399
        %v7418 = vunpack.c.l.b16 %v7266
        %v7419 = vunpack.c.h.b16 %v7266
        %v7420 = vunpack.c.l.b16 %v7267
        %v7421 = vunpack.c.l.b16 %v7268
        %v7422 = vunpack.c.h.b16 %v7268
        %v7423 = vunpack.c.l.b16 %v7269
        %v7424 = vunpack.c.l.b16 %v7270
        %v7425 = vunpack.c.h.b16 %v7270
        %v7426 = vunpack.c.l.b16 %v7271
        %v7427 = vunpack.c.l.b16 %v7272
        %v7428 = vunpack.c.h.b16 %v7272
        %v7429 = vunpack.c.l.b16 %v7273
        %v7430 = vunpack.c.l.b16 %v7274
        %v7431 = vunpack.c.h.b16 %v7274
        %v7432 = vunpack.c.l.b16 %v7275
        %v7433 = vunpack.c.l.b16 %v7276
        %v7434 = vunpack.c.h.b16 %v7276
        %v7435 = vunpack.c.l.b16 %v7277
        %v7436 = vunpack.c.l.b16 %v7278
        %v7437 = vunpack.c.h.b16 %v7278
        %v7438 = vunpack.c.l.b16 %v7279
        %v7439 = vunpack.c.l.b16 %v7280
        %v7440 = vunpack.c.h.b16 %v7280
        %v7441 = vunpack.c.l.b16 %v7281
        %v7442 = vpack.c.b16 %v7421, %v7418
        %v7443 = vpack.c.b16 %v7422, %v7419
        %v7444 = vpack.c.b16 %v7423, %v7420
        %v7445 = vpack.c.b16 %v7427, %v7424
        %v7446 = vpack.c.b16 %v7428, %v7425
        %v7447 = vpack.c.b16 %v7429, %v7426
        %v7448 = vpack.c.b16 %v7433, %v7430
        %v7449 = vpack.c.b16 %v7434, %v7431
        %v7450 = vpack.c.b16 %v7435, %v7432
        %v7451 = vpack.c.b16 %v7439, %v7436
        %v7452 = vpack.c.b16 %v7440, %v7437
        %v7453 = vpack.c.b16 %v7441, %v7438
        %v7534 = vunpack.c.l.b16 %v7282
        %v7535 = vunpack.c.h.b16 %v7282
        %v7536 = vunpack.c.l.b16 %v7283
        %v7537 = vunpack.c.l.b16 %v7284
        %v7538 = vunpack.c.h.b16 %v7284
        %v7539 = vunpack.c.l.b16 %v7285
        %v7540 = vunpack.c.l.b16 %v7286
        %v7541 = vunpack.c.h.b16 %v7286
        %v7542 = vunpack.c.l.b16 %v7287
        %v7543 = vunpack.c.l.b16 %v7288
        %v7544 = vunpack.c.h.b16 %v7288
        %v7545 = vunpack.c.l.b16 %v7289
        %v7546 = vunpack.c.l.b16 %v7290
        %v7547 = vunpack.c.h.b16 %v7290
        %v7548 = vunpack.c.l.b16 %v7291
        %v7549 = vunpack.c.l.b16 %v7292
        %v7550 = vunpack.c.h.b16 %v7292
        %v7551 = vunpack.c.l.b16 %v7293
        %v7552 = vunpack.c.l.b16 %v7294
        %v7553 = vunpack.c.h.b16 %v7294
        %v7554 = vunpack.c.l.b16 %v7295
        %v7555 = vunpack.c.l.b16 %v7296
        %v7556 = vunpack.c.h.b16 %v7296
        %v7557 = vunpack.c.l.b16 %v7297
        %v7558 = vunpack.c.l.b16 %v7298
        %v7559 = vunpack.c.h.b16 %v7298
        %v7560 = vunpack.c.l.b16 %v7299
        %v7561 = vunpack.c.l.b16 %v7300
        %v7562 = vunpack.c.h.b16 %v7300
        %v7563 = vunpack.c.l.b16 %v7301
        %v7564 = vunpack.c.l.b16 %v7302
        %v7565 = vunpack.c.h.b16 %v7302
        %v7566 = vunpack.c.l.b16 %v7303
        %v7567 = vunpack.c.l.b16 %v7304
        %v7568 = vunpack.c.h.b16 %v7304
        %v7569 = vunpack.c.l.b16 %v7305
        %v7570 = vunpack.c.l.b16 %v7306
        %v7571 = vunpack.c.h.b16 %v7306
        %v7572 = vunpack.c.l.b16 %v7307
        %v7573 = vunpack.c.l.b16 %v7308
        %v7574 = vunpack.c.h.b16 %v7308
        %v7575 = vunpack.c.l.b16 %v7309
        %v7576 = vunpack.c.l.b16 %v7310
        %v7577 = vunpack.c.h.b16 %v7310
        %v7578 = vunpack.c.l.b16 %v7311
        %v7579 = vunpack.c.l.b16 %v7312
        %v7580 = vunpack.c.h.b16 %v7312
        %v7581 = vunpack.c.l.b16 %v7313
        %v7582 = vunpack.c.l.b16 %v7314
        %v7583 = vunpack.c.h.b16 %v7314
        %v7584 = vunpack.c.l.b16 %v7315
        %v7585 = vunpack.c.l.b16 %v7316
        %v7586 = vunpack.c.h.b16 %v7316
        %v7587 = vunpack.c.l.b16 %v7317
        %v7588 = vunpack.c.l.b16 %v7318
        %v7589 = vunpack.c.h.b16 %v7318
        %v7590 = vunpack.c.l.b16 %v7319
        %v7591 = vunpack.c.l.b16 %v7320
        %v7592 = vunpack.c.h.b16 %v7320
        %v7593 = vunpack.c.l.b16 %v7321
        %v7594 = vunpack.c.l.b16 %v7322
        %v7595 = vunpack.c.h.b16 %v7322
        %v7596 = vunpack.c.l.b16 %v7323
        %v7597 = vunpack.c.l.b16 %v7324
        %v7598 = vunpack.c.h.b16 %v7324
        %v7599 = vunpack.c.l.b16 %v7325
        %v7600 = vunpack.c.l.b16 %v7326
        %v7601 = vunpack.c.h.b16 %v7326
        %v7602 = vunpack.c.l.b16 %v7327
        %v7603 = vunpack.c.l.b16 %v7328
        %v7604 = vunpack.c.h.b16 %v7328
        %v7605 = vunpack.c.l.b16 %v7329
        %v7606 = vunpack.c.l.b16 %v7330
        %v7607 = vunpack.c.h.b16 %v7330
        %v7608 = vunpack.c.l.b16 %v7331
        %v7609 = vunpack.c.l.b16 %v7332
        %v7610 = vunpack.c.h.b16 %v7332
        %v7611 = vunpack.c.l.b16 %v7333
        %v7612 = vunpack.c.l.b16 %v7334
        %v7613 = vunpack.c.h.b16 %v7334
        %v7614 = vunpack.c.l.b16 %v7335
        %v7615 = vunpack.c.l.b16 %v7336
        %v7616 = vunpack.c.h.b16 %v7336
        %v7617 = vunpack.c.l.b16 %v7337
        %v7618 = vunpack.c.l.b16 %v7338
        %v7619 = vunpack.c.h.b16 %v7338
        %v7620 = vunpack.c.l.b16 %v7339
        %v7621 = vunpack.c.l.b16 %v7340
        %v7622 = vunpack.c.h.b16 %v7340
        %v7623 = vunpack.c.l.b16 %v7341
        %v7624 = vunpack.c.l.b16 %v7342
        %v7625 = vunpack.c.h.b16 %v7342
        %v7626 = vunpack.c.l.b16 %v7343
        %v7627 = vunpack.c.l.b16 %v7344
        %v7628 = vunpack.c.h.b16 %v7344
        %v7629 = vunpack.c.l.b16 %v7345
        %v7630 = vunpack.c.l.b16 %v7346
        %v7631 = vunpack.c.h.b16 %v7346
        %v7632 = vunpack.c.l.b16 %v7347
        %v7633 = vunpack.c.l.b16 %v7348
        %v7634 = vunpack.c.h.b16 %v7348
        %v7635 = vunpack.c.l.b16 %v7349
        %v7636 = vunpack.c.l.b16 %v7350
        %v7637 = vunpack.c.h.b16 %v7350
        %v7638 = vunpack.c.l.b16 %v7351
        %v7639 = vunpack.c.l.b16 %v7352
        %v7640 = vunpack.c.h.b16 %v7352
        %v7641 = vunpack.c.l.b16 %v7353
        %v7642 = vpack.c.b16 %v7537, %v7534
        %v7643 = vpack.c.b16 %v7538, %v7535
        %v7644 = vpack.c.b16 %v7539, %v7536
        %v7645 = vpack.c.b16 %v7543, %v7540
        %v7646 = vpack.c.b16 %v7544, %v7541
        %v7647 = vpack.c.b16 %v7545, %v7542
        %v7648 = vpack.c.b16 %v7549, %v7546
        %v7649 = vpack.c.b16 %v7550, %v7547
        %v7650 = vpack.c.b16 %v7551, %v7548
        %v7651 = vpack.c.b16 %v7555, %v7552
        %v7652 = vpack.c.b16 %v7556, %v7553
        %v7653 = vpack.c.b16 %v7557, %v7554
        %v7654 = vpack.c.b16 %v7561, %v7558
        %v7655 = vpack.c.b16 %v7562, %v7559
        %v7656 = vpack.c.b16 %v7563, %v7560
        %v7657 = vpack.c.b16 %v7567, %v7564
        %v7658 = vpack.c.b16 %v7568, %v7565
        %v7659 = vpack.c.b16 %v7569, %v7566
        %v7660 = vpack.c.b16 %v7573, %v7570
        %v7661 = vpack.c.b16 %v7574, %v7571
        %v7662 = vpack.c.b16 %v7575, %v7572
        %v7663 = vpack.c.b16 %v7579, %v7576
        %v7664 = vpack.c.b16 %v7580, %v7577
        %v7665 = vpack.c.b16 %v7581, %v7578
        %v7666 = vpack.c.b16 %v7585, %v7582
        %v7667 = vpack.c.b16 %v7586, %v7583
        %v7668 = vpack.c.b16 %v7587, %v7584
        %v7669 = vpack.c.b16 %v7591, %v7588
        %v7670 = vpack.c.b16 %v7592, %v7589
        %v7671 = vpack.c.b16 %v7593, %v7590
        %v7672 = vpack.c.b16 %v7597, %v7594
        %v7673 = vpack.c.b16 %v7598, %v7595
        %v7674 = vpack.c.b16 %v7599, %v7596
        %v7675 = vpack.c.b16 %v7603, %v7600
        %v7676 = vpack.c.b16 %v7604, %v7601
        %v7677 = vpack.c.b16 %v7605, %v7602
        %v7678 = vpack.c.b16 %v7609, %v7606
        %v7679 = vpack.c.b16 %v7610, %v7607
        %v7680 = vpack.c.b16 %v7611, %v7608
        %v7681 = vpack.c.b16 %v7615, %v7612
        %v7682 = vpack.c.b16 %v7616, %v7613
        %v7683 = vpack.c.b16 %v7617, %v7614
        %v7684 = vpack.c.b16 %v7621, %v7618
        %v7685 = vpack.c.b16 %v7622, %v7619
        %v7686 = vpack.c.b16 %v7623, %v7620
        %v7687 = vpack.c.b16 %v7627, %v7624
        %v7688 = vpack.c.b16 %v7628, %v7625
        %v7689 = vpack.c.b16 %v7629, %v7626
        %v7690 = vpack.c.b16 %v7633, %v7630
        %v7691 = vpack.c.b16 %v7634, %v7631
        %v7692 = vpack.c.b16 %v7635, %v7632
        %v7693 = vpack.c.b16 %v7639, %v7636
        %v7694 = vpack.c.b16 %v7640, %v7637
        %v7695 = vpack.c.b16 %v7641, %v7638
        %v7751 = vsel %vm4725, %v7444, 0
        %v7754 = vsel %vm4725, %v7447, 0
        %v7757 = vsel %vm4725, %v7450, 0
        %v7760 = vsel %vm4725, %v7453, 0
        %7762 = vmatprep.subr.bf16.mxu0 %v7664
        %7763 = vmatpush1.bf16.msra.mxu0 %v7663
        %7764 = vmatprep.subr.bf16.mxu0 %v7661
        %7765 = vmatpush1.bf16.msra.mxu0 %v7660
        %7766 = vmatprep.subr.bf16.mxu0 %v7658
        %7767 = vmatpush1.bf16.msra.mxu0 %v7657
        %7768 = vmatprep.subr.bf16.mxu0 %v7655
        %7769 = vmatpush1.bf16.msra.mxu0 %v7654
        %7770 = vmatprep.subr.bf16.mxu0 %v7652
        %7771 = vmatpush1.bf16.msra.mxu0 %v7651
        %7772 = vmatprep.subr.bf16.mxu0 %v7649
        %7773 = vmatpush1.bf16.msra.mxu0 %v7648
        %7774 = vmatprep.subr.bf16.mxu0 %v7646
        %7775 = vmatpush1.bf16.msra.mxu0 %v7645
        %7776 = vmatprep.subr.bf16.mxu0 %v7643
        %7777 = vmatpush1.bf16.msra.mxu0 %v7642
        %7778 = vmatprep.subr.bf16.mxu0 %v7688
        %7779 = vmatpush2.bf16.msra.mxu0 %v7687
        %7780 = vmatprep.subr.bf16.mxu0 %v7685
        %7781 = vmatpush2.bf16.msra.mxu0 %v7684
        %7782 = vmatprep.subr.bf16.mxu0 %v7682
        %7783 = vmatpush2.bf16.msra.mxu0 %v7681
        %7784 = vmatprep.subr.bf16.mxu0 %v7679
        %7785 = vmatpush2.bf16.msra.mxu0 %v7678
        %7786 = vmatprep.subr.bf16.mxu0 %v7676
        %7787 = vmatpush2.bf16.msra.mxu0 %v7675
        %7788 = vmatprep.subr.bf16.mxu0 %v7673
        %7789 = vmatpush2.bf16.msra.mxu0 %v7672
        %7790 = vmatprep.subr.bf16.mxu0 %v7670
        %7791 = vmatpush2.bf16.msra.mxu0 %v7669
        %7792 = vmatprep.subr.bf16.mxu0 %v7667
        %7793 = vmatpush2.bf16.msra.mxu0 %v7666
        %7794 = vmatprep.mubr.bf16.mxu0 %v7443
        %7795 = vmatmul.mubr.bf16.gmra.mxu0 %v7442
        %v7796 = vpop.f32.mrf.mxu0
        %v7797 = vadd.f32 %v7365, %v7796
        %v7798 = vpop.f32.mrf.mxu0
        %v7799 = vadd.f32 %v7365, %v7798
        %v7800 = vpop.f32.mrf.mxu0
        %v7801 = vadd.f32 %v7370, %v7800
        %v7802 = vpop.f32.mrf.mxu0
        %v7803 = vadd.f32 %v7370, %v7802
        %7804 = vmatprep.mubr.bf16.mxu0 %v7446
        %7805 = vmatmul.mubr.bf16.gmra.mxu0 %v7445
        %v7806 = vpop.f32.mrf.mxu0
        %v7807 = vadd.f32 %v7375, %v7806
        %v7808 = vpop.f32.mrf.mxu0
        %v7809 = vadd.f32 %v7375, %v7808
        %v7810 = vpop.f32.mrf.mxu0
        %v7811 = vadd.f32 %v7380, %v7810
        %v7812 = vpop.f32.mrf.mxu0
        %v7813 = vadd.f32 %v7380, %v7812
        %7814 = vmatprep.mubr.bf16.mxu0 %v7449
        %7815 = vmatmul.mubr.bf16.gmra.mxu0 %v7448
        %v7816 = vpop.f32.mrf.mxu0
        %v7817 = vadd.f32 %v7385, %v7816
        %v7818 = vpop.f32.mrf.mxu0
        %v7819 = vadd.f32 %v7385, %v7818
        %v7820 = vpop.f32.mrf.mxu0
        %v7821 = vadd.f32 %v7390, %v7820
        %v7822 = vpop.f32.mrf.mxu0
        %v7823 = vadd.f32 %v7390, %v7822
        %7824 = vmatprep.mubr.bf16.mxu0 %v7452
        %7825 = vmatmul.mubr.bf16.gmra.mxu0 %v7451
        %v7826 = vpop.f32.mrf.mxu0
        %v7827 = vadd.f32 %v7395, %v7826
        %v7828 = vpop.f32.mrf.mxu0
        %v7829 = vadd.f32 %v7395, %v7828
        %v7830 = vpop.f32.mrf.mxu0
        %v7831 = vadd.f32 %v7400, %v7830
        %v7832 = vpop.f32.mrf.mxu0
        %v7833 = vadd.f32 %v7400, %v7832
        %7834 = vdwg.mxu0
        %7835 = vmatprep.subr.bf16.mxu0 0
        %7836 = vmatpush1.bf16.msra.mxu0 0
        %7837 = vmatprep.subr.bf16.mxu0 0
        %7838 = vmatpush1.bf16.msra.mxu0 0
        %7839 = vmatprep.subr.bf16.mxu0 0
        %7840 = vmatpush1.bf16.msra.mxu0 0
        %7841 = vmatprep.subr.bf16.mxu0 0
        %7842 = vmatpush1.bf16.msra.mxu0 0
        %7843 = vmatprep.subr.bf16.mxu0 0
        %7844 = vmatpush1.bf16.msra.mxu0 0
        %7845 = vmatprep.subr.bf16.mxu0 0
        %7846 = vmatpush1.bf16.msra.mxu0 0
        %7847 = vmatprep.subr.bf16.mxu0 %v7694
        %7848 = vmatpush1.bf16.msra.mxu0 %v7693
        %7849 = vmatprep.subr.bf16.mxu0 %v7691
        %7850 = vmatpush1.bf16.msra.mxu0 %v7690
        %7851 = vmatprep.subr.bf16.mxu0 0
        %7852 = vmatpush2.bf16.msra.mxu0 0
        %7853 = vmatprep.subr.bf16.mxu0 0
        %7854 = vmatpush2.bf16.msra.mxu0 0
        %7855 = vmatprep.subr.bf16.mxu0 0
        %7856 = vmatpush2.bf16.msra.mxu0 0
        %7857 = vmatprep.subr.bf16.mxu0 0
        %7858 = vmatpush2.bf16.msra.mxu0 0
        %7859 = vmatprep.subr.bf16.mxu0 0
        %7860 = vmatpush2.bf16.msra.mxu0 0
        %7861 = vmatprep.subr.bf16.mxu0 0
        %7862 = vmatpush2.bf16.msra.mxu0 0
        %7863 = vmatprep.subr.bf16.mxu0 0
        %7864 = vmatpush2.bf16.msra.mxu0 0
        %7865 = vmatprep.subr.bf16.mxu0 0
        %7866 = vmatpush2.bf16.msra.mxu0 0
        %7867 = vmatprep.mubr.bf16.mxu0 0
        %7868 = vmatmul.mubr.bf16.gmra.mxu0 %v7751
        %v7869 = vpop.f32.mrf.mxu0
        %v7870 = vadd.f32 %v7797, %v7869
        %v7871 = vpop.f32.mrf.mxu0
        %v7872 = vadd.f32 %v7799, %v7871
        %v7873 = vpop.f32.mrf.mxu0
        %v7874 = vadd.f32 %v7801, %v7873
        %v7875 = vpop.f32.mrf.mxu0
        %v7876 = vadd.f32 %v7803, %v7875
        %7877 = vmatprep.mubr.bf16.mxu0 0
        %7878 = vmatmul.mubr.bf16.gmra.mxu0 %v7754
        %v7879 = vpop.f32.mrf.mxu0
        %v7880 = vadd.f32 %v7807, %v7879
        %v7881 = vpop.f32.mrf.mxu0
        %v7882 = vadd.f32 %v7809, %v7881
        %v7883 = vpop.f32.mrf.mxu0
        %v7884 = vadd.f32 %v7811, %v7883
        %v7885 = vpop.f32.mrf.mxu0
        %v7886 = vadd.f32 %v7813, %v7885
        %7887 = vmatprep.mubr.bf16.mxu0 0
        %7888 = vmatmul.mubr.bf16.gmra.mxu0 %v7757
        %v7889 = vpop.f32.mrf.mxu0
        %v7890 = vadd.f32 %v7817, %v7889
        %v7891 = vpop.f32.mrf.mxu0
        %v7892 = vadd.f32 %v7819, %v7891
        %v7893 = vpop.f32.mrf.mxu0
        %v7894 = vadd.f32 %v7821, %v7893
        %v7895 = vpop.f32.mrf.mxu0
        %v7896 = vadd.f32 %v7823, %v7895
        %7897 = vmatprep.mubr.bf16.mxu0 0
        %7898 = vmatmul.mubr.bf16.gmra.mxu0 %v7760
        %v7899 = vpop.f32.mrf.mxu0
        %v7900 = vadd.f32 %v7827, %v7899
        %v7901 = vpop.f32.mrf.mxu0
        %v7902 = vadd.f32 %v7829, %v7901
        %v7903 = vpop.f32.mrf.mxu0
        %v7904 = vadd.f32 %v7831, %v7903
        %v7905 = vpop.f32.mrf.mxu0
        %v7906 = vadd.f32 %v7833, %v7905
        %7907 = vdwg.mxu0
        %7908 = vmatprep.subr.bf16.mxu0 0
        %7909 = vmatpush1.bf16.msra.mxu0 %v7665
        %7910 = vmatprep.subr.bf16.mxu0 0
        %7911 = vmatpush1.bf16.msra.mxu0 %v7662
        %7912 = vmatprep.subr.bf16.mxu0 0
        %7913 = vmatpush1.bf16.msra.mxu0 %v7659
        %7914 = vmatprep.subr.bf16.mxu0 0
        %7915 = vmatpush1.bf16.msra.mxu0 %v7656
        %7916 = vmatprep.subr.bf16.mxu0 0
        %7917 = vmatpush1.bf16.msra.mxu0 %v7653
        %7918 = vmatprep.subr.bf16.mxu0 0
        %7919 = vmatpush1.bf16.msra.mxu0 %v7650
        %7920 = vmatprep.subr.bf16.mxu0 0
        %7921 = vmatpush1.bf16.msra.mxu0 %v7647
        %7922 = vmatprep.subr.bf16.mxu0 0
        %7923 = vmatpush1.bf16.msra.mxu0 %v7644
        %7924 = vmatprep.subr.bf16.mxu0 0
        %7925 = vmatpush2.bf16.msra.mxu0 %v7689
        %7926 = vmatprep.subr.bf16.mxu0 0
        %7927 = vmatpush2.bf16.msra.mxu0 %v7686
        %7928 = vmatprep.subr.bf16.mxu0 0
        %7929 = vmatpush2.bf16.msra.mxu0 %v7683
        %7930 = vmatprep.subr.bf16.mxu0 0
        %7931 = vmatpush2.bf16.msra.mxu0 %v7680
        %7932 = vmatprep.subr.bf16.mxu0 0
        %7933 = vmatpush2.bf16.msra.mxu0 %v7677
        %7934 = vmatprep.subr.bf16.mxu0 0
        %7935 = vmatpush2.bf16.msra.mxu0 %v7674
        %7936 = vmatprep.subr.bf16.mxu0 0
        %7937 = vmatpush2.bf16.msra.mxu0 %v7671
        %7938 = vmatprep.subr.bf16.mxu0 0
        %7939 = vmatpush2.bf16.msra.mxu0 %v7668
        %7940 = vmatprep.mubr.bf16.mxu0 %v7443
        %7941 = vmatmul.mubr.bf16.gmra.mxu0 %v7442
        %v7942 = vpop.f32.mrf.mxu0
        %v7943 = vadd.f32 %v7365, %v7942
        %v7944 = vpop.f32.mrf.mxu0
        %v7945 = vpop.f32.mrf.mxu0
        %v7946 = vadd.f32 %v7370, %v7945
        %v7947 = vpop.f32.mrf.mxu0
        %7948 = vmatprep.mubr.bf16.mxu0 %v7446
        %7949 = vmatmul.mubr.bf16.gmra.mxu0 %v7445
        %v7950 = vpop.f32.mrf.mxu0
        %v7951 = vadd.f32 %v7375, %v7950
        %v7952 = vpop.f32.mrf.mxu0
        %v7953 = vpop.f32.mrf.mxu0
        %v7954 = vadd.f32 %v7380, %v7953
        %v7955 = vpop.f32.mrf.mxu0
        %7956 = vmatprep.mubr.bf16.mxu0 %v7449
        %7957 = vmatmul.mubr.bf16.gmra.mxu0 %v7448
        %v7958 = vpop.f32.mrf.mxu0
        %v7959 = vadd.f32 %v7385, %v7958
        %v7960 = vpop.f32.mrf.mxu0
        %v7961 = vpop.f32.mrf.mxu0
        %v7962 = vadd.f32 %v7390, %v7961
        %v7963 = vpop.f32.mrf.mxu0
        %7964 = vmatprep.mubr.bf16.mxu0 %v7452
        %7965 = vmatmul.mubr.bf16.gmra.mxu0 %v7451
        %v7966 = vpop.f32.mrf.mxu0
        %v7967 = vadd.f32 %v7395, %v7966
        %v7968 = vpop.f32.mrf.mxu0
        %v7969 = vpop.f32.mrf.mxu0
        %v7970 = vadd.f32 %v7400, %v7969
        %v7971 = vpop.f32.mrf.mxu0
        %7972 = vdwg.mxu0
        %7973 = vmatprep.subr.bf16.mxu0 0
        %7974 = vmatpush1.bf16.msra.mxu0 0
        %7975 = vmatprep.subr.bf16.mxu0 0
        %7976 = vmatpush1.bf16.msra.mxu0 0
        %7977 = vmatprep.subr.bf16.mxu0 0
        %7978 = vmatpush1.bf16.msra.mxu0 0
        %7979 = vmatprep.subr.bf16.mxu0 0
        %7980 = vmatpush1.bf16.msra.mxu0 0
        %7981 = vmatprep.subr.bf16.mxu0 0
        %7982 = vmatpush1.bf16.msra.mxu0 0
        %7983 = vmatprep.subr.bf16.mxu0 0
        %7984 = vmatpush1.bf16.msra.mxu0 0
        %7985 = vmatprep.subr.bf16.mxu0 0
        %7986 = vmatpush1.bf16.msra.mxu0 %v7695
        %7987 = vmatprep.subr.bf16.mxu0 0
        %7988 = vmatpush1.bf16.msra.mxu0 %v7692
        %7989 = vmatprep.subr.bf16.mxu0 0
        %7990 = vmatpush2.bf16.msra.mxu0 0
        %7991 = vmatprep.subr.bf16.mxu0 0
        %7992 = vmatpush2.bf16.msra.mxu0 0
        %7993 = vmatprep.subr.bf16.mxu0 0
        %7994 = vmatpush2.bf16.msra.mxu0 0
        %7995 = vmatprep.subr.bf16.mxu0 0
        %7996 = vmatpush2.bf16.msra.mxu0 0
        %7997 = vmatprep.subr.bf16.mxu0 0
        %7998 = vmatpush2.bf16.msra.mxu0 0
        %7999 = vmatprep.subr.bf16.mxu0 0
        %8000 = vmatpush2.bf16.msra.mxu0 0
        %8001 = vmatprep.subr.bf16.mxu0 0
        %8002 = vmatpush2.bf16.msra.mxu0 0
        %8003 = vmatprep.subr.bf16.mxu0 0
        %8004 = vmatpush2.bf16.msra.mxu0 0
        %8005 = vmatprep.mubr.bf16.mxu0 0
        %8006 = vmatmul.mubr.bf16.gmra.mxu0 %v7751
        %v8007 = vpop.f32.mrf.mxu0
        %v8008 = vadd.f32 %v7943, %v8007
        %v8009 = vpop.f32.mrf.mxu0
        %v8010 = vpop.f32.mrf.mxu0
        %v8011 = vadd.f32 %v7946, %v8010
        %v8012 = vpop.f32.mrf.mxu0
        %8013 = vmatprep.mubr.bf16.mxu0 0
        %8014 = vmatmul.mubr.bf16.gmra.mxu0 %v7754
        %v8015 = vpop.f32.mrf.mxu0
        %v8016 = vadd.f32 %v7951, %v8015
        %v8017 = vpop.f32.mrf.mxu0
        %v8018 = vpop.f32.mrf.mxu0
        %v8019 = vadd.f32 %v7954, %v8018
        %v8020 = vpop.f32.mrf.mxu0
        %8021 = vmatprep.mubr.bf16.mxu0 0
        %8022 = vmatmul.mubr.bf16.gmra.mxu0 %v7757
        %v8023 = vpop.f32.mrf.mxu0
        %v8024 = vadd.f32 %v7959, %v8023
        %v8025 = vpop.f32.mrf.mxu0
        %v8026 = vpop.f32.mrf.mxu0
        %v8027 = vadd.f32 %v7962, %v8026
        %v8028 = vpop.f32.mrf.mxu0
        %8029 = vmatprep.mubr.bf16.mxu0 0
        %8030 = vmatmul.mubr.bf16.gmra.mxu0 %v7760
        %v8031 = vpop.f32.mrf.mxu0
        %v8032 = vadd.f32 %v7967, %v8031
        %v8033 = vpop.f32.mrf.mxu0
        %v8034 = vpop.f32.mrf.mxu0
        %v8035 = vadd.f32 %v7970, %v8034
        %v8036 = vpop.f32.mrf.mxu0
        %8037 = vdwg.mxu0
        %v8038 = vxor.u32 %v7890, 2147483648
        %v8039 = vxor.u32 %v7892, 2147483648
        %v8040 = vxor.u32 %v8024, 2147483648
        %v8041 = vxor.u32 %v7894, 2147483648
        %v8042 = vxor.u32 %v7896, 2147483648
        %v8043 = vxor.u32 %v8027, 2147483648
        %v8044 = vxor.u32 %v7900, 2147483648
        %v8045 = vxor.u32 %v7902, 2147483648
        %v8046 = vxor.u32 %v8032, 2147483648
        %v8047 = vxor.u32 %v7904, 2147483648
        %v8048 = vxor.u32 %v7906, 2147483648
        %v8049 = vxor.u32 %v8035, 2147483648
        %v8050 = vmul.f32 %v8038, 1.442695
        %v8051 = vpow.pop %v8050
        %v8052 = vmul.f32 %v8039, 1.442695
        %v8053 = vpow.pop %v8052
        %v8054 = vmul.f32 %v8040, 1.442695
        %v8055 = vpow.pop %v8054
        %v8056 = vmul.f32 %v8041, 1.442695
        %v8057 = vpow.pop %v8056
        %v8058 = vmul.f32 %v8042, 1.442695
        %v8059 = vpow.pop %v8058
        %v8060 = vmul.f32 %v8043, 1.442695
        %v8061 = vpow.pop %v8060
        %v8062 = vmul.f32 %v8044, 1.442695
        %v8063 = vpow.pop %v8062
        %v8064 = vmul.f32 %v8045, 1.442695
        %v8065 = vpow.pop %v8064
        %v8066 = vmul.f32 %v8046, 1.442695
        %v8067 = vpow.pop %v8066
        %v8068 = vmul.f32 %v8047, 1.442695
        %v8069 = vpow.pop %v8068
        %v8070 = vmul.f32 %v8048, 1.442695
        %v8071 = vpow.pop %v8070
        %v8072 = vmul.f32 %v8049, 1.442695
        %v8073 = vpow.pop %v8072
        %v8074 = vadd.f32 %v8051, 1.0
        %v8075 = vadd.f32 %v8053, 1.0
        %v8076 = vadd.f32 %v8055, 1.0
        %v8077 = vadd.f32 %v8057, 1.0
        %v8078 = vadd.f32 %v8059, 1.0
        %v8079 = vadd.f32 %v8061, 1.0
        %v8080 = vadd.f32 %v8063, 1.0
        %v8081 = vadd.f32 %v8065, 1.0
        %v8082 = vadd.f32 %v8067, 1.0
        %v8083 = vadd.f32 %v8069, 1.0
        %v8084 = vadd.f32 %v8071, 1.0
        %v8085 = vadd.f32 %v8073, 1.0
        %v8086 = vrcp.pop %v8074
        %v8087 = vmul.f32 1.0, %v8086
        %v8088 = vrcp.pop %v8075
        %v8089 = vmul.f32 1.0, %v8088
        %v8090 = vrcp.pop %v8076
        %v8091 = vmul.f32 1.0, %v8090
        %v8092 = vrcp.pop %v8077
        %v8093 = vmul.f32 1.0, %v8092
        %v8094 = vrcp.pop %v8078
        %v8095 = vmul.f32 1.0, %v8094
        %v8096 = vrcp.pop %v8079
        %v8097 = vmul.f32 1.0, %v8096
        %v8098 = vrcp.pop %v8080
        %v8099 = vmul.f32 1.0, %v8098
        %v8100 = vrcp.pop %v8081
        %v8101 = vmul.f32 1.0, %v8100
        %v8102 = vrcp.pop %v8082
        %v8103 = vmul.f32 1.0, %v8102
        %v8104 = vrcp.pop %v8083
        %v8105 = vmul.f32 1.0, %v8104
        %v8106 = vrcp.pop %v8084
        %v8107 = vmul.f32 1.0, %v8106
        %v8108 = vrcp.pop %v8085
        %v8109 = vmul.f32 1.0, %v8108
        %v8110 = vmul.f32 %v7870, %v8087
        %v8111 = vmul.f32 %v7872, %v8089
        %v8112 = vmul.f32 %v8008, %v8091
        %v8113 = vmul.f32 %v7874, %v8093
        %v8114 = vmul.f32 %v7876, %v8095
        %v8115 = vmul.f32 %v8011, %v8097
        %v8116 = vmul.f32 %v7880, %v8099
        %v8117 = vmul.f32 %v7882, %v8101
        %v8118 = vmul.f32 %v8016, %v8103
        %v8119 = vmul.f32 %v7884, %v8105
        %v8120 = vmul.f32 %v7886, %v8107
        %v8121 = vmul.f32 %v8019, %v8109
        %v8122 = vmul.f32 %v8110, %v3473
        %v8123 = vmul.f32 %v8111, %v3477
        %v8124 = vmul.f32 %v8112, %v3481
        %v8125 = vmul.f32 %v8113, %v3473
        %v8126 = vmul.f32 %v8114, %v3477
        %v8127 = vmul.f32 %v8115, %v3481
        %v8128 = vmul.f32 %v8116, %v3473
        %v8129 = vmul.f32 %v8117, %v3477
        %v8130 = vmul.f32 %v8118, %v3481
        %v8131 = vmul.f32 %v8119, %v3473
        %v8132 = vmul.f32 %v8120, %v3477
        %v8133 = vmul.f32 %v8121, %v3481
        %8134 = vst [vmem:[#allocation2 + $0x60] sm:$0xff] %v8122
        %8135 = vst [vmem:[#allocation2 + $0x68] sm:$0xff] %v8123
        %8136 = vst [vmem:[#allocation2 + $0x70] sm:$0xff] %v8124
        %8137 = vst [vmem:[#allocation2 + $0x78] sm:$0xff] %v8125
        %8138 = vst [vmem:[#allocation2 + $0x80] sm:$0xff] %v8126
        %8139 = vst [vmem:[#allocation2 + $0x88] sm:$0xff] %v8127
        %8140 = vst [vmem:[#allocation2 + $0x90] sm:$0xff] %v8128
        %8141 = vst [vmem:[#allocation2 + $0x98] sm:$0xff] %v8129
        %8142 = vst [vmem:[#allocation2 + $0xa0] sm:$0xff] %v8130
        %8143 = vst [vmem:[#allocation2 + $0xa8] sm:$0xff] %v8131
        %8144 = vst [vmem:[#allocation2 + $0xb0] sm:$0xff] %v8132
        %8145 = vst [vmem:[#allocation2 + $0xb8] sm:$0xff] %v8133
        %v8146 = vld [vmem:[#allocation2 + $0x60] sm:$0xff]
        %v8147 = vld [vmem:[#allocation2 + $0x68] sm:$0xff]
        %v8148 = vld [vmem:[#allocation2 + $0x70] sm:$0xff]
        %v8149 = vld [vmem:[#allocation2 + $0x78] sm:$0xff]
        %v8150 = vld [vmem:[#allocation2 + $0x80] sm:$0xff]
        %v8151 = vld [vmem:[#allocation2 + $0x88] sm:$0xff]
        %v8152 = vld [vmem:[#allocation2 + $0x90] sm:$0xff]
        %v8153 = vld [vmem:[#allocation2 + $0x98] sm:$0xff]
        %v8154 = vld [vmem:[#allocation2 + $0xa0] sm:$0xff]
        %v8155 = vld [vmem:[#allocation2 + $0xa8] sm:$0xff]
        %v8156 = vld [vmem:[#allocation2 + $0xb0] sm:$0xff]
        %v8157 = vld [vmem:[#allocation2 + $0xb8] sm:$0xff]
        %8158 = vrot.lane.b32.xlu0 %v8146, 19
        %v8159 = vpop.permute.xlu0 %8158
        %8160 = vrot.lane.b32.xlu0 %v8149, 19
        %v8161 = vpop.permute.xlu0 %8160
        %8162 = vrot.lane.b32.xlu0 %v8152, 19
        %v8163 = vpop.permute.xlu0 %8162
        %8164 = vrot.lane.b32.xlu0 %v8155, 19
        %v8165 = vpop.permute.xlu0 %8164
        %8166 = vrot.lane.b32.xlu0 %v8147, 19
        %v8167 = vpop.permute.xlu0 %8166
        %8168 = vrot.lane.b32.xlu0 %v8150, 19
        %v8169 = vpop.permute.xlu0 %8168
        %8170 = vrot.lane.b32.xlu0 %v8153, 19
        %v8171 = vpop.permute.xlu0 %8170
        %8172 = vrot.lane.b32.xlu0 %v8156, 19
        %v8173 = vpop.permute.xlu0 %8172
        %8174 = vrot.lane.b32.xlu0 %v8148, 19
        %v8175 = vpop.permute.xlu0 %8174
        %8176 = vrot.lane.b32.xlu0 %v8151, 19
        %v8177 = vpop.permute.xlu0 %8176
        %8178 = vrot.lane.b32.xlu0 %v8154, 19
        %v8179 = vpop.permute.xlu0 %8178
        %8180 = vrot.lane.b32.xlu0 %v8157, 19
        %v8181 = vpop.permute.xlu0 %8180
        %v8182 = vsel %vm666, %v8167, %v8175
        %v8183 = vsel %vm666, %v8169, %v8177
        %v8184 = vsel %vm666, %v8171, %v8179
        %v8185 = vsel %vm666, %v8173, %v8181
        %v8186 = vsel %vm666, %v8159, %v8167
        %v8187 = vsel %vm666, %v8161, %v8169
        %v8188 = vsel %vm666, %v8163, %v8171
        %v8189 = vsel %vm666, %v8165, %v8173
        %v8190 = vsel %vm666, %v8175, %v8159
        %v8191 = vsel %vm666, %v8177, %v8161
        %v8192 = vsel %vm666, %v8179, %v8163
        %v8193 = vsel %vm666, %v8181, %v8165
        %v8194 = vpack.c.bf16 %v8191, %v8190
        %v8195 = vpack.c.bf16 %v8187, %v8186
        %v8196 = vpack.c.bf16 %v8183, %v8182
        %v8197 = vpack.c.bf16 %v8193, %v8192
        %v8198 = vpack.c.bf16 %v8189, %v8188
        %v8199 = vpack.c.bf16 %v8185, %v8184
        %v8206 = vunpack.c.l.b16 %v8194
        %v8207 = vunpack.c.l.b16 %v8195
        %v8208 = vunpack.c.l.b16 %v8196
        %v8209 = vunpack.c.h.b16 %v8194
        %v8210 = vunpack.c.h.b16 %v8195
        %v8211 = vunpack.c.h.b16 %v8196
        %v8212 = vunpack.c.l.b16 %v8197
        %v8213 = vunpack.c.l.b16 %v8198
        %v8214 = vunpack.c.l.b16 %v8199
        %v8215 = vunpack.c.h.b16 %v8197
        %v8216 = vunpack.c.h.b16 %v8198
        %v8217 = vunpack.c.h.b16 %v8199
        %v8218 = vpack.c.b16 %v8207, %v8206
        %v8219 = vpack.c.b16 %v8208, %v8208
        %v8220 = vpack.c.b16 %v8210, %v8209
        %v8221 = vpack.c.b16 %v8211, %v8211
        %v8222 = vpack.c.b16 %v8213, %v8212
        %v8223 = vpack.c.b16 %v8214, %v8214
        %v8224 = vpack.c.b16 %v8216, %v8215
        %v8225 = vpack.c.b16 %v8217, %v8217
        %8234 = vst [vmem:[#allocation3] sm:$0xff] %v8218
        %8235 = vst [vmem:[#allocation3 + $0x8] sm:$0xf] %v8219
        %8236 = vst [vmem:[#allocation3 + $0xc] sm:$0xff] %v8220
        %8237 = vst [vmem:[#allocation3 + $0x14] sm:$0xf] %v8221
        %8238 = vst [vmem:[#allocation3 + $0x18] sm:$0xff] %v8222
        %8239 = vst [vmem:[#allocation3 + $0x20] sm:$0xf] %v8223
        %8240 = vst [vmem:[#allocation3 + $0x24] sm:$0xff] %v8224
        %8241 = vst [vmem:[#allocation3 + $0x2c] sm:$0xf] %v8225
        %8242 = vrot.lane.b32.xlu0 %v8146, 18
        %v8243 = vpop.permute.xlu0 %8242
        %8244 = vrot.lane.b32.xlu0 %v8149, 18
        %v8245 = vpop.permute.xlu0 %8244
        %8246 = vrot.lane.b32.xlu0 %v8152, 18
        %v8247 = vpop.permute.xlu0 %8246
        %8248 = vrot.lane.b32.xlu0 %v8155, 18
        %v8249 = vpop.permute.xlu0 %8248
        %8250 = vrot.lane.b32.xlu0 %v8147, 18
        %v8251 = vpop.permute.xlu0 %8250
        %8252 = vrot.lane.b32.xlu0 %v8150, 18
        %v8253 = vpop.permute.xlu0 %8252
        %8254 = vrot.lane.b32.xlu0 %v8153, 18
        %v8255 = vpop.permute.xlu0 %8254
        %8256 = vrot.lane.b32.xlu0 %v8156, 18
        %v8257 = vpop.permute.xlu0 %8256
        %8258 = vrot.lane.b32.xlu0 %v8148, 18
        %v8259 = vpop.permute.xlu0 %8258
        %8260 = vrot.lane.b32.xlu0 %v8151, 18
        %v8261 = vpop.permute.xlu0 %8260
        %8262 = vrot.lane.b32.xlu0 %v8154, 18
        %v8263 = vpop.permute.xlu0 %8262
        %8264 = vrot.lane.b32.xlu0 %v8157, 18
        %v8265 = vpop.permute.xlu0 %8264
        %v8266 = vsel %vm835, %v8251, %v8259
        %v8267 = vsel %vm835, %v8253, %v8261
        %v8268 = vsel %vm835, %v8255, %v8263
        %v8269 = vsel %vm835, %v8257, %v8265
        %v8270 = vsel %vm835, %v8243, %v8251
        %v8271 = vsel %vm835, %v8245, %v8253
        %v8272 = vsel %vm835, %v8247, %v8255
        %v8273 = vsel %vm835, %v8249, %v8257
        %v8274 = vsel %vm835, %v8259, %v8243
        %v8275 = vsel %vm835, %v8261, %v8245
        %v8276 = vsel %vm835, %v8263, %v8247
        %v8277 = vsel %vm835, %v8265, %v8249
        %v8278 = vpack.c.bf16 %v8275, %v8274
        %v8279 = vpack.c.bf16 %v8271, %v8270
        %v8280 = vpack.c.bf16 %v8267, %v8266
        %v8281 = vpack.c.bf16 %v8277, %v8276
        %v8282 = vpack.c.bf16 %v8273, %v8272
        %v8283 = vpack.c.bf16 %v8269, %v8268
        %v8290 = vunpack.c.l.b16 %v8278
        %v8291 = vunpack.c.l.b16 %v8279
        %v8292 = vunpack.c.l.b16 %v8280
        %v8293 = vunpack.c.h.b16 %v8278
        %v8294 = vunpack.c.h.b16 %v8279
        %v8295 = vunpack.c.h.b16 %v8280
        %v8296 = vunpack.c.l.b16 %v8281
        %v8297 = vunpack.c.l.b16 %v8282
        %v8298 = vunpack.c.l.b16 %v8283
        %v8299 = vunpack.c.h.b16 %v8281
        %v8300 = vunpack.c.h.b16 %v8282
        %v8301 = vunpack.c.h.b16 %v8283
        %v8302 = vpack.c.b16 %v8291, %v8290
        %v8303 = vpack.c.b16 %v8292, %v8292
        %v8304 = vpack.c.b16 %v8294, %v8293
        %v8305 = vpack.c.b16 %v8295, %v8295
        %v8306 = vpack.c.b16 %v8297, %v8296
        %v8307 = vpack.c.b16 %v8298, %v8298
        %v8308 = vpack.c.b16 %v8300, %v8299
        %v8309 = vpack.c.b16 %v8301, %v8301
        %8318 = vst [vmem:[#allocation3 + $0x30] sm:$0xff] %v8302
        %8319 = vst [vmem:[#allocation3 + $0x38] sm:$0xf] %v8303
        %8320 = vst [vmem:[#allocation3 + $0x3c] sm:$0xff] %v8304
        %8321 = vst [vmem:[#allocation3 + $0x44] sm:$0xf] %v8305
        %8322 = vst [vmem:[#allocation3 + $0x48] sm:$0xff] %v8306
        %8323 = vst [vmem:[#allocation3 + $0x50] sm:$0xf] %v8307
        %8324 = vst [vmem:[#allocation3 + $0x54] sm:$0xff] %v8308
        %8325 = vst [vmem:[#allocation3 + $0x5c] sm:$0xf] %v8309
        %8326 = vrot.lane.b32.xlu0 %v8146, 17
        %v8327 = vpop.permute.xlu0 %8326
        %8328 = vrot.lane.b32.xlu0 %v8149, 17
        %v8329 = vpop.permute.xlu0 %8328
        %8330 = vrot.lane.b32.xlu0 %v8152, 17
        %v8331 = vpop.permute.xlu0 %8330
        %8332 = vrot.lane.b32.xlu0 %v8155, 17
        %v8333 = vpop.permute.xlu0 %8332
        %8334 = vrot.lane.b32.xlu0 %v8147, 17
        %v8335 = vpop.permute.xlu0 %8334
        %8336 = vrot.lane.b32.xlu0 %v8150, 17
        %v8337 = vpop.permute.xlu0 %8336
        %8338 = vrot.lane.b32.xlu0 %v8153, 17
        %v8339 = vpop.permute.xlu0 %8338
        %8340 = vrot.lane.b32.xlu0 %v8156, 17
        %v8341 = vpop.permute.xlu0 %8340
        %8342 = vrot.lane.b32.xlu0 %v8148, 17
        %v8343 = vpop.permute.xlu0 %8342
        %8344 = vrot.lane.b32.xlu0 %v8151, 17
        %v8345 = vpop.permute.xlu0 %8344
        %8346 = vrot.lane.b32.xlu0 %v8154, 17
        %v8347 = vpop.permute.xlu0 %8346
        %8348 = vrot.lane.b32.xlu0 %v8157, 17
        %v8349 = vpop.permute.xlu0 %8348
        %v8350 = vsel %vm1004, %v8335, %v8343
        %v8351 = vsel %vm1004, %v8337, %v8345
        %v8352 = vsel %vm1004, %v8339, %v8347
        %v8353 = vsel %vm1004, %v8341, %v8349
        %v8354 = vsel %vm1004, %v8327, %v8335
        %v8355 = vsel %vm1004, %v8329, %v8337
        %v8356 = vsel %vm1004, %v8331, %v8339
        %v8357 = vsel %vm1004, %v8333, %v8341
        %v8358 = vsel %vm1004, %v8343, %v8327
        %v8359 = vsel %vm1004, %v8345, %v8329
        %v8360 = vsel %vm1004, %v8347, %v8331
        %v8361 = vsel %vm1004, %v8349, %v8333
        %v8362 = vpack.c.bf16 %v8359, %v8358
        %v8363 = vpack.c.bf16 %v8355, %v8354
        %v8364 = vpack.c.bf16 %v8351, %v8350
        %v8365 = vpack.c.bf16 %v8361, %v8360
        %v8366 = vpack.c.bf16 %v8357, %v8356
        %v8367 = vpack.c.bf16 %v8353, %v8352
        %v8374 = vunpack.c.l.b16 %v8362
        %v8375 = vunpack.c.l.b16 %v8363
        %v8376 = vunpack.c.l.b16 %v8364
        %v8377 = vunpack.c.h.b16 %v8362
        %v8378 = vunpack.c.h.b16 %v8363
        %v8379 = vunpack.c.h.b16 %v8364
        %v8380 = vunpack.c.l.b16 %v8365
        %v8381 = vunpack.c.l.b16 %v8366
        %v8382 = vunpack.c.l.b16 %v8367
        %v8383 = vunpack.c.h.b16 %v8365
        %v8384 = vunpack.c.h.b16 %v8366
        %v8385 = vunpack.c.h.b16 %v8367
        %v8386 = vpack.c.b16 %v8375, %v8374
        %v8387 = vpack.c.b16 %v8376, %v8376
        %v8388 = vpack.c.b16 %v8378, %v8377
        %v8389 = vpack.c.b16 %v8379, %v8379
        %v8390 = vpack.c.b16 %v8381, %v8380
        %v8391 = vpack.c.b16 %v8382, %v8382
        %v8392 = vpack.c.b16 %v8384, %v8383
        %v8393 = vpack.c.b16 %v8385, %v8385
        %8402 = vst [vmem:[#allocation3 + $0x60] sm:$0xff] %v8386
        %8403 = vst [vmem:[#allocation3 + $0x68] sm:$0xf] %v8387
        %8404 = vst [vmem:[#allocation3 + $0x6c] sm:$0xff] %v8388
        %8405 = vst [vmem:[#allocation3 + $0x74] sm:$0xf] %v8389
        %8406 = vst [vmem:[#allocation3 + $0x78] sm:$0xff] %v8390
        %8407 = vst [vmem:[#allocation3 + $0x80] sm:$0xf] %v8391
        %8408 = vst [vmem:[#allocation3 + $0x84] sm:$0xff] %v8392
        %8409 = vst [vmem:[#allocation3 + $0x8c] sm:$0xf] %v8393
        %8410 = vrot.lane.b32.xlu0 %v8146, 1
        %v8411 = vpop.permute.xlu0 %8410
        %8412 = vrot.lane.b32.xlu0 %v8149, 1
        %v8413 = vpop.permute.xlu0 %8412
        %8414 = vrot.lane.b32.xlu0 %v8152, 1
        %v8415 = vpop.permute.xlu0 %8414
        %8416 = vrot.lane.b32.xlu0 %v8155, 1
        %v8417 = vpop.permute.xlu0 %8416
        %8418 = vrot.lane.b32.xlu0 %v8147, 1
        %v8419 = vpop.permute.xlu0 %8418
        %8420 = vrot.lane.b32.xlu0 %v8150, 1
        %v8421 = vpop.permute.xlu0 %8420
        %8422 = vrot.lane.b32.xlu0 %v8153, 1
        %v8423 = vpop.permute.xlu0 %8422
        %8424 = vrot.lane.b32.xlu0 %v8156, 1
        %v8425 = vpop.permute.xlu0 %8424
        %8426 = vrot.lane.b32.xlu0 %v8148, 1
        %v8427 = vpop.permute.xlu0 %8426
        %8428 = vrot.lane.b32.xlu0 %v8151, 1
        %v8429 = vpop.permute.xlu0 %8428
        %8430 = vrot.lane.b32.xlu0 %v8154, 1
        %v8431 = vpop.permute.xlu0 %8430
        %8432 = vrot.lane.b32.xlu0 %v8157, 1
        %v8433 = vpop.permute.xlu0 %8432
        %v8434 = vsel %vm1173, %v8419, %v8427
        %v8435 = vsel %vm1173, %v8421, %v8429
        %v8436 = vsel %vm1173, %v8423, %v8431
        %v8437 = vsel %vm1173, %v8425, %v8433
        %v8438 = vsel %vm1173, %v8411, %v8419
        %v8439 = vsel %vm1173, %v8413, %v8421
        %v8440 = vsel %vm1173, %v8415, %v8423
        %v8441 = vsel %vm1173, %v8417, %v8425
        %v8442 = vsel %vm1173, %v8427, %v8411
        %v8443 = vsel %vm1173, %v8429, %v8413
        %v8444 = vsel %vm1173, %v8431, %v8415
        %v8445 = vsel %vm1173, %v8433, %v8417
        %v8446 = vpack.c.bf16 %v8443, %v8442
        %v8447 = vpack.c.bf16 %v8439, %v8438
        %v8448 = vpack.c.bf16 %v8435, %v8434
        %v8449 = vpack.c.bf16 %v8445, %v8444
        %v8450 = vpack.c.bf16 %v8441, %v8440
        %v8451 = vpack.c.bf16 %v8437, %v8436
        %v8458 = vunpack.c.l.b16 %v8446
        %v8459 = vunpack.c.l.b16 %v8447
        %v8460 = vunpack.c.l.b16 %v8448
        %v8461 = vunpack.c.h.b16 %v8446
        %v8462 = vunpack.c.h.b16 %v8447
        %v8463 = vunpack.c.h.b16 %v8448
        %v8464 = vunpack.c.l.b16 %v8449
        %v8465 = vunpack.c.l.b16 %v8450
        %v8466 = vunpack.c.l.b16 %v8451
        %v8467 = vunpack.c.h.b16 %v8449
        %v8468 = vunpack.c.h.b16 %v8450
        %v8469 = vunpack.c.h.b16 %v8451
        %v8470 = vpack.c.b16 %v8459, %v8458
        %v8471 = vpack.c.b16 %v8460, %v8460
        %v8472 = vpack.c.b16 %v8462, %v8461
        %v8473 = vpack.c.b16 %v8463, %v8463
        %v8474 = vpack.c.b16 %v8465, %v8464
        %v8475 = vpack.c.b16 %v8466, %v8466
        %v8476 = vpack.c.b16 %v8468, %v8467
        %v8477 = vpack.c.b16 %v8469, %v8469
        %8486 = vst [vmem:[#allocation3 + $0x90] sm:$0xff] %v8470
        %8487 = vst [vmem:[#allocation3 + $0x98] sm:$0xf] %v8471
        %8488 = vst [vmem:[#allocation3 + $0x9c] sm:$0xff] %v8472
        %8489 = vst [vmem:[#allocation3 + $0xa4] sm:$0xf] %v8473
        %8490 = vst [vmem:[#allocation3 + $0xa8] sm:$0xff] %v8474
        %8491 = vst [vmem:[#allocation3 + $0xb0] sm:$0xf] %v8475
        %8492 = vst [vmem:[#allocation3 + $0xb4] sm:$0xff] %v8476
        %8493 = vst [vmem:[#allocation3 + $0xbc] sm:$0xf] %v8477
        %v8494 = vpack.c.bf16 %v8149, %v8146
        %v8495 = vpack.c.bf16 %v8150, %v8147
        %v8496 = vpack.c.bf16 %v8151, %v8148
        %v8497 = vpack.c.bf16 %v8155, %v8152
        %v8498 = vpack.c.bf16 %v8156, %v8153
        %v8499 = vpack.c.bf16 %v8157, %v8154
        %v8506 = vunpack.c.l.b16 %v8494
        %v8507 = vunpack.c.l.b16 %v8495
        %v8508 = vunpack.c.l.b16 %v8496
        %v8509 = vunpack.c.h.b16 %v8494
        %v8510 = vunpack.c.h.b16 %v8495
        %v8511 = vunpack.c.h.b16 %v8496
        %v8512 = vunpack.c.l.b16 %v8497
        %v8513 = vunpack.c.l.b16 %v8498
        %v8514 = vunpack.c.l.b16 %v8499
        %v8515 = vunpack.c.h.b16 %v8497
        %v8516 = vunpack.c.h.b16 %v8498
        %v8517 = vunpack.c.h.b16 %v8499
        %v8518 = vpack.c.b16 %v8507, %v8506
        %v8519 = vpack.c.b16 %v8508, %v8508
        %v8520 = vpack.c.b16 %v8510, %v8509
        %v8521 = vpack.c.b16 %v8511, %v8511
        %v8522 = vpack.c.b16 %v8513, %v8512
        %v8523 = vpack.c.b16 %v8514, %v8514
        %v8524 = vpack.c.b16 %v8516, %v8515
        %v8525 = vpack.c.b16 %v8517, %v8517
        %8534 = vst [vmem:[#allocation3 + $0xc0] sm:$0xff] %v8518
        %8535 = vst [vmem:[#allocation3 + $0xc8] sm:$0xf] %v8519
        %8536 = vst [vmem:[#allocation3 + $0xcc] sm:$0xff] %v8520
        %8537 = vst [vmem:[#allocation3 + $0xd4] sm:$0xf] %v8521
        %8538 = vst [vmem:[#allocation3 + $0xd8] sm:$0xff] %v8522
        %8539 = vst [vmem:[#allocation3 + $0xe0] sm:$0xf] %v8523
        %8540 = vst [vmem:[#allocation3 + $0xe4] sm:$0xff] %v8524
        %8541 = vst [vmem:[#allocation3 + $0xec] sm:$0xf] %v8525
        %8542 = vrot.lane.b32.xlu0 %v8146, 127
        %v8543 = vpop.permute.xlu0 %8542
        %8544 = vrot.lane.b32.xlu0 %v8149, 127
        %v8545 = vpop.permute.xlu0 %8544
        %8546 = vrot.lane.b32.xlu0 %v8152, 127
        %v8547 = vpop.permute.xlu0 %8546
        %8548 = vrot.lane.b32.xlu0 %v8155, 127
        %v8549 = vpop.permute.xlu0 %8548
        %8550 = vrot.lane.b32.xlu0 %v8147, 127
        %v8551 = vpop.permute.xlu0 %8550
        %8552 = vrot.lane.b32.xlu0 %v8150, 127
        %v8553 = vpop.permute.xlu0 %8552
        %8554 = vrot.lane.b32.xlu0 %v8153, 127
        %v8555 = vpop.permute.xlu0 %8554
        %8556 = vrot.lane.b32.xlu0 %v8156, 127
        %v8557 = vpop.permute.xlu0 %8556
        %8558 = vrot.lane.b32.xlu0 %v8148, 127
        %v8559 = vpop.permute.xlu0 %8558
        %8560 = vrot.lane.b32.xlu0 %v8151, 127
        %v8561 = vpop.permute.xlu0 %8560
        %8562 = vrot.lane.b32.xlu0 %v8154, 127
        %v8563 = vpop.permute.xlu0 %8562
        %8564 = vrot.lane.b32.xlu0 %v8157, 127
        %v8565 = vpop.permute.xlu0 %8564
        %v8566 = vsel %vm1438, %v8551, %v8559
        %v8567 = vsel %vm1438, %v8553, %v8561
        %v8568 = vsel %vm1438, %v8555, %v8563
        %v8569 = vsel %vm1438, %v8557, %v8565
        %v8570 = vsel %vm1438, %v8543, %v8551
        %v8571 = vsel %vm1438, %v8545, %v8553
        %v8572 = vsel %vm1438, %v8547, %v8555
        %v8573 = vsel %vm1438, %v8549, %v8557
        %v8574 = vsel %vm1438, %v8559, %v8543
        %v8575 = vsel %vm1438, %v8561, %v8545
        %v8576 = vsel %vm1438, %v8563, %v8547
        %v8577 = vsel %vm1438, %v8565, %v8549
        %v8578 = vpack.c.bf16 %v8571, %v8570
        %v8579 = vpack.c.bf16 %v8567, %v8566
        %v8580 = vpack.c.bf16 %v8575, %v8574
        %v8581 = vpack.c.bf16 %v8573, %v8572
        %v8582 = vpack.c.bf16 %v8569, %v8568
        %v8583 = vpack.c.bf16 %v8577, %v8576
        %v8590 = vunpack.c.l.b16 %v8578
        %v8591 = vunpack.c.l.b16 %v8579
        %v8592 = vunpack.c.l.b16 %v8580
        %v8593 = vunpack.c.h.b16 %v8578
        %v8594 = vunpack.c.h.b16 %v8579
        %v8595 = vunpack.c.h.b16 %v8580
        %v8596 = vunpack.c.l.b16 %v8581
        %v8597 = vunpack.c.l.b16 %v8582
        %v8598 = vunpack.c.l.b16 %v8583
        %v8599 = vunpack.c.h.b16 %v8581
        %v8600 = vunpack.c.h.b16 %v8582
        %v8601 = vunpack.c.h.b16 %v8583
        %v8602 = vpack.c.b16 %v8591, %v8590
        %v8603 = vpack.c.b16 %v8592, %v8592
        %v8604 = vpack.c.b16 %v8594, %v8593
        %v8605 = vpack.c.b16 %v8595, %v8595
        %v8606 = vpack.c.b16 %v8597, %v8596
        %v8607 = vpack.c.b16 %v8598, %v8598
        %v8608 = vpack.c.b16 %v8600, %v8599
        %v8609 = vpack.c.b16 %v8601, %v8601
        %8618 = vst [vmem:[#allocation3 + $0xf0] sm:$0xff] %v8602
        %8619 = vst [vmem:[#allocation3 + $0xf8] sm:$0xf] %v8603
        %8620 = vst [vmem:[#allocation3 + $0xfc] sm:$0xff] %v8604
        %8621 = vst [vmem:[#allocation3 + $0x104] sm:$0xf] %v8605
        %8622 = vst [vmem:[#allocation3 + $0x108] sm:$0xff] %v8606
        %8623 = vst [vmem:[#allocation3 + $0x110] sm:$0xf] %v8607
        %8624 = vst [vmem:[#allocation3 + $0x114] sm:$0xff] %v8608
        %8625 = vst [vmem:[#allocation3 + $0x11c] sm:$0xf] %v8609
        %8626 = vrot.lane.b32.xlu0 %v8146, 111
        %v8627 = vpop.permute.xlu0 %8626
        %8628 = vrot.lane.b32.xlu0 %v8149, 111
        %v8629 = vpop.permute.xlu0 %8628
        %8630 = vrot.lane.b32.xlu0 %v8152, 111
        %v8631 = vpop.permute.xlu0 %8630
        %8632 = vrot.lane.b32.xlu0 %v8155, 111
        %v8633 = vpop.permute.xlu0 %8632
        %8634 = vrot.lane.b32.xlu0 %v8147, 111
        %v8635 = vpop.permute.xlu0 %8634
        %8636 = vrot.lane.b32.xlu0 %v8150, 111
        %v8637 = vpop.permute.xlu0 %8636
        %8638 = vrot.lane.b32.xlu0 %v8153, 111
        %v8639 = vpop.permute.xlu0 %8638
        %8640 = vrot.lane.b32.xlu0 %v8156, 111
        %v8641 = vpop.permute.xlu0 %8640
        %8642 = vrot.lane.b32.xlu0 %v8148, 111
        %v8643 = vpop.permute.xlu0 %8642
        %8644 = vrot.lane.b32.xlu0 %v8151, 111
        %v8645 = vpop.permute.xlu0 %8644
        %8646 = vrot.lane.b32.xlu0 %v8154, 111
        %v8647 = vpop.permute.xlu0 %8646
        %8648 = vrot.lane.b32.xlu0 %v8157, 111
        %v8649 = vpop.permute.xlu0 %8648
        %v8650 = vsel %vm1607, %v8635, %v8643
        %v8651 = vsel %vm1607, %v8637, %v8645
        %v8652 = vsel %vm1607, %v8639, %v8647
        %v8653 = vsel %vm1607, %v8641, %v8649
        %v8654 = vsel %vm1607, %v8627, %v8635
        %v8655 = vsel %vm1607, %v8629, %v8637
        %v8656 = vsel %vm1607, %v8631, %v8639
        %v8657 = vsel %vm1607, %v8633, %v8641
        %v8658 = vsel %vm1607, %v8643, %v8627
        %v8659 = vsel %vm1607, %v8645, %v8629
        %v8660 = vsel %vm1607, %v8647, %v8631
        %v8661 = vsel %vm1607, %v8649, %v8633
        %v8662 = vpack.c.bf16 %v8655, %v8654
        %v8663 = vpack.c.bf16 %v8651, %v8650
        %v8664 = vpack.c.bf16 %v8659, %v8658
        %v8665 = vpack.c.bf16 %v8657, %v8656
        %v8666 = vpack.c.bf16 %v8653, %v8652
        %v8667 = vpack.c.bf16 %v8661, %v8660
        %v8674 = vunpack.c.l.b16 %v8662
        %v8675 = vunpack.c.l.b16 %v8663
        %v8676 = vunpack.c.l.b16 %v8664
        %v8677 = vunpack.c.h.b16 %v8662
        %v8678 = vunpack.c.h.b16 %v8663
        %v8679 = vunpack.c.h.b16 %v8664
        %v8680 = vunpack.c.l.b16 %v8665
        %v8681 = vunpack.c.l.b16 %v8666
        %v8682 = vunpack.c.l.b16 %v8667
        %v8683 = vunpack.c.h.b16 %v8665
        %v8684 = vunpack.c.h.b16 %v8666
        %v8685 = vunpack.c.h.b16 %v8667
        %v8686 = vpack.c.b16 %v8675, %v8674
        %v8687 = vpack.c.b16 %v8676, %v8676
        %v8688 = vpack.c.b16 %v8678, %v8677
        %v8689 = vpack.c.b16 %v8679, %v8679
        %v8690 = vpack.c.b16 %v8681, %v8680
        %v8691 = vpack.c.b16 %v8682, %v8682
        %v8692 = vpack.c.b16 %v8684, %v8683
        %v8693 = vpack.c.b16 %v8685, %v8685
        %8702 = vst [vmem:[#allocation3 + $0x120] sm:$0xff] %v8686
        %8703 = vst [vmem:[#allocation3 + $0x128] sm:$0xf] %v8687
        %8704 = vst [vmem:[#allocation3 + $0x12c] sm:$0xff] %v8688
        %8705 = vst [vmem:[#allocation3 + $0x134] sm:$0xf] %v8689
        %8706 = vst [vmem:[#allocation3 + $0x138] sm:$0xff] %v8690
        %8707 = vst [vmem:[#allocation3 + $0x140] sm:$0xf] %v8691
        %8708 = vst [vmem:[#allocation3 + $0x144] sm:$0xff] %v8692
        %8709 = vst [vmem:[#allocation3 + $0x14c] sm:$0xf] %v8693
        %8710 = vrot.lane.b32.xlu0 %v8146, 110
        %v8711 = vpop.permute.xlu0 %8710
        %8712 = vrot.lane.b32.xlu0 %v8149, 110
        %v8713 = vpop.permute.xlu0 %8712
        %8714 = vrot.lane.b32.xlu0 %v8152, 110
        %v8715 = vpop.permute.xlu0 %8714
        %8716 = vrot.lane.b32.xlu0 %v8155, 110
        %v8717 = vpop.permute.xlu0 %8716
        %8718 = vrot.lane.b32.xlu0 %v8147, 110
        %v8719 = vpop.permute.xlu0 %8718
        %8720 = vrot.lane.b32.xlu0 %v8150, 110
        %v8721 = vpop.permute.xlu0 %8720
        %8722 = vrot.lane.b32.xlu0 %v8153, 110
        %v8723 = vpop.permute.xlu0 %8722
        %8724 = vrot.lane.b32.xlu0 %v8156, 110
        %v8725 = vpop.permute.xlu0 %8724
        %8726 = vrot.lane.b32.xlu0 %v8148, 110
        %v8727 = vpop.permute.xlu0 %8726
        %8728 = vrot.lane.b32.xlu0 %v8151, 110
        %v8729 = vpop.permute.xlu0 %8728
        %8730 = vrot.lane.b32.xlu0 %v8154, 110
        %v8731 = vpop.permute.xlu0 %8730
        %8732 = vrot.lane.b32.xlu0 %v8157, 110
        %v8733 = vpop.permute.xlu0 %8732
        %v8734 = vsel %vm1776, %v8719, %v8727
        %v8735 = vsel %vm1776, %v8721, %v8729
        %v8736 = vsel %vm1776, %v8723, %v8731
        %v8737 = vsel %vm1776, %v8725, %v8733
        %v8738 = vsel %vm1776, %v8711, %v8719
        %v8739 = vsel %vm1776, %v8713, %v8721
        %v8740 = vsel %vm1776, %v8715, %v8723
        %v8741 = vsel %vm1776, %v8717, %v8725
        %v8742 = vsel %vm1776, %v8727, %v8711
        %v8743 = vsel %vm1776, %v8729, %v8713
        %v8744 = vsel %vm1776, %v8731, %v8715
        %v8745 = vsel %vm1776, %v8733, %v8717
        %v8746 = vpack.c.bf16 %v8739, %v8738
        %v8747 = vpack.c.bf16 %v8735, %v8734
        %v8748 = vpack.c.bf16 %v8743, %v8742
        %v8749 = vpack.c.bf16 %v8741, %v8740
        %v8750 = vpack.c.bf16 %v8737, %v8736
        %v8751 = vpack.c.bf16 %v8745, %v8744
        %v8758 = vunpack.c.l.b16 %v8746
        %v8759 = vunpack.c.l.b16 %v8747
        %v8760 = vunpack.c.l.b16 %v8748
        %v8761 = vunpack.c.h.b16 %v8746
        %v8762 = vunpack.c.h.b16 %v8747
        %v8763 = vunpack.c.h.b16 %v8748
        %v8764 = vunpack.c.l.b16 %v8749
        %v8765 = vunpack.c.l.b16 %v8750
        %v8766 = vunpack.c.l.b16 %v8751
        %v8767 = vunpack.c.h.b16 %v8749
        %v8768 = vunpack.c.h.b16 %v8750
        %v8769 = vunpack.c.h.b16 %v8751
        %v8770 = vpack.c.b16 %v8759, %v8758
        %v8771 = vpack.c.b16 %v8760, %v8760
        %v8772 = vpack.c.b16 %v8762, %v8761
        %v8773 = vpack.c.b16 %v8763, %v8763
        %v8774 = vpack.c.b16 %v8765, %v8764
        %v8775 = vpack.c.b16 %v8766, %v8766
        %v8776 = vpack.c.b16 %v8768, %v8767
        %v8777 = vpack.c.b16 %v8769, %v8769
        %8786 = vst [vmem:[#allocation3 + $0x150] sm:$0xff] %v8770
        %8787 = vst [vmem:[#allocation3 + $0x158] sm:$0xf] %v8771
        %8788 = vst [vmem:[#allocation3 + $0x15c] sm:$0xff] %v8772
        %8789 = vst [vmem:[#allocation3 + $0x164] sm:$0xf] %v8773
        %8790 = vst [vmem:[#allocation3 + $0x168] sm:$0xff] %v8774
        %8791 = vst [vmem:[#allocation3 + $0x170] sm:$0xf] %v8775
        %8792 = vst [vmem:[#allocation3 + $0x174] sm:$0xff] %v8776
        %8793 = vst [vmem:[#allocation3 + $0x17c] sm:$0xf] %v8777
        %8794 = vrot.lane.b32.xlu0 %v8146, 109
        %v8795 = vpop.permute.xlu0 %8794
        %8796 = vrot.lane.b32.xlu0 %v8149, 109
        %v8797 = vpop.permute.xlu0 %8796
        %8798 = vrot.lane.b32.xlu0 %v8152, 109
        %v8799 = vpop.permute.xlu0 %8798
        %8800 = vrot.lane.b32.xlu0 %v8155, 109
        %v8801 = vpop.permute.xlu0 %8800
        %8802 = vrot.lane.b32.xlu0 %v8147, 109
        %v8803 = vpop.permute.xlu0 %8802
        %8804 = vrot.lane.b32.xlu0 %v8150, 109
        %v8805 = vpop.permute.xlu0 %8804
        %8806 = vrot.lane.b32.xlu0 %v8153, 109
        %v8807 = vpop.permute.xlu0 %8806
        %8808 = vrot.lane.b32.xlu0 %v8156, 109
        %v8809 = vpop.permute.xlu0 %8808
        %8810 = vrot.lane.b32.xlu0 %v8148, 109
        %v8811 = vpop.permute.xlu0 %8810
        %8812 = vrot.lane.b32.xlu0 %v8151, 109
        %v8813 = vpop.permute.xlu0 %8812
        %8814 = vrot.lane.b32.xlu0 %v8154, 109
        %v8815 = vpop.permute.xlu0 %8814
        %8816 = vrot.lane.b32.xlu0 %v8157, 109
        %v8817 = vpop.permute.xlu0 %8816
        %v8818 = vsel %vm1945, %v8803, %v8811
        %v8819 = vsel %vm1945, %v8805, %v8813
        %v8820 = vsel %vm1945, %v8807, %v8815
        %v8821 = vsel %vm1945, %v8809, %v8817
        %v8822 = vsel %vm1945, %v8795, %v8803
        %v8823 = vsel %vm1945, %v8797, %v8805
        %v8824 = vsel %vm1945, %v8799, %v8807
        %v8825 = vsel %vm1945, %v8801, %v8809
        %v8826 = vsel %vm1945, %v8811, %v8795
        %v8827 = vsel %vm1945, %v8813, %v8797
        %v8828 = vsel %vm1945, %v8815, %v8799
        %v8829 = vsel %vm1945, %v8817, %v8801
        %v8830 = vpack.c.bf16 %v8823, %v8822
        %v8831 = vpack.c.bf16 %v8819, %v8818
        %v8832 = vpack.c.bf16 %v8827, %v8826
        %v8833 = vpack.c.bf16 %v8825, %v8824
        %v8834 = vpack.c.bf16 %v8821, %v8820
        %v8835 = vpack.c.bf16 %v8829, %v8828
        %v8842 = vunpack.c.l.b16 %v8830
        %v8843 = vunpack.c.l.b16 %v8831
        %v8844 = vunpack.c.l.b16 %v8832
        %v8845 = vunpack.c.h.b16 %v8830
        %v8846 = vunpack.c.h.b16 %v8831
        %v8847 = vunpack.c.h.b16 %v8832
        %v8848 = vunpack.c.l.b16 %v8833
        %v8849 = vunpack.c.l.b16 %v8834
        %v8850 = vunpack.c.l.b16 %v8835
        %v8851 = vunpack.c.h.b16 %v8833
        %v8852 = vunpack.c.h.b16 %v8834
        %v8853 = vunpack.c.h.b16 %v8835
        %v8854 = vpack.c.b16 %v8843, %v8842
        %v8855 = vpack.c.b16 %v8844, %v8844
        %v8856 = vpack.c.b16 %v8846, %v8845
        %v8857 = vpack.c.b16 %v8847, %v8847
        %v8858 = vpack.c.b16 %v8849, %v8848
        %v8859 = vpack.c.b16 %v8850, %v8850
        %v8860 = vpack.c.b16 %v8852, %v8851
        %v8861 = vpack.c.b16 %v8853, %v8853
        %8870 = vst [vmem:[#allocation3 + $0x180] sm:$0xff] %v8854
        %8871 = vst [vmem:[#allocation3 + $0x188] sm:$0xf] %v8855
        %8872 = vst [vmem:[#allocation3 + $0x18c] sm:$0xff] %v8856
        %8873 = vst [vmem:[#allocation3 + $0x194] sm:$0xf] %v8857
        %8874 = vst [vmem:[#allocation3 + $0x198] sm:$0xff] %v8858
        %8875 = vst [vmem:[#allocation3 + $0x1a0] sm:$0xf] %v8859
        %8876 = vst [vmem:[#allocation3 + $0x1a4] sm:$0xff] %v8860
        %8877 = vst [vmem:[#allocation3 + $0x1ac] sm:$0xf] %v8861
        %v8878 = vld [vmem:[#allocation10] sm:$0xff]
        %v8879 = vld [vmem:[#allocation10 + $0x8] sm:$0xf]
        %v8880 = vld [vmem:[#allocation10 + $0xc] sm:$0xff]
        %v8881 = vld [vmem:[#allocation10 + $0x14] sm:$0xf]
        %v8882 = vld [vmem:[#allocation10 + $0x18] sm:$0xff]
        %v8883 = vld [vmem:[#allocation10 + $0x20] sm:$0xf]
        %v8884 = vld [vmem:[#allocation10 + $0x24] sm:$0xff]
        %v8885 = vld [vmem:[#allocation10 + $0x2c] sm:$0xf]
        %v8886 = vld [vmem:[#allocation3] sm:$0xff]
        %v8887 = vld [vmem:[#allocation3 + $0x8] sm:$0xf]
        %v8888 = vld [vmem:[#allocation3 + $0xc] sm:$0xff]
        %v8889 = vld [vmem:[#allocation3 + $0x14] sm:$0xf]
        %v8890 = vld [vmem:[#allocation3 + $0x18] sm:$0xff]
        %v8891 = vld [vmem:[#allocation3 + $0x20] sm:$0xf]
        %v8892 = vld [vmem:[#allocation3 + $0x24] sm:$0xff]
        %v8893 = vld [vmem:[#allocation3 + $0x2c] sm:$0xf]
        %v8894 = vld [vmem:[#allocation3 + $0x30] sm:$0xff]
        %v8895 = vld [vmem:[#allocation3 + $0x38] sm:$0xf]
        %v8896 = vld [vmem:[#allocation3 + $0x3c] sm:$0xff]
        %v8897 = vld [vmem:[#allocation3 + $0x44] sm:$0xf]
        %v8898 = vld [vmem:[#allocation3 + $0x48] sm:$0xff]
        %v8899 = vld [vmem:[#allocation3 + $0x50] sm:$0xf]
        %v8900 = vld [vmem:[#allocation3 + $0x54] sm:$0xff]
        %v8901 = vld [vmem:[#allocation3 + $0x5c] sm:$0xf]
        %v8902 = vld [vmem:[#allocation3 + $0x60] sm:$0xff]
        %v8903 = vld [vmem:[#allocation3 + $0x68] sm:$0xf]
        %v8904 = vld [vmem:[#allocation3 + $0x6c] sm:$0xff]
        %v8905 = vld [vmem:[#allocation3 + $0x74] sm:$0xf]
        %v8906 = vld [vmem:[#allocation3 + $0x78] sm:$0xff]
        %v8907 = vld [vmem:[#allocation3 + $0x80] sm:$0xf]
        %v8908 = vld [vmem:[#allocation3 + $0x84] sm:$0xff]
        %v8909 = vld [vmem:[#allocation3 + $0x8c] sm:$0xf]
        %v8910 = vld [vmem:[#allocation3 + $0x90] sm:$0xff]
        %v8911 = vld [vmem:[#allocation3 + $0x98] sm:$0xf]
        %v8912 = vld [vmem:[#allocation3 + $0x9c] sm:$0xff]
        %v8913 = vld [vmem:[#allocation3 + $0xa4] sm:$0xf]
        %v8914 = vld [vmem:[#allocation3 + $0xa8] sm:$0xff]
        %v8915 = vld [vmem:[#allocation3 + $0xb0] sm:$0xf]
        %v8916 = vld [vmem:[#allocation3 + $0xb4] sm:$0xff]
        %v8917 = vld [vmem:[#allocation3 + $0xbc] sm:$0xf]
        %v8918 = vld [vmem:[#allocation3 + $0xc0] sm:$0xff]
        %v8919 = vld [vmem:[#allocation3 + $0xc8] sm:$0xf]
        %v8920 = vld [vmem:[#allocation3 + $0xcc] sm:$0xff]
        %v8921 = vld [vmem:[#allocation3 + $0xd4] sm:$0xf]
        %v8922 = vld [vmem:[#allocation3 + $0xd8] sm:$0xff]
        %v8923 = vld [vmem:[#allocation3 + $0xe0] sm:$0xf]
        %v8924 = vld [vmem:[#allocation3 + $0xe4] sm:$0xff]
        %v8925 = vld [vmem:[#allocation3 + $0xec] sm:$0xf]
        %v8926 = vld [vmem:[#allocation3 + $0xf0] sm:$0xff]
        %v8927 = vld [vmem:[#allocation3 + $0xf8] sm:$0xf]
        %v8928 = vld [vmem:[#allocation3 + $0xfc] sm:$0xff]
        %v8929 = vld [vmem:[#allocation3 + $0x104] sm:$0xf]
        %v8930 = vld [vmem:[#allocation3 + $0x108] sm:$0xff]
        %v8931 = vld [vmem:[#allocation3 + $0x110] sm:$0xf]
        %v8932 = vld [vmem:[#allocation3 + $0x114] sm:$0xff]
        %v8933 = vld [vmem:[#allocation3 + $0x11c] sm:$0xf]
        %v8934 = vld [vmem:[#allocation3 + $0x120] sm:$0xff]
        %v8935 = vld [vmem:[#allocation3 + $0x128] sm:$0xf]
        %v8936 = vld [vmem:[#allocation3 + $0x12c] sm:$0xff]
        %v8937 = vld [vmem:[#allocation3 + $0x134] sm:$0xf]
        %v8938 = vld [vmem:[#allocation3 + $0x138] sm:$0xff]
        %v8939 = vld [vmem:[#allocation3 + $0x140] sm:$0xf]
        %v8940 = vld [vmem:[#allocation3 + $0x144] sm:$0xff]
        %v8941 = vld [vmem:[#allocation3 + $0x14c] sm:$0xf]
        %v8942 = vld [vmem:[#allocation3 + $0x150] sm:$0xff]
        %v8943 = vld [vmem:[#allocation3 + $0x158] sm:$0xf]
        %v8944 = vld [vmem:[#allocation3 + $0x15c] sm:$0xff]
        %v8945 = vld [vmem:[#allocation3 + $0x164] sm:$0xf]
        %v8946 = vld [vmem:[#allocation3 + $0x168] sm:$0xff]
        %v8947 = vld [vmem:[#allocation3 + $0x170] sm:$0xf]
        %v8948 = vld [vmem:[#allocation3 + $0x174] sm:$0xff]
        %v8949 = vld [vmem:[#allocation3 + $0x17c] sm:$0xf]
        %v8950 = vld [vmem:[#allocation3 + $0x180] sm:$0xff]
        %v8951 = vld [vmem:[#allocation3 + $0x188] sm:$0xf]
        %v8952 = vld [vmem:[#allocation3 + $0x18c] sm:$0xff]
        %v8953 = vld [vmem:[#allocation3 + $0x194] sm:$0xf]
        %v8954 = vld [vmem:[#allocation3 + $0x198] sm:$0xff]
        %v8955 = vld [vmem:[#allocation3 + $0x1a0] sm:$0xf]
        %v8956 = vld [vmem:[#allocation3 + $0x1a4] sm:$0xff]
        %v8957 = vld [vmem:[#allocation3 + $0x1ac] sm:$0xf]
        %v8958 = vld [vmem:[%s11] sm:$0xff]
        %v8959 = vld [vmem:[%s11 + $0x8] sm:$0xff]
        %v8960 = vld [vmem:[%s11 + $0x10] sm:$0xff]
        %v8961 = vld [vmem:[%s11 + $0x18] sm:$0xff]
        %8963 = vset.pattern.permute.xlu0 0
        %8964 = vperm.xlu0 %8963, %v8958
        %v8965 = vpop.permute.xlu0 %8964
        %8968 = vset.pattern.permute.xlu0 0
        %8969 = vperm.xlu0 %8968, %v8959
        %v8970 = vpop.permute.xlu0 %8969
        %8973 = vset.pattern.permute.xlu0 0
        %8974 = vperm.xlu0 %8973, %v8960
        %v8975 = vpop.permute.xlu0 %8974
        %8978 = vset.pattern.permute.xlu0 0
        %8979 = vperm.xlu0 %8978, %v8961
        %v8980 = vpop.permute.xlu0 %8979
        %v8990 = vunpack.c.l.b16 %v8878
        %v8991 = vunpack.c.h.b16 %v8878
        %v8992 = vunpack.c.l.b16 %v8879
        %v8993 = vunpack.c.l.b16 %v8880
        %v8994 = vunpack.c.h.b16 %v8880
        %v8995 = vunpack.c.l.b16 %v8881
        %v8996 = vunpack.c.l.b16 %v8882
        %v8997 = vunpack.c.h.b16 %v8882
        %v8998 = vunpack.c.l.b16 %v8883
        %v8999 = vunpack.c.l.b16 %v8884
        %v9000 = vunpack.c.h.b16 %v8884
        %v9001 = vunpack.c.l.b16 %v8885
        %v9002 = vpack.c.b16 %v8993, %v8990
        %v9003 = vpack.c.b16 %v8994, %v8991
        %v9004 = vpack.c.b16 %v8995, %v8992
        %v9005 = vpack.c.b16 %v8999, %v8996
        %v9006 = vpack.c.b16 %v9000, %v8997
        %v9007 = vpack.c.b16 %v9001, %v8998
        %v9084 = vunpack.c.l.b16 %v8886
        %v9085 = vunpack.c.h.b16 %v8886
        %v9086 = vunpack.c.l.b16 %v8887
        %v9087 = vunpack.c.l.b16 %v8888
        %v9088 = vunpack.c.h.b16 %v8888
        %v9089 = vunpack.c.l.b16 %v8889
        %v9090 = vunpack.c.l.b16 %v8890
        %v9091 = vunpack.c.h.b16 %v8890
        %v9092 = vunpack.c.l.b16 %v8891
        %v9093 = vunpack.c.l.b16 %v8892
        %v9094 = vunpack.c.h.b16 %v8892
        %v9095 = vunpack.c.l.b16 %v8893
        %v9096 = vunpack.c.l.b16 %v8894
        %v9097 = vunpack.c.h.b16 %v8894
        %v9098 = vunpack.c.l.b16 %v8895
        %v9099 = vunpack.c.l.b16 %v8896
        %v9100 = vunpack.c.h.b16 %v8896
        %v9101 = vunpack.c.l.b16 %v8897
        %v9102 = vunpack.c.l.b16 %v8898
        %v9103 = vunpack.c.h.b16 %v8898
        %v9104 = vunpack.c.l.b16 %v8899
        %v9105 = vunpack.c.l.b16 %v8900
        %v9106 = vunpack.c.h.b16 %v8900
        %v9107 = vunpack.c.l.b16 %v8901
        %v9108 = vunpack.c.l.b16 %v8902
        %v9109 = vunpack.c.h.b16 %v8902
        %v9110 = vunpack.c.l.b16 %v8903
        %v9111 = vunpack.c.l.b16 %v8904
        %v9112 = vunpack.c.h.b16 %v8904
        %v9113 = vunpack.c.l.b16 %v8905
        %v9114 = vunpack.c.l.b16 %v8906
        %v9115 = vunpack.c.h.b16 %v8906
        %v9116 = vunpack.c.l.b16 %v8907
        %v9117 = vunpack.c.l.b16 %v8908
        %v9118 = vunpack.c.h.b16 %v8908
        %v9119 = vunpack.c.l.b16 %v8909
        %v9120 = vunpack.c.l.b16 %v8910
        %v9121 = vunpack.c.h.b16 %v8910
        %v9122 = vunpack.c.l.b16 %v8911
        %v9123 = vunpack.c.l.b16 %v8912
        %v9124 = vunpack.c.h.b16 %v8912
        %v9125 = vunpack.c.l.b16 %v8913
        %v9126 = vunpack.c.l.b16 %v8914
        %v9127 = vunpack.c.h.b16 %v8914
        %v9128 = vunpack.c.l.b16 %v8915
        %v9129 = vunpack.c.l.b16 %v8916
        %v9130 = vunpack.c.h.b16 %v8916
        %v9131 = vunpack.c.l.b16 %v8917
        %v9132 = vunpack.c.l.b16 %v8918
        %v9133 = vunpack.c.h.b16 %v8918
        %v9134 = vunpack.c.l.b16 %v8919
        %v9135 = vunpack.c.l.b16 %v8920
        %v9136 = vunpack.c.h.b16 %v8920
        %v9137 = vunpack.c.l.b16 %v8921
        %v9138 = vunpack.c.l.b16 %v8922
        %v9139 = vunpack.c.h.b16 %v8922
        %v9140 = vunpack.c.l.b16 %v8923
        %v9141 = vunpack.c.l.b16 %v8924
        %v9142 = vunpack.c.h.b16 %v8924
        %v9143 = vunpack.c.l.b16 %v8925
        %v9144 = vunpack.c.l.b16 %v8926
        %v9145 = vunpack.c.h.b16 %v8926
        %v9146 = vunpack.c.l.b16 %v8927
        %v9147 = vunpack.c.l.b16 %v8928
        %v9148 = vunpack.c.h.b16 %v8928
        %v9149 = vunpack.c.l.b16 %v8929
        %v9150 = vunpack.c.l.b16 %v8930
        %v9151 = vunpack.c.h.b16 %v8930
        %v9152 = vunpack.c.l.b16 %v8931
        %v9153 = vunpack.c.l.b16 %v8932
        %v9154 = vunpack.c.h.b16 %v8932
        %v9155 = vunpack.c.l.b16 %v8933
        %v9156 = vunpack.c.l.b16 %v8934
        %v9157 = vunpack.c.h.b16 %v8934
        %v9158 = vunpack.c.l.b16 %v8935
        %v9159 = vunpack.c.l.b16 %v8936
        %v9160 = vunpack.c.h.b16 %v8936
        %v9161 = vunpack.c.l.b16 %v8937
        %v9162 = vunpack.c.l.b16 %v8938
        %v9163 = vunpack.c.h.b16 %v8938
        %v9164 = vunpack.c.l.b16 %v8939
        %v9165 = vunpack.c.l.b16 %v8940
        %v9166 = vunpack.c.h.b16 %v8940
        %v9167 = vunpack.c.l.b16 %v8941
        %v9168 = vunpack.c.l.b16 %v8942
        %v9169 = vunpack.c.h.b16 %v8942
        %v9170 = vunpack.c.l.b16 %v8943
        %v9171 = vunpack.c.l.b16 %v8944
        %v9172 = vunpack.c.h.b16 %v8944
        %v9173 = vunpack.c.l.b16 %v8945
        %v9174 = vunpack.c.l.b16 %v8946
        %v9175 = vunpack.c.h.b16 %v8946
        %v9176 = vunpack.c.l.b16 %v8947
        %v9177 = vunpack.c.l.b16 %v8948
        %v9178 = vunpack.c.h.b16 %v8948
        %v9179 = vunpack.c.l.b16 %v8949
        %v9180 = vunpack.c.l.b16 %v8950
        %v9181 = vunpack.c.h.b16 %v8950
        %v9182 = vunpack.c.l.b16 %v8951
        %v9183 = vunpack.c.l.b16 %v8952
        %v9184 = vunpack.c.h.b16 %v8952
        %v9185 = vunpack.c.l.b16 %v8953
        %v9186 = vunpack.c.l.b16 %v8954
        %v9187 = vunpack.c.h.b16 %v8954
        %v9188 = vunpack.c.l.b16 %v8955
        %v9189 = vunpack.c.l.b16 %v8956
        %v9190 = vunpack.c.h.b16 %v8956
        %v9191 = vunpack.c.l.b16 %v8957
        %v9192 = vpack.c.b16 %v9087, %v9084
        %v9193 = vpack.c.b16 %v9088, %v9085
        %v9194 = vpack.c.b16 %v9089, %v9086
        %v9195 = vpack.c.b16 %v9093, %v9090
        %v9196 = vpack.c.b16 %v9094, %v9091
        %v9197 = vpack.c.b16 %v9095, %v9092
        %v9198 = vpack.c.b16 %v9099, %v9096
        %v9199 = vpack.c.b16 %v9100, %v9097
        %v9200 = vpack.c.b16 %v9101, %v9098
        %v9201 = vpack.c.b16 %v9105, %v9102
        %v9202 = vpack.c.b16 %v9106, %v9103
        %v9203 = vpack.c.b16 %v9107, %v9104
        %v9204 = vpack.c.b16 %v9111, %v9108
        %v9205 = vpack.c.b16 %v9112, %v9109
        %v9206 = vpack.c.b16 %v9113, %v9110
        %v9207 = vpack.c.b16 %v9117, %v9114
        %v9208 = vpack.c.b16 %v9118, %v9115
        %v9209 = vpack.c.b16 %v9119, %v9116
        %v9210 = vpack.c.b16 %v9123, %v9120
        %v9211 = vpack.c.b16 %v9124, %v9121
        %v9212 = vpack.c.b16 %v9125, %v9122
        %v9213 = vpack.c.b16 %v9129, %v9126
        %v9214 = vpack.c.b16 %v9130, %v9127
        %v9215 = vpack.c.b16 %v9131, %v9128
        %v9216 = vpack.c.b16 %v9135, %v9132
        %v9217 = vpack.c.b16 %v9136, %v9133
        %v9218 = vpack.c.b16 %v9137, %v9134
        %v9219 = vpack.c.b16 %v9141, %v9138
        %v9220 = vpack.c.b16 %v9142, %v9139
        %v9221 = vpack.c.b16 %v9143, %v9140
        %v9222 = vpack.c.b16 %v9147, %v9144
        %v9223 = vpack.c.b16 %v9148, %v9145
        %v9224 = vpack.c.b16 %v9149, %v9146
        %v9225 = vpack.c.b16 %v9153, %v9150
        %v9226 = vpack.c.b16 %v9154, %v9151
        %v9227 = vpack.c.b16 %v9155, %v9152
        %v9228 = vpack.c.b16 %v9159, %v9156
        %v9229 = vpack.c.b16 %v9160, %v9157
        %v9230 = vpack.c.b16 %v9161, %v9158
        %v9231 = vpack.c.b16 %v9165, %v9162
        %v9232 = vpack.c.b16 %v9166, %v9163
        %v9233 = vpack.c.b16 %v9167, %v9164
        %v9234 = vpack.c.b16 %v9171, %v9168
        %v9235 = vpack.c.b16 %v9172, %v9169
        %v9236 = vpack.c.b16 %v9173, %v9170
        %v9237 = vpack.c.b16 %v9177, %v9174
        %v9238 = vpack.c.b16 %v9178, %v9175
        %v9239 = vpack.c.b16 %v9179, %v9176
        %v9240 = vpack.c.b16 %v9183, %v9180
        %v9241 = vpack.c.b16 %v9184, %v9181
        %v9242 = vpack.c.b16 %v9185, %v9182
        %v9243 = vpack.c.b16 %v9189, %v9186
        %v9244 = vpack.c.b16 %v9190, %v9187
        %v9245 = vpack.c.b16 %v9191, %v9188
        %v9301 = vsel %vm4725, %v9004, 0
        %v9304 = vsel %vm4725, %v9007, 0
        %9306 = vmatprep.subr.bf16.mxu0 %v9214
        %9307 = vmatpush1.bf16.msra.mxu0 %v9213
        %9308 = vmatprep.subr.bf16.mxu0 %v9211
        %9309 = vmatpush1.bf16.msra.mxu0 %v9210
        %9310 = vmatprep.subr.bf16.mxu0 %v9208
        %9311 = vmatpush1.bf16.msra.mxu0 %v9207
        %9312 = vmatprep.subr.bf16.mxu0 %v9205
        %9313 = vmatpush1.bf16.msra.mxu0 %v9204
        %9314 = vmatprep.subr.bf16.mxu0 %v9202
        %9315 = vmatpush1.bf16.msra.mxu0 %v9201
        %9316 = vmatprep.subr.bf16.mxu0 %v9199
        %9317 = vmatpush1.bf16.msra.mxu0 %v9198
        %9318 = vmatprep.subr.bf16.mxu0 %v9196
        %9319 = vmatpush1.bf16.msra.mxu0 %v9195
        %9320 = vmatprep.subr.bf16.mxu0 %v9193
        %9321 = vmatpush1.bf16.msra.mxu0 %v9192
        %9322 = vmatprep.subr.bf16.mxu0 %v9238
        %9323 = vmatpush2.bf16.msra.mxu0 %v9237
        %9324 = vmatprep.subr.bf16.mxu0 %v9235
        %9325 = vmatpush2.bf16.msra.mxu0 %v9234
        %9326 = vmatprep.subr.bf16.mxu0 %v9232
        %9327 = vmatpush2.bf16.msra.mxu0 %v9231
        %9328 = vmatprep.subr.bf16.mxu0 %v9229
        %9329 = vmatpush2.bf16.msra.mxu0 %v9228
        %9330 = vmatprep.subr.bf16.mxu0 %v9226
        %9331 = vmatpush2.bf16.msra.mxu0 %v9225
        %9332 = vmatprep.subr.bf16.mxu0 %v9223
        %9333 = vmatpush2.bf16.msra.mxu0 %v9222
        %9334 = vmatprep.subr.bf16.mxu0 %v9220
        %9335 = vmatpush2.bf16.msra.mxu0 %v9219
        %9336 = vmatprep.subr.bf16.mxu0 %v9217
        %9337 = vmatpush2.bf16.msra.mxu0 %v9216
        %9338 = vmatprep.mubr.bf16.mxu0 %v9003
        %9339 = vmatmul.mubr.bf16.gmra.mxu0 %v9002
        %v9340 = vpop.f32.mrf.mxu0
        %v9341 = vadd.f32 %v8965, %v9340
        %v9342 = vpop.f32.mrf.mxu0
        %v9343 = vadd.f32 %v8965, %v9342
        %v9344 = vpop.f32.mrf.mxu0
        %v9345 = vadd.f32 %v8970, %v9344
        %v9346 = vpop.f32.mrf.mxu0
        %v9347 = vadd.f32 %v8970, %v9346
        %9348 = vmatprep.mubr.bf16.mxu0 %v9006
        %9349 = vmatmul.mubr.bf16.gmra.mxu0 %v9005
        %v9350 = vpop.f32.mrf.mxu0
        %v9351 = vadd.f32 %v8975, %v9350
        %v9352 = vpop.f32.mrf.mxu0
        %v9353 = vadd.f32 %v8975, %v9352
        %v9354 = vpop.f32.mrf.mxu0
        %v9355 = vadd.f32 %v8980, %v9354
        %v9356 = vpop.f32.mrf.mxu0
        %v9357 = vadd.f32 %v8980, %v9356
        %9358 = vdwg.mxu0
        %9359 = vmatprep.subr.bf16.mxu0 0
        %9360 = vmatpush1.bf16.msra.mxu0 0
        %9361 = vmatprep.subr.bf16.mxu0 0
        %9362 = vmatpush1.bf16.msra.mxu0 0
        %9363 = vmatprep.subr.bf16.mxu0 0
        %9364 = vmatpush1.bf16.msra.mxu0 0
        %9365 = vmatprep.subr.bf16.mxu0 0
        %9366 = vmatpush1.bf16.msra.mxu0 0
        %9367 = vmatprep.subr.bf16.mxu0 0
        %9368 = vmatpush1.bf16.msra.mxu0 0
        %9369 = vmatprep.subr.bf16.mxu0 0
        %9370 = vmatpush1.bf16.msra.mxu0 0
        %9371 = vmatprep.subr.bf16.mxu0 %v9244
        %9372 = vmatpush1.bf16.msra.mxu0 %v9243
        %9373 = vmatprep.subr.bf16.mxu0 %v9241
        %9374 = vmatpush1.bf16.msra.mxu0 %v9240
        %9375 = vmatprep.subr.bf16.mxu0 0
        %9376 = vmatpush2.bf16.msra.mxu0 0
        %9377 = vmatprep.subr.bf16.mxu0 0
        %9378 = vmatpush2.bf16.msra.mxu0 0
        %9379 = vmatprep.subr.bf16.mxu0 0
        %9380 = vmatpush2.bf16.msra.mxu0 0
        %9381 = vmatprep.subr.bf16.mxu0 0
        %9382 = vmatpush2.bf16.msra.mxu0 0
        %9383 = vmatprep.subr.bf16.mxu0 0
        %9384 = vmatpush2.bf16.msra.mxu0 0
        %9385 = vmatprep.subr.bf16.mxu0 0
        %9386 = vmatpush2.bf16.msra.mxu0 0
        %9387 = vmatprep.subr.bf16.mxu0 0
        %9388 = vmatpush2.bf16.msra.mxu0 0
        %9389 = vmatprep.subr.bf16.mxu0 0
        %9390 = vmatpush2.bf16.msra.mxu0 0
        %9391 = vmatprep.mubr.bf16.mxu0 0
        %9392 = vmatmul.mubr.bf16.gmra.mxu0 %v9301
        %v9393 = vpop.f32.mrf.mxu0
        %v9394 = vadd.f32 %v9341, %v9393
        %v9395 = vpop.f32.mrf.mxu0
        %v9396 = vadd.f32 %v9343, %v9395
        %v9397 = vpop.f32.mrf.mxu0
        %v9398 = vadd.f32 %v9345, %v9397
        %v9399 = vpop.f32.mrf.mxu0
        %v9400 = vadd.f32 %v9347, %v9399
        %9401 = vmatprep.mubr.bf16.mxu0 0
        %9402 = vmatmul.mubr.bf16.gmra.mxu0 %v9304
        %v9403 = vpop.f32.mrf.mxu0
        %v9404 = vadd.f32 %v9351, %v9403
        %v9405 = vpop.f32.mrf.mxu0
        %v9406 = vadd.f32 %v9353, %v9405
        %v9407 = vpop.f32.mrf.mxu0
        %v9408 = vadd.f32 %v9355, %v9407
        %v9409 = vpop.f32.mrf.mxu0
        %v9410 = vadd.f32 %v9357, %v9409
        %9411 = vdwg.mxu0
        %9412 = vmatprep.subr.bf16.mxu0 0
        %9413 = vmatpush1.bf16.msra.mxu0 %v9215
        %9414 = vmatprep.subr.bf16.mxu0 0
        %9415 = vmatpush1.bf16.msra.mxu0 %v9212
        %9416 = vmatprep.subr.bf16.mxu0 0
        %9417 = vmatpush1.bf16.msra.mxu0 %v9209
        %9418 = vmatprep.subr.bf16.mxu0 0
        %9419 = vmatpush1.bf16.msra.mxu0 %v9206
        %9420 = vmatprep.subr.bf16.mxu0 0
        %9421 = vmatpush1.bf16.msra.mxu0 %v9203
        %9422 = vmatprep.subr.bf16.mxu0 0
        %9423 = vmatpush1.bf16.msra.mxu0 %v9200
        %9424 = vmatprep.subr.bf16.mxu0 0
        %9425 = vmatpush1.bf16.msra.mxu0 %v9197
        %9426 = vmatprep.subr.bf16.mxu0 0
        %9427 = vmatpush1.bf16.msra.mxu0 %v9194
        %9428 = vmatprep.subr.bf16.mxu0 0
        %9429 = vmatpush2.bf16.msra.mxu0 %v9239
        %9430 = vmatprep.subr.bf16.mxu0 0
        %9431 = vmatpush2.bf16.msra.mxu0 %v9236
        %9432 = vmatprep.subr.bf16.mxu0 0
        %9433 = vmatpush2.bf16.msra.mxu0 %v9233
        %9434 = vmatprep.subr.bf16.mxu0 0
        %9435 = vmatpush2.bf16.msra.mxu0 %v9230
        %9436 = vmatprep.subr.bf16.mxu0 0
        %9437 = vmatpush2.bf16.msra.mxu0 %v9227
        %9438 = vmatprep.subr.bf16.mxu0 0
        %9439 = vmatpush2.bf16.msra.mxu0 %v9224
        %9440 = vmatprep.subr.bf16.mxu0 0
        %9441 = vmatpush2.bf16.msra.mxu0 %v9221
        %9442 = vmatprep.subr.bf16.mxu0 0
        %9443 = vmatpush2.bf16.msra.mxu0 %v9218
        %9444 = vmatprep.mubr.bf16.mxu0 %v9003
        %9445 = vmatmul.mubr.bf16.gmra.mxu0 %v9002
        %v9446 = vpop.f32.mrf.mxu0
        %v9447 = vadd.f32 %v8965, %v9446
        %v9448 = vpop.f32.mrf.mxu0
        %v9449 = vpop.f32.mrf.mxu0
        %v9450 = vadd.f32 %v8970, %v9449
        %v9451 = vpop.f32.mrf.mxu0
        %9452 = vmatprep.mubr.bf16.mxu0 %v9006
        %9453 = vmatmul.mubr.bf16.gmra.mxu0 %v9005
        %v9454 = vpop.f32.mrf.mxu0
        %v9455 = vadd.f32 %v8975, %v9454
        %v9456 = vpop.f32.mrf.mxu0
        %v9457 = vpop.f32.mrf.mxu0
        %v9458 = vadd.f32 %v8980, %v9457
        %v9459 = vpop.f32.mrf.mxu0
        %9460 = vdwg.mxu0
        %9461 = vmatprep.subr.bf16.mxu0 0
        %9462 = vmatpush1.bf16.msra.mxu0 0
        %9463 = vmatprep.subr.bf16.mxu0 0
        %9464 = vmatpush1.bf16.msra.mxu0 0
        %9465 = vmatprep.subr.bf16.mxu0 0
        %9466 = vmatpush1.bf16.msra.mxu0 0
        %9467 = vmatprep.subr.bf16.mxu0 0
        %9468 = vmatpush1.bf16.msra.mxu0 0
        %9469 = vmatprep.subr.bf16.mxu0 0
        %9470 = vmatpush1.bf16.msra.mxu0 0
        %9471 = vmatprep.subr.bf16.mxu0 0
        %9472 = vmatpush1.bf16.msra.mxu0 0
        %9473 = vmatprep.subr.bf16.mxu0 0
        %9474 = vmatpush1.bf16.msra.mxu0 %v9245
        %9475 = vmatprep.subr.bf16.mxu0 0
        %9476 = vmatpush1.bf16.msra.mxu0 %v9242
        %9477 = vmatprep.subr.bf16.mxu0 0
        %9478 = vmatpush2.bf16.msra.mxu0 0
        %9479 = vmatprep.subr.bf16.mxu0 0
        %9480 = vmatpush2.bf16.msra.mxu0 0
        %9481 = vmatprep.subr.bf16.mxu0 0
        %9482 = vmatpush2.bf16.msra.mxu0 0
        %9483 = vmatprep.subr.bf16.mxu0 0
        %9484 = vmatpush2.bf16.msra.mxu0 0
        %9485 = vmatprep.subr.bf16.mxu0 0
        %9486 = vmatpush2.bf16.msra.mxu0 0
        %9487 = vmatprep.subr.bf16.mxu0 0
        %9488 = vmatpush2.bf16.msra.mxu0 0
        %9489 = vmatprep.subr.bf16.mxu0 0
        %9490 = vmatpush2.bf16.msra.mxu0 0
        %9491 = vmatprep.subr.bf16.mxu0 0
        %9492 = vmatpush2.bf16.msra.mxu0 0
        %9493 = vmatprep.mubr.bf16.mxu0 0
        %9494 = vmatmul.mubr.bf16.gmra.mxu0 %v9301
        %v9495 = vpop.f32.mrf.mxu0
        %v9496 = vadd.f32 %v9447, %v9495
        %v9497 = vpop.f32.mrf.mxu0
        %v9498 = vpop.f32.mrf.mxu0
        %v9499 = vadd.f32 %v9450, %v9498
        %v9500 = vpop.f32.mrf.mxu0
        %9501 = vmatprep.mubr.bf16.mxu0 0
        %9502 = vmatmul.mubr.bf16.gmra.mxu0 %v9304
        %v9503 = vpop.f32.mrf.mxu0
        %v9504 = vadd.f32 %v9455, %v9503
        %v9505 = vpop.f32.mrf.mxu0
        %v9506 = vpop.f32.mrf.mxu0
        %v9507 = vadd.f32 %v9458, %v9506
        %v9508 = vpop.f32.mrf.mxu0
        %9509 = vdwg.mxu0
        %v9510 = vmul.f32 %v9394, %v3473
        %v9511 = vmul.f32 %v9396, %v3477
        %v9512 = vmul.f32 %v9496, %v3481
        %v9513 = vmul.f32 %v9398, %v3473
        %v9514 = vmul.f32 %v9400, %v3477
        %v9515 = vmul.f32 %v9499, %v3481
        %v9516 = vmul.f32 %v9404, %v3473
        %v9517 = vmul.f32 %v9406, %v3477
        %v9518 = vmul.f32 %v9504, %v3481
        %v9519 = vmul.f32 %v9408, %v3473
        %v9520 = vmul.f32 %v9410, %v3477
        %v9521 = vmul.f32 %v9507, %v3481
        %v9522 = vld [vmem:[#allocation2] sm:$0xff]
        %v9523 = vld [vmem:[#allocation2 + $0x8] sm:$0xff]
        %v9524 = vld [vmem:[#allocation2 + $0x10] sm:$0xff]
        %v9525 = vld [vmem:[#allocation2 + $0x18] sm:$0xff]
        %v9526 = vld [vmem:[#allocation2 + $0x20] sm:$0xff]
        %v9527 = vld [vmem:[#allocation2 + $0x28] sm:$0xff]
        %v9528 = vld [vmem:[#allocation2 + $0x30] sm:$0xff]
        %v9529 = vld [vmem:[#allocation2 + $0x38] sm:$0xff]
        %v9530 = vld [vmem:[#allocation2 + $0x40] sm:$0xff]
        %v9531 = vld [vmem:[#allocation2 + $0x48] sm:$0xff]
        %v9532 = vld [vmem:[#allocation2 + $0x50] sm:$0xff]
        %v9533 = vld [vmem:[#allocation2 + $0x58] sm:$0xff]
        %v9534 = vadd.f32 %v9510, %v9522
        %v9535 = vadd.f32 %v9511, %v9523
        %v9536 = vadd.f32 %v9512, %v9524
        %v9537 = vadd.f32 %v9513, %v9525
        %v9538 = vadd.f32 %v9514, %v9526
        %v9539 = vadd.f32 %v9515, %v9527
        %v9540 = vadd.f32 %v9516, %v9528
        %v9541 = vadd.f32 %v9517, %v9529
        %v9542 = vadd.f32 %v9518, %v9530
        %v9543 = vadd.f32 %v9519, %v9531
        %v9544 = vadd.f32 %v9520, %v9532
        %v9545 = vadd.f32 %v9521, %v9533
        %9546 = vst [vmem:[#allocation2] sm:$0xff] %v9534
        %9547 = vst [vmem:[#allocation2 + $0x8] sm:$0xff] %v9535
        %9548 = vst [vmem:[#allocation2 + $0x10] sm:$0xff] %v9536
        %9549 = vst [vmem:[#allocation2 + $0x18] sm:$0xff] %v9537
        %9550 = vst [vmem:[#allocation2 + $0x20] sm:$0xff] %v9538
        %9551 = vst [vmem:[#allocation2 + $0x28] sm:$0xff] %v9539
        %9552 = vst [vmem:[#allocation2 + $0x30] sm:$0xff] %v9540
        %9553 = vst [vmem:[#allocation2 + $0x38] sm:$0xff] %v9541
        %9554 = vst [vmem:[#allocation2 + $0x40] sm:$0xff] %v9542
        %9555 = vst [vmem:[#allocation2 + $0x48] sm:$0xff] %v9543
        %9556 = vst [vmem:[#allocation2 + $0x50] sm:$0xff] %v9544
        %9557 = vst [vmem:[#allocation2 + $0x58] sm:$0xff] %v9545
        %v9558 = vld [vmem:[#allocation2] sm:$0xff]
        %v9559 = vld [vmem:[#allocation2 + $0x8] sm:$0xff]
        %v9560 = vld [vmem:[#allocation2 + $0x10] sm:$0xff]
        %v9561 = vld [vmem:[#allocation2 + $0x18] sm:$0xff]
        %v9562 = vld [vmem:[#allocation2 + $0x20] sm:$0xff]
        %v9563 = vld [vmem:[#allocation2 + $0x28] sm:$0xff]
        %v9564 = vld [vmem:[#allocation2 + $0x30] sm:$0xff]
        %v9565 = vld [vmem:[#allocation2 + $0x38] sm:$0xff]
        %v9566 = vld [vmem:[#allocation2 + $0x40] sm:$0xff]
        %v9567 = vld [vmem:[#allocation2 + $0x48] sm:$0xff]
        %v9568 = vld [vmem:[#allocation2 + $0x50] sm:$0xff]
        %v9569 = vld [vmem:[#allocation2 + $0x58] sm:$0xff]
        %9570 = vrot.lane.b32.xlu0 %v9558, 19
        %v9571 = vpop.permute.xlu0 %9570
        %9572 = vrot.lane.b32.xlu0 %v9561, 19
        %v9573 = vpop.permute.xlu0 %9572
        %9574 = vrot.lane.b32.xlu0 %v9564, 19
        %v9575 = vpop.permute.xlu0 %9574
        %9576 = vrot.lane.b32.xlu0 %v9567, 19
        %v9577 = vpop.permute.xlu0 %9576
        %9578 = vrot.lane.b32.xlu0 %v9559, 19
        %v9579 = vpop.permute.xlu0 %9578
        %9580 = vrot.lane.b32.xlu0 %v9562, 19
        %v9581 = vpop.permute.xlu0 %9580
        %9582 = vrot.lane.b32.xlu0 %v9565, 19
        %v9583 = vpop.permute.xlu0 %9582
        %9584 = vrot.lane.b32.xlu0 %v9568, 19
        %v9585 = vpop.permute.xlu0 %9584
        %9586 = vrot.lane.b32.xlu0 %v9560, 19
        %v9587 = vpop.permute.xlu0 %9586
        %9588 = vrot.lane.b32.xlu0 %v9563, 19
        %v9589 = vpop.permute.xlu0 %9588
        %9590 = vrot.lane.b32.xlu0 %v9566, 19
        %v9591 = vpop.permute.xlu0 %9590
        %9592 = vrot.lane.b32.xlu0 %v9569, 19
        %v9593 = vpop.permute.xlu0 %9592
        %v9594 = vsel %vm666, %v9579, %v9587
        %v9595 = vsel %vm666, %v9581, %v9589
        %v9596 = vsel %vm666, %v9583, %v9591
        %v9597 = vsel %vm666, %v9585, %v9593
        %v9598 = vsel %vm666, %v9571, %v9579
        %v9599 = vsel %vm666, %v9573, %v9581
        %v9600 = vsel %vm666, %v9575, %v9583
        %v9601 = vsel %vm666, %v9577, %v9585
        %v9602 = vsel %vm666, %v9587, %v9571
        %v9603 = vsel %vm666, %v9589, %v9573
        %v9604 = vsel %vm666, %v9591, %v9575
        %v9605 = vsel %vm666, %v9593, %v9577
        %v9606 = vpack.c.bf16 %v9603, %v9602
        %v9607 = vpack.c.bf16 %v9599, %v9598
        %v9608 = vpack.c.bf16 %v9595, %v9594
        %v9609 = vpack.c.bf16 %v9605, %v9604
        %v9610 = vpack.c.bf16 %v9601, %v9600
        %v9611 = vpack.c.bf16 %v9597, %v9596
        %v9618 = vunpack.c.l.b16 %v9606
        %v9619 = vunpack.c.l.b16 %v9607
        %v9620 = vunpack.c.l.b16 %v9608
        %v9621 = vunpack.c.h.b16 %v9606
        %v9622 = vunpack.c.h.b16 %v9607
        %v9623 = vunpack.c.h.b16 %v9608
        %v9624 = vunpack.c.l.b16 %v9609
        %v9625 = vunpack.c.l.b16 %v9610
        %v9626 = vunpack.c.l.b16 %v9611
        %v9627 = vunpack.c.h.b16 %v9609
        %v9628 = vunpack.c.h.b16 %v9610
        %v9629 = vunpack.c.h.b16 %v9611
        %v9630 = vpack.c.b16 %v9619, %v9618
        %v9631 = vpack.c.b16 %v9620, %v9620
        %v9632 = vpack.c.b16 %v9622, %v9621
        %v9633 = vpack.c.b16 %v9623, %v9623
        %v9634 = vpack.c.b16 %v9625, %v9624
        %v9635 = vpack.c.b16 %v9626, %v9626
        %v9636 = vpack.c.b16 %v9628, %v9627
        %v9637 = vpack.c.b16 %v9629, %v9629
        %9646 = vst [vmem:[#allocation3] sm:$0xff] %v9630
        %9647 = vst [vmem:[#allocation3 + $0x8] sm:$0xf] %v9631
        %9648 = vst [vmem:[#allocation3 + $0xc] sm:$0xff] %v9632
        %9649 = vst [vmem:[#allocation3 + $0x14] sm:$0xf] %v9633
        %9650 = vst [vmem:[#allocation3 + $0x18] sm:$0xff] %v9634
        %9651 = vst [vmem:[#allocation3 + $0x20] sm:$0xf] %v9635
        %9652 = vst [vmem:[#allocation3 + $0x24] sm:$0xff] %v9636
        %9653 = vst [vmem:[#allocation3 + $0x2c] sm:$0xf] %v9637
        %9654 = vrot.lane.b32.xlu0 %v9558, 18
        %v9655 = vpop.permute.xlu0 %9654
        %9656 = vrot.lane.b32.xlu0 %v9561, 18
        %v9657 = vpop.permute.xlu0 %9656
        %9658 = vrot.lane.b32.xlu0 %v9564, 18
        %v9659 = vpop.permute.xlu0 %9658
        %9660 = vrot.lane.b32.xlu0 %v9567, 18
        %v9661 = vpop.permute.xlu0 %9660
        %9662 = vrot.lane.b32.xlu0 %v9559, 18
        %v9663 = vpop.permute.xlu0 %9662
        %9664 = vrot.lane.b32.xlu0 %v9562, 18
        %v9665 = vpop.permute.xlu0 %9664
        %9666 = vrot.lane.b32.xlu0 %v9565, 18
        %v9667 = vpop.permute.xlu0 %9666
        %9668 = vrot.lane.b32.xlu0 %v9568, 18
        %v9669 = vpop.permute.xlu0 %9668
        %9670 = vrot.lane.b32.xlu0 %v9560, 18
        %v9671 = vpop.permute.xlu0 %9670
        %9672 = vrot.lane.b32.xlu0 %v9563, 18
        %v9673 = vpop.permute.xlu0 %9672
        %9674 = vrot.lane.b32.xlu0 %v9566, 18
        %v9675 = vpop.permute.xlu0 %9674
        %9676 = vrot.lane.b32.xlu0 %v9569, 18
        %v9677 = vpop.permute.xlu0 %9676
        %v9678 = vsel %vm835, %v9663, %v9671
        %v9679 = vsel %vm835, %v9665, %v9673
        %v9680 = vsel %vm835, %v9667, %v9675
        %v9681 = vsel %vm835, %v9669, %v9677
        %v9682 = vsel %vm835, %v9655, %v9663
        %v9683 = vsel %vm835, %v9657, %v9665
        %v9684 = vsel %vm835, %v9659, %v9667
        %v9685 = vsel %vm835, %v9661, %v9669
        %v9686 = vsel %vm835, %v9671, %v9655
        %v9687 = vsel %vm835, %v9673, %v9657
        %v9688 = vsel %vm835, %v9675, %v9659
        %v9689 = vsel %vm835, %v9677, %v9661
        %v9690 = vpack.c.bf16 %v9687, %v9686
        %v9691 = vpack.c.bf16 %v9683, %v9682
        %v9692 = vpack.c.bf16 %v9679, %v9678
        %v9693 = vpack.c.bf16 %v9689, %v9688
        %v9694 = vpack.c.bf16 %v9685, %v9684
        %v9695 = vpack.c.bf16 %v9681, %v9680
        %v9702 = vunpack.c.l.b16 %v9690
        %v9703 = vunpack.c.l.b16 %v9691
        %v9704 = vunpack.c.l.b16 %v9692
        %v9705 = vunpack.c.h.b16 %v9690
        %v9706 = vunpack.c.h.b16 %v9691
        %v9707 = vunpack.c.h.b16 %v9692
        %v9708 = vunpack.c.l.b16 %v9693
        %v9709 = vunpack.c.l.b16 %v9694
        %v9710 = vunpack.c.l.b16 %v9695
        %v9711 = vunpack.c.h.b16 %v9693
        %v9712 = vunpack.c.h.b16 %v9694
        %v9713 = vunpack.c.h.b16 %v9695
        %v9714 = vpack.c.b16 %v9703, %v9702
        %v9715 = vpack.c.b16 %v9704, %v9704
        %v9716 = vpack.c.b16 %v9706, %v9705
        %v9717 = vpack.c.b16 %v9707, %v9707
        %v9718 = vpack.c.b16 %v9709, %v9708
        %v9719 = vpack.c.b16 %v9710, %v9710
        %v9720 = vpack.c.b16 %v9712, %v9711
        %v9721 = vpack.c.b16 %v9713, %v9713
        %9730 = vst [vmem:[#allocation3 + $0x30] sm:$0xff] %v9714
        %9731 = vst [vmem:[#allocation3 + $0x38] sm:$0xf] %v9715
        %9732 = vst [vmem:[#allocation3 + $0x3c] sm:$0xff] %v9716
        %9733 = vst [vmem:[#allocation3 + $0x44] sm:$0xf] %v9717
        %9734 = vst [vmem:[#allocation3 + $0x48] sm:$0xff] %v9718
        %9735 = vst [vmem:[#allocation3 + $0x50] sm:$0xf] %v9719
        %9736 = vst [vmem:[#allocation3 + $0x54] sm:$0xff] %v9720
        %9737 = vst [vmem:[#allocation3 + $0x5c] sm:$0xf] %v9721
        %9738 = vrot.lane.b32.xlu0 %v9558, 17
        %v9739 = vpop.permute.xlu0 %9738
        %9740 = vrot.lane.b32.xlu0 %v9561, 17
        %v9741 = vpop.permute.xlu0 %9740
        %9742 = vrot.lane.b32.xlu0 %v9564, 17
        %v9743 = vpop.permute.xlu0 %9742
        %9744 = vrot.lane.b32.xlu0 %v9567, 17
        %v9745 = vpop.permute.xlu0 %9744
        %9746 = vrot.lane.b32.xlu0 %v9559, 17
        %v9747 = vpop.permute.xlu0 %9746
        %9748 = vrot.lane.b32.xlu0 %v9562, 17
        %v9749 = vpop.permute.xlu0 %9748
        %9750 = vrot.lane.b32.xlu0 %v9565, 17
        %v9751 = vpop.permute.xlu0 %9750
        %9752 = vrot.lane.b32.xlu0 %v9568, 17
        %v9753 = vpop.permute.xlu0 %9752
        %9754 = vrot.lane.b32.xlu0 %v9560, 17
        %v9755 = vpop.permute.xlu0 %9754
        %9756 = vrot.lane.b32.xlu0 %v9563, 17
        %v9757 = vpop.permute.xlu0 %9756
        %9758 = vrot.lane.b32.xlu0 %v9566, 17
        %v9759 = vpop.permute.xlu0 %9758
        %9760 = vrot.lane.b32.xlu0 %v9569, 17
        %v9761 = vpop.permute.xlu0 %9760
        %v9762 = vsel %vm1004, %v9747, %v9755
        %v9763 = vsel %vm1004, %v9749, %v9757
        %v9764 = vsel %vm1004, %v9751, %v9759
        %v9765 = vsel %vm1004, %v9753, %v9761
        %v9766 = vsel %vm1004, %v9739, %v9747
        %v9767 = vsel %vm1004, %v9741, %v9749
        %v9768 = vsel %vm1004, %v9743, %v9751
        %v9769 = vsel %vm1004, %v9745, %v9753
        %v9770 = vsel %vm1004, %v9755, %v9739
        %v9771 = vsel %vm1004, %v9757, %v9741
        %v9772 = vsel %vm1004, %v9759, %v9743
        %v9773 = vsel %vm1004, %v9761, %v9745
        %v9774 = vpack.c.bf16 %v9771, %v9770
        %v9775 = vpack.c.bf16 %v9767, %v9766
        %v9776 = vpack.c.bf16 %v9763, %v9762
        %v9777 = vpack.c.bf16 %v9773, %v9772
        %v9778 = vpack.c.bf16 %v9769, %v9768
        %v9779 = vpack.c.bf16 %v9765, %v9764
        %v9786 = vunpack.c.l.b16 %v9774
        %v9787 = vunpack.c.l.b16 %v9775
        %v9788 = vunpack.c.l.b16 %v9776
        %v9789 = vunpack.c.h.b16 %v9774
        %v9790 = vunpack.c.h.b16 %v9775
        %v9791 = vunpack.c.h.b16 %v9776
        %v9792 = vunpack.c.l.b16 %v9777
        %v9793 = vunpack.c.l.b16 %v9778
        %v9794 = vunpack.c.l.b16 %v9779
        %v9795 = vunpack.c.h.b16 %v9777
        %v9796 = vunpack.c.h.b16 %v9778
        %v9797 = vunpack.c.h.b16 %v9779
        %v9798 = vpack.c.b16 %v9787, %v9786
        %v9799 = vpack.c.b16 %v9788, %v9788
        %v9800 = vpack.c.b16 %v9790, %v9789
        %v9801 = vpack.c.b16 %v9791, %v9791
        %v9802 = vpack.c.b16 %v9793, %v9792
        %v9803 = vpack.c.b16 %v9794, %v9794
        %v9804 = vpack.c.b16 %v9796, %v9795
        %v9805 = vpack.c.b16 %v9797, %v9797
        %9814 = vst [vmem:[#allocation3 + $0x60] sm:$0xff] %v9798
        %9815 = vst [vmem:[#allocation3 + $0x68] sm:$0xf] %v9799
        %9816 = vst [vmem:[#allocation3 + $0x6c] sm:$0xff] %v9800
        %9817 = vst [vmem:[#allocation3 + $0x74] sm:$0xf] %v9801
        %9818 = vst [vmem:[#allocation3 + $0x78] sm:$0xff] %v9802
        %9819 = vst [vmem:[#allocation3 + $0x80] sm:$0xf] %v9803
        %9820 = vst [vmem:[#allocation3 + $0x84] sm:$0xff] %v9804
        %9821 = vst [vmem:[#allocation3 + $0x8c] sm:$0xf] %v9805
        %9822 = vrot.lane.b32.xlu0 %v9558, 1
        %v9823 = vpop.permute.xlu0 %9822
        %9824 = vrot.lane.b32.xlu0 %v9561, 1
        %v9825 = vpop.permute.xlu0 %9824
        %9826 = vrot.lane.b32.xlu0 %v9564, 1
        %v9827 = vpop.permute.xlu0 %9826
        %9828 = vrot.lane.b32.xlu0 %v9567, 1
        %v9829 = vpop.permute.xlu0 %9828
        %9830 = vrot.lane.b32.xlu0 %v9559, 1
        %v9831 = vpop.permute.xlu0 %9830
        %9832 = vrot.lane.b32.xlu0 %v9562, 1
        %v9833 = vpop.permute.xlu0 %9832
        %9834 = vrot.lane.b32.xlu0 %v9565, 1
        %v9835 = vpop.permute.xlu0 %9834
        %9836 = vrot.lane.b32.xlu0 %v9568, 1
        %v9837 = vpop.permute.xlu0 %9836
        %9838 = vrot.lane.b32.xlu0 %v9560, 1
        %v9839 = vpop.permute.xlu0 %9838
        %9840 = vrot.lane.b32.xlu0 %v9563, 1
        %v9841 = vpop.permute.xlu0 %9840
        %9842 = vrot.lane.b32.xlu0 %v9566, 1
        %v9843 = vpop.permute.xlu0 %9842
        %9844 = vrot.lane.b32.xlu0 %v9569, 1
        %v9845 = vpop.permute.xlu0 %9844
        %v9846 = vsel %vm1173, %v9831, %v9839
        %v9847 = vsel %vm1173, %v9833, %v9841
        %v9848 = vsel %vm1173, %v9835, %v9843
        %v9849 = vsel %vm1173, %v9837, %v9845
        %v9850 = vsel %vm1173, %v9823, %v9831
        %v9851 = vsel %vm1173, %v9825, %v9833
        %v9852 = vsel %vm1173, %v9827, %v9835
        %v9853 = vsel %vm1173, %v9829, %v9837
        %v9854 = vsel %vm1173, %v9839, %v9823
        %v9855 = vsel %vm1173, %v9841, %v9825
        %v9856 = vsel %vm1173, %v9843, %v9827
        %v9857 = vsel %vm1173, %v9845, %v9829
        %v9858 = vpack.c.bf16 %v9855, %v9854
        %v9859 = vpack.c.bf16 %v9851, %v9850
        %v9860 = vpack.c.bf16 %v9847, %v9846
        %v9861 = vpack.c.bf16 %v9857, %v9856
        %v9862 = vpack.c.bf16 %v9853, %v9852
        %v9863 = vpack.c.bf16 %v9849, %v9848
        %v9870 = vunpack.c.l.b16 %v9858
        %v9871 = vunpack.c.l.b16 %v9859
        %v9872 = vunpack.c.l.b16 %v9860
        %v9873 = vunpack.c.h.b16 %v9858
        %v9874 = vunpack.c.h.b16 %v9859
        %v9875 = vunpack.c.h.b16 %v9860
        %v9876 = vunpack.c.l.b16 %v9861
        %v9877 = vunpack.c.l.b16 %v9862
        %v9878 = vunpack.c.l.b16 %v9863
        %v9879 = vunpack.c.h.b16 %v9861
        %v9880 = vunpack.c.h.b16 %v9862
        %v9881 = vunpack.c.h.b16 %v9863
        %v9882 = vpack.c.b16 %v9871, %v9870
        %v9883 = vpack.c.b16 %v9872, %v9872
        %v9884 = vpack.c.b16 %v9874, %v9873
        %v9885 = vpack.c.b16 %v9875, %v9875
        %v9886 = vpack.c.b16 %v9877, %v9876
        %v9887 = vpack.c.b16 %v9878, %v9878
        %v9888 = vpack.c.b16 %v9880, %v9879
        %v9889 = vpack.c.b16 %v9881, %v9881
        %9898 = vst [vmem:[#allocation3 + $0x90] sm:$0xff] %v9882
        %9899 = vst [vmem:[#allocation3 + $0x98] sm:$0xf] %v9883
        %9900 = vst [vmem:[#allocation3 + $0x9c] sm:$0xff] %v9884
        %9901 = vst [vmem:[#allocation3 + $0xa4] sm:$0xf] %v9885
        %9902 = vst [vmem:[#allocation3 + $0xa8] sm:$0xff] %v9886
        %9903 = vst [vmem:[#allocation3 + $0xb0] sm:$0xf] %v9887
        %9904 = vst [vmem:[#allocation3 + $0xb4] sm:$0xff] %v9888
        %9905 = vst [vmem:[#allocation3 + $0xbc] sm:$0xf] %v9889
        %v9906 = vpack.c.bf16 %v9561, %v9558
        %v9907 = vpack.c.bf16 %v9562, %v9559
        %v9908 = vpack.c.bf16 %v9563, %v9560
        %v9909 = vpack.c.bf16 %v9567, %v9564
        %v9910 = vpack.c.bf16 %v9568, %v9565
        %v9911 = vpack.c.bf16 %v9569, %v9566
        %v9918 = vunpack.c.l.b16 %v9906
        %v9919 = vunpack.c.l.b16 %v9907
        %v9920 = vunpack.c.l.b16 %v9908
        %v9921 = vunpack.c.h.b16 %v9906
        %v9922 = vunpack.c.h.b16 %v9907
        %v9923 = vunpack.c.h.b16 %v9908
        %v9924 = vunpack.c.l.b16 %v9909
        %v9925 = vunpack.c.l.b16 %v9910
        %v9926 = vunpack.c.l.b16 %v9911
        %v9927 = vunpack.c.h.b16 %v9909
        %v9928 = vunpack.c.h.b16 %v9910
        %v9929 = vunpack.c.h.b16 %v9911
        %v9930 = vpack.c.b16 %v9919, %v9918
        %v9931 = vpack.c.b16 %v9920, %v9920
        %v9932 = vpack.c.b16 %v9922, %v9921
        %v9933 = vpack.c.b16 %v9923, %v9923
        %v9934 = vpack.c.b16 %v9925, %v9924
        %v9935 = vpack.c.b16 %v9926, %v9926
        %v9936 = vpack.c.b16 %v9928, %v9927
        %v9937 = vpack.c.b16 %v9929, %v9929
        %9946 = vst [vmem:[#allocation3 + $0xc0] sm:$0xff] %v9930
        %9947 = vst [vmem:[#allocation3 + $0xc8] sm:$0xf] %v9931
        %9948 = vst [vmem:[#allocation3 + $0xcc] sm:$0xff] %v9932
        %9949 = vst [vmem:[#allocation3 + $0xd4] sm:$0xf] %v9933
        %9950 = vst [vmem:[#allocation3 + $0xd8] sm:$0xff] %v9934
        %9951 = vst [vmem:[#allocation3 + $0xe0] sm:$0xf] %v9935
        %9952 = vst [vmem:[#allocation3 + $0xe4] sm:$0xff] %v9936
        %9953 = vst [vmem:[#allocation3 + $0xec] sm:$0xf] %v9937
        %9954 = vrot.lane.b32.xlu0 %v9558, 127
        %v9955 = vpop.permute.xlu0 %9954
        %9956 = vrot.lane.b32.xlu0 %v9561, 127
        %v9957 = vpop.permute.xlu0 %9956
        %9958 = vrot.lane.b32.xlu0 %v9564, 127
        %v9959 = vpop.permute.xlu0 %9958
        %9960 = vrot.lane.b32.xlu0 %v9567, 127
        %v9961 = vpop.permute.xlu0 %9960
        %9962 = vrot.lane.b32.xlu0 %v9559, 127
        %v9963 = vpop.permute.xlu0 %9962
        %9964 = vrot.lane.b32.xlu0 %v9562, 127
        %v9965 = vpop.permute.xlu0 %9964
        %9966 = vrot.lane.b32.xlu0 %v9565, 127
        %v9967 = vpop.permute.xlu0 %9966
        %9968 = vrot.lane.b32.xlu0 %v9568, 127
        %v9969 = vpop.permute.xlu0 %9968
        %9970 = vrot.lane.b32.xlu0 %v9560, 127
        %v9971 = vpop.permute.xlu0 %9970
        %9972 = vrot.lane.b32.xlu0 %v9563, 127
        %v9973 = vpop.permute.xlu0 %9972
        %9974 = vrot.lane.b32.xlu0 %v9566, 127
        %v9975 = vpop.permute.xlu0 %9974
        %9976 = vrot.lane.b32.xlu0 %v9569, 127
        %v9977 = vpop.permute.xlu0 %9976
        %v9978 = vsel %vm1438, %v9963, %v9971
        %v9979 = vsel %vm1438, %v9965, %v9973
        %v9980 = vsel %vm1438, %v9967, %v9975
        %v9981 = vsel %vm1438, %v9969, %v9977
        %v9982 = vsel %vm1438, %v9955, %v9963
        %v9983 = vsel %vm1438, %v9957, %v9965
        %v9984 = vsel %vm1438, %v9959, %v9967
        %v9985 = vsel %vm1438, %v9961, %v9969
        %v9986 = vsel %vm1438, %v9971, %v9955
        %v9987 = vsel %vm1438, %v9973, %v9957
        %v9988 = vsel %vm1438, %v9975, %v9959
        %v9989 = vsel %vm1438, %v9977, %v9961
        %v9990 = vpack.c.bf16 %v9983, %v9982
        %v9991 = vpack.c.bf16 %v9979, %v9978
        %v9992 = vpack.c.bf16 %v9987, %v9986
        %v9993 = vpack.c.bf16 %v9985, %v9984
        %v9994 = vpack.c.bf16 %v9981, %v9980
        %v9995 = vpack.c.bf16 %v9989, %v9988
        %v10002 = vunpack.c.l.b16 %v9990
        %v10003 = vunpack.c.l.b16 %v9991
        %v10004 = vunpack.c.l.b16 %v9992
        %v10005 = vunpack.c.h.b16 %v9990
        %v10006 = vunpack.c.h.b16 %v9991
        %v10007 = vunpack.c.h.b16 %v9992
        %v10008 = vunpack.c.l.b16 %v9993
        %v10009 = vunpack.c.l.b16 %v9994
        %v10010 = vunpack.c.l.b16 %v9995
        %v10011 = vunpack.c.h.b16 %v9993
        %v10012 = vunpack.c.h.b16 %v9994
        %v10013 = vunpack.c.h.b16 %v9995
        %v10014 = vpack.c.b16 %v10003, %v10002
        %v10015 = vpack.c.b16 %v10004, %v10004
        %v10016 = vpack.c.b16 %v10006, %v10005
        %v10017 = vpack.c.b16 %v10007, %v10007
        %v10018 = vpack.c.b16 %v10009, %v10008
        %v10019 = vpack.c.b16 %v10010, %v10010
        %v10020 = vpack.c.b16 %v10012, %v10011
        %v10021 = vpack.c.b16 %v10013, %v10013
        %10030 = vst [vmem:[#allocation3 + $0xf0] sm:$0xff] %v10014
        %10031 = vst [vmem:[#allocation3 + $0xf8] sm:$0xf] %v10015
        %10032 = vst [vmem:[#allocation3 + $0xfc] sm:$0xff] %v10016
        %10033 = vst [vmem:[#allocation3 + $0x104] sm:$0xf] %v10017
        %10034 = vst [vmem:[#allocation3 + $0x108] sm:$0xff] %v10018
        %10035 = vst [vmem:[#allocation3 + $0x110] sm:$0xf] %v10019
        %10036 = vst [vmem:[#allocation3 + $0x114] sm:$0xff] %v10020
        %10037 = vst [vmem:[#allocation3 + $0x11c] sm:$0xf] %v10021
        %10038 = vrot.lane.b32.xlu0 %v9558, 111
        %v10039 = vpop.permute.xlu0 %10038
        %10040 = vrot.lane.b32.xlu0 %v9561, 111
        %v10041 = vpop.permute.xlu0 %10040
        %10042 = vrot.lane.b32.xlu0 %v9564, 111
        %v10043 = vpop.permute.xlu0 %10042
        %10044 = vrot.lane.b32.xlu0 %v9567, 111
        %v10045 = vpop.permute.xlu0 %10044
        %10046 = vrot.lane.b32.xlu0 %v9559, 111
        %v10047 = vpop.permute.xlu0 %10046
        %10048 = vrot.lane.b32.xlu0 %v9562, 111
        %v10049 = vpop.permute.xlu0 %10048
        %10050 = vrot.lane.b32.xlu0 %v9565, 111
        %v10051 = vpop.permute.xlu0 %10050
        %10052 = vrot.lane.b32.xlu0 %v9568, 111
        %v10053 = vpop.permute.xlu0 %10052
        %10054 = vrot.lane.b32.xlu0 %v9560, 111
        %v10055 = vpop.permute.xlu0 %10054
        %10056 = vrot.lane.b32.xlu0 %v9563, 111
        %v10057 = vpop.permute.xlu0 %10056
        %10058 = vrot.lane.b32.xlu0 %v9566, 111
        %v10059 = vpop.permute.xlu0 %10058
        %10060 = vrot.lane.b32.xlu0 %v9569, 111
        %v10061 = vpop.permute.xlu0 %10060
        %v10062 = vsel %vm1607, %v10047, %v10055
        %v10063 = vsel %vm1607, %v10049, %v10057
        %v10064 = vsel %vm1607, %v10051, %v10059
        %v10065 = vsel %vm1607, %v10053, %v10061
        %v10066 = vsel %vm1607, %v10039, %v10047
        %v10067 = vsel %vm1607, %v10041, %v10049
        %v10068 = vsel %vm1607, %v10043, %v10051
        %v10069 = vsel %vm1607, %v10045, %v10053
        %v10070 = vsel %vm1607, %v10055, %v10039
        %v10071 = vsel %vm1607, %v10057, %v10041
        %v10072 = vsel %vm1607, %v10059, %v10043
        %v10073 = vsel %vm1607, %v10061, %v10045
        %v10074 = vpack.c.bf16 %v10067, %v10066
        %v10075 = vpack.c.bf16 %v10063, %v10062
        %v10076 = vpack.c.bf16 %v10071, %v10070
        %v10077 = vpack.c.bf16 %v10069, %v10068
        %v10078 = vpack.c.bf16 %v10065, %v10064
        %v10079 = vpack.c.bf16 %v10073, %v10072
        %v10086 = vunpack.c.l.b16 %v10074
        %v10087 = vunpack.c.l.b16 %v10075
        %v10088 = vunpack.c.l.b16 %v10076
        %v10089 = vunpack.c.h.b16 %v10074
        %v10090 = vunpack.c.h.b16 %v10075
        %v10091 = vunpack.c.h.b16 %v10076
        %v10092 = vunpack.c.l.b16 %v10077
        %v10093 = vunpack.c.l.b16 %v10078
        %v10094 = vunpack.c.l.b16 %v10079
        %v10095 = vunpack.c.h.b16 %v10077
        %v10096 = vunpack.c.h.b16 %v10078
        %v10097 = vunpack.c.h.b16 %v10079
        %v10098 = vpack.c.b16 %v10087, %v10086
        %v10099 = vpack.c.b16 %v10088, %v10088
        %v10100 = vpack.c.b16 %v10090, %v10089
        %v10101 = vpack.c.b16 %v10091, %v10091
        %v10102 = vpack.c.b16 %v10093, %v10092
        %v10103 = vpack.c.b16 %v10094, %v10094
        %v10104 = vpack.c.b16 %v10096, %v10095
        %v10105 = vpack.c.b16 %v10097, %v10097
        %10114 = vst [vmem:[#allocation3 + $0x120] sm:$0xff] %v10098
        %10115 = vst [vmem:[#allocation3 + $0x128] sm:$0xf] %v10099
        %10116 = vst [vmem:[#allocation3 + $0x12c] sm:$0xff] %v10100
        %10117 = vst [vmem:[#allocation3 + $0x134] sm:$0xf] %v10101
        %10118 = vst [vmem:[#allocation3 + $0x138] sm:$0xff] %v10102
        %10119 = vst [vmem:[#allocation3 + $0x140] sm:$0xf] %v10103
        %10120 = vst [vmem:[#allocation3 + $0x144] sm:$0xff] %v10104
        %10121 = vst [vmem:[#allocation3 + $0x14c] sm:$0xf] %v10105
        %10122 = vrot.lane.b32.xlu0 %v9558, 110
        %v10123 = vpop.permute.xlu0 %10122
        %10124 = vrot.lane.b32.xlu0 %v9561, 110
        %v10125 = vpop.permute.xlu0 %10124
        %10126 = vrot.lane.b32.xlu0 %v9564, 110
        %v10127 = vpop.permute.xlu0 %10126
        %10128 = vrot.lane.b32.xlu0 %v9567, 110
        %v10129 = vpop.permute.xlu0 %10128
        %10130 = vrot.lane.b32.xlu0 %v9559, 110
        %v10131 = vpop.permute.xlu0 %10130
        %10132 = vrot.lane.b32.xlu0 %v9562, 110
        %v10133 = vpop.permute.xlu0 %10132
        %10134 = vrot.lane.b32.xlu0 %v9565, 110
        %v10135 = vpop.permute.xlu0 %10134
        %10136 = vrot.lane.b32.xlu0 %v9568, 110
        %v10137 = vpop.permute.xlu0 %10136
        %10138 = vrot.lane.b32.xlu0 %v9560, 110
        %v10139 = vpop.permute.xlu0 %10138
        %10140 = vrot.lane.b32.xlu0 %v9563, 110
        %v10141 = vpop.permute.xlu0 %10140
        %10142 = vrot.lane.b32.xlu0 %v9566, 110
        %v10143 = vpop.permute.xlu0 %10142
        %10144 = vrot.lane.b32.xlu0 %v9569, 110
        %v10145 = vpop.permute.xlu0 %10144
        %v10146 = vsel %vm1776, %v10131, %v10139
        %v10147 = vsel %vm1776, %v10133, %v10141
        %v10148 = vsel %vm1776, %v10135, %v10143
        %v10149 = vsel %vm1776, %v10137, %v10145
        %v10150 = vsel %vm1776, %v10123, %v10131
        %v10151 = vsel %vm1776, %v10125, %v10133
        %v10152 = vsel %vm1776, %v10127, %v10135
        %v10153 = vsel %vm1776, %v10129, %v10137
        %v10154 = vsel %vm1776, %v10139, %v10123
        %v10155 = vsel %vm1776, %v10141, %v10125
        %v10156 = vsel %vm1776, %v10143, %v10127
        %v10157 = vsel %vm1776, %v10145, %v10129
        %v10158 = vpack.c.bf16 %v10151, %v10150
        %v10159 = vpack.c.bf16 %v10147, %v10146
        %v10160 = vpack.c.bf16 %v10155, %v10154
        %v10161 = vpack.c.bf16 %v10153, %v10152
        %v10162 = vpack.c.bf16 %v10149, %v10148
        %v10163 = vpack.c.bf16 %v10157, %v10156
        %v10170 = vunpack.c.l.b16 %v10158
        %v10171 = vunpack.c.l.b16 %v10159
        %v10172 = vunpack.c.l.b16 %v10160
        %v10173 = vunpack.c.h.b16 %v10158
        %v10174 = vunpack.c.h.b16 %v10159
        %v10175 = vunpack.c.h.b16 %v10160
        %v10176 = vunpack.c.l.b16 %v10161
        %v10177 = vunpack.c.l.b16 %v10162
        %v10178 = vunpack.c.l.b16 %v10163
        %v10179 = vunpack.c.h.b16 %v10161
        %v10180 = vunpack.c.h.b16 %v10162
        %v10181 = vunpack.c.h.b16 %v10163
        %v10182 = vpack.c.b16 %v10171, %v10170
        %v10183 = vpack.c.b16 %v10172, %v10172
        %v10184 = vpack.c.b16 %v10174, %v10173
        %v10185 = vpack.c.b16 %v10175, %v10175
        %v10186 = vpack.c.b16 %v10177, %v10176
        %v10187 = vpack.c.b16 %v10178, %v10178
        %v10188 = vpack.c.b16 %v10180, %v10179
        %v10189 = vpack.c.b16 %v10181, %v10181
        %10198 = vst [vmem:[#allocation3 + $0x150] sm:$0xff] %v10182
        %10199 = vst [vmem:[#allocation3 + $0x158] sm:$0xf] %v10183
        %10200 = vst [vmem:[#allocation3 + $0x15c] sm:$0xff] %v10184
        %10201 = vst [vmem:[#allocation3 + $0x164] sm:$0xf] %v10185
        %10202 = vst [vmem:[#allocation3 + $0x168] sm:$0xff] %v10186
        %10203 = vst [vmem:[#allocation3 + $0x170] sm:$0xf] %v10187
        %10204 = vst [vmem:[#allocation3 + $0x174] sm:$0xff] %v10188
        %10205 = vst [vmem:[#allocation3 + $0x17c] sm:$0xf] %v10189
        %10206 = vrot.lane.b32.xlu0 %v9558, 109
        %v10207 = vpop.permute.xlu0 %10206
        %10208 = vrot.lane.b32.xlu0 %v9561, 109
        %v10209 = vpop.permute.xlu0 %10208
        %10210 = vrot.lane.b32.xlu0 %v9564, 109
        %v10211 = vpop.permute.xlu0 %10210
        %10212 = vrot.lane.b32.xlu0 %v9567, 109
        %v10213 = vpop.permute.xlu0 %10212
        %10214 = vrot.lane.b32.xlu0 %v9559, 109
        %v10215 = vpop.permute.xlu0 %10214
        %10216 = vrot.lane.b32.xlu0 %v9562, 109
        %v10217 = vpop.permute.xlu0 %10216
        %10218 = vrot.lane.b32.xlu0 %v9565, 109
        %v10219 = vpop.permute.xlu0 %10218
        %10220 = vrot.lane.b32.xlu0 %v9568, 109
        %v10221 = vpop.permute.xlu0 %10220
        %10222 = vrot.lane.b32.xlu0 %v9560, 109
        %v10223 = vpop.permute.xlu0 %10222
        %10224 = vrot.lane.b32.xlu0 %v9563, 109
        %v10225 = vpop.permute.xlu0 %10224
        %10226 = vrot.lane.b32.xlu0 %v9566, 109
        %v10227 = vpop.permute.xlu0 %10226
        %10228 = vrot.lane.b32.xlu0 %v9569, 109
        %v10229 = vpop.permute.xlu0 %10228
        %v10230 = vsel %vm1945, %v10215, %v10223
        %v10231 = vsel %vm1945, %v10217, %v10225
        %v10232 = vsel %vm1945, %v10219, %v10227
        %v10233 = vsel %vm1945, %v10221, %v10229
        %v10234 = vsel %vm1945, %v10207, %v10215
        %v10235 = vsel %vm1945, %v10209, %v10217
        %v10236 = vsel %vm1945, %v10211, %v10219
        %v10237 = vsel %vm1945, %v10213, %v10221
        %v10238 = vsel %vm1945, %v10223, %v10207
        %v10239 = vsel %vm1945, %v10225, %v10209
        %v10240 = vsel %vm1945, %v10227, %v10211
        %v10241 = vsel %vm1945, %v10229, %v10213
        %v10242 = vpack.c.bf16 %v10235, %v10234
        %v10243 = vpack.c.bf16 %v10231, %v10230
        %v10244 = vpack.c.bf16 %v10239, %v10238
        %v10245 = vpack.c.bf16 %v10237, %v10236
        %v10246 = vpack.c.bf16 %v10233, %v10232
        %v10247 = vpack.c.bf16 %v10241, %v10240
        %v10254 = vunpack.c.l.b16 %v10242
        %v10255 = vunpack.c.l.b16 %v10243
        %v10256 = vunpack.c.l.b16 %v10244
        %v10257 = vunpack.c.h.b16 %v10242
        %v10258 = vunpack.c.h.b16 %v10243
        %v10259 = vunpack.c.h.b16 %v10244
        %v10260 = vunpack.c.l.b16 %v10245
        %v10261 = vunpack.c.l.b16 %v10246
        %v10262 = vunpack.c.l.b16 %v10247
        %v10263 = vunpack.c.h.b16 %v10245
        %v10264 = vunpack.c.h.b16 %v10246
        %v10265 = vunpack.c.h.b16 %v10247
        %v10266 = vpack.c.b16 %v10255, %v10254
        %v10267 = vpack.c.b16 %v10256, %v10256
        %v10268 = vpack.c.b16 %v10258, %v10257
        %v10269 = vpack.c.b16 %v10259, %v10259
        %v10270 = vpack.c.b16 %v10261, %v10260
        %v10271 = vpack.c.b16 %v10262, %v10262
        %v10272 = vpack.c.b16 %v10264, %v10263
        %v10273 = vpack.c.b16 %v10265, %v10265
        %10282 = vst [vmem:[#allocation3 + $0x180] sm:$0xff] %v10266
        %10283 = vst [vmem:[#allocation3 + $0x188] sm:$0xf] %v10267
        %10284 = vst [vmem:[#allocation3 + $0x18c] sm:$0xff] %v10268
        %10285 = vst [vmem:[#allocation3 + $0x194] sm:$0xf] %v10269
        %10286 = vst [vmem:[#allocation3 + $0x198] sm:$0xff] %v10270
        %10287 = vst [vmem:[#allocation3 + $0x1a0] sm:$0xf] %v10271
        %10288 = vst [vmem:[#allocation3 + $0x1a4] sm:$0xff] %v10272
        %10289 = vst [vmem:[#allocation3 + $0x1ac] sm:$0xf] %v10273
        %v10290 = vld [vmem:[#allocation12] sm:$0xff]
        %v10291 = vld [vmem:[#allocation12 + $0x8] sm:$0xf]
        %v10292 = vld [vmem:[#allocation12 + $0xc] sm:$0xff]
        %v10293 = vld [vmem:[#allocation12 + $0x14] sm:$0xf]
        %v10294 = vld [vmem:[#allocation12 + $0x18] sm:$0xff]
        %v10295 = vld [vmem:[#allocation12 + $0x20] sm:$0xf]
        %v10296 = vld [vmem:[#allocation12 + $0x24] sm:$0xff]
        %v10297 = vld [vmem:[#allocation12 + $0x2c] sm:$0xf]
        %v10298 = vld [vmem:[#allocation3] sm:$0xff]
        %v10299 = vld [vmem:[#allocation3 + $0x8] sm:$0xf]
        %v10300 = vld [vmem:[#allocation3 + $0xc] sm:$0xff]
        %v10301 = vld [vmem:[#allocation3 + $0x14] sm:$0xf]
        %v10302 = vld [vmem:[#allocation3 + $0x18] sm:$0xff]
        %v10303 = vld [vmem:[#allocation3 + $0x20] sm:$0xf]
        %v10304 = vld [vmem:[#allocation3 + $0x24] sm:$0xff]
        %v10305 = vld [vmem:[#allocation3 + $0x2c] sm:$0xf]
        %v10306 = vld [vmem:[#allocation3 + $0x30] sm:$0xff]
        %v10307 = vld [vmem:[#allocation3 + $0x38] sm:$0xf]
        %v10308 = vld [vmem:[#allocation3 + $0x3c] sm:$0xff]
        %v10309 = vld [vmem:[#allocation3 + $0x44] sm:$0xf]
        %v10310 = vld [vmem:[#allocation3 + $0x48] sm:$0xff]
        %v10311 = vld [vmem:[#allocation3 + $0x50] sm:$0xf]
        %v10312 = vld [vmem:[#allocation3 + $0x54] sm:$0xff]
        %v10313 = vld [vmem:[#allocation3 + $0x5c] sm:$0xf]
        %v10314 = vld [vmem:[#allocation3 + $0x60] sm:$0xff]
        %v10315 = vld [vmem:[#allocation3 + $0x68] sm:$0xf]
        %v10316 = vld [vmem:[#allocation3 + $0x6c] sm:$0xff]
        %v10317 = vld [vmem:[#allocation3 + $0x74] sm:$0xf]
        %v10318 = vld [vmem:[#allocation3 + $0x78] sm:$0xff]
        %v10319 = vld [vmem:[#allocation3 + $0x80] sm:$0xf]
        %v10320 = vld [vmem:[#allocation3 + $0x84] sm:$0xff]
        %v10321 = vld [vmem:[#allocation3 + $0x8c] sm:$0xf]
        %v10322 = vld [vmem:[#allocation3 + $0x90] sm:$0xff]
        %v10323 = vld [vmem:[#allocation3 + $0x98] sm:$0xf]
        %v10324 = vld [vmem:[#allocation3 + $0x9c] sm:$0xff]
        %v10325 = vld [vmem:[#allocation3 + $0xa4] sm:$0xf]
        %v10326 = vld [vmem:[#allocation3 + $0xa8] sm:$0xff]
        %v10327 = vld [vmem:[#allocation3 + $0xb0] sm:$0xf]
        %v10328 = vld [vmem:[#allocation3 + $0xb4] sm:$0xff]
        %v10329 = vld [vmem:[#allocation3 + $0xbc] sm:$0xf]
        %v10330 = vld [vmem:[#allocation3 + $0xc0] sm:$0xff]
        %v10331 = vld [vmem:[#allocation3 + $0xc8] sm:$0xf]
        %v10332 = vld [vmem:[#allocation3 + $0xcc] sm:$0xff]
        %v10333 = vld [vmem:[#allocation3 + $0xd4] sm:$0xf]
        %v10334 = vld [vmem:[#allocation3 + $0xd8] sm:$0xff]
        %v10335 = vld [vmem:[#allocation3 + $0xe0] sm:$0xf]
        %v10336 = vld [vmem:[#allocation3 + $0xe4] sm:$0xff]
        %v10337 = vld [vmem:[#allocation3 + $0xec] sm:$0xf]
        %v10338 = vld [vmem:[#allocation3 + $0xf0] sm:$0xff]
        %v10339 = vld [vmem:[#allocation3 + $0xf8] sm:$0xf]
        %v10340 = vld [vmem:[#allocation3 + $0xfc] sm:$0xff]
        %v10341 = vld [vmem:[#allocation3 + $0x104] sm:$0xf]
        %v10342 = vld [vmem:[#allocation3 + $0x108] sm:$0xff]
        %v10343 = vld [vmem:[#allocation3 + $0x110] sm:$0xf]
        %v10344 = vld [vmem:[#allocation3 + $0x114] sm:$0xff]
        %v10345 = vld [vmem:[#allocation3 + $0x11c] sm:$0xf]
        %v10346 = vld [vmem:[#allocation3 + $0x120] sm:$0xff]
        %v10347 = vld [vmem:[#allocation3 + $0x128] sm:$0xf]
        %v10348 = vld [vmem:[#allocation3 + $0x12c] sm:$0xff]
        %v10349 = vld [vmem:[#allocation3 + $0x134] sm:$0xf]
        %v10350 = vld [vmem:[#allocation3 + $0x138] sm:$0xff]
        %v10351 = vld [vmem:[#allocation3 + $0x140] sm:$0xf]
        %v10352 = vld [vmem:[#allocation3 + $0x144] sm:$0xff]
        %v10353 = vld [vmem:[#allocation3 + $0x14c] sm:$0xf]
        %v10354 = vld [vmem:[#allocation3 + $0x150] sm:$0xff]
        %v10355 = vld [vmem:[#allocation3 + $0x158] sm:$0xf]
        %v10356 = vld [vmem:[#allocation3 + $0x15c] sm:$0xff]
        %v10357 = vld [vmem:[#allocation3 + $0x164] sm:$0xf]
        %v10358 = vld [vmem:[#allocation3 + $0x168] sm:$0xff]
        %v10359 = vld [vmem:[#allocation3 + $0x170] sm:$0xf]
        %v10360 = vld [vmem:[#allocation3 + $0x174] sm:$0xff]
        %v10361 = vld [vmem:[#allocation3 + $0x17c] sm:$0xf]
        %v10362 = vld [vmem:[#allocation3 + $0x180] sm:$0xff]
        %v10363 = vld [vmem:[#allocation3 + $0x188] sm:$0xf]
        %v10364 = vld [vmem:[#allocation3 + $0x18c] sm:$0xff]
        %v10365 = vld [vmem:[#allocation3 + $0x194] sm:$0xf]
        %v10366 = vld [vmem:[#allocation3 + $0x198] sm:$0xff]
        %v10367 = vld [vmem:[#allocation3 + $0x1a0] sm:$0xf]
        %v10368 = vld [vmem:[#allocation3 + $0x1a4] sm:$0xff]
        %v10369 = vld [vmem:[#allocation3 + $0x1ac] sm:$0xf]
        %v10370 = vld [vmem:[%s13] sm:$0xff]
        %v10371 = vld [vmem:[%s13 + $0x8] sm:$0xff]
        %v10372 = vld [vmem:[%s13 + $0x10] sm:$0xff]
        %v10373 = vld [vmem:[%s13 + $0x18] sm:$0xff]
        %10375 = vset.pattern.permute.xlu0 0
        %10376 = vperm.xlu0 %10375, %v10370
        %v10377 = vpop.permute.xlu0 %10376
        %10380 = vset.pattern.permute.xlu0 0
        %10381 = vperm.xlu0 %10380, %v10371
        %v10382 = vpop.permute.xlu0 %10381
        %10385 = vset.pattern.permute.xlu0 0
        %10386 = vperm.xlu0 %10385, %v10372
        %v10387 = vpop.permute.xlu0 %10386
        %10390 = vset.pattern.permute.xlu0 0
        %10391 = vperm.xlu0 %10390, %v10373
        %v10392 = vpop.permute.xlu0 %10391
        %v10402 = vunpack.c.l.b16 %v10290
        %v10403 = vunpack.c.h.b16 %v10290
        %v10404 = vunpack.c.l.b16 %v10291
        %v10405 = vunpack.c.l.b16 %v10292
        %v10406 = vunpack.c.h.b16 %v10292
        %v10407 = vunpack.c.l.b16 %v10293
        %v10408 = vunpack.c.l.b16 %v10294
        %v10409 = vunpack.c.h.b16 %v10294
        %v10410 = vunpack.c.l.b16 %v10295
        %v10411 = vunpack.c.l.b16 %v10296
        %v10412 = vunpack.c.h.b16 %v10296
        %v10413 = vunpack.c.l.b16 %v10297
        %v10414 = vpack.c.b16 %v10405, %v10402
        %v10415 = vpack.c.b16 %v10406, %v10403
        %v10416 = vpack.c.b16 %v10407, %v10404
        %v10417 = vpack.c.b16 %v10411, %v10408
        %v10418 = vpack.c.b16 %v10412, %v10409
        %v10419 = vpack.c.b16 %v10413, %v10410
        %v10496 = vunpack.c.l.b16 %v10298
        %v10497 = vunpack.c.h.b16 %v10298
        %v10498 = vunpack.c.l.b16 %v10299
        %v10499 = vunpack.c.l.b16 %v10300
        %v10500 = vunpack.c.h.b16 %v10300
        %v10501 = vunpack.c.l.b16 %v10301
        %v10502 = vunpack.c.l.b16 %v10302
        %v10503 = vunpack.c.h.b16 %v10302
        %v10504 = vunpack.c.l.b16 %v10303
        %v10505 = vunpack.c.l.b16 %v10304
        %v10506 = vunpack.c.h.b16 %v10304
        %v10507 = vunpack.c.l.b16 %v10305
        %v10508 = vunpack.c.l.b16 %v10306
        %v10509 = vunpack.c.h.b16 %v10306
        %v10510 = vunpack.c.l.b16 %v10307
        %v10511 = vunpack.c.l.b16 %v10308
        %v10512 = vunpack.c.h.b16 %v10308
        %v10513 = vunpack.c.l.b16 %v10309
        %v10514 = vunpack.c.l.b16 %v10310
        %v10515 = vunpack.c.h.b16 %v10310
        %v10516 = vunpack.c.l.b16 %v10311
        %v10517 = vunpack.c.l.b16 %v10312
        %v10518 = vunpack.c.h.b16 %v10312
        %v10519 = vunpack.c.l.b16 %v10313
        %v10520 = vunpack.c.l.b16 %v10314
        %v10521 = vunpack.c.h.b16 %v10314
        %v10522 = vunpack.c.l.b16 %v10315
        %v10523 = vunpack.c.l.b16 %v10316
        %v10524 = vunpack.c.h.b16 %v10316
        %v10525 = vunpack.c.l.b16 %v10317
        %v10526 = vunpack.c.l.b16 %v10318
        %v10527 = vunpack.c.h.b16 %v10318
        %v10528 = vunpack.c.l.b16 %v10319
        %v10529 = vunpack.c.l.b16 %v10320
        %v10530 = vunpack.c.h.b16 %v10320
        %v10531 = vunpack.c.l.b16 %v10321
        %v10532 = vunpack.c.l.b16 %v10322
        %v10533 = vunpack.c.h.b16 %v10322
        %v10534 = vunpack.c.l.b16 %v10323
        %v10535 = vunpack.c.l.b16 %v10324
        %v10536 = vunpack.c.h.b16 %v10324
        %v10537 = vunpack.c.l.b16 %v10325
        %v10538 = vunpack.c.l.b16 %v10326
        %v10539 = vunpack.c.h.b16 %v10326
        %v10540 = vunpack.c.l.b16 %v10327
        %v10541 = vunpack.c.l.b16 %v10328
        %v10542 = vunpack.c.h.b16 %v10328
        %v10543 = vunpack.c.l.b16 %v10329
        %v10544 = vunpack.c.l.b16 %v10330
        %v10545 = vunpack.c.h.b16 %v10330
        %v10546 = vunpack.c.l.b16 %v10331
        %v10547 = vunpack.c.l.b16 %v10332
        %v10548 = vunpack.c.h.b16 %v10332
        %v10549 = vunpack.c.l.b16 %v10333
        %v10550 = vunpack.c.l.b16 %v10334
        %v10551 = vunpack.c.h.b16 %v10334
        %v10552 = vunpack.c.l.b16 %v10335
        %v10553 = vunpack.c.l.b16 %v10336
        %v10554 = vunpack.c.h.b16 %v10336
        %v10555 = vunpack.c.l.b16 %v10337
        %v10556 = vunpack.c.l.b16 %v10338
        %v10557 = vunpack.c.h.b16 %v10338
        %v10558 = vunpack.c.l.b16 %v10339
        %v10559 = vunpack.c.l.b16 %v10340
        %v10560 = vunpack.c.h.b16 %v10340
        %v10561 = vunpack.c.l.b16 %v10341
        %v10562 = vunpack.c.l.b16 %v10342
        %v10563 = vunpack.c.h.b16 %v10342
        %v10564 = vunpack.c.l.b16 %v10343
        %v10565 = vunpack.c.l.b16 %v10344
        %v10566 = vunpack.c.h.b16 %v10344
        %v10567 = vunpack.c.l.b16 %v10345
        %v10568 = vunpack.c.l.b16 %v10346
        %v10569 = vunpack.c.h.b16 %v10346
        %v10570 = vunpack.c.l.b16 %v10347
        %v10571 = vunpack.c.l.b16 %v10348
        %v10572 = vunpack.c.h.b16 %v10348
        %v10573 = vunpack.c.l.b16 %v10349
        %v10574 = vunpack.c.l.b16 %v10350
        %v10575 = vunpack.c.h.b16 %v10350
        %v10576 = vunpack.c.l.b16 %v10351
        %v10577 = vunpack.c.l.b16 %v10352
        %v10578 = vunpack.c.h.b16 %v10352
        %v10579 = vunpack.c.l.b16 %v10353
        %v10580 = vunpack.c.l.b16 %v10354
        %v10581 = vunpack.c.h.b16 %v10354
        %v10582 = vunpack.c.l.b16 %v10355
        %v10583 = vunpack.c.l.b16 %v10356
        %v10584 = vunpack.c.h.b16 %v10356
        %v10585 = vunpack.c.l.b16 %v10357
        %v10586 = vunpack.c.l.b16 %v10358
        %v10587 = vunpack.c.h.b16 %v10358
        %v10588 = vunpack.c.l.b16 %v10359
        %v10589 = vunpack.c.l.b16 %v10360
        %v10590 = vunpack.c.h.b16 %v10360
        %v10591 = vunpack.c.l.b16 %v10361
        %v10592 = vunpack.c.l.b16 %v10362
        %v10593 = vunpack.c.h.b16 %v10362
        %v10594 = vunpack.c.l.b16 %v10363
        %v10595 = vunpack.c.l.b16 %v10364
        %v10596 = vunpack.c.h.b16 %v10364
        %v10597 = vunpack.c.l.b16 %v10365
        %v10598 = vunpack.c.l.b16 %v10366
        %v10599 = vunpack.c.h.b16 %v10366
        %v10600 = vunpack.c.l.b16 %v10367
        %v10601 = vunpack.c.l.b16 %v10368
        %v10602 = vunpack.c.h.b16 %v10368
        %v10603 = vunpack.c.l.b16 %v10369
        %v10604 = vpack.c.b16 %v10499, %v10496
        %v10605 = vpack.c.b16 %v10500, %v10497
        %v10606 = vpack.c.b16 %v10501, %v10498
        %v10607 = vpack.c.b16 %v10505, %v10502
        %v10608 = vpack.c.b16 %v10506, %v10503
        %v10609 = vpack.c.b16 %v10507, %v10504
        %v10610 = vpack.c.b16 %v10511, %v10508
        %v10611 = vpack.c.b16 %v10512, %v10509
        %v10612 = vpack.c.b16 %v10513, %v10510
        %v10613 = vpack.c.b16 %v10517, %v10514
        %v10614 = vpack.c.b16 %v10518, %v10515
        %v10615 = vpack.c.b16 %v10519, %v10516
        %v10616 = vpack.c.b16 %v10523, %v10520
        %v10617 = vpack.c.b16 %v10524, %v10521
        %v10618 = vpack.c.b16 %v10525, %v10522
        %v10619 = vpack.c.b16 %v10529, %v10526
        %v10620 = vpack.c.b16 %v10530, %v10527
        %v10621 = vpack.c.b16 %v10531, %v10528
        %v10622 = vpack.c.b16 %v10535, %v10532
        %v10623 = vpack.c.b16 %v10536, %v10533
        %v10624 = vpack.c.b16 %v10537, %v10534
        %v10625 = vpack.c.b16 %v10541, %v10538
        %v10626 = vpack.c.b16 %v10542, %v10539
        %v10627 = vpack.c.b16 %v10543, %v10540
        %v10628 = vpack.c.b16 %v10547, %v10544
        %v10629 = vpack.c.b16 %v10548, %v10545
        %v10630 = vpack.c.b16 %v10549, %v10546
        %v10631 = vpack.c.b16 %v10553, %v10550
        %v10632 = vpack.c.b16 %v10554, %v10551
        %v10633 = vpack.c.b16 %v10555, %v10552
        %v10634 = vpack.c.b16 %v10559, %v10556
        %v10635 = vpack.c.b16 %v10560, %v10557
        %v10636 = vpack.c.b16 %v10561, %v10558
        %v10637 = vpack.c.b16 %v10565, %v10562
        %v10638 = vpack.c.b16 %v10566, %v10563
        %v10639 = vpack.c.b16 %v10567, %v10564
        %v10640 = vpack.c.b16 %v10571, %v10568
        %v10641 = vpack.c.b16 %v10572, %v10569
        %v10642 = vpack.c.b16 %v10573, %v10570
        %v10643 = vpack.c.b16 %v10577, %v10574
        %v10644 = vpack.c.b16 %v10578, %v10575
        %v10645 = vpack.c.b16 %v10579, %v10576
        %v10646 = vpack.c.b16 %v10583, %v10580
        %v10647 = vpack.c.b16 %v10584, %v10581
        %v10648 = vpack.c.b16 %v10585, %v10582
        %v10649 = vpack.c.b16 %v10589, %v10586
        %v10650 = vpack.c.b16 %v10590, %v10587
        %v10651 = vpack.c.b16 %v10591, %v10588
        %v10652 = vpack.c.b16 %v10595, %v10592
        %v10653 = vpack.c.b16 %v10596, %v10593
        %v10654 = vpack.c.b16 %v10597, %v10594
        %v10655 = vpack.c.b16 %v10601, %v10598
        %v10656 = vpack.c.b16 %v10602, %v10599
        %v10657 = vpack.c.b16 %v10603, %v10600
        %v10713 = vsel %vm4725, %v10416, 0
        %v10716 = vsel %vm4725, %v10419, 0
        %10718 = vmatprep.subr.bf16.mxu0 %v10626
        %10719 = vmatpush1.bf16.msra.mxu0 %v10625
        %10720 = vmatprep.subr.bf16.mxu0 %v10623
        %10721 = vmatpush1.bf16.msra.mxu0 %v10622
        %10722 = vmatprep.subr.bf16.mxu0 %v10620
        %10723 = vmatpush1.bf16.msra.mxu0 %v10619
        %10724 = vmatprep.subr.bf16.mxu0 %v10617
        %10725 = vmatpush1.bf16.msra.mxu0 %v10616
        %10726 = vmatprep.subr.bf16.mxu0 %v10614
        %10727 = vmatpush1.bf16.msra.mxu0 %v10613
        %10728 = vmatprep.subr.bf16.mxu0 %v10611
        %10729 = vmatpush1.bf16.msra.mxu0 %v10610
        %10730 = vmatprep.subr.bf16.mxu0 %v10608
        %10731 = vmatpush1.bf16.msra.mxu0 %v10607
        %10732 = vmatprep.subr.bf16.mxu0 %v10605
        %10733 = vmatpush1.bf16.msra.mxu0 %v10604
        %10734 = vmatprep.subr.bf16.mxu0 %v10650
        %10735 = vmatpush2.bf16.msra.mxu0 %v10649
        %10736 = vmatprep.subr.bf16.mxu0 %v10647
        %10737 = vmatpush2.bf16.msra.mxu0 %v10646
        %10738 = vmatprep.subr.bf16.mxu0 %v10644
        %10739 = vmatpush2.bf16.msra.mxu0 %v10643
        %10740 = vmatprep.subr.bf16.mxu0 %v10641
        %10741 = vmatpush2.bf16.msra.mxu0 %v10640
        %10742 = vmatprep.subr.bf16.mxu0 %v10638
        %10743 = vmatpush2.bf16.msra.mxu0 %v10637
        %10744 = vmatprep.subr.bf16.mxu0 %v10635
        %10745 = vmatpush2.bf16.msra.mxu0 %v10634
        %10746 = vmatprep.subr.bf16.mxu0 %v10632
        %10747 = vmatpush2.bf16.msra.mxu0 %v10631
        %10748 = vmatprep.subr.bf16.mxu0 %v10629
        %10749 = vmatpush2.bf16.msra.mxu0 %v10628
        %10750 = vmatprep.mubr.bf16.mxu0 %v10415
        %10751 = vmatmul.mubr.bf16.gmra.mxu0 %v10414
        %v10752 = vpop.f32.mrf.mxu0
        %v10753 = vadd.f32 %v10377, %v10752
        %v10754 = vpop.f32.mrf.mxu0
        %v10755 = vadd.f32 %v10377, %v10754
        %v10756 = vpop.f32.mrf.mxu0
        %v10757 = vadd.f32 %v10382, %v10756
        %v10758 = vpop.f32.mrf.mxu0
        %v10759 = vadd.f32 %v10382, %v10758
        %10760 = vmatprep.mubr.bf16.mxu0 %v10418
        %10761 = vmatmul.mubr.bf16.gmra.mxu0 %v10417
        %v10762 = vpop.f32.mrf.mxu0
        %v10763 = vadd.f32 %v10387, %v10762
        %v10764 = vpop.f32.mrf.mxu0
        %v10765 = vadd.f32 %v10387, %v10764
        %v10766 = vpop.f32.mrf.mxu0
        %v10767 = vadd.f32 %v10392, %v10766
        %v10768 = vpop.f32.mrf.mxu0
        %v10769 = vadd.f32 %v10392, %v10768
        %10770 = vdwg.mxu0
        %10771 = vmatprep.subr.bf16.mxu0 0
        %10772 = vmatpush1.bf16.msra.mxu0 0
        %10773 = vmatprep.subr.bf16.mxu0 0
        %10774 = vmatpush1.bf16.msra.mxu0 0
        %10775 = vmatprep.subr.bf16.mxu0 0
        %10776 = vmatpush1.bf16.msra.mxu0 0
        %10777 = vmatprep.subr.bf16.mxu0 0
        %10778 = vmatpush1.bf16.msra.mxu0 0
        %10779 = vmatprep.subr.bf16.mxu0 0
        %10780 = vmatpush1.bf16.msra.mxu0 0
        %10781 = vmatprep.subr.bf16.mxu0 0
        %10782 = vmatpush1.bf16.msra.mxu0 0
        %10783 = vmatprep.subr.bf16.mxu0 %v10656
        %10784 = vmatpush1.bf16.msra.mxu0 %v10655
        %10785 = vmatprep.subr.bf16.mxu0 %v10653
        %10786 = vmatpush1.bf16.msra.mxu0 %v10652
        %10787 = vmatprep.subr.bf16.mxu0 0
        %10788 = vmatpush2.bf16.msra.mxu0 0
        %10789 = vmatprep.subr.bf16.mxu0 0
        %10790 = vmatpush2.bf16.msra.mxu0 0
        %10791 = vmatprep.subr.bf16.mxu0 0
        %10792 = vmatpush2.bf16.msra.mxu0 0
        %10793 = vmatprep.subr.bf16.mxu0 0
        %10794 = vmatpush2.bf16.msra.mxu0 0
        %10795 = vmatprep.subr.bf16.mxu0 0
        %10796 = vmatpush2.bf16.msra.mxu0 0
        %10797 = vmatprep.subr.bf16.mxu0 0
        %10798 = vmatpush2.bf16.msra.mxu0 0
        %10799 = vmatprep.subr.bf16.mxu0 0
        %10800 = vmatpush2.bf16.msra.mxu0 0
        %10801 = vmatprep.subr.bf16.mxu0 0
        %10802 = vmatpush2.bf16.msra.mxu0 0
        %10803 = vmatprep.mubr.bf16.mxu0 0
        %10804 = vmatmul.mubr.bf16.gmra.mxu0 %v10713
        %v10805 = vpop.f32.mrf.mxu0
        %v10806 = vadd.f32 %v10753, %v10805
        %v10807 = vpop.f32.mrf.mxu0
        %v10808 = vadd.f32 %v10755, %v10807
        %v10809 = vpop.f32.mrf.mxu0
        %v10810 = vadd.f32 %v10757, %v10809
        %v10811 = vpop.f32.mrf.mxu0
        %v10812 = vadd.f32 %v10759, %v10811
        %10813 = vmatprep.mubr.bf16.mxu0 0
        %10814 = vmatmul.mubr.bf16.gmra.mxu0 %v10716
        %v10815 = vpop.f32.mrf.mxu0
        %v10816 = vadd.f32 %v10763, %v10815
        %v10817 = vpop.f32.mrf.mxu0
        %v10818 = vadd.f32 %v10765, %v10817
        %v10819 = vpop.f32.mrf.mxu0
        %v10820 = vadd.f32 %v10767, %v10819
        %v10821 = vpop.f32.mrf.mxu0
        %v10822 = vadd.f32 %v10769, %v10821
        %10823 = vdwg.mxu0
        %10824 = vmatprep.subr.bf16.mxu0 0
        %10825 = vmatpush1.bf16.msra.mxu0 %v10627
        %10826 = vmatprep.subr.bf16.mxu0 0
        %10827 = vmatpush1.bf16.msra.mxu0 %v10624
        %10828 = vmatprep.subr.bf16.mxu0 0
        %10829 = vmatpush1.bf16.msra.mxu0 %v10621
        %10830 = vmatprep.subr.bf16.mxu0 0
        %10831 = vmatpush1.bf16.msra.mxu0 %v10618
        %10832 = vmatprep.subr.bf16.mxu0 0
        %10833 = vmatpush1.bf16.msra.mxu0 %v10615
        %10834 = vmatprep.subr.bf16.mxu0 0
        %10835 = vmatpush1.bf16.msra.mxu0 %v10612
        %10836 = vmatprep.subr.bf16.mxu0 0
        %10837 = vmatpush1.bf16.msra.mxu0 %v10609
        %10838 = vmatprep.subr.bf16.mxu0 0
        %10839 = vmatpush1.bf16.msra.mxu0 %v10606
        %10840 = vmatprep.subr.bf16.mxu0 0
        %10841 = vmatpush2.bf16.msra.mxu0 %v10651
        %10842 = vmatprep.subr.bf16.mxu0 0
        %10843 = vmatpush2.bf16.msra.mxu0 %v10648
        %10844 = vmatprep.subr.bf16.mxu0 0
        %10845 = vmatpush2.bf16.msra.mxu0 %v10645
        %10846 = vmatprep.subr.bf16.mxu0 0
        %10847 = vmatpush2.bf16.msra.mxu0 %v10642
        %10848 = vmatprep.subr.bf16.mxu0 0
        %10849 = vmatpush2.bf16.msra.mxu0 %v10639
        %10850 = vmatprep.subr.bf16.mxu0 0
        %10851 = vmatpush2.bf16.msra.mxu0 %v10636
        %10852 = vmatprep.subr.bf16.mxu0 0
        %10853 = vmatpush2.bf16.msra.mxu0 %v10633
        %10854 = vmatprep.subr.bf16.mxu0 0
        %10855 = vmatpush2.bf16.msra.mxu0 %v10630
        %10856 = vmatprep.mubr.bf16.mxu0 %v10415
        %10857 = vmatmul.mubr.bf16.gmra.mxu0 %v10414
        %v10858 = vpop.f32.mrf.mxu0
        %v10859 = vadd.f32 %v10377, %v10858
        %v10860 = vpop.f32.mrf.mxu0
        %v10861 = vpop.f32.mrf.mxu0
        %v10862 = vadd.f32 %v10382, %v10861
        %v10863 = vpop.f32.mrf.mxu0
        %10864 = vmatprep.mubr.bf16.mxu0 %v10418
        %10865 = vmatmul.mubr.bf16.gmra.mxu0 %v10417
        %v10866 = vpop.f32.mrf.mxu0
        %v10867 = vadd.f32 %v10387, %v10866
        %v10868 = vpop.f32.mrf.mxu0
        %v10869 = vpop.f32.mrf.mxu0
        %v10870 = vadd.f32 %v10392, %v10869
        %v10871 = vpop.f32.mrf.mxu0
        %10872 = vdwg.mxu0
        %10873 = vmatprep.subr.bf16.mxu0 0
        %10874 = vmatpush1.bf16.msra.mxu0 0
        %10875 = vmatprep.subr.bf16.mxu0 0
        %10876 = vmatpush1.bf16.msra.mxu0 0
        %10877 = vmatprep.subr.bf16.mxu0 0
        %10878 = vmatpush1.bf16.msra.mxu0 0
        %10879 = vmatprep.subr.bf16.mxu0 0
        %10880 = vmatpush1.bf16.msra.mxu0 0
        %10881 = vmatprep.subr.bf16.mxu0 0
        %10882 = vmatpush1.bf16.msra.mxu0 0
        %10883 = vmatprep.subr.bf16.mxu0 0
        %10884 = vmatpush1.bf16.msra.mxu0 0
        %10885 = vmatprep.subr.bf16.mxu0 0
        %10886 = vmatpush1.bf16.msra.mxu0 %v10657
        %10887 = vmatprep.subr.bf16.mxu0 0
        %10888 = vmatpush1.bf16.msra.mxu0 %v10654
        %10889 = vmatprep.subr.bf16.mxu0 0
        %10890 = vmatpush2.bf16.msra.mxu0 0
        %10891 = vmatprep.subr.bf16.mxu0 0
        %10892 = vmatpush2.bf16.msra.mxu0 0
        %10893 = vmatprep.subr.bf16.mxu0 0
        %10894 = vmatpush2.bf16.msra.mxu0 0
        %10895 = vmatprep.subr.bf16.mxu0 0
        %10896 = vmatpush2.bf16.msra.mxu0 0
        %10897 = vmatprep.subr.bf16.mxu0 0
        %10898 = vmatpush2.bf16.msra.mxu0 0
        %10899 = vmatprep.subr.bf16.mxu0 0
        %10900 = vmatpush2.bf16.msra.mxu0 0
        %10901 = vmatprep.subr.bf16.mxu0 0
        %10902 = vmatpush2.bf16.msra.mxu0 0
        %10903 = vmatprep.subr.bf16.mxu0 0
        %10904 = vmatpush2.bf16.msra.mxu0 0
        %10905 = vmatprep.mubr.bf16.mxu0 0
        %10906 = vmatmul.mubr.bf16.gmra.mxu0 %v10713
        %v10907 = vpop.f32.mrf.mxu0
        %v10908 = vadd.f32 %v10859, %v10907
        %v10909 = vpop.f32.mrf.mxu0
        %v10910 = vpop.f32.mrf.mxu0
        %v10911 = vadd.f32 %v10862, %v10910
        %v10912 = vpop.f32.mrf.mxu0
        %10913 = vmatprep.mubr.bf16.mxu0 0
        %10914 = vmatmul.mubr.bf16.gmra.mxu0 %v10716
        %v10915 = vpop.f32.mrf.mxu0
        %v10916 = vadd.f32 %v10867, %v10915
        %v10917 = vpop.f32.mrf.mxu0
        %v10918 = vpop.f32.mrf.mxu0
        %v10919 = vadd.f32 %v10870, %v10918
        %v10920 = vpop.f32.mrf.mxu0
        %10921 = vdwg.mxu0
        %v10922 = vxor.u32 %v10816, 2147483648
        %v10923 = vxor.u32 %v10818, 2147483648
        %v10924 = vxor.u32 %v10916, 2147483648
        %v10925 = vxor.u32 %v10820, 2147483648
        %v10926 = vxor.u32 %v10822, 2147483648
        %v10927 = vxor.u32 %v10919, 2147483648
        %v10928 = vmul.f32 %v10922, 1.442695
        %v10929 = vpow.pop %v10928
        %v10930 = vmul.f32 %v10923, 1.442695
        %v10931 = vpow.pop %v10930
        %v10932 = vmul.f32 %v10924, 1.442695
        %v10933 = vpow.pop %v10932
        %v10934 = vmul.f32 %v10925, 1.442695
        %v10935 = vpow.pop %v10934
        %v10936 = vmul.f32 %v10926, 1.442695
        %v10937 = vpow.pop %v10936
        %v10938 = vmul.f32 %v10927, 1.442695
        %v10939 = vpow.pop %v10938
        %v10940 = vadd.f32 %v10929, 1.0
        %v10941 = vadd.f32 %v10931, 1.0
        %v10942 = vadd.f32 %v10933, 1.0
        %v10943 = vadd.f32 %v10935, 1.0
        %v10944 = vadd.f32 %v10937, 1.0
        %v10945 = vadd.f32 %v10939, 1.0
        %v10946 = vrcp.pop %v10940
        %v10947 = vmul.f32 1.0, %v10946
        %v10948 = vrcp.pop %v10941
        %v10949 = vmul.f32 1.0, %v10948
        %v10950 = vrcp.pop %v10942
        %v10951 = vmul.f32 1.0, %v10950
        %v10952 = vrcp.pop %v10943
        %v10953 = vmul.f32 1.0, %v10952
        %v10954 = vrcp.pop %v10944
        %v10955 = vmul.f32 1.0, %v10954
        %v10956 = vrcp.pop %v10945
        %v10957 = vmul.f32 1.0, %v10956
        %v10958 = vmul.f32 %v10806, %v10947
        %v10959 = vmul.f32 %v10808, %v10949
        %v10960 = vmul.f32 %v10908, %v10951
        %v10961 = vmul.f32 %v10810, %v10953
        %v10962 = vmul.f32 %v10812, %v10955
        %v10963 = vmul.f32 %v10911, %v10957
        %v10964 = vmul.f32 %v10958, %v3473
        %v10965 = vmul.f32 %v10959, %v3477
        %v10966 = vmul.f32 %v10960, %v3481
        %v10967 = vmul.f32 %v10961, %v3473
        %v10968 = vmul.f32 %v10962, %v3477
        %v10969 = vmul.f32 %v10963, %v3481
        %10970 = vst [vmem:[%s541] sm:$0xff] %v10964
        %10971 = vst [vmem:[%s541 + $0x8] sm:$0xff] %v10965
        %10972 = vst [vmem:[%s541 + $0x10] sm:$0xff] %v10966
        %10973 = vst [vmem:[%s541 + $0x18] sm:$0xff] %v10967
        %10974 = vst [vmem:[%s541 + $0x20] sm:$0xff] %v10968
        %10975 = vst [vmem:[%s541 + $0x28] sm:$0xff] %v10969
        %s10976 = sand.u32 %s340, 1
        %s10977 = scalar_lea.sflag [#allocation6], %s10976
        %s10978 = sand.u32 %s340, 1
        %s10979 = smul.addr %s10978, 48
        %s10980 = scalar_lea.vmem [#allocation13], %s10979
        // Predicated region
        $region97: #{tpu_custom_call.1} parent=75 // pred_check
          %p10981 = pneg %p350
        $region98: #{tpu_custom_call.1} parent=75 // pred_check_branch
          %10983 = sbr.rel (%p10981) target = $region100
        $region99: #{tpu_custom_call.1} parent=75 // pred_region
          %s10985 = ssub.s32 768, 768
          %10986 = vsyncadd %s10977, %s10985
          %s10987 = smul.addr %s33, 6
          %s10988 = smul.addr %s10987, 128
          %s10989 = scalar_lea.hbm %s14, %s10988
          %s10990 = sshll.u32 %s10980, 4
          %s10991 = int_to_ptr.vmem [resolvable:$true] %s10990
          %10996 = dma.vmem_to_hbm [thread:$0]  %s10991, 768, %s10989, %s10977, 384, 384, 24
        $region100: #{tpu_custom_call.1} parent=75 // pred_fallthru
          _
      $region76: #{tpu_custom_call.1} parent=5 // pred_fallthru
        _
      %p10997 = scmp.le.s32.totalorder 2, %s28
      // Predicated region
      $region101: #{tpu_custom_call.1} parent=5 // pred_check
        %p10998 = pneg %p10997
      $region102: #{tpu_custom_call.1} parent=5 // pred_check_branch
        %11000 = sbr.rel (%p10998) target = $region104
      $region103: #{tpu_custom_call.1} parent=5 // pred_region
        %s11001 = ssub.s32 %s28, 2
        // Predicated region
        $region105: #{tpu_custom_call.1} parent=103 // pred_check
          %p11002 = pneg %p356
        $region106: #{tpu_custom_call.1} parent=103 // pred_check_branch
          %11004 = sbr.rel (%p11002) target = $region108
        $region107: #{tpu_custom_call.1} parent=103 // pred_region
          %s11005 = sand.u32 %s341, 1
          %s11006 = scalar_lea.sflag [#allocation6], %s11005
          %s11007 = sand.u32 %s341, 1
          %s11008 = smul.addr %s11007, 48
          %s11009 = scalar_lea.vmem [#allocation13], %s11008
          %11010 = dma.done %s11006, 768
        $region108: #{tpu_custom_call.1} parent=103 // pred_fallthru
          _
      $region104: #{tpu_custom_call.1} parent=5 // pred_fallthru
        _
    $region6: #{tpu_custom_call.1} parent=1 // loop_footer
      %s32 = sadd.s32 1, %s28
    $region7: #{tpu_custom_call.1} parent=1 // loop_footer_branch
      %27 = sbr.rel target = $region3
    $region8: #{tpu_custom_call.1} parent=1 // loop_exit
      _
    %11011 = vsyncpa [#allocation5], 1
    %s11012 = scalar_lea.sflag [#allocation5], 1
    %11013 = vsyncpa %s11012, 1
    %11014 = vsyncpa [#allocation8], 1
    %11015 = vsyncpa [#allocation11], 1
    %11016 = vsyncpa [#allocation6], 1
    %s11017 = scalar_lea.sflag [#allocation6], 1
    %11018 = vsyncpa %s11017, 1

</llo_original>
